<compile_context>
chip_gen: v7x
topology: tpu7x:2x2x1
jax: 0.10.0
libtpu: 0.0.40
codegen_flags: <defaults>
</compile_context>

<pallas_src>
import functools

import jax
import jax.numpy as jnp
from jax import lax
from jax.experimental import pallas as pl
from jax.experimental.pallas import tpu as pltpu

BN_EPS = 1e-5        # nn.BatchNorm2d default
BLOCK_LN_EPS = 1e-5  # Block(..., epsilon=1e-05)
FINAL_LN_EPS = 1e-6  # self.norm = LayerNorm(hidden_dims, eps=1e-6)
LANE = 128
VMEM_LIMIT = 32 * 1024 * 1024   # safe on v5e/v6e and on v7x (64 MiB physical)


def _round_up(v, m):
    return (v + m - 1) // m * m


# ---------------------------------------------------------------------------
# Kernel 1: fused GEMM + bias (+ swish epilogue)      y = act(x @ w + b)
# ---------------------------------------------------------------------------
def _matmul_bias_act_kernel(x_ref, w_ref, b_ref, o_ref, *, act):
    acc = jnp.dot(x_ref[...], w_ref[...], preferred_element_type=jnp.float32)
    acc = acc + b_ref[...].astype(jnp.float32)
    if act == "swish":
        acc = acc * jax.nn.sigmoid(acc)
    o_ref[...] = acc.astype(o_ref.dtype)


def _pick_tm(M, K, Npad, bytes_per):
    # Size the M-tile against the smallest-VMEM chip (v7x: 64 MiB physical,
    # 32 MiB scoped default): double-buffered x tile + double-buffered out
    # tile must fit a conservative budget; the (K, Npad) weight is resident.
    budget = 12 * 1024 * 1024
    tm = budget // (2 * int(bytes_per) * (K + Npad))
    tm = int(min(1024, max(128, (tm // 128) * 128)))
    return M if M <= tm else tm


def fused_linear(x2d, w_kn, bias_n, act="none"):
    """act(x2d @ w_kn + bias_n); x2d (M, K), w_kn (K, N), bias_n (N,)."""
    M, K = x2d.shape
    K2, N = w_kn.shape
    assert K == K2

    # Lane-dense output: pad N up to a multiple of 128 (zero weight columns,
    # sliced off afterwards) so the output stores are unmasked full vst.
    Npad = _round_up(N, LANE)
    if Npad != N:
        w_kn = jnp.pad(w_kn, ((0, 0), (0, Npad - N)))
        bias_n = jnp.pad(bias_n, (0, Npad - N))
    b2d = bias_n.reshape(1, Npad)

    # Tile M over the grid: Pallas double-buffers HBM<->VMEM DMA and the
    # "parallel" axis can be sharded across TensorCores (v7x).
    TM = _pick_tm(M, K, Npad, x2d.dtype.itemsize)
    Mp = _round_up(M, TM)
    xp = jnp.pad(x2d, ((0, Mp - M), (0, 0))) if Mp != M else x2d

    out = pl.pallas_call(
        functools.partial(_matmul_bias_act_kernel, act=act),
        out_shape=jax.ShapeDtypeStruct((Mp, Npad), x2d.dtype),
        grid_spec=pltpu.PrefetchScalarGridSpec(
            num_scalar_prefetch=0,
            grid=(Mp // TM,),
            in_specs=[
                pl.BlockSpec((TM, K), lambda i: (i, 0)),
                pl.BlockSpec((K, Npad), lambda i: (0, 0)),   # resident weight
                pl.BlockSpec((1, Npad), lambda i: (0, 0)),   # resident bias
            ],
            out_specs=pl.BlockSpec((TM, Npad), lambda i: (i, 0)),
        ),
        compiler_params=pltpu.CompilerParams(
            dimension_semantics=("parallel",),
            vmem_limit_bytes=VMEM_LIMIT,
        ),
    )(xp, w_kn, b2d)

    return out[:M, :N] if (Mp != M or Npad != N) else out


# ---------------------------------------------------------------------------
# Kernel 2: row-wise LayerNorm over (M, C)
# ---------------------------------------------------------------------------
def _layernorm_kernel(x_ref, g_ref, b_ref, o_ref, *, eps):
    x = x_ref[...].astype(jnp.float32)
    mu = jnp.mean(x, axis=-1, keepdims=True)
    xc = x - mu
    var = jnp.mean(xc * xc, axis=-1, keepdims=True)
    y = xc * lax.rsqrt(var + eps)
    o_ref[...] = (y * g_ref[...] + b_ref[...]).astype(o_ref.dtype)


def layernorm(x2d, gamma, beta, eps):
    M, C = x2d.shape
    TM = M if M <= 1024 else 1024
    Mp = _round_up(M, TM)
    xp = jnp.pad(x2d, ((0, Mp - M), (0, 0))) if Mp != M else x2d
    out = pl.pallas_call(
        functools.partial(_layernorm_kernel, eps=eps),
        out_shape=jax.ShapeDtypeStruct((Mp, C), x2d.dtype),
        grid_spec=pltpu.PrefetchScalarGridSpec(
            num_scalar_prefetch=0,
            grid=(Mp // TM,),
            in_specs=[
                pl.BlockSpec((TM, C), lambda i: (i, 0)),
                pl.BlockSpec((1, C), lambda i: (0, 0)),
                pl.BlockSpec((1, C), lambda i: (0, 0)),
            ],
            out_specs=pl.BlockSpec((TM, C), lambda i: (i, 0)),
        ),
        compiler_params=pltpu.CompilerParams(
            dimension_semantics=("parallel",),
            vmem_limit_bytes=VMEM_LIMIT,
        ),
    )(xp, gamma.reshape(1, C), beta.reshape(1, C))
    return out[:M] if Mp != M else out


# ---------------------------------------------------------------------------
# Kernel 3: per-(batch, head) global attention  softmax(Q K^T * scale) V
# ---------------------------------------------------------------------------
def _attention_kernel(q_ref, k_ref, v_ref, o_ref, *, scale):
    q = q_ref[0].astype(jnp.float32)
    k = k_ref[0].astype(jnp.float32)
    v = v_ref[0].astype(jnp.float32)
    s = lax.dot_general(q, k, (((1,), (1,)), ((), ())),
                        preferred_element_type=jnp.float32) * scale
    m = jnp.max(s, axis=-1, keepdims=True)
    p = jnp.exp(s - m)
    l = jnp.sum(p, axis=-1, keepdims=True)
    attn = p / l
    o = jnp.dot(attn, v, preferred_element_type=jnp.float32)
    o_ref[0] = o.astype(o_ref.dtype)


def multi_head_attention(q, k, v, scale):
    # q/k/v: (B*num_heads, N, head_dim); full (N x N) attention per head.
    # TODO(synk): for very long OCR sequences this should become a flash-style
    # online-softmax kernel tiled over keys; sequences here are short (H*W).
    BH, N, hd = q.shape
    spec = pl.BlockSpec((1, N, hd), lambda i: (i, 0, 0))
    return pl.pallas_call(
        functools.partial(_attention_kernel, scale=scale),
        out_shape=jax.ShapeDtypeStruct((BH, N, hd), q.dtype),
        grid_spec=pltpu.PrefetchScalarGridSpec(
            num_scalar_prefetch=0,
            grid=(BH,),
            in_specs=[spec, spec, spec],
            out_specs=pl.BlockSpec((1, N, hd), lambda i: (i, 0, 0)),
        ),
        compiler_params=pltpu.CompilerParams(
            dimension_semantics=("parallel",),
            vmem_limit_bytes=VMEM_LIMIT,
        ),
    )(q, k, v)


# ---------------------------------------------------------------------------
# ConvBNLayer (BN folded, swish fused) on top of the GEMM kernel
# ---------------------------------------------------------------------------
def conv1x1_bn_swish(x_nchw, p):
    B, C, H, W = x_nchw.shape
    x2d = jnp.transpose(x_nchw, (0, 2, 3, 1)).reshape(B * H * W, C)
    y2d = fused_linear(x2d, p["w_kn"], p["b"], act="swish")
    cout = p["w_kn"].shape[1]
    return jnp.transpose(y2d.reshape(B, H, W, cout), (0, 3, 1, 2))


def conv3x3_bn_swish(x_nchw, p):
    # 3x3 / stride 1 / pad 1 conv as im2col + fused Pallas GEMM.
    B, C, H, W = x_nchw.shape
    x_nhwc = jnp.transpose(x_nchw, (0, 2, 3, 1))
    xp = jnp.pad(x_nhwc, ((0, 0), (1, 1), (1, 1), (0, 0)))
    cols = [xp[:, dy:dy + H, dx:dx + W, :] for dy in range(3) for dx in range(3)]
    patches = jnp.stack(cols, axis=3)                       # (B, H, W, 9, C)
    x2d = patches.reshape(B * H * W, 9 * C)
    y2d = fused_linear(x2d, p["w_kn"], p["b"], act="swish")
    cout = p["w_kn"].shape[1]
    return jnp.transpose(y2d.reshape(B, H, W, cout), (0, 3, 1, 2))


# ---------------------------------------------------------------------------
# SVTR mixing block (prenorm=False):  x += Attn(LN1(x));  x += MLP(LN2(x))
# ---------------------------------------------------------------------------
def svtr_block_apply(z, p, *, num_heads):
    B, N, D = z.shape
    hd = D // num_heads
    scale = float(hd) ** -0.5            # qk_scale=None
    z2d = z.reshape(B * N, D)

    # mixer branch
    zn = layernorm(z2d, p["norm1_g"], p["norm1_b"], BLOCK_LN_EPS)
    qkv = fused_linear(zn, p["qkv_w_t"], p["qkv_b"], act="none")   # (B*N, 3D)
    qkv = qkv.reshape(B, N, 3, num_heads, hd).transpose(2, 0, 3, 1, 4)
    q = qkv[0].reshape(B * num_heads, N, hd)
    k = qkv[1].reshape(B * num_heads, N, hd)
    v = qkv[2].reshape(B * num_heads, N, hd)
    o = multi_head_attention(q, k, v, scale)
    o = o.reshape(B, num_heads, N, hd).transpose(0, 2, 1, 3).reshape(B * N, D)
    z2d = z2d + fused_linear(o, p["proj_w_t"], p["proj_b"], act="none")

    # MLP branch (fc1 + swish fused, then fc2)
    zn = layernorm(z2d, p["norm2_g"], p["norm2_b"], BLOCK_LN_EPS)
    m = fused_linear(zn, p["fc1_w_t"], p["fc1_b"], act="swish")
    m = fused_linear(m, p["fc2_w_t"], p["fc2_b"], act="none")
    z2d = z2d + m
    # dropout / attn-dropout / drop-path are identity at inference.
    return z2d.reshape(B, N, D)


# ---------------------------------------------------------------------------
# Full EncoderWithSVTR forward (inference)
# ---------------------------------------------------------------------------
def encoder_with_svtr_forward(x, params, *, num_heads):
    B, C_in, H, W = x.shape
    h = x                                        # use_guide=False -> z = x
    z = conv3x3_bn_swish(x, params["conv1"])     # (B, C_in//8, H, W)
    z = conv1x1_bn_swish(z, params["conv2"])     # (B, hidden_dims, H, W)
    D = z.shape[1]
    seq = z.reshape(B, D, H * W).transpose(0, 2, 1)          # (B, H*W, D)
    for blk in params["blocks"]:
        seq = svtr_block_apply(seq, blk, num_heads=num_heads)
    seq2d = layernorm(seq.reshape(B * H * W, D),
                      params["norm_g"], params["norm_b"], FINAL_LN_EPS)
    z = seq2d.reshape(B, H, W, D).transpose(0, 3, 1, 2)      # (B, D, H, W)
    z = conv1x1_bn_swish(z, params["conv3"])     # (B, C_in, H, W)
    z = jnp.concatenate([h, z], axis=1)          # (B, 2*C_in, H, W)
    z = conv3x3_bn_swish(z, params["conv4"])     # (B, C_in//8, H, W)
    z = conv1x1_bn_swish(z, params["conv1x1"])   # (B, dims, H, W)
    return z


# ---------------------------------------------------------------------------
# Parameters (torch layouts) + one-time kernel-layout prep (fold BN, W.T)
# ---------------------------------------------------------------------------
def make_torch_params(key, in_channels, dims, depth, hidden_dims, num_heads,
                      mlp_ratio):
    c8 = in_channels // 8
    mlp_hidden = int(hidden_dims * mlp_ratio)

    def conv_bn(k, cin, cout, ksz):
        ks = jax.random.split(k, 5)
        return {
            "w": 0.05 * jax.random.normal(ks[0], (cout, cin, ksz, ksz), jnp.float32),
            "gamma": 1.0 + 0.1 * jax.random.normal(ks[1], (cout,), jnp.float32),
            "beta": 0.1 * jax.random.normal(ks[2], (cout,), jnp.float32),
            "mean": 0.1 * jax.random.normal(ks[3], (cout,), jnp.float32),
            "var": 1.0 + 0.1 * jnp.abs(jax.random.normal(ks[4], (cout,), jnp.float32)),
        }

    def linear(k, cin, cout):
        k1, k2 = jax.random.split(k)
        return {"w": 0.05 * jax.random.normal(k1, (cout, cin), jnp.float32),
                "b": 0.05 * jax.random.normal(k2, (cout,), jnp.float32)}

    def ln(k, c):
        k1, k2 = jax.random.split(k)
        return {"g": 1.0 + 0.05 * jax.random.normal(k1, (c,), jnp.float32),
                "b": 0.05 * jax.random.normal(k2, (c,), jnp.float32)}

    keys = jax.random.split(key, 6 + depth)
    params = {
        "conv1": conv_bn(keys[0], in_channels, c8, 3),
        "conv2": conv_bn(keys[1], c8, hidden_dims, 1),
        "conv3": conv_bn(keys[2], hidden_dims, in_channels, 1),
        "conv4": conv_bn(keys[3], 2 * in_channels, c8, 3),
        "conv1x1": conv_bn(keys[4], c8, dims, 1),
        "norm": ln(keys[5], hidden_dims),
        "blocks": [],
    }
    for i in range(depth):
        bk = jax.random.split(keys[6 + i], 6)
        params["blocks"].append({
            "norm1": ln(bk[0], hidden_dims),
            "qkv": linear(bk[1], hidden_dims, 3 * hidden_dims),
            "proj": linear(bk[2], hidden_dims, hidden_dims),
            "norm2": ln(bk[3], hidden_dims),
            "fc1": linear(bk[4], hidden_dims, mlp_hidden),
            "fc2": linear(bk[5], mlp_hidden, hidden_dims),
        })
    return params


def prep_kernel_params(tp):
    """Done once, outside the forward: fold BN into the conv weights and
    pre-transpose Linear weights into (K, N) GEMM layout."""
    def fold_conv(p):
        scale = p["gamma"] / jnp.sqrt(p["var"] + BN_EPS)
        w_f = p["w"] * scale[:, None, None, None]
        b = p["beta"] - p["mean"] * scale
        cout, cin, kh, kw = p["w"].shape
        w_kn = jnp.transpose(w_f, (2, 3, 1, 0)).reshape(kh * kw * cin, cout)
        return {"w_kn": w_kn, "b": b}

    kp = {
        "conv1": fold_conv(tp["conv1"]),
        "conv2": fold_conv(tp["conv2"]),
        "conv3": fold_conv(tp["conv3"]),
        "conv4": fold_conv(tp["conv4"]),
        "conv1x1": fold_conv(tp["conv1x1"]),
        "norm_g": tp["norm"]["g"],
        "norm_b": tp["norm"]["b"],
        "blocks": [],
    }
    for b in tp["blocks"]:
        kp["blocks"].append({
            "norm1_g": b["norm1"]["g"], "norm1_b": b["norm1"]["b"],
            "qkv_w_t": b["qkv"]["w"].T, "qkv_b": b["qkv"]["b"],
            "proj_w_t": b["proj"]["w"].T, "proj_b": b["proj"]["b"],
            "norm2_g": b["norm2"]["g"], "norm2_b": b["norm2"]["b"],
            "fc1_w_t": b["fc1"]["w"].T, "fc1_b": b["fc1"]["b"],
            "fc2_w_t": b["fc2"]["w"].T, "fc2_b": b["fc2"]["b"],
        })
    return kp


# ---------------------------------------------------------------------------
# Pure-JAX reference (same math as the PyTorch module in eval mode)
# ---------------------------------------------------------------------------
def reference_forward(x, tp, *, num_heads):
    def cbs(x, p, pad):
        y = lax.conv_general_dilated(
            x, p["w"], window_strides=(1, 1),
            padding=((pad, pad), (pad, pad)),
            dimension_numbers=("NCHW", "OIHW", "NCHW"))
        scale = p["gamma"] / jnp.sqrt(p["var"] + BN_EPS)
        y = y * scale[None, :, None, None] + \
            (p["beta"] - p["mean"] * scale)[None, :, None, None]
        return y * jax.nn.sigmoid(y)

    def ln(x, p, eps):
        mu = x.mean(-1, keepdims=True)
        var = ((x - mu) ** 2).mean(-1, keepdims=True)
        return (x - mu) / jnp.sqrt(var + eps) * p["g"] + p["b"]

    def block(z, p):
        B, N, D = z.shape
        hd = D // num_heads
        sc = float(hd) ** -0.5
        zn = ln(z, p["norm1"], BLOCK_LN_EPS)
        qkv = zn @ p["qkv"]["w"].T + p["qkv"]["b"]
        qkv = qkv.reshape(B, N, 3, num_heads, hd).transpose(2, 0, 3, 1, 4)
        q, k, v = qkv[0], qkv[1], qkv[2]
        attn = jax.nn.softmax(jnp.einsum("bhnd,bhmd->bhnm", q, k) * sc, axis=-1)
        o = jnp.einsum("bhnm,bhmd->bhnd", attn, v)
        o = o.transpose(0, 2, 1, 3).reshape(B, N, D)
        z = z + (o @ p["proj"]["w"].T + p["proj"]["b"])
        zn = ln(z, p["norm2"], BLOCK_LN_EPS)
        m = zn @ p["fc1"]["w"].T + p["fc1"]["b"]
        m = m * jax.nn.sigmoid(m)
        m = m @ p["fc2"]["w"].T + p["fc2"]["b"]
        return z + m

    B, C, H, W = x.shape
    h = x
    z = cbs(x, tp["conv1"], 1)
    z = cbs(z, tp["conv2"], 0)
    D = z.shape[1]
    z = z.reshape(B, D, H * W).transpose(0, 2, 1)
    for bp in tp["blocks"]:
        z = block(z, bp)
    z = ln(z, tp["norm"], FINAL_LN_EPS)
    z = z.reshape(B, H, W, D).transpose(0, 3, 1, 2)
    z = cbs(z, tp["conv3"], 0)
    z = jnp.concatenate([h, z], axis=1)
    z = cbs(z, tp["conv4"], 1)
    z = cbs(z, tp["conv1x1"], 0)
    return z


if __name__ == "__main__":
    # Small config consistent with the module defaults:
    #   in_channels=64 (backbone channels), dims=64, depth=2, hidden_dims=120,
    #   num_heads=8, mlp_ratio=2.0, feature map 8x16 -> sequence length 128.
    B, in_channels, H, W = 2, 64, 8, 16
    dims, depth, hidden_dims, num_heads, mlp_ratio = 64, 2, 120, 8, 2.0

    key = jax.random.PRNGKey(0)
    kx, kp = jax.random.split(key)
    x = jax.random.normal(kx, (B, in_channels, H, W), dtype=jnp.float32)

    torch_params = make_torch_params(kp, in_channels, dims, depth,
                                     hidden_dims, num_heads, mlp_ratio)
    kernel_params = prep_kernel_params(torch_params)

    fwd = jax.jit(functools.partial(encoder_with_svtr_forward,
                                    num_heads=num_heads))
    y = jax.block_until_ready(fwd(x, kernel_params))
    assert y.shape == (B, dims, H, W), y.shape

    ref = jax.jit(functools.partial(reference_forward, num_heads=num_heads))
    y_ref = jax.block_until_ready(ref(x, torch_params))

    max_err = float(jnp.max(jnp.abs(y - y_ref)))
    scale = float(jnp.max(jnp.abs(y_ref)))
    assert max_err <= 3e-2 * scale + 2e-3, (
        f"mismatch vs reference: max|diff|={max_err}, max|ref|={scale}")

    print("KERNEL_OK")
</pallas_src>

<mosaic_0001>
module attributes {stable_mosaic.version = 11 : i64} {
  func.func @_matmul_bias_act_kernel(%arg0: i32, %arg1: memref<256x576xf32, #tpu.memory_space<vmem>>, %arg2: memref<576x128xf32, #tpu.memory_space<vmem>>, %arg3: memref<1x128xf32, #tpu.memory_space<vmem>>, %arg4: memref<256x128xf32, #tpu.memory_space<vmem>>) attributes {dimension_semantics = [#tpu.dimension_semantics<parallel>], iteration_bounds = array<i64: 1>, scalar_prefetch = 0 : i64, scratch_operands = 0 : i64, tpu.core_type = #tpu.core_type<tc>, window_params = [{transform_indices = @transform_0, window_bounds = array<i64: 256, 576>}, {pipeline_mode = #tpu.pipeline_mode<synchronous>, transform_indices = @transform_1, window_bounds = array<i64: 576, 128>}, {pipeline_mode = #tpu.pipeline_mode<synchronous>, transform_indices = @transform_2, window_bounds = array<i64: 1, 128>}, {transform_indices = @transform_3, window_bounds = array<i64: 256, 128>}]} {
    %c0 = arith.constant 0 : index
    %c0_0 = arith.constant 0 : index
    %0 = vector.load %arg1[%c0, %c0_0] : memref<256x576xf32, #tpu.memory_space<vmem>>, vector<256x576xf32>
    %c0_1 = arith.constant 0 : index
    %c0_2 = arith.constant 0 : index
    %1 = vector.load %arg2[%c0_1, %c0_2] : memref<576x128xf32, #tpu.memory_space<vmem>>, vector<576x128xf32>
    %cst = arith.constant dense<0.000000e+00> : vector<256x128xf32>
    %2 = tpu.matmul %0, %1, %cst {dimension_numbers = #tpu.dot_dimension_numbers<[1], [0], [0], [1], [0, 0, 1, 1], [], []>} : vector<256x576xf32>, vector<576x128xf32>, vector<256x128xf32> -> vector<256x128xf32>
    %c0_3 = arith.constant 0 : index
    %c0_4 = arith.constant 0 : index
    %3 = vector.load %arg3[%c0_3, %c0_4] : memref<1x128xf32, #tpu.memory_space<vmem>>, vector<1x128xf32>
    %4 = vector.broadcast %3 : vector<1x128xf32> to vector<256x128xf32>
    %5 = arith.addf %2, %4 : vector<256x128xf32>
    %6 = arith.negf %5 : vector<256x128xf32>
    %7 = math.exp %6 : vector<256x128xf32>
    %cst_5 = arith.constant 1.000000e+00 : f32
    %8 = vector.broadcast %cst_5 : f32 to vector<256x128xf32>
    %9 = arith.addf %8, %7 : vector<256x128xf32>
    %10 = arith.divf %8, %9 : vector<256x128xf32>
    %11 = arith.mulf %5, %10 : vector<256x128xf32>
    %c0_6 = arith.constant 0 : index
    %c0_7 = arith.constant 0 : index
    %12 = vector.load %arg4[%c0_6, %c0_7] : memref<256x128xf32, #tpu.memory_space<vmem>>, vector<256x128xf32>
    tpu.vector_store %arg4[%c0_6, %c0_7], %11 {strides = array<i32>} : memref<256x128xf32, #tpu.memory_space<vmem>>, vector<256x128xf32>,
    return
  }
  func.func @transform_0(%arg0: i32) -> (i32, i32) {
    %c0_i32 = arith.constant 0 : i32
    %c0_i32_0 = arith.constant 0 : i32
    return %arg0, %c0_i32 : i32, i32
  }
  func.func @transform_1(%arg0: i32) -> (i32, i32) {
    %c0_i32 = arith.constant 0 : i32
    %c0_i32_0 = arith.constant 0 : i32
    %c0_i32_1 = arith.constant 0 : i32
    return %c0_i32, %c0_i32_0 : i32, i32
  }
  func.func @transform_2(%arg0: i32) -> (i32, i32) {
    %c0_i32 = arith.constant 0 : i32
    %c0_i32_0 = arith.constant 0 : i32
    %c0_i32_1 = arith.constant 0 : i32
    return %c0_i32, %c0_i32_0 : i32, i32
  }
  func.func @transform_3(%arg0: i32) -> (i32, i32) {
    %c0_i32 = arith.constant 0 : i32
    %c0_i32_0 = arith.constant 0 : i32
    return %arg0, %c0_i32 : i32, i32
  }
}

module attributes {stable_mosaic.version = 11 : i64} {
  func.func @_matmul_bias_act_kernel(%arg0: i32, %arg1: memref<256x8xf32, #tpu.memory_space<vmem>>, %arg2: memref<8x128xf32, #tpu.memory_space<vmem>>, %arg3: memref<1x128xf32, #tpu.memory_space<vmem>>, %arg4: memref<256x128xf32, #tpu.memory_space<vmem>>) attributes {dimension_semantics = [#tpu.dimension_semantics<parallel>], iteration_bounds = array<i64: 1>, scalar_prefetch = 0 : i64, scratch_operands = 0 : i64, tpu.core_type = #tpu.core_type<tc>, window_params = [{transform_indices = @transform_0, window_bounds = array<i64: 256, 8>}, {pipeline_mode = #tpu.pipeline_mode<synchronous>, transform_indices = @transform_1, window_bounds = array<i64: 8, 128>}, {pipeline_mode = #tpu.pipeline_mode<synchronous>, transform_indices = @transform_2, window_bounds = array<i64: 1, 128>}, {transform_indices = @transform_3, window_bounds = array<i64: 256, 128>}]} {
    %c0 = arith.constant 0 : index
    %c0_0 = arith.constant 0 : index
    %0 = vector.load %arg1[%c0, %c0_0] : memref<256x8xf32, #tpu.memory_space<vmem>>, vector<256x8xf32>
    %c0_1 = arith.constant 0 : index
    %c0_2 = arith.constant 0 : index
    %1 = vector.load %arg2[%c0_1, %c0_2] : memref<8x128xf32, #tpu.memory_space<vmem>>, vector<8x128xf32>
    %cst = arith.constant dense<0.000000e+00> : vector<256x128xf32>
    %2 = tpu.matmul %0, %1, %cst {dimension_numbers = #tpu.dot_dimension_numbers<[1], [0], [0], [1], [0, 0, 1, 1], [], []>} : vector<256x8xf32>, vector<8x128xf32>, vector<256x128xf32> -> vector<256x128xf32>
    %c0_3 = arith.constant 0 : index
    %c0_4 = arith.constant 0 : index
    %3 = vector.load %arg3[%c0_3, %c0_4] : memref<1x128xf32, #tpu.memory_space<vmem>>, vector<1x128xf32>
    %4 = vector.broadcast %3 : vector<1x128xf32> to vector<256x128xf32>
    %5 = arith.addf %2, %4 : vector<256x128xf32>
    %6 = arith.negf %5 : vector<256x128xf32>
    %7 = math.exp %6 : vector<256x128xf32>
    %cst_5 = arith.constant 1.000000e+00 : f32
    %8 = vector.broadcast %cst_5 : f32 to vector<256x128xf32>
    %9 = arith.addf %8, %7 : vector<256x128xf32>
    %10 = arith.divf %8, %9 : vector<256x128xf32>
    %11 = arith.mulf %5, %10 : vector<256x128xf32>
    %c0_6 = arith.constant 0 : index
    %c0_7 = arith.constant 0 : index
    %12 = vector.load %arg4[%c0_6, %c0_7] : memref<256x128xf32, #tpu.memory_space<vmem>>, vector<256x128xf32>
    tpu.vector_store %arg4[%c0_6, %c0_7], %11 {strides = array<i32>} : memref<256x128xf32, #tpu.memory_space<vmem>>, vector<256x128xf32>,
    return
  }
  func.func @transform_0(%arg0: i32) -> (i32, i32) {
    %c0_i32 = arith.constant 0 : i32
    %c0_i32_0 = arith.constant 0 : i32
    return %arg0, %c0_i32 : i32, i32
  }
  func.func @transform_1(%arg0: i32) -> (i32, i32) {
    %c0_i32 = arith.constant 0 : i32
    %c0_i32_0 = arith.constant 0 : i32
    %c0_i32_1 = arith.constant 0 : i32
    return %c0_i32, %c0_i32_0 : i32, i32
  }
  func.func @transform_2(%arg0: i32) -> (i32, i32) {
    %c0_i32 = arith.constant 0 : i32
    %c0_i32_0 = arith.constant 0 : i32
    %c0_i32_1 = arith.constant 0 : i32
    return %c0_i32, %c0_i32_0 : i32, i32
  }
  func.func @transform_3(%arg0: i32) -> (i32, i32) {
    %c0_i32 = arith.constant 0 : i32
    %c0_i32_0 = arith.constant 0 : i32
    return %arg0, %c0_i32 : i32, i32
  }
}

module attributes {stable_mosaic.version = 11 : i64} {
  func.func @_layernorm_kernel(%arg0: i32, %arg1: memref<256x120xf32, #tpu.memory_space<vmem>>, %arg2: memref<1x120xf32, #tpu.memory_space<vmem>>, %arg3: memref<1x120xf32, #tpu.memory_space<vmem>>, %arg4: memref<256x120xf32, #tpu.memory_space<vmem>>) attributes {dimension_semantics = [#tpu.dimension_semantics<parallel>], iteration_bounds = array<i64: 1>, scalar_prefetch = 0 : i64, scratch_operands = 0 : i64, tpu.core_type = #tpu.core_type<tc>, window_params = [{transform_indices = @transform_0, window_bounds = array<i64: 256, 120>}, {pipeline_mode = #tpu.pipeline_mode<synchronous>, transform_indices = @transform_1, window_bounds = array<i64: 1, 120>}, {pipeline_mode = #tpu.pipeline_mode<synchronous>, transform_indices = @transform_2, window_bounds = array<i64: 1, 120>}, {transform_indices = @transform_3, window_bounds = array<i64: 256, 120>}]} {
    %c0 = arith.constant 0 : index
    %c0_0 = arith.constant 0 : index
    %0 = vector.load %arg1[%c0, %c0_0] : memref<256x120xf32, #tpu.memory_space<vmem>>, vector<256x120xf32>
    %cst = arith.constant dense<0.000000e+00> : vector<256xf32>
    %1 = vector.multi_reduction <add>, %0, %cst [1] : vector<256x120xf32> to vector<256xf32>
    %2 = vector.shape_cast %1 : vector<256xf32> to vector<256x1xf32>
    %cst_1 = arith.constant 1.200000e+02 : f32
    %3 = vector.broadcast %cst_1 : f32 to vector<256x1xf32>
    %4 = arith.divf %2, %3 : vector<256x1xf32>
    %5 = vector.broadcast %4 : vector<256x1xf32> to vector<256x120xf32>
    %6 = arith.subf %0, %5 : vector<256x120xf32>
    %7 = arith.mulf %6, %6 : vector<256x120xf32>
    %cst_2 = arith.constant dense<0.000000e+00> : vector<256xf32>
    %8 = vector.multi_reduction <add>, %7, %cst_2 [1] : vector<256x120xf32> to vector<256xf32>
    %9 = vector.shape_cast %8 : vector<256xf32> to vector<256x1xf32>
    %cst_3 = arith.constant 1.200000e+02 : f32
    %10 = vector.broadcast %cst_3 : f32 to vector<256x1xf32>
    %11 = arith.divf %9, %10 : vector<256x1xf32>
    %cst_4 = arith.constant 9.99999974E-6 : f32
    %12 = vector.broadcast %cst_4 : f32 to vector<256x1xf32>
    %13 = arith.addf %11, %12 : vector<256x1xf32>
    %14 = math.rsqrt %13 : vector<256x1xf32>
    %15 = vector.broadcast %14 : vector<256x1xf32> to vector<256x120xf32>
    %16 = arith.mulf %6, %15 : vector<256x120xf32>
    %c0_5 = arith.constant 0 : index
    %c0_6 = arith.constant 0 : index
    %17 = vector.load %arg2[%c0_5, %c0_6] : memref<1x120xf32, #tpu.memory_space<vmem>>, vector<1x120xf32>
    %18 = vector.broadcast %17 : vector<1x120xf32> to vector<256x120xf32>
    %19 = arith.mulf %16, %18 : vector<256x120xf32>
    %c0_7 = arith.constant 0 : index
    %c0_8 = arith.constant 0 : index
    %20 = vector.load %arg3[%c0_7, %c0_8] : memref<1x120xf32, #tpu.memory_space<vmem>>, vector<1x120xf32>
    %21 = vector.broadcast %20 : vector<1x120xf32> to vector<256x120xf32>
    %22 = arith.addf %19, %21 : vector<256x120xf32>
    %c0_9 = arith.constant 0 : index
    %c0_10 = arith.constant 0 : index
    %23 = vector.load %arg4[%c0_9, %c0_10] : memref<256x120xf32, #tpu.memory_space<vmem>>, vector<256x120xf32>
    tpu.vector_store %arg4[%c0_9, %c0_10], %22 {strides = array<i32>} : memref<256x120xf32, #tpu.memory_space<vmem>>, vector<256x120xf32>,
    return
  }
  func.func @transform_0(%arg0: i32) -> (i32, i32) {
    %c0_i32 = arith.constant 0 : i32
    %c0_i32_0 = arith.constant 0 : i32
    return %arg0, %c0_i32 : i32, i32
  }
  func.func @transform_1(%arg0: i32) -> (i32, i32) {
    %c0_i32 = arith.constant 0 : i32
    %c0_i32_0 = arith.constant 0 : i32
    %c0_i32_1 = arith.constant 0 : i32
    return %c0_i32, %c0_i32_0 : i32, i32
  }
  func.func @transform_2(%arg0: i32) -> (i32, i32) {
    %c0_i32 = arith.constant 0 : i32
    %c0_i32_0 = arith.constant 0 : i32
    %c0_i32_1 = arith.constant 0 : i32
    return %c0_i32, %c0_i32_0 : i32, i32
  }
  func.func @transform_3(%arg0: i32) -> (i32, i32) {
    %c0_i32 = arith.constant 0 : i32
    %c0_i32_0 = arith.constant 0 : i32
    return %arg0, %c0_i32 : i32, i32
  }
}

module attributes {stable_mosaic.version = 11 : i64} {
  func.func @_matmul_bias_act_kernel(%arg0: i32, %arg1: memref<256x120xf32, #tpu.memory_space<vmem>>, %arg2: memref<120x384xf32, #tpu.memory_space<vmem>>, %arg3: memref<1x384xf32, #tpu.memory_space<vmem>>, %arg4: memref<256x384xf32, #tpu.memory_space<vmem>>) attributes {dimension_semantics = [#tpu.dimension_semantics<parallel>], iteration_bounds = array<i64: 1>, scalar_prefetch = 0 : i64, scratch_operands = 0 : i64, tpu.core_type = #tpu.core_type<tc>, window_params = [{transform_indices = @transform_0, window_bounds = array<i64: 256, 120>}, {pipeline_mode = #tpu.pipeline_mode<synchronous>, transform_indices = @transform_1, window_bounds = array<i64: 120, 384>}, {pipeline_mode = #tpu.pipeline_mode<synchronous>, transform_indices = @transform_2, window_bounds = array<i64: 1, 384>}, {transform_indices = @transform_3, window_bounds = array<i64: 256, 384>}]} {
    %c0 = arith.constant 0 : index
    %c0_0 = arith.constant 0 : index
    %0 = vector.load %arg1[%c0, %c0_0] : memref<256x120xf32, #tpu.memory_space<vmem>>, vector<256x120xf32>
    %c0_1 = arith.constant 0 : index
    %c0_2 = arith.constant 0 : index
    %1 = vector.load %arg2[%c0_1, %c0_2] : memref<120x384xf32, #tpu.memory_space<vmem>>, vector<120x384xf32>
    %cst = arith.constant dense<0.000000e+00> : vector<256x384xf32>
    %2 = tpu.matmul %0, %1, %cst {dimension_numbers = #tpu.dot_dimension_numbers<[1], [0], [0], [1], [0, 0, 1, 1], [], []>} : vector<256x120xf32>, vector<120x384xf32>, vector<256x384xf32> -> vector<256x384xf32>
    %c0_3 = arith.constant 0 : index
    %c0_4 = arith.constant 0 : index
    %3 = vector.load %arg3[%c0_3, %c0_4] : memref<1x384xf32, #tpu.memory_space<vmem>>, vector<1x384xf32>
    %4 = vector.broadcast %3 : vector<1x384xf32> to vector<256x384xf32>
    %5 = arith.addf %2, %4 : vector<256x384xf32>
    %c0_5 = arith.constant 0 : index
    %c0_6 = arith.constant 0 : index
    %6 = vector.load %arg4[%c0_5, %c0_6] : memref<256x384xf32, #tpu.memory_space<vmem>>, vector<256x384xf32>
    tpu.vector_store %arg4[%c0_5, %c0_6], %5 {strides = array<i32>} : memref<256x384xf32, #tpu.memory_space<vmem>>, vector<256x384xf32>,
    return
  }
  func.func @transform_0(%arg0: i32) -> (i32, i32) {
    %c0_i32 = arith.constant 0 : i32
    %c0_i32_0 = arith.constant 0 : i32
    return %arg0, %c0_i32 : i32, i32
  }
  func.func @transform_1(%arg0: i32) -> (i32, i32) {
    %c0_i32 = arith.constant 0 : i32
    %c0_i32_0 = arith.constant 0 : i32
    %c0_i32_1 = arith.constant 0 : i32
    return %c0_i32, %c0_i32_0 : i32, i32
  }
  func.func @transform_2(%arg0: i32) -> (i32, i32) {
    %c0_i32 = arith.constant 0 : i32
    %c0_i32_0 = arith.constant 0 : i32
    %c0_i32_1 = arith.constant 0 : i32
    return %c0_i32, %c0_i32_0 : i32, i32
  }
  func.func @transform_3(%arg0: i32) -> (i32, i32) {
    %c0_i32 = arith.constant 0 : i32
    %c0_i32_0 = arith.constant 0 : i32
    return %arg0, %c0_i32 : i32, i32
  }
}

module attributes {stable_mosaic.version = 11 : i64} {
  func.func @_attention_kernel(%arg0: i32, %arg1: memref<1x128x15xf32, #tpu.memory_space<vmem>>, %arg2: memref<1x128x15xf32, #tpu.memory_space<vmem>>, %arg3: memref<1x128x15xf32, #tpu.memory_space<vmem>>, %arg4: memref<1x128x15xf32, #tpu.memory_space<vmem>>) attributes {dimension_semantics = [#tpu.dimension_semantics<parallel>], iteration_bounds = array<i64: 16>, scalar_prefetch = 0 : i64, scratch_operands = 0 : i64, tpu.core_type = #tpu.core_type<tc>, window_params = [{transform_indices = @transform_0, window_bounds = array<i64: 1, 128, 15>}, {transform_indices = @transform_1, window_bounds = array<i64: 1, 128, 15>}, {transform_indices = @transform_2, window_bounds = array<i64: 1, 128, 15>}, {transform_indices = @transform_3, window_bounds = array<i64: 1, 128, 15>}]} {
    %c0 = arith.constant 0 : index
    %c0_0 = arith.constant 0 : index
    %c0_1 = arith.constant 0 : index
    %0 = vector.load %arg1[%c0, %c0_0, %c0_1] : memref<1x128x15xf32, #tpu.memory_space<vmem>>, vector<1x128x15xf32>
    %1 = vector.shape_cast %0 : vector<1x128x15xf32> to vector<128x15xf32>
    %c0_2 = arith.constant 0 : index
    %c0_3 = arith.constant 0 : index
    %c0_4 = arith.constant 0 : index
    %2 = vector.load %arg2[%c0_2, %c0_3, %c0_4] : memref<1x128x15xf32, #tpu.memory_space<vmem>>, vector<1x128x15xf32>
    %3 = vector.shape_cast %2 : vector<1x128x15xf32> to vector<128x15xf32>
    %c0_5 = arith.constant 0 : index
    %c0_6 = arith.constant 0 : index
    %c0_7 = arith.constant 0 : index
    %4 = vector.load %arg3[%c0_5, %c0_6, %c0_7] : memref<1x128x15xf32, #tpu.memory_space<vmem>>, vector<1x128x15xf32>
    %5 = vector.shape_cast %4 : vector<1x128x15xf32> to vector<128x15xf32>
    %cst = arith.constant dense<0.000000e+00> : vector<128x128xf32>
    %6 = tpu.matmul %1, %3, %cst {dimension_numbers = #tpu.dot_dimension_numbers<[1], [1], [0], [0], [0, 0, 1, 0], [], []>} : vector<128x15xf32>, vector<128x15xf32>, vector<128x128xf32> -> vector<128x128xf32>
    %cst_8 = arith.constant 0.258198887 : f32
    %7 = vector.broadcast %cst_8 : f32 to vector<128x128xf32>
    %8 = arith.mulf %6, %7 : vector<128x128xf32>
    %cst_9 = arith.constant dense<0xFF800000> : vector<128xf32>
    %9 = vector.multi_reduction <maximumf>, %8, %cst_9 [1] : vector<128x128xf32> to vector<128xf32>
    %10 = vector.shape_cast %9 : vector<128xf32> to vector<128x1xf32>
    %11 = vector.broadcast %10 : vector<128x1xf32> to vector<128x128xf32>
    %12 = arith.subf %8, %11 : vector<128x128xf32>
    %13 = math.exp %12 : vector<128x128xf32>
    %cst_10 = arith.constant dense<0.000000e+00> : vector<128xf32>
    %14 = vector.multi_reduction <add>, %13, %cst_10 [1] : vector<128x128xf32> to vector<128xf32>
    %15 = vector.shape_cast %14 : vector<128xf32> to vector<128x1xf32>
    %16 = vector.broadcast %15 : vector<128x1xf32> to vector<128x128xf32>
    %17 = arith.divf %13, %16 : vector<128x128xf32>
    %cst_11 = arith.constant dense<0.000000e+00> : vector<128x15xf32>
    %18 = tpu.matmul %17, %5, %cst_11 {dimension_numbers = #tpu.dot_dimension_numbers<[1], [0], [0], [1], [0, 0, 1, 1], [], []>} : vector<128x128xf32>, vector<128x15xf32>, vector<128x15xf32> -> vector<128x15xf32>
    %c0_12 = arith.constant 0 : index
    %c0_13 = arith.constant 0 : index
    %c0_14 = arith.constant 0 : index
    %19 = vector.load %arg4[%c0_12, %c0_13, %c0_14] : memref<1x128x15xf32, #tpu.memory_space<vmem>>, vector<1x128x15xf32>
    %20 = vector.shape_cast %19 : vector<1x128x15xf32> to vector<128x15xf32>
    %21 = vector.shape_cast %18 : vector<128x15xf32> to vector<1x128x15xf32>
    tpu.vector_store %arg4[%c0_12, %c0_13, %c0_14], %21 {strides = array<i32>} : memref<1x128x15xf32, #tpu.memory_space<vmem>>, vector<1x128x15xf32>,
    return
  }
  func.func @transform_0(%arg0: i32) -> (i32, i32, i32) {
    %c0_i32 = arith.constant 0 : i32
    %c0_i32_0 = arith.constant 0 : i32
    %c0_i32_1 = arith.constant 0 : i32
    return %arg0, %c0_i32, %c0_i32_0 : i32, i32, i32
  }
  func.func @transform_1(%arg0: i32) -> (i32, i32, i32) {
    %c0_i32 = arith.constant 0 : i32
    %c0_i32_0 = arith.constant 0 : i32
    %c0_i32_1 = arith.constant 0 : i32
    return %arg0, %c0_i32, %c0_i32_0 : i32, i32, i32
  }
  func.func @transform_2(%arg0: i32) -> (i32, i32, i32) {
    %c0_i32 = arith.constant 0 : i32
    %c0_i32_0 = arith.constant 0 : i32
    %c0_i32_1 = arith.constant 0 : i32
    return %arg0, %c0_i32, %c0_i32_0 : i32, i32, i32
  }
  func.func @transform_3(%arg0: i32) -> (i32, i32, i32) {
    %c0_i32 = arith.constant 0 : i32
    %c0_i32_0 = arith.constant 0 : i32
    %c0_i32_1 = arith.constant 0 : i32
    return %arg0, %c0_i32, %c0_i32_0 : i32, i32, i32
  }
}

module attributes {stable_mosaic.version = 11 : i64} {
  func.func @_matmul_bias_act_kernel(%arg0: i32, %arg1: memref<256x120xf32, #tpu.memory_space<vmem>>, %arg2: memref<120x128xf32, #tpu.memory_space<vmem>>, %arg3: memref<1x128xf32, #tpu.memory_space<vmem>>, %arg4: memref<256x128xf32, #tpu.memory_space<vmem>>) attributes {dimension_semantics = [#tpu.dimension_semantics<parallel>], iteration_bounds = array<i64: 1>, scalar_prefetch = 0 : i64, scratch_operands = 0 : i64, tpu.core_type = #tpu.core_type<tc>, window_params = [{transform_indices = @transform_0, window_bounds = array<i64: 256, 120>}, {pipeline_mode = #tpu.pipeline_mode<synchronous>, transform_indices = @transform_1, window_bounds = array<i64: 120, 128>}, {pipeline_mode = #tpu.pipeline_mode<synchronous>, transform_indices = @transform_2, window_bounds = array<i64: 1, 128>}, {transform_indices = @transform_3, window_bounds = array<i64: 256, 128>}]} {
    %c0 = arith.constant 0 : index
    %c0_0 = arith.constant 0 : index
    %0 = vector.load %arg1[%c0, %c0_0] : memref<256x120xf32, #tpu.memory_space<vmem>>, vector<256x120xf32>
    %c0_1 = arith.constant 0 : index
    %c0_2 = arith.constant 0 : index
    %1 = vector.load %arg2[%c0_1, %c0_2] : memref<120x128xf32, #tpu.memory_space<vmem>>, vector<120x128xf32>
    %cst = arith.constant dense<0.000000e+00> : vector<256x128xf32>
    %2 = tpu.matmul %0, %1, %cst {dimension_numbers = #tpu.dot_dimension_numbers<[1], [0], [0], [1], [0, 0, 1, 1], [], []>} : vector<256x120xf32>, vector<120x128xf32>, vector<256x128xf32> -> vector<256x128xf32>
    %c0_3 = arith.constant 0 : index
    %c0_4 = arith.constant 0 : index
    %3 = vector.load %arg3[%c0_3, %c0_4] : memref<1x128xf32, #tpu.memory_space<vmem>>, vector<1x128xf32>
    %4 = vector.broadcast %3 : vector<1x128xf32> to vector<256x128xf32>
    %5 = arith.addf %2, %4 : vector<256x128xf32>
    %c0_5 = arith.constant 0 : index
    %c0_6 = arith.constant 0 : index
    %6 = vector.load %arg4[%c0_5, %c0_6] : memref<256x128xf32, #tpu.memory_space<vmem>>, vector<256x128xf32>
    tpu.vector_store %arg4[%c0_5, %c0_6], %5 {strides = array<i32>} : memref<256x128xf32, #tpu.memory_space<vmem>>, vector<256x128xf32>,
    return
  }
  func.func @transform_0(%arg0: i32) -> (i32, i32) {
    %c0_i32 = arith.constant 0 : i32
    %c0_i32_0 = arith.constant 0 : i32
    return %arg0, %c0_i32 : i32, i32
  }
  func.func @transform_1(%arg0: i32) -> (i32, i32) {
    %c0_i32 = arith.constant 0 : i32
    %c0_i32_0 = arith.constant 0 : i32
    %c0_i32_1 = arith.constant 0 : i32
    return %c0_i32, %c0_i32_0 : i32, i32
  }
  func.func @transform_2(%arg0: i32) -> (i32, i32) {
    %c0_i32 = arith.constant 0 : i32
    %c0_i32_0 = arith.constant 0 : i32
    %c0_i32_1 = arith.constant 0 : i32
    return %c0_i32, %c0_i32_0 : i32, i32
  }
  func.func @transform_3(%arg0: i32) -> (i32, i32) {
    %c0_i32 = arith.constant 0 : i32
    %c0_i32_0 = arith.constant 0 : i32
    return %arg0, %c0_i32 : i32, i32
  }
}

module attributes {stable_mosaic.version = 11 : i64} {
  func.func @_matmul_bias_act_kernel(%arg0: i32, %arg1: memref<256x120xf32, #tpu.memory_space<vmem>>, %arg2: memref<120x256xf32, #tpu.memory_space<vmem>>, %arg3: memref<1x256xf32, #tpu.memory_space<vmem>>, %arg4: memref<256x256xf32, #tpu.memory_space<vmem>>) attributes {dimension_semantics = [#tpu.dimension_semantics<parallel>], iteration_bounds = array<i64: 1>, scalar_prefetch = 0 : i64, scratch_operands = 0 : i64, tpu.core_type = #tpu.core_type<tc>, window_params = [{transform_indices = @transform_0, window_bounds = array<i64: 256, 120>}, {pipeline_mode = #tpu.pipeline_mode<synchronous>, transform_indices = @transform_1, window_bounds = array<i64: 120, 256>}, {pipeline_mode = #tpu.pipeline_mode<synchronous>, transform_indices = @transform_2, window_bounds = array<i64: 1, 256>}, {transform_indices = @transform_3, window_bounds = array<i64: 256, 256>}]} {
    %c0 = arith.constant 0 : index
    %c0_0 = arith.constant 0 : index
    %0 = vector.load %arg1[%c0, %c0_0] : memref<256x120xf32, #tpu.memory_space<vmem>>, vector<256x120xf32>
    %c0_1 = arith.constant 0 : index
    %c0_2 = arith.constant 0 : index
    %1 = vector.load %arg2[%c0_1, %c0_2] : memref<120x256xf32, #tpu.memory_space<vmem>>, vector<120x256xf32>
    %cst = arith.constant dense<0.000000e+00> : vector<256x256xf32>
    %2 = tpu.matmul %0, %1, %cst {dimension_numbers = #tpu.dot_dimension_numbers<[1], [0], [0], [1], [0, 0, 1, 1], [], []>} : vector<256x120xf32>, vector<120x256xf32>, vector<256x256xf32> -> vector<256x256xf32>
    %c0_3 = arith.constant 0 : index
    %c0_4 = arith.constant 0 : index
    %3 = vector.load %arg3[%c0_3, %c0_4] : memref<1x256xf32, #tpu.memory_space<vmem>>, vector<1x256xf32>
    %4 = vector.broadcast %3 : vector<1x256xf32> to vector<256x256xf32>
    %5 = arith.addf %2, %4 : vector<256x256xf32>
    %6 = arith.negf %5 : vector<256x256xf32>
    %7 = math.exp %6 : vector<256x256xf32>
    %cst_5 = arith.constant 1.000000e+00 : f32
    %8 = vector.broadcast %cst_5 : f32 to vector<256x256xf32>
    %9 = arith.addf %8, %7 : vector<256x256xf32>
    %10 = arith.divf %8, %9 : vector<256x256xf32>
    %11 = arith.mulf %5, %10 : vector<256x256xf32>
    %c0_6 = arith.constant 0 : index
    %c0_7 = arith.constant 0 : index
    %12 = vector.load %arg4[%c0_6, %c0_7] : memref<256x256xf32, #tpu.memory_space<vmem>>, vector<256x256xf32>
    tpu.vector_store %arg4[%c0_6, %c0_7], %11 {strides = array<i32>} : memref<256x256xf32, #tpu.memory_space<vmem>>, vector<256x256xf32>,
    return
  }
  func.func @transform_0(%arg0: i32) -> (i32, i32) {
    %c0_i32 = arith.constant 0 : i32
    %c0_i32_0 = arith.constant 0 : i32
    return %arg0, %c0_i32 : i32, i32
  }
  func.func @transform_1(%arg0: i32) -> (i32, i32) {
    %c0_i32 = arith.constant 0 : i32
    %c0_i32_0 = arith.constant 0 : i32
    %c0_i32_1 = arith.constant 0 : i32
    return %c0_i32, %c0_i32_0 : i32, i32
  }
  func.func @transform_2(%arg0: i32) -> (i32, i32) {
    %c0_i32 = arith.constant 0 : i32
    %c0_i32_0 = arith.constant 0 : i32
    %c0_i32_1 = arith.constant 0 : i32
    return %c0_i32, %c0_i32_0 : i32, i32
  }
  func.func @transform_3(%arg0: i32) -> (i32, i32) {
    %c0_i32 = arith.constant 0 : i32
    %c0_i32_0 = arith.constant 0 : i32
    return %arg0, %c0_i32 : i32, i32
  }
}

module attributes {stable_mosaic.version = 11 : i64} {
  func.func @_matmul_bias_act_kernel(%arg0: i32, %arg1: memref<256x240xf32, #tpu.memory_space<vmem>>, %arg2: memref<240x128xf32, #tpu.memory_space<vmem>>, %arg3: memref<1x128xf32, #tpu.memory_space<vmem>>, %arg4: memref<256x128xf32, #tpu.memory_space<vmem>>) attributes {dimension_semantics = [#tpu.dimension_semantics<parallel>], iteration_bounds = array<i64: 1>, scalar_prefetch = 0 : i64, scratch_operands = 0 : i64, tpu.core_type = #tpu.core_type<tc>, window_params = [{transform_indices = @transform_0, window_bounds = array<i64: 256, 240>}, {pipeline_mode = #tpu.pipeline_mode<synchronous>, transform_indices = @transform_1, window_bounds = array<i64: 240, 128>}, {pipeline_mode = #tpu.pipeline_mode<synchronous>, transform_indices = @transform_2, window_bounds = array<i64: 1, 128>}, {transform_indices = @transform_3, window_bounds = array<i64: 256, 128>}]} {
    %c0 = arith.constant 0 : index
    %c0_0 = arith.constant 0 : index
    %0 = vector.load %arg1[%c0, %c0_0] : memref<256x240xf32, #tpu.memory_space<vmem>>, vector<256x240xf32>
    %c0_1 = arith.constant 0 : index
    %c0_2 = arith.constant 0 : index
    %1 = vector.load %arg2[%c0_1, %c0_2] : memref<240x128xf32, #tpu.memory_space<vmem>>, vector<240x128xf32>
    %cst = arith.constant dense<0.000000e+00> : vector<256x128xf32>
    %2 = tpu.matmul %0, %1, %cst {dimension_numbers = #tpu.dot_dimension_numbers<[1], [0], [0], [1], [0, 0, 1, 1], [], []>} : vector<256x240xf32>, vector<240x128xf32>, vector<256x128xf32> -> vector<256x128xf32>
    %c0_3 = arith.constant 0 : index
    %c0_4 = arith.constant 0 : index
    %3 = vector.load %arg3[%c0_3, %c0_4] : memref<1x128xf32, #tpu.memory_space<vmem>>, vector<1x128xf32>
    %4 = vector.broadcast %3 : vector<1x128xf32> to vector<256x128xf32>
    %5 = arith.addf %2, %4 : vector<256x128xf32>
    %c0_5 = arith.constant 0 : index
    %c0_6 = arith.constant 0 : index
    %6 = vector.load %arg4[%c0_5, %c0_6] : memref<256x128xf32, #tpu.memory_space<vmem>>, vector<256x128xf32>
    tpu.vector_store %arg4[%c0_5, %c0_6], %5 {strides = array<i32>} : memref<256x128xf32, #tpu.memory_space<vmem>>, vector<256x128xf32>,
    return
  }
  func.func @transform_0(%arg0: i32) -> (i32, i32) {
    %c0_i32 = arith.constant 0 : i32
    %c0_i32_0 = arith.constant 0 : i32
    return %arg0, %c0_i32 : i32, i32
  }
  func.func @transform_1(%arg0: i32) -> (i32, i32) {
    %c0_i32 = arith.constant 0 : i32
    %c0_i32_0 = arith.constant 0 : i32
    %c0_i32_1 = arith.constant 0 : i32
    return %c0_i32, %c0_i32_0 : i32, i32
  }
  func.func @transform_2(%arg0: i32) -> (i32, i32) {
    %c0_i32 = arith.constant 0 : i32
    %c0_i32_0 = arith.constant 0 : i32
    %c0_i32_1 = arith.constant 0 : i32
    return %c0_i32, %c0_i32_0 : i32, i32
  }
  func.func @transform_3(%arg0: i32) -> (i32, i32) {
    %c0_i32 = arith.constant 0 : i32
    %c0_i32_0 = arith.constant 0 : i32
    return %arg0, %c0_i32 : i32, i32
  }
}

module attributes {stable_mosaic.version = 11 : i64} {
  func.func @_layernorm_kernel(%arg0: i32, %arg1: memref<256x120xf32, #tpu.memory_space<vmem>>, %arg2: memref<1x120xf32, #tpu.memory_space<vmem>>, %arg3: memref<1x120xf32, #tpu.memory_space<vmem>>, %arg4: memref<256x120xf32, #tpu.memory_space<vmem>>) attributes {dimension_semantics = [#tpu.dimension_semantics<parallel>], iteration_bounds = array<i64: 1>, scalar_prefetch = 0 : i64, scratch_operands = 0 : i64, tpu.core_type = #tpu.core_type<tc>, window_params = [{transform_indices = @transform_0, window_bounds = array<i64: 256, 120>}, {pipeline_mode = #tpu.pipeline_mode<synchronous>, transform_indices = @transform_1, window_bounds = array<i64: 1, 120>}, {pipeline_mode = #tpu.pipeline_mode<synchronous>, transform_indices = @transform_2, window_bounds = array<i64: 1, 120>}, {transform_indices = @transform_3, window_bounds = array<i64: 256, 120>}]} {
    %c0 = arith.constant 0 : index
    %c0_0 = arith.constant 0 : index
    %0 = vector.load %arg1[%c0, %c0_0] : memref<256x120xf32, #tpu.memory_space<vmem>>, vector<256x120xf32>
    %cst = arith.constant dense<0.000000e+00> : vector<256xf32>
    %1 = vector.multi_reduction <add>, %0, %cst [1] : vector<256x120xf32> to vector<256xf32>
    %2 = vector.shape_cast %1 : vector<256xf32> to vector<256x1xf32>
    %cst_1 = arith.constant 1.200000e+02 : f32
    %3 = vector.broadcast %cst_1 : f32 to vector<256x1xf32>
    %4 = arith.divf %2, %3 : vector<256x1xf32>
    %5 = vector.broadcast %4 : vector<256x1xf32> to vector<256x120xf32>
    %6 = arith.subf %0, %5 : vector<256x120xf32>
    %7 = arith.mulf %6, %6 : vector<256x120xf32>
    %cst_2 = arith.constant dense<0.000000e+00> : vector<256xf32>
    %8 = vector.multi_reduction <add>, %7, %cst_2 [1] : vector<256x120xf32> to vector<256xf32>
    %9 = vector.shape_cast %8 : vector<256xf32> to vector<256x1xf32>
    %cst_3 = arith.constant 1.200000e+02 : f32
    %10 = vector.broadcast %cst_3 : f32 to vector<256x1xf32>
    %11 = arith.divf %9, %10 : vector<256x1xf32>
    %cst_4 = arith.constant 9.99999997E-7 : f32
    %12 = vector.broadcast %cst_4 : f32 to vector<256x1xf32>
    %13 = arith.addf %11, %12 : vector<256x1xf32>
    %14 = math.rsqrt %13 : vector<256x1xf32>
    %15 = vector.broadcast %14 : vector<256x1xf32> to vector<256x120xf32>
    %16 = arith.mulf %6, %15 : vector<256x120xf32>
    %c0_5 = arith.constant 0 : index
    %c0_6 = arith.constant 0 : index
    %17 = vector.load %arg2[%c0_5, %c0_6] : memref<1x120xf32, #tpu.memory_space<vmem>>, vector<1x120xf32>
    %18 = vector.broadcast %17 : vector<1x120xf32> to vector<256x120xf32>
    %19 = arith.mulf %16, %18 : vector<256x120xf32>
    %c0_7 = arith.constant 0 : index
    %c0_8 = arith.constant 0 : index
    %20 = vector.load %arg3[%c0_7, %c0_8] : memref<1x120xf32, #tpu.memory_space<vmem>>, vector<1x120xf32>
    %21 = vector.broadcast %20 : vector<1x120xf32> to vector<256x120xf32>
    %22 = arith.addf %19, %21 : vector<256x120xf32>
    %c0_9 = arith.constant 0 : index
    %c0_10 = arith.constant 0 : index
    %23 = vector.load %arg4[%c0_9, %c0_10] : memref<256x120xf32, #tpu.memory_space<vmem>>, vector<256x120xf32>
    tpu.vector_store %arg4[%c0_9, %c0_10], %22 {strides = array<i32>} : memref<256x120xf32, #tpu.memory_space<vmem>>, vector<256x120xf32>,
    return
  }
  func.func @transform_0(%arg0: i32) -> (i32, i32) {
    %c0_i32 = arith.constant 0 : i32
    %c0_i32_0 = arith.constant 0 : i32
    return %arg0, %c0_i32 : i32, i32
  }
  func.func @transform_1(%arg0: i32) -> (i32, i32) {
    %c0_i32 = arith.constant 0 : i32
    %c0_i32_0 = arith.constant 0 : i32
    %c0_i32_1 = arith.constant 0 : i32
    return %c0_i32, %c0_i32_0 : i32, i32
  }
  func.func @transform_2(%arg0: i32) -> (i32, i32) {
    %c0_i32 = arith.constant 0 : i32
    %c0_i32_0 = arith.constant 0 : i32
    %c0_i32_1 = arith.constant 0 : i32
    return %c0_i32, %c0_i32_0 : i32, i32
  }
  func.func @transform_3(%arg0: i32) -> (i32, i32) {
    %c0_i32 = arith.constant 0 : i32
    %c0_i32_0 = arith.constant 0 : i32
    return %arg0, %c0_i32 : i32, i32
  }
}

module attributes {stable_mosaic.version = 11 : i64} {
  func.func @_matmul_bias_act_kernel(%arg0: i32, %arg1: memref<256x120xf32, #tpu.memory_space<vmem>>, %arg2: memref<120x128xf32, #tpu.memory_space<vmem>>, %arg3: memref<1x128xf32, #tpu.memory_space<vmem>>, %arg4: memref<256x128xf32, #tpu.memory_space<vmem>>) attributes {dimension_semantics = [#tpu.dimension_semantics<parallel>], iteration_bounds = array<i64: 1>, scalar_prefetch = 0 : i64, scratch_operands = 0 : i64, tpu.core_type = #tpu.core_type<tc>, window_params = [{transform_indices = @transform_0, window_bounds = array<i64: 256, 120>}, {pipeline_mode = #tpu.pipeline_mode<synchronous>, transform_indices = @transform_1, window_bounds = array<i64: 120, 128>}, {pipeline_mode = #tpu.pipeline_mode<synchronous>, transform_indices = @transform_2, window_bounds = array<i64: 1, 128>}, {transform_indices = @transform_3, window_bounds = array<i64: 256, 128>}]} {
    %c0 = arith.constant 0 : index
    %c0_0 = arith.constant 0 : index
    %0 = vector.load %arg1[%c0, %c0_0] : memref<256x120xf32, #tpu.memory_space<vmem>>, vector<256x120xf32>
    %c0_1 = arith.constant 0 : index
    %c0_2 = arith.constant 0 : index
    %1 = vector.load %arg2[%c0_1, %c0_2] : memref<120x128xf32, #tpu.memory_space<vmem>>, vector<120x128xf32>
    %cst = arith.constant dense<0.000000e+00> : vector<256x128xf32>
    %2 = tpu.matmul %0, %1, %cst {dimension_numbers = #tpu.dot_dimension_numbers<[1], [0], [0], [1], [0, 0, 1, 1], [], []>} : vector<256x120xf32>, vector<120x128xf32>, vector<256x128xf32> -> vector<256x128xf32>
    %c0_3 = arith.constant 0 : index
    %c0_4 = arith.constant 0 : index
    %3 = vector.load %arg3[%c0_3, %c0_4] : memref<1x128xf32, #tpu.memory_space<vmem>>, vector<1x128xf32>
    %4 = vector.broadcast %3 : vector<1x128xf32> to vector<256x128xf32>
    %5 = arith.addf %2, %4 : vector<256x128xf32>
    %6 = arith.negf %5 : vector<256x128xf32>
    %7 = math.exp %6 : vector<256x128xf32>
    %cst_5 = arith.constant 1.000000e+00 : f32
    %8 = vector.broadcast %cst_5 : f32 to vector<256x128xf32>
    %9 = arith.addf %8, %7 : vector<256x128xf32>
    %10 = arith.divf %8, %9 : vector<256x128xf32>
    %11 = arith.mulf %5, %10 : vector<256x128xf32>
    %c0_6 = arith.constant 0 : index
    %c0_7 = arith.constant 0 : index
    %12 = vector.load %arg4[%c0_6, %c0_7] : memref<256x128xf32, #tpu.memory_space<vmem>>, vector<256x128xf32>
    tpu.vector_store %arg4[%c0_6, %c0_7], %11 {strides = array<i32>} : memref<256x128xf32, #tpu.memory_space<vmem>>, vector<256x128xf32>,
    return
  }
  func.func @transform_0(%arg0: i32) -> (i32, i32) {
    %c0_i32 = arith.constant 0 : i32
    %c0_i32_0 = arith.constant 0 : i32
    return %arg0, %c0_i32 : i32, i32
  }
  func.func @transform_1(%arg0: i32) -> (i32, i32) {
    %c0_i32 = arith.constant 0 : i32
    %c0_i32_0 = arith.constant 0 : i32
    %c0_i32_1 = arith.constant 0 : i32
    return %c0_i32, %c0_i32_0 : i32, i32
  }
  func.func @transform_2(%arg0: i32) -> (i32, i32) {
    %c0_i32 = arith.constant 0 : i32
    %c0_i32_0 = arith.constant 0 : i32
    %c0_i32_1 = arith.constant 0 : i32
    return %c0_i32, %c0_i32_0 : i32, i32
  }
  func.func @transform_3(%arg0: i32) -> (i32, i32) {
    %c0_i32 = arith.constant 0 : i32
    %c0_i32_0 = arith.constant 0 : i32
    return %arg0, %c0_i32 : i32, i32
  }
}

module attributes {stable_mosaic.version = 11 : i64} {
  func.func @_matmul_bias_act_kernel(%arg0: i32, %arg1: memref<256x1152xf32, #tpu.memory_space<vmem>>, %arg2: memref<1152x128xf32, #tpu.memory_space<vmem>>, %arg3: memref<1x128xf32, #tpu.memory_space<vmem>>, %arg4: memref<256x128xf32, #tpu.memory_space<vmem>>) attributes {dimension_semantics = [#tpu.dimension_semantics<parallel>], iteration_bounds = array<i64: 1>, scalar_prefetch = 0 : i64, scratch_operands = 0 : i64, tpu.core_type = #tpu.core_type<tc>, window_params = [{transform_indices = @transform_0, window_bounds = array<i64: 256, 1152>}, {pipeline_mode = #tpu.pipeline_mode<synchronous>, transform_indices = @transform_1, window_bounds = array<i64: 1152, 128>}, {pipeline_mode = #tpu.pipeline_mode<synchronous>, transform_indices = @transform_2, window_bounds = array<i64: 1, 128>}, {transform_indices = @transform_3, window_bounds = array<i64: 256, 128>}]} {
    %c0 = arith.constant 0 : index
    %c0_0 = arith.constant 0 : index
    %0 = vector.load %arg1[%c0, %c0_0] : memref<256x1152xf32, #tpu.memory_space<vmem>>, vector<256x1152xf32>
    %c0_1 = arith.constant 0 : index
    %c0_2 = arith.constant 0 : index
    %1 = vector.load %arg2[%c0_1, %c0_2] : memref<1152x128xf32, #tpu.memory_space<vmem>>, vector<1152x128xf32>
    %cst = arith.constant dense<0.000000e+00> : vector<256x128xf32>
    %2 = tpu.matmul %0, %1, %cst {dimension_numbers = #tpu.dot_dimension_numbers<[1], [0], [0], [1], [0, 0, 1, 1], [], []>} : vector<256x1152xf32>, vector<1152x128xf32>, vector<256x128xf32> -> vector<256x128xf32>
    %c0_3 = arith.constant 0 : index
    %c0_4 = arith.constant 0 : index
    %3 = vector.load %arg3[%c0_3, %c0_4] : memref<1x128xf32, #tpu.memory_space<vmem>>, vector<1x128xf32>
    %4 = vector.broadcast %3 : vector<1x128xf32> to vector<256x128xf32>
    %5 = arith.addf %2, %4 : vector<256x128xf32>
    %6 = arith.negf %5 : vector<256x128xf32>
    %7 = math.exp %6 : vector<256x128xf32>
    %cst_5 = arith.constant 1.000000e+00 : f32
    %8 = vector.broadcast %cst_5 : f32 to vector<256x128xf32>
    %9 = arith.addf %8, %7 : vector<256x128xf32>
    %10 = arith.divf %8, %9 : vector<256x128xf32>
    %11 = arith.mulf %5, %10 : vector<256x128xf32>
    %c0_6 = arith.constant 0 : index
    %c0_7 = arith.constant 0 : index
    %12 = vector.load %arg4[%c0_6, %c0_7] : memref<256x128xf32, #tpu.memory_space<vmem>>, vector<256x128xf32>
    tpu.vector_store %arg4[%c0_6, %c0_7], %11 {strides = array<i32>} : memref<256x128xf32, #tpu.memory_space<vmem>>, vector<256x128xf32>,
    return
  }
  func.func @transform_0(%arg0: i32) -> (i32, i32) {
    %c0_i32 = arith.constant 0 : i32
    %c0_i32_0 = arith.constant 0 : i32
    return %arg0, %c0_i32 : i32, i32
  }
  func.func @transform_1(%arg0: i32) -> (i32, i32) {
    %c0_i32 = arith.constant 0 : i32
    %c0_i32_0 = arith.constant 0 : i32
    %c0_i32_1 = arith.constant 0 : i32
    return %c0_i32, %c0_i32_0 : i32, i32
  }
  func.func @transform_2(%arg0: i32) -> (i32, i32) {
    %c0_i32 = arith.constant 0 : i32
    %c0_i32_0 = arith.constant 0 : i32
    %c0_i32_1 = arith.constant 0 : i32
    return %c0_i32, %c0_i32_0 : i32, i32
  }
  func.func @transform_3(%arg0: i32) -> (i32, i32) {
    %c0_i32 = arith.constant 0 : i32
    %c0_i32_0 = arith.constant 0 : i32
    return %arg0, %c0_i32 : i32, i32
  }
}

module attributes {stable_mosaic.version = 11 : i64} {
  func.func @_matmul_bias_act_kernel(%arg0: i32, %arg1: memref<256x8xf32, #tpu.memory_space<vmem>>, %arg2: memref<8x128xf32, #tpu.memory_space<vmem>>, %arg3: memref<1x128xf32, #tpu.memory_space<vmem>>, %arg4: memref<256x128xf32, #tpu.memory_space<vmem>>) attributes {dimension_semantics = [#tpu.dimension_semantics<parallel>], iteration_bounds = array<i64: 1>, scalar_prefetch = 0 : i64, scratch_operands = 0 : i64, tpu.core_type = #tpu.core_type<tc>, window_params = [{transform_indices = @transform_0, window_bounds = array<i64: 256, 8>}, {pipeline_mode = #tpu.pipeline_mode<synchronous>, transform_indices = @transform_1, window_bounds = array<i64: 8, 128>}, {pipeline_mode = #tpu.pipeline_mode<synchronous>, transform_indices = @transform_2, window_bounds = array<i64: 1, 128>}, {transform_indices = @transform_3, window_bounds = array<i64: 256, 128>}]} {
    %c0 = arith.constant 0 : index
    %c0_0 = arith.constant 0 : index
    %0 = vector.load %arg1[%c0, %c0_0] : memref<256x8xf32, #tpu.memory_space<vmem>>, vector<256x8xf32>
    %c0_1 = arith.constant 0 : index
    %c0_2 = arith.constant 0 : index
    %1 = vector.load %arg2[%c0_1, %c0_2] : memref<8x128xf32, #tpu.memory_space<vmem>>, vector<8x128xf32>
    %cst = arith.constant dense<0.000000e+00> : vector<256x128xf32>
    %2 = tpu.matmul %0, %1, %cst {dimension_numbers = #tpu.dot_dimension_numbers<[1], [0], [0], [1], [0, 0, 1, 1], [], []>} : vector<256x8xf32>, vector<8x128xf32>, vector<256x128xf32> -> vector<256x128xf32>
    %c0_3 = arith.constant 0 : index
    %c0_4 = arith.constant 0 : index
    %3 = vector.load %arg3[%c0_3, %c0_4] : memref<1x128xf32, #tpu.memory_space<vmem>>, vector<1x128xf32>
    %4 = vector.broadcast %3 : vector<1x128xf32> to vector<256x128xf32>
    %5 = arith.addf %2, %4 : vector<256x128xf32>
    %6 = arith.negf %5 : vector<256x128xf32>
    %7 = math.exp %6 : vector<256x128xf32>
    %cst_5 = arith.constant 1.000000e+00 : f32
    %8 = vector.broadcast %cst_5 : f32 to vector<256x128xf32>
    %9 = arith.addf %8, %7 : vector<256x128xf32>
    %10 = arith.divf %8, %9 : vector<256x128xf32>
    %11 = arith.mulf %5, %10 : vector<256x128xf32>
    %c0_6 = arith.constant 0 : index
    %c0_7 = arith.constant 0 : index
    %12 = vector.load %arg4[%c0_6, %c0_7] : memref<256x128xf32, #tpu.memory_space<vmem>>, vector<256x128xf32>
    tpu.vector_store %arg4[%c0_6, %c0_7], %11 {strides = array<i32>} : memref<256x128xf32, #tpu.memory_space<vmem>>, vector<256x128xf32>,
    return
  }
  func.func @transform_0(%arg0: i32) -> (i32, i32) {
    %c0_i32 = arith.constant 0 : i32
    %c0_i32_0 = arith.constant 0 : i32
    return %arg0, %c0_i32 : i32, i32
  }
  func.func @transform_1(%arg0: i32) -> (i32, i32) {
    %c0_i32 = arith.constant 0 : i32
    %c0_i32_0 = arith.constant 0 : i32
    %c0_i32_1 = arith.constant 0 : i32
    return %c0_i32, %c0_i32_0 : i32, i32
  }
  func.func @transform_2(%arg0: i32) -> (i32, i32) {
    %c0_i32 = arith.constant 0 : i32
    %c0_i32_0 = arith.constant 0 : i32
    %c0_i32_1 = arith.constant 0 : i32
    return %c0_i32, %c0_i32_0 : i32, i32
  }
  func.func @transform_3(%arg0: i32) -> (i32, i32) {
    %c0_i32 = arith.constant 0 : i32
    %c0_i32_0 = arith.constant 0 : i32
    return %arg0, %c0_i32 : i32, i32
  }
}

</mosaic_0001>

<llo_original>
// kernel: encoder_with_svtr_forward.21
$region0: #{encoder_with_svtr_forward.21}
  #allocation0 [shape = 'u32[]', space=smem, size = 0x4, offset = 0x4, fixed_abs, tag = 'smem constant byte address 0x4 - core index']
  #allocation1 [shape = 'u32[144,128]{1,0:T(1,128)}', space=vmem, size = 0x12000, scoped, tag = 'internal scratch']
  %s0 = inlined_call_operand.vmem [shape: f32[256,8], index: 0, kind: input, shape index: {}]
  %s1 = inlined_call_operand.vmem [shape: f32[8,128], index: 1, kind: input, shape index: {}]
  %s2 = inlined_call_operand.vmem [shape: f32[1,128], index: 2, kind: input, shape index: {}]
  %s3 = inlined_call_operand.vmem [shape: f32[256,128], index: 3, kind: output, shape index: {}]
  %s4 = sld [smem:[#allocation0]]
  $region22: #{encoder_with_svtr_forward.21} parent=0
    _
  %s6 = ssub.s32 1, %s4
  %s7 = scalar_select 0, %s6, %s4
  // Predicated region
  $region2: #{encoder_with_svtr_forward.21} parent=0 // pred_check
    _
  $region3: #{encoder_with_svtr_forward.21} parent=0 // pred_check_branch
    %9 = sbr.rel (0) target = $region5
  $region4: #{encoder_with_svtr_forward.21} parent=0 // pred_region
    _
  $region5: #{encoder_with_svtr_forward.21} parent=0 // pred_fallthru
    _
  // Predicated region
  $region6: #{encoder_with_svtr_forward.21} parent=0 // pred_check
    _
  $region7: #{encoder_with_svtr_forward.21} parent=0 // pred_check_branch
    %11 = sbr.rel (0) target = $region9
  $region8: #{encoder_with_svtr_forward.21} parent=0 // pred_region
    _
  $region9: #{encoder_with_svtr_forward.21} parent=0 // pred_fallthru
    _
  // Predicated region
  $region10: #{encoder_with_svtr_forward.21} parent=0 // pred_check
    _
  $region11: #{encoder_with_svtr_forward.21} parent=0 // pred_check_branch
    %13 = sbr.rel (0) target = $region13
  $region12: #{encoder_with_svtr_forward.21} parent=0 // pred_region
    _
  $region13: #{encoder_with_svtr_forward.21} parent=0 // pred_fallthru
    _
  %v14 = vld [vmem:[%s0] sm:$0xff]
  %v15 = vld [vmem:[%s0 + $0x8] sm:$0xff]
  %v16 = vld [vmem:[%s0 + $0x10] sm:$0xff]
  %v17 = vld [vmem:[%s0 + $0x18] sm:$0xff]
  %v18 = vld [vmem:[%s0 + $0x20] sm:$0xff]
  %v19 = vld [vmem:[%s0 + $0x28] sm:$0xff]
  %v20 = vld [vmem:[%s0 + $0x30] sm:$0xff]
  %v21 = vld [vmem:[%s0 + $0x38] sm:$0xff]
  %v22 = vld [vmem:[%s0 + $0x40] sm:$0xff]
  %v23 = vld [vmem:[%s0 + $0x48] sm:$0xff]
  %v24 = vld [vmem:[%s0 + $0x50] sm:$0xff]
  %v25 = vld [vmem:[%s0 + $0x58] sm:$0xff]
  %v26 = vld [vmem:[%s0 + $0x60] sm:$0xff]
  %v27 = vld [vmem:[%s0 + $0x68] sm:$0xff]
  %v28 = vld [vmem:[%s0 + $0x70] sm:$0xff]
  %v29 = vld [vmem:[%s0 + $0x78] sm:$0xff]
  %v30 = vld [vmem:[%s0 + $0x80] sm:$0xff]
  %v31 = vld [vmem:[%s0 + $0x88] sm:$0xff]
  %v32 = vld [vmem:[%s0 + $0x90] sm:$0xff]
  %v33 = vld [vmem:[%s0 + $0x98] sm:$0xff]
  %v34 = vld [vmem:[%s0 + $0xa0] sm:$0xff]
  %v35 = vld [vmem:[%s0 + $0xa8] sm:$0xff]
  %v36 = vld [vmem:[%s0 + $0xb0] sm:$0xff]
  %v37 = vld [vmem:[%s0 + $0xb8] sm:$0xff]
  %v38 = vld [vmem:[%s0 + $0xc0] sm:$0xff]
  %v39 = vld [vmem:[%s0 + $0xc8] sm:$0xff]
  %v40 = vld [vmem:[%s0 + $0xd0] sm:$0xff]
  %v41 = vld [vmem:[%s0 + $0xd8] sm:$0xff]
  %v42 = vld [vmem:[%s0 + $0xe0] sm:$0xff]
  %v43 = vld [vmem:[%s0 + $0xe8] sm:$0xff]
  %v44 = vld [vmem:[%s0 + $0xf0] sm:$0xff]
  %v45 = vld [vmem:[%s0 + $0xf8] sm:$0xff]
  %v46 = vld [vmem:[%s1] sm:$0xff]
  %v47 = vld [vmem:[%s2] sm:$0x1]
  %v49 = vlaneseq
  %v50 = vshrl.u32 %v49, 7
  %v51 = vsub.s32 0, %v50
  %v52 = vrot.slane %v47, %v51
  %vm54 = vcmask 64512
  %v56 = vsel %vm54, %v14, 0
  %v59 = vsel %vm54, %v15, 0
  %v62 = vsel %vm54, %v16, 0
  %v65 = vsel %vm54, %v17, 0
  %v68 = vsel %vm54, %v18, 0
  %v71 = vsel %vm54, %v19, 0
  %v74 = vsel %vm54, %v20, 0
  %v77 = vsel %vm54, %v21, 0
  %v80 = vsel %vm54, %v22, 0
  %v83 = vsel %vm54, %v23, 0
  %v86 = vsel %vm54, %v24, 0
  %v89 = vsel %vm54, %v25, 0
  %v92 = vsel %vm54, %v26, 0
  %v95 = vsel %vm54, %v27, 0
  %v98 = vsel %vm54, %v28, 0
  %v101 = vsel %vm54, %v29, 0
  %v104 = vsel %vm54, %v30, 0
  %v107 = vsel %vm54, %v31, 0
  %v110 = vsel %vm54, %v32, 0
  %v113 = vsel %vm54, %v33, 0
  %v116 = vsel %vm54, %v34, 0
  %v119 = vsel %vm54, %v35, 0
  %v122 = vsel %vm54, %v36, 0
  %v125 = vsel %vm54, %v37, 0
  %v128 = vsel %vm54, %v38, 0
  %v131 = vsel %vm54, %v39, 0
  %v134 = vsel %vm54, %v40, 0
  %v137 = vsel %vm54, %v41, 0
  %v140 = vsel %vm54, %v42, 0
  %v143 = vsel %vm54, %v43, 0
  %v146 = vsel %vm54, %v44, 0
  %v149 = vsel %vm54, %v45, 0
  %151 = vmatprep.subr.mxu0 0.0
  %152 = vmatpush1.msra.mxu0 %v46
  %153 = vmatprep.subr.mxu0 0.0
  %154 = vmatpush1.msra.mxu0 0.0
  %155 = vmatprep.subr.mxu0 0.0
  %156 = vmatpush1.msra.mxu0 0.0
  %157 = vmatprep.subr.mxu0 0.0
  %158 = vmatpush1.msra.mxu0 0.0
  %159 = vmatprep.subr.mxu0 0.0
  %160 = vmatpush1.msra.mxu0 0.0
  %161 = vmatprep.subr.mxu0 0.0
  %162 = vmatpush1.msra.mxu0 0.0
  %163 = vmatprep.subr.mxu0 0.0
  %164 = vmatpush1.msra.mxu0 0.0
  %165 = vmatprep.subr.mxu0 0.0
  %166 = vmatpush1.msra.mxu0 0.0
  %167 = vmatprep.subr.mxu0 0.0
  %168 = vmatpush1.msra.mxu0 0.0
  %169 = vmatprep.subr.mxu0 0.0
  %170 = vmatpush1.msra.mxu0 0.0
  %171 = vmatprep.subr.mxu0 0.0
  %172 = vmatpush1.msra.mxu0 0.0
  %173 = vmatprep.subr.mxu0 0.0
  %174 = vmatpush1.msra.mxu0 0.0
  %175 = vmatprep.subr.mxu0 0.0
  %176 = vmatpush1.msra.mxu0 0.0
  %177 = vmatprep.subr.mxu0 0.0
  %178 = vmatpush1.msra.mxu0 0.0
  %179 = vmatprep.subr.mxu0 0.0
  %180 = vmatpush1.msra.mxu0 0.0
  %181 = vmatprep.subr.mxu0 0.0
  %182 = vmatpush1.msra.mxu0 0.0
  %183 = vmatprep.subr.mxu0 0.0
  %184 = vmatpush1.msra.mxu0 0.0
  %185 = vmatprep.subr.mxu0 0.0
  %186 = vmatpush1.msra.mxu0 0.0
  %187 = vmatprep.subr.mxu0 0.0
  %188 = vmatpush1.msra.mxu0 0.0
  %189 = vmatprep.subr.mxu0 0.0
  %190 = vmatpush1.msra.mxu0 0.0
  %191 = vmatprep.subr.mxu0 0.0
  %192 = vmatpush1.msra.mxu0 0.0
  %193 = vmatprep.subr.mxu0 0.0
  %194 = vmatpush1.msra.mxu0 0.0
  %195 = vmatprep.subr.mxu0 0.0
  %196 = vmatpush1.msra.mxu0 0.0
  %197 = vmatprep.subr.mxu0 0.0
  %198 = vmatpush1.msra.mxu0 0.0
  %199 = vmatprep.subr.mxu0 0.0
  %200 = vmatpush1.msra.mxu0 0.0
  %201 = vmatprep.subr.mxu0 0.0
  %202 = vmatpush1.msra.mxu0 0.0
  %203 = vmatprep.subr.mxu0 0.0
  %204 = vmatpush1.msra.mxu0 0.0
  %205 = vmatprep.subr.mxu0 0.0
  %206 = vmatpush1.msra.mxu0 0.0
  %207 = vmatprep.subr.mxu0 0.0
  %208 = vmatpush1.msra.mxu0 0.0
  %209 = vmatprep.subr.mxu0 0.0
  %210 = vmatpush1.msra.mxu0 0.0
  %211 = vmatprep.subr.mxu0 0.0
  %212 = vmatpush1.msra.mxu0 0.0
  %213 = vmatprep.subr.mxu0 0.0
  %214 = vmatpush1.msra.mxu0 0.0
  %215 = vmatprep.mubr.f32.mxu0 0.0
  %216 = vmatmul.mubr.f32.gmra.mrb[0].mxu0 %v56
  %v217 = vpop.f32.mrb[0].mxu0
  %v218 = vadd.f32 %v52, %v217
  %v219 = vpop.f32.mrb[0].mxu0
  %220 = vmatprep.mubr.f32.mxu0 0.0
  %221 = vmatmul.mubr.f32.gmra.mrb[0].mxu0 %v59
  %v222 = vpop.f32.mrb[0].mxu0
  %v223 = vadd.f32 %v52, %v222
  %v224 = vpop.f32.mrb[0].mxu0
  %225 = vmatprep.mubr.f32.mxu0 0.0
  %226 = vmatmul.mubr.f32.gmra.mrb[0].mxu0 %v62
  %v227 = vpop.f32.mrb[0].mxu0
  %v228 = vadd.f32 %v52, %v227
  %v229 = vpop.f32.mrb[0].mxu0
  %230 = vmatprep.mubr.f32.mxu0 0.0
  %231 = vmatmul.mubr.f32.gmra.mrb[0].mxu0 %v65
  %v232 = vpop.f32.mrb[0].mxu0
  %v233 = vadd.f32 %v52, %v232
  %v234 = vpop.f32.mrb[0].mxu0
  %235 = vmatprep.mubr.f32.mxu0 0.0
  %236 = vmatmul.mubr.f32.gmra.mrb[0].mxu0 %v68
  %v237 = vpop.f32.mrb[0].mxu0
  %v238 = vadd.f32 %v52, %v237
  %v239 = vpop.f32.mrb[0].mxu0
  %240 = vmatprep.mubr.f32.mxu0 0.0
  %241 = vmatmul.mubr.f32.gmra.mrb[0].mxu0 %v71
  %v242 = vpop.f32.mrb[0].mxu0
  %v243 = vadd.f32 %v52, %v242
  %v244 = vpop.f32.mrb[0].mxu0
  %245 = vmatprep.mubr.f32.mxu0 0.0
  %246 = vmatmul.mubr.f32.gmra.mrb[0].mxu0 %v74
  %v247 = vpop.f32.mrb[0].mxu0
  %v248 = vadd.f32 %v52, %v247
  %v249 = vpop.f32.mrb[0].mxu0
  %250 = vmatprep.mubr.f32.mxu0 0.0
  %251 = vmatmul.mubr.f32.gmra.mrb[0].mxu0 %v77
  %v252 = vpop.f32.mrb[0].mxu0
  %v253 = vadd.f32 %v52, %v252
  %v254 = vpop.f32.mrb[0].mxu0
  %255 = vmatprep.mubr.f32.mxu0 0.0
  %256 = vmatmul.mubr.f32.gmra.mrb[0].mxu0 %v80
  %v257 = vpop.f32.mrb[0].mxu0
  %v258 = vadd.f32 %v52, %v257
  %v259 = vpop.f32.mrb[0].mxu0
  %260 = vmatprep.mubr.f32.mxu0 0.0
  %261 = vmatmul.mubr.f32.gmra.mrb[0].mxu0 %v83
  %v262 = vpop.f32.mrb[0].mxu0
  %v263 = vadd.f32 %v52, %v262
  %v264 = vpop.f32.mrb[0].mxu0
  %265 = vmatprep.mubr.f32.mxu0 0.0
  %266 = vmatmul.mubr.f32.gmra.mrb[0].mxu0 %v86
  %v267 = vpop.f32.mrb[0].mxu0
  %v268 = vadd.f32 %v52, %v267
  %v269 = vpop.f32.mrb[0].mxu0
  %270 = vmatprep.mubr.f32.mxu0 0.0
  %271 = vmatmul.mubr.f32.gmra.mrb[0].mxu0 %v89
  %v272 = vpop.f32.mrb[0].mxu0
  %v273 = vadd.f32 %v52, %v272
  %v274 = vpop.f32.mrb[0].mxu0
  %275 = vmatprep.mubr.f32.mxu0 0.0
  %276 = vmatmul.mubr.f32.gmra.mrb[0].mxu0 %v92
  %v277 = vpop.f32.mrb[0].mxu0
  %v278 = vadd.f32 %v52, %v277
  %v279 = vpop.f32.mrb[0].mxu0
  %280 = vmatprep.mubr.f32.mxu0 0.0
  %281 = vmatmul.mubr.f32.gmra.mrb[0].mxu0 %v95
  %v282 = vpop.f32.mrb[0].mxu0
  %v283 = vadd.f32 %v52, %v282
  %v284 = vpop.f32.mrb[0].mxu0
  %285 = vmatprep.mubr.f32.mxu0 0.0
  %286 = vmatmul.mubr.f32.gmra.mrb[0].mxu0 %v98
  %v287 = vpop.f32.mrb[0].mxu0
  %v288 = vadd.f32 %v52, %v287
  %v289 = vpop.f32.mrb[0].mxu0
  %290 = vmatprep.mubr.f32.mxu0 0.0
  %291 = vmatmul.mubr.f32.gmra.mrb[0].mxu0 %v101
  %v292 = vpop.f32.mrb[0].mxu0
  %v293 = vadd.f32 %v52, %v292
  %v294 = vpop.f32.mrb[0].mxu0
  %295 = vmatprep.mubr.f32.mxu0 0.0
  %296 = vmatmul.mubr.f32.gmra.mrb[0].mxu0 %v104
  %v297 = vpop.f32.mrb[0].mxu0
  %v298 = vadd.f32 %v52, %v297
  %v299 = vpop.f32.mrb[0].mxu0
  %300 = vmatprep.mubr.f32.mxu0 0.0
  %301 = vmatmul.mubr.f32.gmra.mrb[0].mxu0 %v107
  %v302 = vpop.f32.mrb[0].mxu0
  %v303 = vadd.f32 %v52, %v302
  %v304 = vpop.f32.mrb[0].mxu0
  %305 = vmatprep.mubr.f32.mxu0 0.0
  %306 = vmatmul.mubr.f32.gmra.mrb[0].mxu0 %v110
  %v307 = vpop.f32.mrb[0].mxu0
  %v308 = vadd.f32 %v52, %v307
  %v309 = vpop.f32.mrb[0].mxu0
  %310 = vmatprep.mubr.f32.mxu0 0.0
  %311 = vmatmul.mubr.f32.gmra.mrb[0].mxu0 %v113
  %v312 = vpop.f32.mrb[0].mxu0
  %v313 = vadd.f32 %v52, %v312
  %v314 = vpop.f32.mrb[0].mxu0
  %315 = vmatprep.mubr.f32.mxu0 0.0
  %316 = vmatmul.mubr.f32.gmra.mrb[0].mxu0 %v116
  %v317 = vpop.f32.mrb[0].mxu0
  %v318 = vadd.f32 %v52, %v317
  %v319 = vpop.f32.mrb[0].mxu0
  %320 = vmatprep.mubr.f32.mxu0 0.0
  %321 = vmatmul.mubr.f32.gmra.mrb[0].mxu0 %v119
  %v322 = vpop.f32.mrb[0].mxu0
  %v323 = vadd.f32 %v52, %v322
  %v324 = vpop.f32.mrb[0].mxu0
  %325 = vmatprep.mubr.f32.mxu0 0.0
  %326 = vmatmul.mubr.f32.gmra.mrb[0].mxu0 %v122
  %v327 = vpop.f32.mrb[0].mxu0
  %v328 = vadd.f32 %v52, %v327
  %v329 = vpop.f32.mrb[0].mxu0
  %330 = vmatprep.mubr.f32.mxu0 0.0
  %331 = vmatmul.mubr.f32.gmra.mrb[0].mxu0 %v125
  %v332 = vpop.f32.mrb[0].mxu0
  %v333 = vadd.f32 %v52, %v332
  %v334 = vpop.f32.mrb[0].mxu0
  %335 = vmatprep.mubr.f32.mxu0 0.0
  %336 = vmatmul.mubr.f32.gmra.mrb[0].mxu0 %v128
  %v337 = vpop.f32.mrb[0].mxu0
  %v338 = vadd.f32 %v52, %v337
  %v339 = vpop.f32.mrb[0].mxu0
  %340 = vmatprep.mubr.f32.mxu0 0.0
  %341 = vmatmul.mubr.f32.gmra.mrb[0].mxu0 %v131
  %v342 = vpop.f32.mrb[0].mxu0
  %v343 = vadd.f32 %v52, %v342
  %v344 = vpop.f32.mrb[0].mxu0
  %345 = vmatprep.mubr.f32.mxu0 0.0
  %346 = vmatmul.mubr.f32.gmra.mrb[0].mxu0 %v134
  %v347 = vpop.f32.mrb[0].mxu0
  %v348 = vadd.f32 %v52, %v347
  %v349 = vpop.f32.mrb[0].mxu0
  %350 = vmatprep.mubr.f32.mxu0 0.0
  %351 = vmatmul.mubr.f32.gmra.mrb[0].mxu0 %v137
  %v352 = vpop.f32.mrb[0].mxu0
  %v353 = vadd.f32 %v52, %v352
  %v354 = vpop.f32.mrb[0].mxu0
  %355 = vmatprep.mubr.f32.mxu0 0.0
  %356 = vmatmul.mubr.f32.gmra.mrb[0].mxu0 %v140
  %v357 = vpop.f32.mrb[0].mxu0
  %v358 = vadd.f32 %v52, %v357
  %v359 = vpop.f32.mrb[0].mxu0
  %360 = vmatprep.mubr.f32.mxu0 0.0
  %361 = vmatmul.mubr.f32.gmra.mrb[0].mxu0 %v143
  %v362 = vpop.f32.mrb[0].mxu0
  %v363 = vadd.f32 %v52, %v362
  %v364 = vpop.f32.mrb[0].mxu0
  %365 = vmatprep.mubr.f32.mxu0 0.0
  %366 = vmatmul.mubr.f32.gmra.mrb[0].mxu0 %v146
  %v367 = vpop.f32.mrb[0].mxu0
  %v368 = vadd.f32 %v52, %v367
  %v369 = vpop.f32.mrb[0].mxu0
  %370 = vmatprep.mubr.f32.mxu0 0.0
  %371 = vmatmul.mubr.f32.gmra.mrb[0].mxu0 %v149
  %v372 = vpop.f32.mrb[0].mxu0
  %v373 = vadd.f32 %v52, %v372
  %v374 = vpop.f32.mrb[0].mxu0
  %375 = vdwg.mxu0
  %v376 = vxor.u32 %v218, 2147483648
  %v377 = vxor.u32 %v223, 2147483648
  %v378 = vxor.u32 %v228, 2147483648
  %v379 = vxor.u32 %v233, 2147483648
  %v380 = vxor.u32 %v238, 2147483648
  %v381 = vxor.u32 %v243, 2147483648
  %v382 = vxor.u32 %v248, 2147483648
  %v383 = vxor.u32 %v253, 2147483648
  %v384 = vxor.u32 %v258, 2147483648
  %v385 = vxor.u32 %v263, 2147483648
  %v386 = vxor.u32 %v268, 2147483648
  %v387 = vxor.u32 %v273, 2147483648
  %v388 = vxor.u32 %v278, 2147483648
  %v389 = vxor.u32 %v283, 2147483648
  %v390 = vxor.u32 %v288, 2147483648
  %v391 = vxor.u32 %v293, 2147483648
  %v392 = vxor.u32 %v298, 2147483648
  %v393 = vxor.u32 %v303, 2147483648
  %v394 = vxor.u32 %v308, 2147483648
  %v395 = vxor.u32 %v313, 2147483648
  %v396 = vxor.u32 %v318, 2147483648
  %v397 = vxor.u32 %v323, 2147483648
  %v398 = vxor.u32 %v328, 2147483648
  %v399 = vxor.u32 %v333, 2147483648
  %v400 = vxor.u32 %v338, 2147483648
  %v401 = vxor.u32 %v343, 2147483648
  %v402 = vxor.u32 %v348, 2147483648
  %v403 = vxor.u32 %v353, 2147483648
  %v404 = vxor.u32 %v358, 2147483648
  %v405 = vxor.u32 %v363, 2147483648
  %v406 = vxor.u32 %v368, 2147483648
  %v407 = vxor.u32 %v373, 2147483648
  %v408 = vmul.f32 %v376, 1.442695
  %v409 = vpow.pop %v408
  %v410 = vmul.f32 %v377, 1.442695
  %v411 = vpow.pop %v410
  %v412 = vmul.f32 %v378, 1.442695
  %v413 = vpow.pop %v412
  %v414 = vmul.f32 %v379, 1.442695
  %v415 = vpow.pop %v414
  %v416 = vmul.f32 %v380, 1.442695
  %v417 = vpow.pop %v416
  %v418 = vmul.f32 %v381, 1.442695
  %v419 = vpow.pop %v418
  %v420 = vmul.f32 %v382, 1.442695
  %v421 = vpow.pop %v420
  %v422 = vmul.f32 %v383, 1.442695
  %v423 = vpow.pop %v422
  %v424 = vmul.f32 %v384, 1.442695
  %v425 = vpow.pop %v424
  %v426 = vmul.f32 %v385, 1.442695
  %v427 = vpow.pop %v426
  %v428 = vmul.f32 %v386, 1.442695
  %v429 = vpow.pop %v428
  %v430 = vmul.f32 %v387, 1.442695
  %v431 = vpow.pop %v430
  %v432 = vmul.f32 %v388, 1.442695
  %v433 = vpow.pop %v432
  %v434 = vmul.f32 %v389, 1.442695
  %v435 = vpow.pop %v434
  %v436 = vmul.f32 %v390, 1.442695
  %v437 = vpow.pop %v436
  %v438 = vmul.f32 %v391, 1.442695
  %v439 = vpow.pop %v438
  %v440 = vmul.f32 %v392, 1.442695
  %v441 = vpow.pop %v440
  %v442 = vmul.f32 %v393, 1.442695
  %v443 = vpow.pop %v442
  %v444 = vmul.f32 %v394, 1.442695
  %v445 = vpow.pop %v444
  %v446 = vmul.f32 %v395, 1.442695
  %v447 = vpow.pop %v446
  %v448 = vmul.f32 %v396, 1.442695
  %v449 = vpow.pop %v448
  %v450 = vmul.f32 %v397, 1.442695
  %v451 = vpow.pop %v450
  %v452 = vmul.f32 %v398, 1.442695
  %v453 = vpow.pop %v452
  %v454 = vmul.f32 %v399, 1.442695
  %v455 = vpow.pop %v454
  %v456 = vmul.f32 %v400, 1.442695
  %v457 = vpow.pop %v456
  %v458 = vmul.f32 %v401, 1.442695
  %v459 = vpow.pop %v458
  %v460 = vmul.f32 %v402, 1.442695
  %v461 = vpow.pop %v460
  %v462 = vmul.f32 %v403, 1.442695
  %v463 = vpow.pop %v462
  %v464 = vmul.f32 %v404, 1.442695
  %v465 = vpow.pop %v464
  %v466 = vmul.f32 %v405, 1.442695
  %v467 = vpow.pop %v466
  %v468 = vmul.f32 %v406, 1.442695
  %v469 = vpow.pop %v468
  %v470 = vmul.f32 %v407, 1.442695
  %v471 = vpow.pop %v470
  %v472 = vadd.f32 %v409, 1.0
  %v473 = vadd.f32 %v411, 1.0
  %v474 = vadd.f32 %v413, 1.0
  %v475 = vadd.f32 %v415, 1.0
  %v476 = vadd.f32 %v417, 1.0
  %v477 = vadd.f32 %v419, 1.0
  %v478 = vadd.f32 %v421, 1.0
  %v479 = vadd.f32 %v423, 1.0
  %v480 = vadd.f32 %v425, 1.0
  %v481 = vadd.f32 %v427, 1.0
  %v482 = vadd.f32 %v429, 1.0
  %v483 = vadd.f32 %v431, 1.0
  %v484 = vadd.f32 %v433, 1.0
  %v485 = vadd.f32 %v435, 1.0
  %v486 = vadd.f32 %v437, 1.0
  %v487 = vadd.f32 %v439, 1.0
  %v488 = vadd.f32 %v441, 1.0
  %v489 = vadd.f32 %v443, 1.0
  %v490 = vadd.f32 %v445, 1.0
  %v491 = vadd.f32 %v447, 1.0
  %v492 = vadd.f32 %v449, 1.0
  %v493 = vadd.f32 %v451, 1.0
  %v494 = vadd.f32 %v453, 1.0
  %v495 = vadd.f32 %v455, 1.0
  %v496 = vadd.f32 %v457, 1.0
  %v497 = vadd.f32 %v459, 1.0
  %v498 = vadd.f32 %v461, 1.0
  %v499 = vadd.f32 %v463, 1.0
  %v500 = vadd.f32 %v465, 1.0
  %v501 = vadd.f32 %v467, 1.0
  %v502 = vadd.f32 %v469, 1.0
  %v503 = vadd.f32 %v471, 1.0
  %v504 = vrcp.pop %v472
  %v505 = vmul.f32 1.0, %v504
  %v506 = vrcp.pop %v473
  %v507 = vmul.f32 1.0, %v506
  %v508 = vrcp.pop %v474
  %v509 = vmul.f32 1.0, %v508
  %v510 = vrcp.pop %v475
  %v511 = vmul.f32 1.0, %v510
  %v512 = vrcp.pop %v476
  %v513 = vmul.f32 1.0, %v512
  %v514 = vrcp.pop %v477
  %v515 = vmul.f32 1.0, %v514
  %v516 = vrcp.pop %v478
  %v517 = vmul.f32 1.0, %v516
  %v518 = vrcp.pop %v479
  %v519 = vmul.f32 1.0, %v518
  %v520 = vrcp.pop %v480
  %v521 = vmul.f32 1.0, %v520
  %v522 = vrcp.pop %v481
  %v523 = vmul.f32 1.0, %v522
  %v524 = vrcp.pop %v482
  %v525 = vmul.f32 1.0, %v524
  %v526 = vrcp.pop %v483
  %v527 = vmul.f32 1.0, %v526
  %v528 = vrcp.pop %v484
  %v529 = vmul.f32 1.0, %v528
  %v530 = vrcp.pop %v485
  %v531 = vmul.f32 1.0, %v530
  %v532 = vrcp.pop %v486
  %v533 = vmul.f32 1.0, %v532
  %v534 = vrcp.pop %v487
  %v535 = vmul.f32 1.0, %v534
  %v536 = vrcp.pop %v488
  %v537 = vmul.f32 1.0, %v536
  %v538 = vrcp.pop %v489
  %v539 = vmul.f32 1.0, %v538
  %v540 = vrcp.pop %v490
  %v541 = vmul.f32 1.0, %v540
  %v542 = vrcp.pop %v491
  %v543 = vmul.f32 1.0, %v542
  %v544 = vrcp.pop %v492
  %v545 = vmul.f32 1.0, %v544
  %v546 = vrcp.pop %v493
  %v547 = vmul.f32 1.0, %v546
  %v548 = vrcp.pop %v494
  %v549 = vmul.f32 1.0, %v548
  %v550 = vrcp.pop %v495
  %v551 = vmul.f32 1.0, %v550
  %v552 = vrcp.pop %v496
  %v553 = vmul.f32 1.0, %v552
  %v554 = vrcp.pop %v497
  %v555 = vmul.f32 1.0, %v554
  %v556 = vrcp.pop %v498
  %v557 = vmul.f32 1.0, %v556
  %v558 = vrcp.pop %v499
  %v559 = vmul.f32 1.0, %v558
  %v560 = vrcp.pop %v500
  %v561 = vmul.f32 1.0, %v560
  %v562 = vrcp.pop %v501
  %v563 = vmul.f32 1.0, %v562
  %v564 = vrcp.pop %v502
  %v565 = vmul.f32 1.0, %v564
  %v566 = vrcp.pop %v503
  %v567 = vmul.f32 1.0, %v566
  %v568 = vmul.f32 %v218, %v505
  %v569 = vmul.f32 %v223, %v507
  %v570 = vmul.f32 %v228, %v509
  %v571 = vmul.f32 %v233, %v511
  %v572 = vmul.f32 %v238, %v513
  %v573 = vmul.f32 %v243, %v515
  %v574 = vmul.f32 %v248, %v517
  %v575 = vmul.f32 %v253, %v519
  %v576 = vmul.f32 %v258, %v521
  %v577 = vmul.f32 %v263, %v523
  %v578 = vmul.f32 %v268, %v525
  %v579 = vmul.f32 %v273, %v527
  %v580 = vmul.f32 %v278, %v529
  %v581 = vmul.f32 %v283, %v531
  %v582 = vmul.f32 %v288, %v533
  %v583 = vmul.f32 %v293, %v535
  %v584 = vmul.f32 %v298, %v537
  %v585 = vmul.f32 %v303, %v539
  %v586 = vmul.f32 %v308, %v541
  %v587 = vmul.f32 %v313, %v543
  %v588 = vmul.f32 %v318, %v545
  %v589 = vmul.f32 %v323, %v547
  %v590 = vmul.f32 %v328, %v549
  %v591 = vmul.f32 %v333, %v551
  %v592 = vmul.f32 %v338, %v553
  %v593 = vmul.f32 %v343, %v555
  %v594 = vmul.f32 %v348, %v557
  %v595 = vmul.f32 %v353, %v559
  %v596 = vmul.f32 %v358, %v561
  %v597 = vmul.f32 %v363, %v563
  %v598 = vmul.f32 %v368, %v565
  %v599 = vmul.f32 %v373, %v567
  %600 = vst [vmem:[%s3] sm:$0xff] %v568
  %601 = vst [vmem:[%s3 + $0x8] sm:$0xff] %v569
  %602 = vst [vmem:[%s3 + $0x10] sm:$0xff] %v570
  %603 = vst [vmem:[%s3 + $0x18] sm:$0xff] %v571
  %604 = vst [vmem:[%s3 + $0x20] sm:$0xff] %v572
  %605 = vst [vmem:[%s3 + $0x28] sm:$0xff] %v573
  %606 = vst [vmem:[%s3 + $0x30] sm:$0xff] %v574
  %607 = vst [vmem:[%s3 + $0x38] sm:$0xff] %v575
  %608 = vst [vmem:[%s3 + $0x40] sm:$0xff] %v576
  %609 = vst [vmem:[%s3 + $0x48] sm:$0xff] %v577
  %610 = vst [vmem:[%s3 + $0x50] sm:$0xff] %v578
  %611 = vst [vmem:[%s3 + $0x58] sm:$0xff] %v579
  %612 = vst [vmem:[%s3 + $0x60] sm:$0xff] %v580
  %613 = vst [vmem:[%s3 + $0x68] sm:$0xff] %v581
  %614 = vst [vmem:[%s3 + $0x70] sm:$0xff] %v582
  %615 = vst [vmem:[%s3 + $0x78] sm:$0xff] %v583
  %616 = vst [vmem:[%s3 + $0x80] sm:$0xff] %v584
  %617 = vst [vmem:[%s3 + $0x88] sm:$0xff] %v585
  %618 = vst [vmem:[%s3 + $0x90] sm:$0xff] %v586
  %619 = vst [vmem:[%s3 + $0x98] sm:$0xff] %v587
  %620 = vst [vmem:[%s3 + $0xa0] sm:$0xff] %v588
  %621 = vst [vmem:[%s3 + $0xa8] sm:$0xff] %v589
  %622 = vst [vmem:[%s3 + $0xb0] sm:$0xff] %v590
  %623 = vst [vmem:[%s3 + $0xb8] sm:$0xff] %v591
  %624 = vst [vmem:[%s3 + $0xc0] sm:$0xff] %v592
  %625 = vst [vmem:[%s3 + $0xc8] sm:$0xff] %v593
  %626 = vst [vmem:[%s3 + $0xd0] sm:$0xff] %v594
  %627 = vst [vmem:[%s3 + $0xd8] sm:$0xff] %v595
  %628 = vst [vmem:[%s3 + $0xe0] sm:$0xff] %v596
  %629 = vst [vmem:[%s3 + $0xe8] sm:$0xff] %v597
  %630 = vst [vmem:[%s3 + $0xf0] sm:$0xff] %v598
  %631 = vst [vmem:[%s3 + $0xf8] sm:$0xff] %v599
  // Predicated region
  $region14: #{encoder_with_svtr_forward.21} parent=0 // pred_check
    _
  $region15: #{encoder_with_svtr_forward.21} parent=0 // pred_check_branch
    %633 = sbr.rel (0) target = $region17
  $region16: #{encoder_with_svtr_forward.21} parent=0 // pred_region
    _
  $region17: #{encoder_with_svtr_forward.21} parent=0 // pred_fallthru
    _
  // Predicated region
  $region18: #{encoder_with_svtr_forward.21} parent=0 // pred_check
    _
  $region19: #{encoder_with_svtr_forward.21} parent=0 // pred_check_branch
    %635 = sbr.rel (0) target = $region21
  $region20: #{encoder_with_svtr_forward.21} parent=0 // pred_region
    _
  $region21: #{encoder_with_svtr_forward.21} parent=0 // pred_fallthru
    _

// kernel: encoder_with_svtr_forward.20
$region0: #{encoder_with_svtr_forward.20}
  #allocation0 [shape = 'u32[]', space=smem, size = 0x4, offset = 0x4, fixed_abs, tag = 'smem constant byte address 0x4 - core index']
  #allocation1 [shape = 'u32[144,128]{1,0:T(1,128)}', space=vmem, size = 0x12000, scoped, tag = 'internal scratch']
  %s0 = inlined_call_operand.vmem [shape: f32[256,576], index: 0, kind: input, shape index: {}]
  %s1 = inlined_call_operand.vmem [shape: f32[576,128], index: 1, kind: input, shape index: {}]
  %s2 = inlined_call_operand.vmem [shape: f32[1,128], index: 2, kind: input, shape index: {}]
  %s3 = inlined_call_operand.vmem [shape: f32[256,128], index: 3, kind: output, shape index: {}]
  %s4 = sld [smem:[#allocation0]]
  $region22: #{encoder_with_svtr_forward.20} parent=0
    _
  %s6 = ssub.s32 1, %s4
  %s7 = scalar_select 0, %s6, %s4
  // Predicated region
  $region2: #{encoder_with_svtr_forward.20} parent=0 // pred_check
    _
  $region3: #{encoder_with_svtr_forward.20} parent=0 // pred_check_branch
    %9 = sbr.rel (0) target = $region5
  $region4: #{encoder_with_svtr_forward.20} parent=0 // pred_region
    _
  $region5: #{encoder_with_svtr_forward.20} parent=0 // pred_fallthru
    _
  // Predicated region
  $region6: #{encoder_with_svtr_forward.20} parent=0 // pred_check
    _
  $region7: #{encoder_with_svtr_forward.20} parent=0 // pred_check_branch
    %11 = sbr.rel (0) target = $region9
  $region8: #{encoder_with_svtr_forward.20} parent=0 // pred_region
    _
  $region9: #{encoder_with_svtr_forward.20} parent=0 // pred_fallthru
    _
  // Predicated region
  $region10: #{encoder_with_svtr_forward.20} parent=0 // pred_check
    _
  $region11: #{encoder_with_svtr_forward.20} parent=0 // pred_check_branch
    %13 = sbr.rel (0) target = $region13
  $region12: #{encoder_with_svtr_forward.20} parent=0 // pred_region
    _
  $region13: #{encoder_with_svtr_forward.20} parent=0 // pred_fallthru
    _
  %v14 = vld [vmem:[%s0] sm:$0xff]
  %v15 = vld [vmem:[%s0 + $0x8] sm:$0xff]
  %v16 = vld [vmem:[%s0 + $0x10] sm:$0xff]
  %v17 = vld [vmem:[%s0 + $0x18] sm:$0xff]
  %v18 = vld [vmem:[%s0 + $0x20] sm:$0xff]
  %v19 = vld [vmem:[%s0 + $0x28] sm:$0xff]
  %v20 = vld [vmem:[%s0 + $0x30] sm:$0xff]
  %v21 = vld [vmem:[%s0 + $0x38] sm:$0xff]
  %v22 = vld [vmem:[%s0 + $0x40] sm:$0xff]
  %v23 = vld [vmem:[%s0 + $0x48] sm:$0xff]
  %v24 = vld [vmem:[%s0 + $0x50] sm:$0xff]
  %v25 = vld [vmem:[%s0 + $0x58] sm:$0xff]
  %v26 = vld [vmem:[%s0 + $0x60] sm:$0xff]
  %v27 = vld [vmem:[%s0 + $0x68] sm:$0xff]
  %v28 = vld [vmem:[%s0 + $0x70] sm:$0xff]
  %v29 = vld [vmem:[%s0 + $0x78] sm:$0xff]
  %v30 = vld [vmem:[%s0 + $0x80] sm:$0xff]
  %v31 = vld [vmem:[%s0 + $0x88] sm:$0xff]
  %v32 = vld [vmem:[%s0 + $0x90] sm:$0xff]
  %v33 = vld [vmem:[%s0 + $0x98] sm:$0xff]
  %v34 = vld [vmem:[%s0 + $0xa0] sm:$0xff]
  %v35 = vld [vmem:[%s0 + $0xa8] sm:$0xff]
  %v36 = vld [vmem:[%s0 + $0xb0] sm:$0xff]
  %v37 = vld [vmem:[%s0 + $0xb8] sm:$0xff]
  %v38 = vld [vmem:[%s0 + $0xc0] sm:$0xff]
  %v39 = vld [vmem:[%s0 + $0xc8] sm:$0xff]
  %v40 = vld [vmem:[%s0 + $0xd0] sm:$0xff]
  %v41 = vld [vmem:[%s0 + $0xd8] sm:$0xff]
  %v42 = vld [vmem:[%s0 + $0xe0] sm:$0xff]
  %v43 = vld [vmem:[%s0 + $0xe8] sm:$0xff]
  %v44 = vld [vmem:[%s0 + $0xf0] sm:$0xff]
  %v45 = vld [vmem:[%s0 + $0xf8] sm:$0xff]
  %v46 = vld [vmem:[%s0 + $0x100] sm:$0xff]
  %v47 = vld [vmem:[%s0 + $0x108] sm:$0xff]
  %v48 = vld [vmem:[%s0 + $0x110] sm:$0xff]
  %v49 = vld [vmem:[%s0 + $0x118] sm:$0xff]
  %v50 = vld [vmem:[%s0 + $0x120] sm:$0xff]
  %v51 = vld [vmem:[%s0 + $0x128] sm:$0xff]
  %v52 = vld [vmem:[%s0 + $0x130] sm:$0xff]
  %v53 = vld [vmem:[%s0 + $0x138] sm:$0xff]
  %v54 = vld [vmem:[%s0 + $0x140] sm:$0xff]
  %v55 = vld [vmem:[%s0 + $0x148] sm:$0xff]
  %v56 = vld [vmem:[%s0 + $0x150] sm:$0xff]
  %v57 = vld [vmem:[%s0 + $0x158] sm:$0xff]
  %v58 = vld [vmem:[%s0 + $0x160] sm:$0xff]
  %v59 = vld [vmem:[%s0 + $0x168] sm:$0xff]
  %v60 = vld [vmem:[%s0 + $0x170] sm:$0xff]
  %v61 = vld [vmem:[%s0 + $0x178] sm:$0xff]
  %v62 = vld [vmem:[%s0 + $0x180] sm:$0xff]
  %v63 = vld [vmem:[%s0 + $0x188] sm:$0xff]
  %v64 = vld [vmem:[%s0 + $0x190] sm:$0xff]
  %v65 = vld [vmem:[%s0 + $0x198] sm:$0xff]
  %v66 = vld [vmem:[%s0 + $0x1a0] sm:$0xff]
  %v67 = vld [vmem:[%s0 + $0x1a8] sm:$0xff]
  %v68 = vld [vmem:[%s0 + $0x1b0] sm:$0xff]
  %v69 = vld [vmem:[%s0 + $0x1b8] sm:$0xff]
  %v70 = vld [vmem:[%s0 + $0x1c0] sm:$0xff]
  %v71 = vld [vmem:[%s0 + $0x1c8] sm:$0xff]
  %v72 = vld [vmem:[%s0 + $0x1d0] sm:$0xff]
  %v73 = vld [vmem:[%s0 + $0x1d8] sm:$0xff]
  %v74 = vld [vmem:[%s0 + $0x1e0] sm:$0xff]
  %v75 = vld [vmem:[%s0 + $0x1e8] sm:$0xff]
  %v76 = vld [vmem:[%s0 + $0x1f0] sm:$0xff]
  %v77 = vld [vmem:[%s0 + $0x1f8] sm:$0xff]
  %v78 = vld [vmem:[%s0 + $0x200] sm:$0xff]
  %v79 = vld [vmem:[%s0 + $0x208] sm:$0xff]
  %v80 = vld [vmem:[%s0 + $0x210] sm:$0xff]
  %v81 = vld [vmem:[%s0 + $0x218] sm:$0xff]
  %v82 = vld [vmem:[%s0 + $0x220] sm:$0xff]
  %v83 = vld [vmem:[%s0 + $0x228] sm:$0xff]
  %v84 = vld [vmem:[%s0 + $0x230] sm:$0xff]
  %v85 = vld [vmem:[%s0 + $0x238] sm:$0xff]
  %v86 = vld [vmem:[%s0 + $0x240] sm:$0xff]
  %v87 = vld [vmem:[%s0 + $0x248] sm:$0xff]
  %v88 = vld [vmem:[%s0 + $0x250] sm:$0xff]
  %v89 = vld [vmem:[%s0 + $0x258] sm:$0xff]
  %v90 = vld [vmem:[%s0 + $0x260] sm:$0xff]
  %v91 = vld [vmem:[%s0 + $0x268] sm:$0xff]
  %v92 = vld [vmem:[%s0 + $0x270] sm:$0xff]
  %v93 = vld [vmem:[%s0 + $0x278] sm:$0xff]
  %v94 = vld [vmem:[%s0 + $0x280] sm:$0xff]
  %v95 = vld [vmem:[%s0 + $0x288] sm:$0xff]
  %v96 = vld [vmem:[%s0 + $0x290] sm:$0xff]
  %v97 = vld [vmem:[%s0 + $0x298] sm:$0xff]
  %v98 = vld [vmem:[%s0 + $0x2a0] sm:$0xff]
  %v99 = vld [vmem:[%s0 + $0x2a8] sm:$0xff]
  %v100 = vld [vmem:[%s0 + $0x2b0] sm:$0xff]
  %v101 = vld [vmem:[%s0 + $0x2b8] sm:$0xff]
  %v102 = vld [vmem:[%s0 + $0x2c0] sm:$0xff]
  %v103 = vld [vmem:[%s0 + $0x2c8] sm:$0xff]
  %v104 = vld [vmem:[%s0 + $0x2d0] sm:$0xff]
  %v105 = vld [vmem:[%s0 + $0x2d8] sm:$0xff]
  %v106 = vld [vmem:[%s0 + $0x2e0] sm:$0xff]
  %v107 = vld [vmem:[%s0 + $0x2e8] sm:$0xff]
  %v108 = vld [vmem:[%s0 + $0x2f0] sm:$0xff]
  %v109 = vld [vmem:[%s0 + $0x2f8] sm:$0xff]
  %v110 = vld [vmem:[%s0 + $0x300] sm:$0xff]
  %v111 = vld [vmem:[%s0 + $0x308] sm:$0xff]
  %v112 = vld [vmem:[%s0 + $0x310] sm:$0xff]
  %v113 = vld [vmem:[%s0 + $0x318] sm:$0xff]
  %v114 = vld [vmem:[%s0 + $0x320] sm:$0xff]
  %v115 = vld [vmem:[%s0 + $0x328] sm:$0xff]
  %v116 = vld [vmem:[%s0 + $0x330] sm:$0xff]
  %v117 = vld [vmem:[%s0 + $0x338] sm:$0xff]
  %v118 = vld [vmem:[%s0 + $0x340] sm:$0xff]
  %v119 = vld [vmem:[%s0 + $0x348] sm:$0xff]
  %v120 = vld [vmem:[%s0 + $0x350] sm:$0xff]
  %v121 = vld [vmem:[%s0 + $0x358] sm:$0xff]
  %v122 = vld [vmem:[%s0 + $0x360] sm:$0xff]
  %v123 = vld [vmem:[%s0 + $0x368] sm:$0xff]
  %v124 = vld [vmem:[%s0 + $0x370] sm:$0xff]
  %v125 = vld [vmem:[%s0 + $0x378] sm:$0xff]
  %v126 = vld [vmem:[%s0 + $0x380] sm:$0xff]
  %v127 = vld [vmem:[%s0 + $0x388] sm:$0xff]
  %v128 = vld [vmem:[%s0 + $0x390] sm:$0xff]
  %v129 = vld [vmem:[%s0 + $0x398] sm:$0xff]
  %v130 = vld [vmem:[%s0 + $0x3a0] sm:$0xff]
  %v131 = vld [vmem:[%s0 + $0x3a8] sm:$0xff]
  %v132 = vld [vmem:[%s0 + $0x3b0] sm:$0xff]
  %v133 = vld [vmem:[%s0 + $0x3b8] sm:$0xff]
  %v134 = vld [vmem:[%s0 + $0x3c0] sm:$0xff]
  %v135 = vld [vmem:[%s0 + $0x3c8] sm:$0xff]
  %v136 = vld [vmem:[%s0 + $0x3d0] sm:$0xff]
  %v137 = vld [vmem:[%s0 + $0x3d8] sm:$0xff]
  %v138 = vld [vmem:[%s0 + $0x3e0] sm:$0xff]
  %v139 = vld [vmem:[%s0 + $0x3e8] sm:$0xff]
  %v140 = vld [vmem:[%s0 + $0x3f0] sm:$0xff]
  %v141 = vld [vmem:[%s0 + $0x3f8] sm:$0xff]
  %v142 = vld [vmem:[%s0 + $0x400] sm:$0xff]
  %v143 = vld [vmem:[%s0 + $0x408] sm:$0xff]
  %v144 = vld [vmem:[%s0 + $0x410] sm:$0xff]
  %v145 = vld [vmem:[%s0 + $0x418] sm:$0xff]
  %v146 = vld [vmem:[%s0 + $0x420] sm:$0xff]
  %v147 = vld [vmem:[%s0 + $0x428] sm:$0xff]
  %v148 = vld [vmem:[%s0 + $0x430] sm:$0xff]
  %v149 = vld [vmem:[%s0 + $0x438] sm:$0xff]
  %v150 = vld [vmem:[%s0 + $0x440] sm:$0xff]
  %v151 = vld [vmem:[%s0 + $0x448] sm:$0xff]
  %v152 = vld [vmem:[%s0 + $0x450] sm:$0xff]
  %v153 = vld [vmem:[%s0 + $0x458] sm:$0xff]
  %v154 = vld [vmem:[%s0 + $0x460] sm:$0xff]
  %v155 = vld [vmem:[%s0 + $0x468] sm:$0xff]
  %v156 = vld [vmem:[%s0 + $0x470] sm:$0xff]
  %v157 = vld [vmem:[%s0 + $0x478] sm:$0xff]
  %v158 = vld [vmem:[%s0 + $0x480] sm:$0xff]
  %v159 = vld [vmem:[%s0 + $0x488] sm:$0xff]
  %v160 = vld [vmem:[%s0 + $0x490] sm:$0xff]
  %v161 = vld [vmem:[%s0 + $0x498] sm:$0xff]
  %v162 = vld [vmem:[%s0 + $0x4a0] sm:$0xff]
  %v163 = vld [vmem:[%s0 + $0x4a8] sm:$0xff]
  %v164 = vld [vmem:[%s0 + $0x4b0] sm:$0xff]
  %v165 = vld [vmem:[%s0 + $0x4b8] sm:$0xff]
  %v166 = vld [vmem:[%s0 + $0x4c0] sm:$0xff]
  %v167 = vld [vmem:[%s0 + $0x4c8] sm:$0xff]
  %v168 = vld [vmem:[%s0 + $0x4d0] sm:$0xff]
  %v169 = vld [vmem:[%s0 + $0x4d8] sm:$0xff]
  %v170 = vld [vmem:[%s0 + $0x4e0] sm:$0xff]
  %v171 = vld [vmem:[%s0 + $0x4e8] sm:$0xff]
  %v172 = vld [vmem:[%s0 + $0x4f0] sm:$0xff]
  %v173 = vld [vmem:[%s0 + $0x4f8] sm:$0xff]
  %v174 = vld [vmem:[%s1] sm:$0xff]
  %v175 = vld [vmem:[%s1 + $0x8] sm:$0xff]
  %v176 = vld [vmem:[%s1 + $0x10] sm:$0xff]
  %v177 = vld [vmem:[%s1 + $0x18] sm:$0xff]
  %v178 = vld [vmem:[%s1 + $0x20] sm:$0xff]
  %v179 = vld [vmem:[%s1 + $0x28] sm:$0xff]
  %v180 = vld [vmem:[%s1 + $0x30] sm:$0xff]
  %v181 = vld [vmem:[%s1 + $0x38] sm:$0xff]
  %v182 = vld [vmem:[%s1 + $0x40] sm:$0xff]
  %v183 = vld [vmem:[%s1 + $0x48] sm:$0xff]
  %v184 = vld [vmem:[%s1 + $0x50] sm:$0xff]
  %v185 = vld [vmem:[%s1 + $0x58] sm:$0xff]
  %v186 = vld [vmem:[%s1 + $0x60] sm:$0xff]
  %v187 = vld [vmem:[%s1 + $0x68] sm:$0xff]
  %v188 = vld [vmem:[%s1 + $0x70] sm:$0xff]
  %v189 = vld [vmem:[%s1 + $0x78] sm:$0xff]
  %v190 = vld [vmem:[%s1 + $0x80] sm:$0xff]
  %v191 = vld [vmem:[%s1 + $0x88] sm:$0xff]
  %v192 = vld [vmem:[%s1 + $0x90] sm:$0xff]
  %v193 = vld [vmem:[%s1 + $0x98] sm:$0xff]
  %v194 = vld [vmem:[%s1 + $0xa0] sm:$0xff]
  %v195 = vld [vmem:[%s1 + $0xa8] sm:$0xff]
  %v196 = vld [vmem:[%s1 + $0xb0] sm:$0xff]
  %v197 = vld [vmem:[%s1 + $0xb8] sm:$0xff]
  %v198 = vld [vmem:[%s1 + $0xc0] sm:$0xff]
  %v199 = vld [vmem:[%s1 + $0xc8] sm:$0xff]
  %v200 = vld [vmem:[%s1 + $0xd0] sm:$0xff]
  %v201 = vld [vmem:[%s1 + $0xd8] sm:$0xff]
  %v202 = vld [vmem:[%s1 + $0xe0] sm:$0xff]
  %v203 = vld [vmem:[%s1 + $0xe8] sm:$0xff]
  %v204 = vld [vmem:[%s1 + $0xf0] sm:$0xff]
  %v205 = vld [vmem:[%s1 + $0xf8] sm:$0xff]
  %v206 = vld [vmem:[%s1 + $0x100] sm:$0xff]
  %v207 = vld [vmem:[%s1 + $0x108] sm:$0xff]
  %v208 = vld [vmem:[%s1 + $0x110] sm:$0xff]
  %v209 = vld [vmem:[%s1 + $0x118] sm:$0xff]
  %v210 = vld [vmem:[%s1 + $0x120] sm:$0xff]
  %v211 = vld [vmem:[%s1 + $0x128] sm:$0xff]
  %v212 = vld [vmem:[%s1 + $0x130] sm:$0xff]
  %v213 = vld [vmem:[%s1 + $0x138] sm:$0xff]
  %v214 = vld [vmem:[%s1 + $0x140] sm:$0xff]
  %v215 = vld [vmem:[%s1 + $0x148] sm:$0xff]
  %v216 = vld [vmem:[%s1 + $0x150] sm:$0xff]
  %v217 = vld [vmem:[%s1 + $0x158] sm:$0xff]
  %v218 = vld [vmem:[%s1 + $0x160] sm:$0xff]
  %v219 = vld [vmem:[%s1 + $0x168] sm:$0xff]
  %v220 = vld [vmem:[%s1 + $0x170] sm:$0xff]
  %v221 = vld [vmem:[%s1 + $0x178] sm:$0xff]
  %v222 = vld [vmem:[%s1 + $0x180] sm:$0xff]
  %v223 = vld [vmem:[%s1 + $0x188] sm:$0xff]
  %v224 = vld [vmem:[%s1 + $0x190] sm:$0xff]
  %v225 = vld [vmem:[%s1 + $0x198] sm:$0xff]
  %v226 = vld [vmem:[%s1 + $0x1a0] sm:$0xff]
  %v227 = vld [vmem:[%s1 + $0x1a8] sm:$0xff]
  %v228 = vld [vmem:[%s1 + $0x1b0] sm:$0xff]
  %v229 = vld [vmem:[%s1 + $0x1b8] sm:$0xff]
  %v230 = vld [vmem:[%s1 + $0x1c0] sm:$0xff]
  %v231 = vld [vmem:[%s1 + $0x1c8] sm:$0xff]
  %v232 = vld [vmem:[%s1 + $0x1d0] sm:$0xff]
  %v233 = vld [vmem:[%s1 + $0x1d8] sm:$0xff]
  %v234 = vld [vmem:[%s1 + $0x1e0] sm:$0xff]
  %v235 = vld [vmem:[%s1 + $0x1e8] sm:$0xff]
  %v236 = vld [vmem:[%s1 + $0x1f0] sm:$0xff]
  %v237 = vld [vmem:[%s1 + $0x1f8] sm:$0xff]
  %v238 = vld [vmem:[%s1 + $0x200] sm:$0xff]
  %v239 = vld [vmem:[%s1 + $0x208] sm:$0xff]
  %v240 = vld [vmem:[%s1 + $0x210] sm:$0xff]
  %v241 = vld [vmem:[%s1 + $0x218] sm:$0xff]
  %v242 = vld [vmem:[%s1 + $0x220] sm:$0xff]
  %v243 = vld [vmem:[%s1 + $0x228] sm:$0xff]
  %v244 = vld [vmem:[%s1 + $0x230] sm:$0xff]
  %v245 = vld [vmem:[%s1 + $0x238] sm:$0xff]
  %v246 = vld [vmem:[%s2] sm:$0x1]
  %v248 = vlaneseq
  %v249 = vshrl.u32 %v248, 7
  %v250 = vsub.s32 0, %v249
  %v251 = vrot.slane %v246, %v250
  %vm253 = vcmask 523264
  %v255 = vsel %vm253, %v18, 0
  %v258 = vsel %vm253, %v23, 0
  %v261 = vsel %vm253, %v28, 0
  %v264 = vsel %vm253, %v33, 0
  %v267 = vsel %vm253, %v38, 0
  %v270 = vsel %vm253, %v43, 0
  %v273 = vsel %vm253, %v48, 0
  %v276 = vsel %vm253, %v53, 0
  %v279 = vsel %vm253, %v58, 0
  %v282 = vsel %vm253, %v63, 0
  %v285 = vsel %vm253, %v68, 0
  %v288 = vsel %vm253, %v73, 0
  %v291 = vsel %vm253, %v78, 0
  %v294 = vsel %vm253, %v83, 0
  %v297 = vsel %vm253, %v88, 0
  %v300 = vsel %vm253, %v93, 0
  %v303 = vsel %vm253, %v98, 0
  %v306 = vsel %vm253, %v103, 0
  %v309 = vsel %vm253, %v108, 0
  %v312 = vsel %vm253, %v113, 0
  %v315 = vsel %vm253, %v118, 0
  %v318 = vsel %vm253, %v123, 0
  %v321 = vsel %vm253, %v128, 0
  %v324 = vsel %vm253, %v133, 0
  %v327 = vsel %vm253, %v138, 0
  %v330 = vsel %vm253, %v143, 0
  %v333 = vsel %vm253, %v148, 0
  %v336 = vsel %vm253, %v153, 0
  %v339 = vsel %vm253, %v158, 0
  %v342 = vsel %vm253, %v163, 0
  %v345 = vsel %vm253, %v168, 0
  %v348 = vsel %vm253, %v173, 0
  %350 = vmatprep.subr.mxu0 0.0
  %351 = vmatpush1.msra.mxu0 %v174
  %352 = vmatprep.subr.mxu0 0.0
  %353 = vmatpush1.msra.mxu0 %v175
  %354 = vmatprep.subr.mxu0 0.0
  %355 = vmatpush1.msra.mxu0 %v176
  %356 = vmatprep.subr.mxu0 0.0
  %357 = vmatpush1.msra.mxu0 %v177
  %358 = vmatprep.subr.mxu0 0.0
  %359 = vmatpush1.msra.mxu0 %v178
  %360 = vmatprep.subr.mxu0 0.0
  %361 = vmatpush1.msra.mxu0 %v179
  %362 = vmatprep.subr.mxu0 0.0
  %363 = vmatpush1.msra.mxu0 %v180
  %364 = vmatprep.subr.mxu0 0.0
  %365 = vmatpush1.msra.mxu0 %v181
  %366 = vmatprep.subr.mxu0 0.0
  %367 = vmatpush1.msra.mxu0 %v182
  %368 = vmatprep.subr.mxu0 0.0
  %369 = vmatpush1.msra.mxu0 %v183
  %370 = vmatprep.subr.mxu0 0.0
  %371 = vmatpush1.msra.mxu0 %v184
  %372 = vmatprep.subr.mxu0 0.0
  %373 = vmatpush1.msra.mxu0 %v185
  %374 = vmatprep.subr.mxu0 0.0
  %375 = vmatpush1.msra.mxu0 %v186
  %376 = vmatprep.subr.mxu0 0.0
  %377 = vmatpush1.msra.mxu0 %v187
  %378 = vmatprep.subr.mxu0 0.0
  %379 = vmatpush1.msra.mxu0 %v188
  %380 = vmatprep.subr.mxu0 0.0
  %381 = vmatpush1.msra.mxu0 %v189
  %382 = vmatprep.subr.mxu0 0.0
  %383 = vmatpush1.msra.mxu0 %v190
  %384 = vmatprep.subr.mxu0 0.0
  %385 = vmatpush1.msra.mxu0 %v191
  %386 = vmatprep.subr.mxu0 0.0
  %387 = vmatpush1.msra.mxu0 %v192
  %388 = vmatprep.subr.mxu0 0.0
  %389 = vmatpush1.msra.mxu0 %v193
  %390 = vmatprep.subr.mxu0 0.0
  %391 = vmatpush1.msra.mxu0 %v194
  %392 = vmatprep.subr.mxu0 0.0
  %393 = vmatpush1.msra.mxu0 %v195
  %394 = vmatprep.subr.mxu0 0.0
  %395 = vmatpush1.msra.mxu0 %v196
  %396 = vmatprep.subr.mxu0 0.0
  %397 = vmatpush1.msra.mxu0 %v197
  %398 = vmatprep.subr.mxu0 0.0
  %399 = vmatpush1.msra.mxu0 %v198
  %400 = vmatprep.subr.mxu0 0.0
  %401 = vmatpush1.msra.mxu0 %v199
  %402 = vmatprep.subr.mxu0 0.0
  %403 = vmatpush1.msra.mxu0 %v200
  %404 = vmatprep.subr.mxu0 0.0
  %405 = vmatpush1.msra.mxu0 %v201
  %406 = vmatprep.subr.mxu0 0.0
  %407 = vmatpush1.msra.mxu0 %v202
  %408 = vmatprep.subr.mxu0 0.0
  %409 = vmatpush1.msra.mxu0 %v203
  %410 = vmatprep.subr.mxu0 0.0
  %411 = vmatpush1.msra.mxu0 %v204
  %412 = vmatprep.subr.mxu0 0.0
  %413 = vmatpush1.msra.mxu0 %v205
  %414 = vmatprep.mubr.f32.mxu0 %v15
  %415 = vmatmul.mubr.f32.gmra.mrb[0].mxu0 %v14
  %v416 = vpop.f32.mrb[0].mxu0
  %v417 = vadd.f32 %v251, %v416
  %v418 = vpop.f32.mrb[0].mxu0
  %419 = vmatprep.mubr.f32.mxu0 %v20
  %420 = vmatmul.mubr.f32.gmra.mrb[0].mxu0 %v19
  %v421 = vpop.f32.mrb[0].mxu0
  %v422 = vadd.f32 %v251, %v421
  %v423 = vpop.f32.mrb[0].mxu0
  %424 = vmatprep.mubr.f32.mxu0 %v25
  %425 = vmatmul.mubr.f32.gmra.mrb[0].mxu0 %v24
  %v426 = vpop.f32.mrb[0].mxu0
  %v427 = vadd.f32 %v251, %v426
  %v428 = vpop.f32.mrb[0].mxu0
  %429 = vmatprep.mubr.f32.mxu0 %v30
  %430 = vmatmul.mubr.f32.gmra.mrb[0].mxu0 %v29
  %v431 = vpop.f32.mrb[0].mxu0
  %v432 = vadd.f32 %v251, %v431
  %v433 = vpop.f32.mrb[0].mxu0
  %434 = vmatprep.mubr.f32.mxu0 %v35
  %435 = vmatmul.mubr.f32.gmra.mrb[0].mxu0 %v34
  %v436 = vpop.f32.mrb[0].mxu0
  %v437 = vadd.f32 %v251, %v436
  %v438 = vpop.f32.mrb[0].mxu0
  %439 = vmatprep.mubr.f32.mxu0 %v40
  %440 = vmatmul.mubr.f32.gmra.mrb[0].mxu0 %v39
  %v441 = vpop.f32.mrb[0].mxu0
  %v442 = vadd.f32 %v251, %v441
  %v443 = vpop.f32.mrb[0].mxu0
  %444 = vmatprep.mubr.f32.mxu0 %v45
  %445 = vmatmul.mubr.f32.gmra.mrb[0].mxu0 %v44
  %v446 = vpop.f32.mrb[0].mxu0
  %v447 = vadd.f32 %v251, %v446
  %v448 = vpop.f32.mrb[0].mxu0
  %449 = vmatprep.mubr.f32.mxu0 %v50
  %450 = vmatmul.mubr.f32.gmra.mrb[0].mxu0 %v49
  %v451 = vpop.f32.mrb[0].mxu0
  %v452 = vadd.f32 %v251, %v451
  %v453 = vpop.f32.mrb[0].mxu0
  %454 = vmatprep.mubr.f32.mxu0 %v55
  %455 = vmatmul.mubr.f32.gmra.mrb[0].mxu0 %v54
  %v456 = vpop.f32.mrb[0].mxu0
  %v457 = vadd.f32 %v251, %v456
  %v458 = vpop.f32.mrb[0].mxu0
  %459 = vmatprep.mubr.f32.mxu0 %v60
  %460 = vmatmul.mubr.f32.gmra.mrb[0].mxu0 %v59
  %v461 = vpop.f32.mrb[0].mxu0
  %v462 = vadd.f32 %v251, %v461
  %v463 = vpop.f32.mrb[0].mxu0
  %464 = vmatprep.mubr.f32.mxu0 %v65
  %465 = vmatmul.mubr.f32.gmra.mrb[0].mxu0 %v64
  %v466 = vpop.f32.mrb[0].mxu0
  %v467 = vadd.f32 %v251, %v466
  %v468 = vpop.f32.mrb[0].mxu0
  %469 = vmatprep.mubr.f32.mxu0 %v70
  %470 = vmatmul.mubr.f32.gmra.mrb[0].mxu0 %v69
  %v471 = vpop.f32.mrb[0].mxu0
  %v472 = vadd.f32 %v251, %v471
  %v473 = vpop.f32.mrb[0].mxu0
  %474 = vmatprep.mubr.f32.mxu0 %v75
  %475 = vmatmul.mubr.f32.gmra.mrb[0].mxu0 %v74
  %v476 = vpop.f32.mrb[0].mxu0
  %v477 = vadd.f32 %v251, %v476
  %v478 = vpop.f32.mrb[0].mxu0
  %479 = vmatprep.mubr.f32.mxu0 %v80
  %480 = vmatmul.mubr.f32.gmra.mrb[0].mxu0 %v79
  %v481 = vpop.f32.mrb[0].mxu0
  %v482 = vadd.f32 %v251, %v481
  %v483 = vpop.f32.mrb[0].mxu0
  %484 = vmatprep.mubr.f32.mxu0 %v85
  %485 = vmatmul.mubr.f32.gmra.mrb[0].mxu0 %v84
  %v486 = vpop.f32.mrb[0].mxu0
  %v487 = vadd.f32 %v251, %v486
  %v488 = vpop.f32.mrb[0].mxu0
  %489 = vmatprep.mubr.f32.mxu0 %v90
  %490 = vmatmul.mubr.f32.gmra.mrb[0].mxu0 %v89
  %v491 = vpop.f32.mrb[0].mxu0
  %v492 = vadd.f32 %v251, %v491
  %v493 = vpop.f32.mrb[0].mxu0
  %494 = vmatprep.mubr.f32.mxu0 %v95
  %495 = vmatmul.mubr.f32.gmra.mrb[0].mxu0 %v94
  %v496 = vpop.f32.mrb[0].mxu0
  %v497 = vadd.f32 %v251, %v496
  %v498 = vpop.f32.mrb[0].mxu0
  %499 = vmatprep.mubr.f32.mxu0 %v100
  %500 = vmatmul.mubr.f32.gmra.mrb[0].mxu0 %v99
  %v501 = vpop.f32.mrb[0].mxu0
  %v502 = vadd.f32 %v251, %v501
  %v503 = vpop.f32.mrb[0].mxu0
  %504 = vmatprep.mubr.f32.mxu0 %v105
  %505 = vmatmul.mubr.f32.gmra.mrb[0].mxu0 %v104
  %v506 = vpop.f32.mrb[0].mxu0
  %v507 = vadd.f32 %v251, %v506
  %v508 = vpop.f32.mrb[0].mxu0
  %509 = vmatprep.mubr.f32.mxu0 %v110
  %510 = vmatmul.mubr.f32.gmra.mrb[0].mxu0 %v109
  %v511 = vpop.f32.mrb[0].mxu0
  %v512 = vadd.f32 %v251, %v511
  %v513 = vpop.f32.mrb[0].mxu0
  %514 = vmatprep.mubr.f32.mxu0 %v115
  %515 = vmatmul.mubr.f32.gmra.mrb[0].mxu0 %v114
  %v516 = vpop.f32.mrb[0].mxu0
  %v517 = vadd.f32 %v251, %v516
  %v518 = vpop.f32.mrb[0].mxu0
  %519 = vmatprep.mubr.f32.mxu0 %v120
  %520 = vmatmul.mubr.f32.gmra.mrb[0].mxu0 %v119
  %v521 = vpop.f32.mrb[0].mxu0
  %v522 = vadd.f32 %v251, %v521
  %v523 = vpop.f32.mrb[0].mxu0
  %524 = vmatprep.mubr.f32.mxu0 %v125
  %525 = vmatmul.mubr.f32.gmra.mrb[0].mxu0 %v124
  %v526 = vpop.f32.mrb[0].mxu0
  %v527 = vadd.f32 %v251, %v526
  %v528 = vpop.f32.mrb[0].mxu0
  %529 = vmatprep.mubr.f32.mxu0 %v130
  %530 = vmatmul.mubr.f32.gmra.mrb[0].mxu0 %v129
  %v531 = vpop.f32.mrb[0].mxu0
  %v532 = vadd.f32 %v251, %v531
  %v533 = vpop.f32.mrb[0].mxu0
  %534 = vmatprep.mubr.f32.mxu0 %v135
  %535 = vmatmul.mubr.f32.gmra.mrb[0].mxu0 %v134
  %v536 = vpop.f32.mrb[0].mxu0
  %v537 = vadd.f32 %v251, %v536
  %v538 = vpop.f32.mrb[0].mxu0
  %539 = vmatprep.mubr.f32.mxu0 %v140
  %540 = vmatmul.mubr.f32.gmra.mrb[0].mxu0 %v139
  %v541 = vpop.f32.mrb[0].mxu0
  %v542 = vadd.f32 %v251, %v541
  %v543 = vpop.f32.mrb[0].mxu0
  %544 = vmatprep.mubr.f32.mxu0 %v145
  %545 = vmatmul.mubr.f32.gmra.mrb[0].mxu0 %v144
  %v546 = vpop.f32.mrb[0].mxu0
  %v547 = vadd.f32 %v251, %v546
  %v548 = vpop.f32.mrb[0].mxu0
  %549 = vmatprep.mubr.f32.mxu0 %v150
  %550 = vmatmul.mubr.f32.gmra.mrb[0].mxu0 %v149
  %v551 = vpop.f32.mrb[0].mxu0
  %v552 = vadd.f32 %v251, %v551
  %v553 = vpop.f32.mrb[0].mxu0
  %554 = vmatprep.mubr.f32.mxu0 %v155
  %555 = vmatmul.mubr.f32.gmra.mrb[0].mxu0 %v154
  %v556 = vpop.f32.mrb[0].mxu0
  %v557 = vadd.f32 %v251, %v556
  %v558 = vpop.f32.mrb[0].mxu0
  %559 = vmatprep.mubr.f32.mxu0 %v160
  %560 = vmatmul.mubr.f32.gmra.mrb[0].mxu0 %v159
  %v561 = vpop.f32.mrb[0].mxu0
  %v562 = vadd.f32 %v251, %v561
  %v563 = vpop.f32.mrb[0].mxu0
  %564 = vmatprep.mubr.f32.mxu0 %v165
  %565 = vmatmul.mubr.f32.gmra.mrb[0].mxu0 %v164
  %v566 = vpop.f32.mrb[0].mxu0
  %v567 = vadd.f32 %v251, %v566
  %v568 = vpop.f32.mrb[0].mxu0
  %569 = vmatprep.mubr.f32.mxu0 %v170
  %570 = vmatmul.mubr.f32.gmra.mrb[0].mxu0 %v169
  %v571 = vpop.f32.mrb[0].mxu0
  %v572 = vadd.f32 %v251, %v571
  %v573 = vpop.f32.mrb[0].mxu0
  %574 = vdwg.mxu0
  %575 = vmatprep.subr.mxu0 0.0
  %576 = vmatpush1.msra.mxu0 %v206
  %577 = vmatprep.subr.mxu0 0.0
  %578 = vmatpush1.msra.mxu0 %v207
  %579 = vmatprep.subr.mxu0 0.0
  %580 = vmatpush1.msra.mxu0 %v208
  %581 = vmatprep.subr.mxu0 0.0
  %582 = vmatpush1.msra.mxu0 %v209
  %583 = vmatprep.subr.mxu0 0.0
  %584 = vmatpush1.msra.mxu0 %v210
  %585 = vmatprep.subr.mxu0 0.0
  %586 = vmatpush1.msra.mxu0 %v211
  %587 = vmatprep.subr.mxu0 0.0
  %588 = vmatpush1.msra.mxu0 %v212
  %589 = vmatprep.subr.mxu0 0.0
  %590 = vmatpush1.msra.mxu0 %v213
  %591 = vmatprep.subr.mxu0 0.0
  %592 = vmatpush1.msra.mxu0 %v214
  %593 = vmatprep.subr.mxu0 0.0
  %594 = vmatpush1.msra.mxu0 %v215
  %595 = vmatprep.subr.mxu0 0.0
  %596 = vmatpush1.msra.mxu0 %v216
  %597 = vmatprep.subr.mxu0 0.0
  %598 = vmatpush1.msra.mxu0 %v217
  %599 = vmatprep.subr.mxu0 0.0
  %600 = vmatpush1.msra.mxu0 %v218
  %601 = vmatprep.subr.mxu0 0.0
  %602 = vmatpush1.msra.mxu0 %v219
  %603 = vmatprep.subr.mxu0 0.0
  %604 = vmatpush1.msra.mxu0 %v220
  %605 = vmatprep.subr.mxu0 0.0
  %606 = vmatpush1.msra.mxu0 %v221
  %607 = vmatprep.subr.mxu0 0.0
  %608 = vmatpush1.msra.mxu0 %v222
  %609 = vmatprep.subr.mxu0 0.0
  %610 = vmatpush1.msra.mxu0 %v223
  %611 = vmatprep.subr.mxu0 0.0
  %612 = vmatpush1.msra.mxu0 %v224
  %613 = vmatprep.subr.mxu0 0.0
  %614 = vmatpush1.msra.mxu0 %v225
  %615 = vmatprep.subr.mxu0 0.0
  %616 = vmatpush1.msra.mxu0 %v226
  %617 = vmatprep.subr.mxu0 0.0
  %618 = vmatpush1.msra.mxu0 %v227
  %619 = vmatprep.subr.mxu0 0.0
  %620 = vmatpush1.msra.mxu0 %v228
  %621 = vmatprep.subr.mxu0 0.0
  %622 = vmatpush1.msra.mxu0 %v229
  %623 = vmatprep.subr.mxu0 0.0
  %624 = vmatpush1.msra.mxu0 %v230
  %625 = vmatprep.subr.mxu0 0.0
  %626 = vmatpush1.msra.mxu0 %v231
  %627 = vmatprep.subr.mxu0 0.0
  %628 = vmatpush1.msra.mxu0 %v232
  %629 = vmatprep.subr.mxu0 0.0
  %630 = vmatpush1.msra.mxu0 %v233
  %631 = vmatprep.subr.mxu0 0.0
  %632 = vmatpush1.msra.mxu0 %v234
  %633 = vmatprep.subr.mxu0 0.0
  %634 = vmatpush1.msra.mxu0 %v235
  %635 = vmatprep.subr.mxu0 0.0
  %636 = vmatpush1.msra.mxu0 %v236
  %637 = vmatprep.subr.mxu0 0.0
  %638 = vmatpush1.msra.mxu0 %v237
  %639 = vmatprep.mubr.f32.mxu0 %v17
  %640 = vmatmul.mubr.f32.gmra.mrb[0].mxu0 %v16
  %v641 = vpop.f32.mrb[0].mxu0
  %v642 = vadd.f32 %v417, %v641
  %v643 = vpop.f32.mrb[0].mxu0
  %644 = vmatprep.mubr.f32.mxu0 %v22
  %645 = vmatmul.mubr.f32.gmra.mrb[0].mxu0 %v21
  %v646 = vpop.f32.mrb[0].mxu0
  %v647 = vadd.f32 %v422, %v646
  %v648 = vpop.f32.mrb[0].mxu0
  %649 = vmatprep.mubr.f32.mxu0 %v27
  %650 = vmatmul.mubr.f32.gmra.mrb[0].mxu0 %v26
  %v651 = vpop.f32.mrb[0].mxu0
  %v652 = vadd.f32 %v427, %v651
  %v653 = vpop.f32.mrb[0].mxu0
  %654 = vmatprep.mubr.f32.mxu0 %v32
  %655 = vmatmul.mubr.f32.gmra.mrb[0].mxu0 %v31
  %v656 = vpop.f32.mrb[0].mxu0
  %v657 = vadd.f32 %v432, %v656
  %v658 = vpop.f32.mrb[0].mxu0
  %659 = vmatprep.mubr.f32.mxu0 %v37
  %660 = vmatmul.mubr.f32.gmra.mrb[0].mxu0 %v36
  %v661 = vpop.f32.mrb[0].mxu0
  %v662 = vadd.f32 %v437, %v661
  %v663 = vpop.f32.mrb[0].mxu0
  %664 = vmatprep.mubr.f32.mxu0 %v42
  %665 = vmatmul.mubr.f32.gmra.mrb[0].mxu0 %v41
  %v666 = vpop.f32.mrb[0].mxu0
  %v667 = vadd.f32 %v442, %v666
  %v668 = vpop.f32.mrb[0].mxu0
  %669 = vmatprep.mubr.f32.mxu0 %v47
  %670 = vmatmul.mubr.f32.gmra.mrb[0].mxu0 %v46
  %v671 = vpop.f32.mrb[0].mxu0
  %v672 = vadd.f32 %v447, %v671
  %v673 = vpop.f32.mrb[0].mxu0
  %674 = vmatprep.mubr.f32.mxu0 %v52
  %675 = vmatmul.mubr.f32.gmra.mrb[0].mxu0 %v51
  %v676 = vpop.f32.mrb[0].mxu0
  %v677 = vadd.f32 %v452, %v676
  %v678 = vpop.f32.mrb[0].mxu0
  %679 = vmatprep.mubr.f32.mxu0 %v57
  %680 = vmatmul.mubr.f32.gmra.mrb[0].mxu0 %v56
  %v681 = vpop.f32.mrb[0].mxu0
  %v682 = vadd.f32 %v457, %v681
  %v683 = vpop.f32.mrb[0].mxu0
  %684 = vmatprep.mubr.f32.mxu0 %v62
  %685 = vmatmul.mubr.f32.gmra.mrb[0].mxu0 %v61
  %v686 = vpop.f32.mrb[0].mxu0
  %v687 = vadd.f32 %v462, %v686
  %v688 = vpop.f32.mrb[0].mxu0
  %689 = vmatprep.mubr.f32.mxu0 %v67
  %690 = vmatmul.mubr.f32.gmra.mrb[0].mxu0 %v66
  %v691 = vpop.f32.mrb[0].mxu0
  %v692 = vadd.f32 %v467, %v691
  %v693 = vpop.f32.mrb[0].mxu0
  %694 = vmatprep.mubr.f32.mxu0 %v72
  %695 = vmatmul.mubr.f32.gmra.mrb[0].mxu0 %v71
  %v696 = vpop.f32.mrb[0].mxu0
  %v697 = vadd.f32 %v472, %v696
  %v698 = vpop.f32.mrb[0].mxu0
  %699 = vmatprep.mubr.f32.mxu0 %v77
  %700 = vmatmul.mubr.f32.gmra.mrb[0].mxu0 %v76
  %v701 = vpop.f32.mrb[0].mxu0
  %v702 = vadd.f32 %v477, %v701
  %v703 = vpop.f32.mrb[0].mxu0
  %704 = vmatprep.mubr.f32.mxu0 %v82
  %705 = vmatmul.mubr.f32.gmra.mrb[0].mxu0 %v81
  %v706 = vpop.f32.mrb[0].mxu0
  %v707 = vadd.f32 %v482, %v706
  %v708 = vpop.f32.mrb[0].mxu0
  %709 = vmatprep.mubr.f32.mxu0 %v87
  %710 = vmatmul.mubr.f32.gmra.mrb[0].mxu0 %v86
  %v711 = vpop.f32.mrb[0].mxu0
  %v712 = vadd.f32 %v487, %v711
  %v713 = vpop.f32.mrb[0].mxu0
  %714 = vmatprep.mubr.f32.mxu0 %v92
  %715 = vmatmul.mubr.f32.gmra.mrb[0].mxu0 %v91
  %v716 = vpop.f32.mrb[0].mxu0
  %v717 = vadd.f32 %v492, %v716
  %v718 = vpop.f32.mrb[0].mxu0
  %719 = vmatprep.mubr.f32.mxu0 %v97
  %720 = vmatmul.mubr.f32.gmra.mrb[0].mxu0 %v96
  %v721 = vpop.f32.mrb[0].mxu0
  %v722 = vadd.f32 %v497, %v721
  %v723 = vpop.f32.mrb[0].mxu0
  %724 = vmatprep.mubr.f32.mxu0 %v102
  %725 = vmatmul.mubr.f32.gmra.mrb[0].mxu0 %v101
  %v726 = vpop.f32.mrb[0].mxu0
  %v727 = vadd.f32 %v502, %v726
  %v728 = vpop.f32.mrb[0].mxu0
  %729 = vmatprep.mubr.f32.mxu0 %v107
  %730 = vmatmul.mubr.f32.gmra.mrb[0].mxu0 %v106
  %v731 = vpop.f32.mrb[0].mxu0
  %v732 = vadd.f32 %v507, %v731
  %v733 = vpop.f32.mrb[0].mxu0
  %734 = vmatprep.mubr.f32.mxu0 %v112
  %735 = vmatmul.mubr.f32.gmra.mrb[0].mxu0 %v111
  %v736 = vpop.f32.mrb[0].mxu0
  %v737 = vadd.f32 %v512, %v736
  %v738 = vpop.f32.mrb[0].mxu0
  %739 = vmatprep.mubr.f32.mxu0 %v117
  %740 = vmatmul.mubr.f32.gmra.mrb[0].mxu0 %v116
  %v741 = vpop.f32.mrb[0].mxu0
  %v742 = vadd.f32 %v517, %v741
  %v743 = vpop.f32.mrb[0].mxu0
  %744 = vmatprep.mubr.f32.mxu0 %v122
  %745 = vmatmul.mubr.f32.gmra.mrb[0].mxu0 %v121
  %v746 = vpop.f32.mrb[0].mxu0
  %v747 = vadd.f32 %v522, %v746
  %v748 = vpop.f32.mrb[0].mxu0
  %749 = vmatprep.mubr.f32.mxu0 %v127
  %750 = vmatmul.mubr.f32.gmra.mrb[0].mxu0 %v126
  %v751 = vpop.f32.mrb[0].mxu0
  %v752 = vadd.f32 %v527, %v751
  %v753 = vpop.f32.mrb[0].mxu0
  %754 = vmatprep.mubr.f32.mxu0 %v132
  %755 = vmatmul.mubr.f32.gmra.mrb[0].mxu0 %v131
  %v756 = vpop.f32.mrb[0].mxu0
  %v757 = vadd.f32 %v532, %v756
  %v758 = vpop.f32.mrb[0].mxu0
  %759 = vmatprep.mubr.f32.mxu0 %v137
  %760 = vmatmul.mubr.f32.gmra.mrb[0].mxu0 %v136
  %v761 = vpop.f32.mrb[0].mxu0
  %v762 = vadd.f32 %v537, %v761
  %v763 = vpop.f32.mrb[0].mxu0
  %764 = vmatprep.mubr.f32.mxu0 %v142
  %765 = vmatmul.mubr.f32.gmra.mrb[0].mxu0 %v141
  %v766 = vpop.f32.mrb[0].mxu0
  %v767 = vadd.f32 %v542, %v766
  %v768 = vpop.f32.mrb[0].mxu0
  %769 = vmatprep.mubr.f32.mxu0 %v147
  %770 = vmatmul.mubr.f32.gmra.mrb[0].mxu0 %v146
  %v771 = vpop.f32.mrb[0].mxu0
  %v772 = vadd.f32 %v547, %v771
  %v773 = vpop.f32.mrb[0].mxu0
  %774 = vmatprep.mubr.f32.mxu0 %v152
  %775 = vmatmul.mubr.f32.gmra.mrb[0].mxu0 %v151
  %v776 = vpop.f32.mrb[0].mxu0
  %v777 = vadd.f32 %v552, %v776
  %v778 = vpop.f32.mrb[0].mxu0
  %779 = vmatprep.mubr.f32.mxu0 %v157
  %780 = vmatmul.mubr.f32.gmra.mrb[0].mxu0 %v156
  %v781 = vpop.f32.mrb[0].mxu0
  %v782 = vadd.f32 %v557, %v781
  %v783 = vpop.f32.mrb[0].mxu0
  %784 = vmatprep.mubr.f32.mxu0 %v162
  %785 = vmatmul.mubr.f32.gmra.mrb[0].mxu0 %v161
  %v786 = vpop.f32.mrb[0].mxu0
  %v787 = vadd.f32 %v562, %v786
  %v788 = vpop.f32.mrb[0].mxu0
  %789 = vmatprep.mubr.f32.mxu0 %v167
  %790 = vmatmul.mubr.f32.gmra.mrb[0].mxu0 %v166
  %v791 = vpop.f32.mrb[0].mxu0
  %v792 = vadd.f32 %v567, %v791
  %v793 = vpop.f32.mrb[0].mxu0
  %794 = vmatprep.mubr.f32.mxu0 %v172
  %795 = vmatmul.mubr.f32.gmra.mrb[0].mxu0 %v171
  %v796 = vpop.f32.mrb[0].mxu0
  %v797 = vadd.f32 %v572, %v796
  %v798 = vpop.f32.mrb[0].mxu0
  %799 = vdwg.mxu0
  %800 = vmatprep.subr.mxu0 0.0
  %801 = vmatpush1.msra.mxu0 %v238
  %802 = vmatprep.subr.mxu0 0.0
  %803 = vmatpush1.msra.mxu0 %v239
  %804 = vmatprep.subr.mxu0 0.0
  %805 = vmatpush1.msra.mxu0 %v240
  %806 = vmatprep.subr.mxu0 0.0
  %807 = vmatpush1.msra.mxu0 %v241
  %808 = vmatprep.subr.mxu0 0.0
  %809 = vmatpush1.msra.mxu0 %v242
  %810 = vmatprep.subr.mxu0 0.0
  %811 = vmatpush1.msra.mxu0 %v243
  %812 = vmatprep.subr.mxu0 0.0
  %813 = vmatpush1.msra.mxu0 %v244
  %814 = vmatprep.subr.mxu0 0.0
  %815 = vmatpush1.msra.mxu0 %v245
  %816 = vmatprep.subr.mxu0 0.0
  %817 = vmatpush1.msra.mxu0 0.0
  %818 = vmatprep.subr.mxu0 0.0
  %819 = vmatpush1.msra.mxu0 0.0
  %820 = vmatprep.subr.mxu0 0.0
  %821 = vmatpush1.msra.mxu0 0.0
  %822 = vmatprep.subr.mxu0 0.0
  %823 = vmatpush1.msra.mxu0 0.0
  %824 = vmatprep.subr.mxu0 0.0
  %825 = vmatpush1.msra.mxu0 0.0
  %826 = vmatprep.subr.mxu0 0.0
  %827 = vmatpush1.msra.mxu0 0.0
  %828 = vmatprep.subr.mxu0 0.0
  %829 = vmatpush1.msra.mxu0 0.0
  %830 = vmatprep.subr.mxu0 0.0
  %831 = vmatpush1.msra.mxu0 0.0
  %832 = vmatprep.subr.mxu0 0.0
  %833 = vmatpush1.msra.mxu0 0.0
  %834 = vmatprep.subr.mxu0 0.0
  %835 = vmatpush1.msra.mxu0 0.0
  %836 = vmatprep.subr.mxu0 0.0
  %837 = vmatpush1.msra.mxu0 0.0
  %838 = vmatprep.subr.mxu0 0.0
  %839 = vmatpush1.msra.mxu0 0.0
  %840 = vmatprep.subr.mxu0 0.0
  %841 = vmatpush1.msra.mxu0 0.0
  %842 = vmatprep.subr.mxu0 0.0
  %843 = vmatpush1.msra.mxu0 0.0
  %844 = vmatprep.subr.mxu0 0.0
  %845 = vmatpush1.msra.mxu0 0.0
  %846 = vmatprep.subr.mxu0 0.0
  %847 = vmatpush1.msra.mxu0 0.0
  %848 = vmatprep.subr.mxu0 0.0
  %849 = vmatpush1.msra.mxu0 0.0
  %850 = vmatprep.subr.mxu0 0.0
  %851 = vmatpush1.msra.mxu0 0.0
  %852 = vmatprep.subr.mxu0 0.0
  %853 = vmatpush1.msra.mxu0 0.0
  %854 = vmatprep.subr.mxu0 0.0
  %855 = vmatpush1.msra.mxu0 0.0
  %856 = vmatprep.subr.mxu0 0.0
  %857 = vmatpush1.msra.mxu0 0.0
  %858 = vmatprep.subr.mxu0 0.0
  %859 = vmatpush1.msra.mxu0 0.0
  %860 = vmatprep.subr.mxu0 0.0
  %861 = vmatpush1.msra.mxu0 0.0
  %862 = vmatprep.subr.mxu0 0.0
  %863 = vmatpush1.msra.mxu0 0.0
  %864 = vmatprep.mubr.f32.mxu0 0.0
  %865 = vmatmul.mubr.f32.gmra.mrb[0].mxu0 %v255
  %v866 = vpop.f32.mrb[0].mxu0
  %v867 = vadd.f32 %v642, %v866
  %v868 = vpop.f32.mrb[0].mxu0
  %869 = vmatprep.mubr.f32.mxu0 0.0
  %870 = vmatmul.mubr.f32.gmra.mrb[0].mxu0 %v258
  %v871 = vpop.f32.mrb[0].mxu0
  %v872 = vadd.f32 %v647, %v871
  %v873 = vpop.f32.mrb[0].mxu0
  %874 = vmatprep.mubr.f32.mxu0 0.0
  %875 = vmatmul.mubr.f32.gmra.mrb[0].mxu0 %v261
  %v876 = vpop.f32.mrb[0].mxu0
  %v877 = vadd.f32 %v652, %v876
  %v878 = vpop.f32.mrb[0].mxu0
  %879 = vmatprep.mubr.f32.mxu0 0.0
  %880 = vmatmul.mubr.f32.gmra.mrb[0].mxu0 %v264
  %v881 = vpop.f32.mrb[0].mxu0
  %v882 = vadd.f32 %v657, %v881
  %v883 = vpop.f32.mrb[0].mxu0
  %884 = vmatprep.mubr.f32.mxu0 0.0
  %885 = vmatmul.mubr.f32.gmra.mrb[0].mxu0 %v267
  %v886 = vpop.f32.mrb[0].mxu0
  %v887 = vadd.f32 %v662, %v886
  %v888 = vpop.f32.mrb[0].mxu0
  %889 = vmatprep.mubr.f32.mxu0 0.0
  %890 = vmatmul.mubr.f32.gmra.mrb[0].mxu0 %v270
  %v891 = vpop.f32.mrb[0].mxu0
  %v892 = vadd.f32 %v667, %v891
  %v893 = vpop.f32.mrb[0].mxu0
  %894 = vmatprep.mubr.f32.mxu0 0.0
  %895 = vmatmul.mubr.f32.gmra.mrb[0].mxu0 %v273
  %v896 = vpop.f32.mrb[0].mxu0
  %v897 = vadd.f32 %v672, %v896
  %v898 = vpop.f32.mrb[0].mxu0
  %899 = vmatprep.mubr.f32.mxu0 0.0
  %900 = vmatmul.mubr.f32.gmra.mrb[0].mxu0 %v276
  %v901 = vpop.f32.mrb[0].mxu0
  %v902 = vadd.f32 %v677, %v901
  %v903 = vpop.f32.mrb[0].mxu0
  %904 = vmatprep.mubr.f32.mxu0 0.0
  %905 = vmatmul.mubr.f32.gmra.mrb[0].mxu0 %v279
  %v906 = vpop.f32.mrb[0].mxu0
  %v907 = vadd.f32 %v682, %v906
  %v908 = vpop.f32.mrb[0].mxu0
  %909 = vmatprep.mubr.f32.mxu0 0.0
  %910 = vmatmul.mubr.f32.gmra.mrb[0].mxu0 %v282
  %v911 = vpop.f32.mrb[0].mxu0
  %v912 = vadd.f32 %v687, %v911
  %v913 = vpop.f32.mrb[0].mxu0
  %914 = vmatprep.mubr.f32.mxu0 0.0
  %915 = vmatmul.mubr.f32.gmra.mrb[0].mxu0 %v285
  %v916 = vpop.f32.mrb[0].mxu0
  %v917 = vadd.f32 %v692, %v916
  %v918 = vpop.f32.mrb[0].mxu0
  %919 = vmatprep.mubr.f32.mxu0 0.0
  %920 = vmatmul.mubr.f32.gmra.mrb[0].mxu0 %v288
  %v921 = vpop.f32.mrb[0].mxu0
  %v922 = vadd.f32 %v697, %v921
  %v923 = vpop.f32.mrb[0].mxu0
  %924 = vmatprep.mubr.f32.mxu0 0.0
  %925 = vmatmul.mubr.f32.gmra.mrb[0].mxu0 %v291
  %v926 = vpop.f32.mrb[0].mxu0
  %v927 = vadd.f32 %v702, %v926
  %v928 = vpop.f32.mrb[0].mxu0
  %929 = vmatprep.mubr.f32.mxu0 0.0
  %930 = vmatmul.mubr.f32.gmra.mrb[0].mxu0 %v294
  %v931 = vpop.f32.mrb[0].mxu0
  %v932 = vadd.f32 %v707, %v931
  %v933 = vpop.f32.mrb[0].mxu0
  %934 = vmatprep.mubr.f32.mxu0 0.0
  %935 = vmatmul.mubr.f32.gmra.mrb[0].mxu0 %v297
  %v936 = vpop.f32.mrb[0].mxu0
  %v937 = vadd.f32 %v712, %v936
  %v938 = vpop.f32.mrb[0].mxu0
  %939 = vmatprep.mubr.f32.mxu0 0.0
  %940 = vmatmul.mubr.f32.gmra.mrb[0].mxu0 %v300
  %v941 = vpop.f32.mrb[0].mxu0
  %v942 = vadd.f32 %v717, %v941
  %v943 = vpop.f32.mrb[0].mxu0
  %944 = vmatprep.mubr.f32.mxu0 0.0
  %945 = vmatmul.mubr.f32.gmra.mrb[0].mxu0 %v303
  %v946 = vpop.f32.mrb[0].mxu0
  %v947 = vadd.f32 %v722, %v946
  %v948 = vpop.f32.mrb[0].mxu0
  %949 = vmatprep.mubr.f32.mxu0 0.0
  %950 = vmatmul.mubr.f32.gmra.mrb[0].mxu0 %v306
  %v951 = vpop.f32.mrb[0].mxu0
  %v952 = vadd.f32 %v727, %v951
  %v953 = vpop.f32.mrb[0].mxu0
  %954 = vmatprep.mubr.f32.mxu0 0.0
  %955 = vmatmul.mubr.f32.gmra.mrb[0].mxu0 %v309
  %v956 = vpop.f32.mrb[0].mxu0
  %v957 = vadd.f32 %v732, %v956
  %v958 = vpop.f32.mrb[0].mxu0
  %959 = vmatprep.mubr.f32.mxu0 0.0
  %960 = vmatmul.mubr.f32.gmra.mrb[0].mxu0 %v312
  %v961 = vpop.f32.mrb[0].mxu0
  %v962 = vadd.f32 %v737, %v961
  %v963 = vpop.f32.mrb[0].mxu0
  %964 = vmatprep.mubr.f32.mxu0 0.0
  %965 = vmatmul.mubr.f32.gmra.mrb[0].mxu0 %v315
  %v966 = vpop.f32.mrb[0].mxu0
  %v967 = vadd.f32 %v742, %v966
  %v968 = vpop.f32.mrb[0].mxu0
  %969 = vmatprep.mubr.f32.mxu0 0.0
  %970 = vmatmul.mubr.f32.gmra.mrb[0].mxu0 %v318
  %v971 = vpop.f32.mrb[0].mxu0
  %v972 = vadd.f32 %v747, %v971
  %v973 = vpop.f32.mrb[0].mxu0
  %974 = vmatprep.mubr.f32.mxu0 0.0
  %975 = vmatmul.mubr.f32.gmra.mrb[0].mxu0 %v321
  %v976 = vpop.f32.mrb[0].mxu0
  %v977 = vadd.f32 %v752, %v976
  %v978 = vpop.f32.mrb[0].mxu0
  %979 = vmatprep.mubr.f32.mxu0 0.0
  %980 = vmatmul.mubr.f32.gmra.mrb[0].mxu0 %v324
  %v981 = vpop.f32.mrb[0].mxu0
  %v982 = vadd.f32 %v757, %v981
  %v983 = vpop.f32.mrb[0].mxu0
  %984 = vmatprep.mubr.f32.mxu0 0.0
  %985 = vmatmul.mubr.f32.gmra.mrb[0].mxu0 %v327
  %v986 = vpop.f32.mrb[0].mxu0
  %v987 = vadd.f32 %v762, %v986
  %v988 = vpop.f32.mrb[0].mxu0
  %989 = vmatprep.mubr.f32.mxu0 0.0
  %990 = vmatmul.mubr.f32.gmra.mrb[0].mxu0 %v330
  %v991 = vpop.f32.mrb[0].mxu0
  %v992 = vadd.f32 %v767, %v991
  %v993 = vpop.f32.mrb[0].mxu0
  %994 = vmatprep.mubr.f32.mxu0 0.0
  %995 = vmatmul.mubr.f32.gmra.mrb[0].mxu0 %v333
  %v996 = vpop.f32.mrb[0].mxu0
  %v997 = vadd.f32 %v772, %v996
  %v998 = vpop.f32.mrb[0].mxu0
  %999 = vmatprep.mubr.f32.mxu0 0.0
  %1000 = vmatmul.mubr.f32.gmra.mrb[0].mxu0 %v336
  %v1001 = vpop.f32.mrb[0].mxu0
  %v1002 = vadd.f32 %v777, %v1001
  %v1003 = vpop.f32.mrb[0].mxu0
  %1004 = vmatprep.mubr.f32.mxu0 0.0
  %1005 = vmatmul.mubr.f32.gmra.mrb[0].mxu0 %v339
  %v1006 = vpop.f32.mrb[0].mxu0
  %v1007 = vadd.f32 %v782, %v1006
  %v1008 = vpop.f32.mrb[0].mxu0
  %1009 = vmatprep.mubr.f32.mxu0 0.0
  %1010 = vmatmul.mubr.f32.gmra.mrb[0].mxu0 %v342
  %v1011 = vpop.f32.mrb[0].mxu0
  %v1012 = vadd.f32 %v787, %v1011
  %v1013 = vpop.f32.mrb[0].mxu0
  %1014 = vmatprep.mubr.f32.mxu0 0.0
  %1015 = vmatmul.mubr.f32.gmra.mrb[0].mxu0 %v345
  %v1016 = vpop.f32.mrb[0].mxu0
  %v1017 = vadd.f32 %v792, %v1016
  %v1018 = vpop.f32.mrb[0].mxu0
  %1019 = vmatprep.mubr.f32.mxu0 0.0
  %1020 = vmatmul.mubr.f32.gmra.mrb[0].mxu0 %v348
  %v1021 = vpop.f32.mrb[0].mxu0
  %v1022 = vadd.f32 %v797, %v1021
  %v1023 = vpop.f32.mrb[0].mxu0
  %1024 = vdwg.mxu0
  %v1025 = vxor.u32 %v867, 2147483648
  %v1026 = vxor.u32 %v872, 2147483648
  %v1027 = vxor.u32 %v877, 2147483648
  %v1028 = vxor.u32 %v882, 2147483648
  %v1029 = vxor.u32 %v887, 2147483648
  %v1030 = vxor.u32 %v892, 2147483648
  %v1031 = vxor.u32 %v897, 2147483648
  %v1032 = vxor.u32 %v902, 2147483648
  %v1033 = vxor.u32 %v907, 2147483648
  %v1034 = vxor.u32 %v912, 2147483648
  %v1035 = vxor.u32 %v917, 2147483648
  %v1036 = vxor.u32 %v922, 2147483648
  %v1037 = vxor.u32 %v927, 2147483648
  %v1038 = vxor.u32 %v932, 2147483648
  %v1039 = vxor.u32 %v937, 2147483648
  %v1040 = vxor.u32 %v942, 2147483648
  %v1041 = vxor.u32 %v947, 2147483648
  %v1042 = vxor.u32 %v952, 2147483648
  %v1043 = vxor.u32 %v957, 2147483648
  %v1044 = vxor.u32 %v962, 2147483648
  %v1045 = vxor.u32 %v967, 2147483648
  %v1046 = vxor.u32 %v972, 2147483648
  %v1047 = vxor.u32 %v977, 2147483648
  %v1048 = vxor.u32 %v982, 2147483648
  %v1049 = vxor.u32 %v987, 2147483648
  %v1050 = vxor.u32 %v992, 2147483648
  %v1051 = vxor.u32 %v997, 2147483648
  %v1052 = vxor.u32 %v1002, 2147483648
  %v1053 = vxor.u32 %v1007, 2147483648
  %v1054 = vxor.u32 %v1012, 2147483648
  %v1055 = vxor.u32 %v1017, 2147483648
  %v1056 = vxor.u32 %v1022, 2147483648
  %v1057 = vmul.f32 %v1025, 1.442695
  %v1058 = vpow.pop %v1057
  %v1059 = vmul.f32 %v1026, 1.442695
  %v1060 = vpow.pop %v1059
  %v1061 = vmul.f32 %v1027, 1.442695
  %v1062 = vpow.pop %v1061
  %v1063 = vmul.f32 %v1028, 1.442695
  %v1064 = vpow.pop %v1063
  %v1065 = vmul.f32 %v1029, 1.442695
  %v1066 = vpow.pop %v1065
  %v1067 = vmul.f32 %v1030, 1.442695
  %v1068 = vpow.pop %v1067
  %v1069 = vmul.f32 %v1031, 1.442695
  %v1070 = vpow.pop %v1069
  %v1071 = vmul.f32 %v1032, 1.442695
  %v1072 = vpow.pop %v1071
  %v1073 = vmul.f32 %v1033, 1.442695
  %v1074 = vpow.pop %v1073
  %v1075 = vmul.f32 %v1034, 1.442695
  %v1076 = vpow.pop %v1075
  %v1077 = vmul.f32 %v1035, 1.442695
  %v1078 = vpow.pop %v1077
  %v1079 = vmul.f32 %v1036, 1.442695
  %v1080 = vpow.pop %v1079
  %v1081 = vmul.f32 %v1037, 1.442695
  %v1082 = vpow.pop %v1081
  %v1083 = vmul.f32 %v1038, 1.442695
  %v1084 = vpow.pop %v1083
  %v1085 = vmul.f32 %v1039, 1.442695
  %v1086 = vpow.pop %v1085
  %v1087 = vmul.f32 %v1040, 1.442695
  %v1088 = vpow.pop %v1087
  %v1089 = vmul.f32 %v1041, 1.442695
  %v1090 = vpow.pop %v1089
  %v1091 = vmul.f32 %v1042, 1.442695
  %v1092 = vpow.pop %v1091
  %v1093 = vmul.f32 %v1043, 1.442695
  %v1094 = vpow.pop %v1093
  %v1095 = vmul.f32 %v1044, 1.442695
  %v1096 = vpow.pop %v1095
  %v1097 = vmul.f32 %v1045, 1.442695
  %v1098 = vpow.pop %v1097
  %v1099 = vmul.f32 %v1046, 1.442695
  %v1100 = vpow.pop %v1099
  %v1101 = vmul.f32 %v1047, 1.442695
  %v1102 = vpow.pop %v1101
  %v1103 = vmul.f32 %v1048, 1.442695
  %v1104 = vpow.pop %v1103
  %v1105 = vmul.f32 %v1049, 1.442695
  %v1106 = vpow.pop %v1105
  %v1107 = vmul.f32 %v1050, 1.442695
  %v1108 = vpow.pop %v1107
  %v1109 = vmul.f32 %v1051, 1.442695
  %v1110 = vpow.pop %v1109
  %v1111 = vmul.f32 %v1052, 1.442695
  %v1112 = vpow.pop %v1111
  %v1113 = vmul.f32 %v1053, 1.442695
  %v1114 = vpow.pop %v1113
  %v1115 = vmul.f32 %v1054, 1.442695
  %v1116 = vpow.pop %v1115
  %v1117 = vmul.f32 %v1055, 1.442695
  %v1118 = vpow.pop %v1117
  %v1119 = vmul.f32 %v1056, 1.442695
  %v1120 = vpow.pop %v1119
  %v1121 = vadd.f32 %v1058, 1.0
  %v1122 = vadd.f32 %v1060, 1.0
  %v1123 = vadd.f32 %v1062, 1.0
  %v1124 = vadd.f32 %v1064, 1.0
  %v1125 = vadd.f32 %v1066, 1.0
  %v1126 = vadd.f32 %v1068, 1.0
  %v1127 = vadd.f32 %v1070, 1.0
  %v1128 = vadd.f32 %v1072, 1.0
  %v1129 = vadd.f32 %v1074, 1.0
  %v1130 = vadd.f32 %v1076, 1.0
  %v1131 = vadd.f32 %v1078, 1.0
  %v1132 = vadd.f32 %v1080, 1.0
  %v1133 = vadd.f32 %v1082, 1.0
  %v1134 = vadd.f32 %v1084, 1.0
  %v1135 = vadd.f32 %v1086, 1.0
  %v1136 = vadd.f32 %v1088, 1.0
  %v1137 = vadd.f32 %v1090, 1.0
  %v1138 = vadd.f32 %v1092, 1.0
  %v1139 = vadd.f32 %v1094, 1.0
  %v1140 = vadd.f32 %v1096, 1.0
  %v1141 = vadd.f32 %v1098, 1.0
  %v1142 = vadd.f32 %v1100, 1.0
  %v1143 = vadd.f32 %v1102, 1.0
  %v1144 = vadd.f32 %v1104, 1.0
  %v1145 = vadd.f32 %v1106, 1.0
  %v1146 = vadd.f32 %v1108, 1.0
  %v1147 = vadd.f32 %v1110, 1.0
  %v1148 = vadd.f32 %v1112, 1.0
  %v1149 = vadd.f32 %v1114, 1.0
  %v1150 = vadd.f32 %v1116, 1.0
  %v1151 = vadd.f32 %v1118, 1.0
  %v1152 = vadd.f32 %v1120, 1.0
  %v1153 = vrcp.pop %v1121
  %v1154 = vmul.f32 1.0, %v1153
  %v1155 = vrcp.pop %v1122
  %v1156 = vmul.f32 1.0, %v1155
  %v1157 = vrcp.pop %v1123
  %v1158 = vmul.f32 1.0, %v1157
  %v1159 = vrcp.pop %v1124
  %v1160 = vmul.f32 1.0, %v1159
  %v1161 = vrcp.pop %v1125
  %v1162 = vmul.f32 1.0, %v1161
  %v1163 = vrcp.pop %v1126
  %v1164 = vmul.f32 1.0, %v1163
  %v1165 = vrcp.pop %v1127
  %v1166 = vmul.f32 1.0, %v1165
  %v1167 = vrcp.pop %v1128
  %v1168 = vmul.f32 1.0, %v1167
  %v1169 = vrcp.pop %v1129
  %v1170 = vmul.f32 1.0, %v1169
  %v1171 = vrcp.pop %v1130
  %v1172 = vmul.f32 1.0, %v1171
  %v1173 = vrcp.pop %v1131
  %v1174 = vmul.f32 1.0, %v1173
  %v1175 = vrcp.pop %v1132
  %v1176 = vmul.f32 1.0, %v1175
  %v1177 = vrcp.pop %v1133
  %v1178 = vmul.f32 1.0, %v1177
  %v1179 = vrcp.pop %v1134
  %v1180 = vmul.f32 1.0, %v1179
  %v1181 = vrcp.pop %v1135
  %v1182 = vmul.f32 1.0, %v1181
  %v1183 = vrcp.pop %v1136
  %v1184 = vmul.f32 1.0, %v1183
  %v1185 = vrcp.pop %v1137
  %v1186 = vmul.f32 1.0, %v1185
  %v1187 = vrcp.pop %v1138
  %v1188 = vmul.f32 1.0, %v1187
  %v1189 = vrcp.pop %v1139
  %v1190 = vmul.f32 1.0, %v1189
  %v1191 = vrcp.pop %v1140
  %v1192 = vmul.f32 1.0, %v1191
  %v1193 = vrcp.pop %v1141
  %v1194 = vmul.f32 1.0, %v1193
  %v1195 = vrcp.pop %v1142
  %v1196 = vmul.f32 1.0, %v1195
  %v1197 = vrcp.pop %v1143
  %v1198 = vmul.f32 1.0, %v1197
  %v1199 = vrcp.pop %v1144
  %v1200 = vmul.f32 1.0, %v1199
  %v1201 = vrcp.pop %v1145
  %v1202 = vmul.f32 1.0, %v1201
  %v1203 = vrcp.pop %v1146
  %v1204 = vmul.f32 1.0, %v1203
  %v1205 = vrcp.pop %v1147
  %v1206 = vmul.f32 1.0, %v1205
  %v1207 = vrcp.pop %v1148
  %v1208 = vmul.f32 1.0, %v1207
  %v1209 = vrcp.pop %v1149
  %v1210 = vmul.f32 1.0, %v1209
  %v1211 = vrcp.pop %v1150
  %v1212 = vmul.f32 1.0, %v1211
  %v1213 = vrcp.pop %v1151
  %v1214 = vmul.f32 1.0, %v1213
  %v1215 = vrcp.pop %v1152
  %v1216 = vmul.f32 1.0, %v1215
  %v1217 = vmul.f32 %v867, %v1154
  %v1218 = vmul.f32 %v872, %v1156
  %v1219 = vmul.f32 %v877, %v1158
  %v1220 = vmul.f32 %v882, %v1160
  %v1221 = vmul.f32 %v887, %v1162
  %v1222 = vmul.f32 %v892, %v1164
  %v1223 = vmul.f32 %v897, %v1166
  %v1224 = vmul.f32 %v902, %v1168
  %v1225 = vmul.f32 %v907, %v1170
  %v1226 = vmul.f32 %v912, %v1172
  %v1227 = vmul.f32 %v917, %v1174
  %v1228 = vmul.f32 %v922, %v1176
  %v1229 = vmul.f32 %v927, %v1178
  %v1230 = vmul.f32 %v932, %v1180
  %v1231 = vmul.f32 %v937, %v1182
  %v1232 = vmul.f32 %v942, %v1184
  %v1233 = vmul.f32 %v947, %v1186
  %v1234 = vmul.f32 %v952, %v1188
  %v1235 = vmul.f32 %v957, %v1190
  %v1236 = vmul.f32 %v962, %v1192
  %v1237 = vmul.f32 %v967, %v1194
  %v1238 = vmul.f32 %v972, %v1196
  %v1239 = vmul.f32 %v977, %v1198
  %v1240 = vmul.f32 %v982, %v1200
  %v1241 = vmul.f32 %v987, %v1202
  %v1242 = vmul.f32 %v992, %v1204
  %v1243 = vmul.f32 %v997, %v1206
  %v1244 = vmul.f32 %v1002, %v1208
  %v1245 = vmul.f32 %v1007, %v1210
  %v1246 = vmul.f32 %v1012, %v1212
  %v1247 = vmul.f32 %v1017, %v1214
  %v1248 = vmul.f32 %v1022, %v1216
  %1249 = vst [vmem:[%s3] sm:$0xff] %v1217
  %1250 = vst [vmem:[%s3 + $0x8] sm:$0xff] %v1218
  %1251 = vst [vmem:[%s3 + $0x10] sm:$0xff] %v1219
  %1252 = vst [vmem:[%s3 + $0x18] sm:$0xff] %v1220
  %1253 = vst [vmem:[%s3 + $0x20] sm:$0xff] %v1221
  %1254 = vst [vmem:[%s3 + $0x28] sm:$0xff] %v1222
  %1255 = vst [vmem:[%s3 + $0x30] sm:$0xff] %v1223
  %1256 = vst [vmem:[%s3 + $0x38] sm:$0xff] %v1224
  %1257 = vst [vmem:[%s3 + $0x40] sm:$0xff] %v1225
  %1258 = vst [vmem:[%s3 + $0x48] sm:$0xff] %v1226
  %1259 = vst [vmem:[%s3 + $0x50] sm:$0xff] %v1227
  %1260 = vst [vmem:[%s3 + $0x58] sm:$0xff] %v1228
  %1261 = vst [vmem:[%s3 + $0x60] sm:$0xff] %v1229
  %1262 = vst [vmem:[%s3 + $0x68] sm:$0xff] %v1230
  %1263 = vst [vmem:[%s3 + $0x70] sm:$0xff] %v1231
  %1264 = vst [vmem:[%s3 + $0x78] sm:$0xff] %v1232
  %1265 = vst [vmem:[%s3 + $0x80] sm:$0xff] %v1233
  %1266 = vst [vmem:[%s3 + $0x88] sm:$0xff] %v1234
  %1267 = vst [vmem:[%s3 + $0x90] sm:$0xff] %v1235
  %1268 = vst [vmem:[%s3 + $0x98] sm:$0xff] %v1236
  %1269 = vst [vmem:[%s3 + $0xa0] sm:$0xff] %v1237
  %1270 = vst [vmem:[%s3 + $0xa8] sm:$0xff] %v1238
  %1271 = vst [vmem:[%s3 + $0xb0] sm:$0xff] %v1239
  %1272 = vst [vmem:[%s3 + $0xb8] sm:$0xff] %v1240
  %1273 = vst [vmem:[%s3 + $0xc0] sm:$0xff] %v1241
  %1274 = vst [vmem:[%s3 + $0xc8] sm:$0xff] %v1242
  %1275 = vst [vmem:[%s3 + $0xd0] sm:$0xff] %v1243
  %1276 = vst [vmem:[%s3 + $0xd8] sm:$0xff] %v1244
  %1277 = vst [vmem:[%s3 + $0xe0] sm:$0xff] %v1245
  %1278 = vst [vmem:[%s3 + $0xe8] sm:$0xff] %v1246
  %1279 = vst [vmem:[%s3 + $0xf0] sm:$0xff] %v1247
  %1280 = vst [vmem:[%s3 + $0xf8] sm:$0xff] %v1248
  // Predicated region
  $region14: #{encoder_with_svtr_forward.20} parent=0 // pred_check
    _
  $region15: #{encoder_with_svtr_forward.20} parent=0 // pred_check_branch
    %1282 = sbr.rel (0) target = $region17
  $region16: #{encoder_with_svtr_forward.20} parent=0 // pred_region
    _
  $region17: #{encoder_with_svtr_forward.20} parent=0 // pred_fallthru
    _
  // Predicated region
  $region18: #{encoder_with_svtr_forward.20} parent=0 // pred_check
    _
  $region19: #{encoder_with_svtr_forward.20} parent=0 // pred_check_branch
    %1284 = sbr.rel (0) target = $region21
  $region20: #{encoder_with_svtr_forward.20} parent=0 // pred_region
    _
  $region21: #{encoder_with_svtr_forward.20} parent=0 // pred_fallthru
    _

// kernel: encoder_with_svtr_forward.22
$region0: #{encoder_with_svtr_forward.22}
  #allocation0 [shape = 'u32[]', space=smem, size = 0x4, offset = 0x4, fixed_abs, tag = 'smem constant byte address 0x4 - core index']
  #allocation1 [shape = 'u32[144,128]{1,0:T(1,128)}', space=vmem, size = 0x12000, scoped, tag = 'internal scratch']
  %s0 = inlined_call_operand.vmem [shape: f32[256,120], index: 0, kind: input, shape index: {}]
  %s1 = inlined_call_operand.vmem [shape: f32[1,120], index: 1, kind: input, shape index: {}]
  %s2 = inlined_call_operand.vmem [shape: f32[1,120], index: 2, kind: input, shape index: {}]
  %s3 = inlined_call_operand.vmem [shape: f32[256,120], index: 3, kind: output, shape index: {}]
  %s4 = sld [smem:[#allocation0]]
  $region22: #{encoder_with_svtr_forward.22} parent=0
    _
  %s6 = ssub.s32 1, %s4
  %s7 = scalar_select 0, %s6, %s4
  // Predicated region
  $region2: #{encoder_with_svtr_forward.22} parent=0 // pred_check
    _
  $region3: #{encoder_with_svtr_forward.22} parent=0 // pred_check_branch
    %9 = sbr.rel (0) target = $region5
  $region4: #{encoder_with_svtr_forward.22} parent=0 // pred_region
    _
  $region5: #{encoder_with_svtr_forward.22} parent=0 // pred_fallthru
    _
  // Predicated region
  $region6: #{encoder_with_svtr_forward.22} parent=0 // pred_check
    _
  $region7: #{encoder_with_svtr_forward.22} parent=0 // pred_check_branch
    %11 = sbr.rel (0) target = $region9
  $region8: #{encoder_with_svtr_forward.22} parent=0 // pred_region
    _
  $region9: #{encoder_with_svtr_forward.22} parent=0 // pred_fallthru
    _
  // Predicated region
  $region10: #{encoder_with_svtr_forward.22} parent=0 // pred_check
    _
  $region11: #{encoder_with_svtr_forward.22} parent=0 // pred_check_branch
    %13 = sbr.rel (0) target = $region13
  $region12: #{encoder_with_svtr_forward.22} parent=0 // pred_region
    _
  $region13: #{encoder_with_svtr_forward.22} parent=0 // pred_fallthru
    _
  %v14 = vld [vmem:[%s0] sm:$0xff]
  %v15 = vld [vmem:[%s0 + $0x8] sm:$0xff]
  %v16 = vld [vmem:[%s0 + $0x10] sm:$0xff]
  %v17 = vld [vmem:[%s0 + $0x18] sm:$0xff]
  %v18 = vld [vmem:[%s0 + $0x20] sm:$0xff]
  %v19 = vld [vmem:[%s0 + $0x28] sm:$0xff]
  %v20 = vld [vmem:[%s0 + $0x30] sm:$0xff]
  %v21 = vld [vmem:[%s0 + $0x38] sm:$0xff]
  %v22 = vld [vmem:[%s0 + $0x40] sm:$0xff]
  %v23 = vld [vmem:[%s0 + $0x48] sm:$0xff]
  %v24 = vld [vmem:[%s0 + $0x50] sm:$0xff]
  %v25 = vld [vmem:[%s0 + $0x58] sm:$0xff]
  %v26 = vld [vmem:[%s0 + $0x60] sm:$0xff]
  %v27 = vld [vmem:[%s0 + $0x68] sm:$0xff]
  %v28 = vld [vmem:[%s0 + $0x70] sm:$0xff]
  %v29 = vld [vmem:[%s0 + $0x78] sm:$0xff]
  %v30 = vld [vmem:[%s0 + $0x80] sm:$0xff]
  %v31 = vld [vmem:[%s0 + $0x88] sm:$0xff]
  %v32 = vld [vmem:[%s0 + $0x90] sm:$0xff]
  %v33 = vld [vmem:[%s0 + $0x98] sm:$0xff]
  %v34 = vld [vmem:[%s0 + $0xa0] sm:$0xff]
  %v35 = vld [vmem:[%s0 + $0xa8] sm:$0xff]
  %v36 = vld [vmem:[%s0 + $0xb0] sm:$0xff]
  %v37 = vld [vmem:[%s0 + $0xb8] sm:$0xff]
  %v38 = vld [vmem:[%s0 + $0xc0] sm:$0xff]
  %v39 = vld [vmem:[%s0 + $0xc8] sm:$0xff]
  %v40 = vld [vmem:[%s0 + $0xd0] sm:$0xff]
  %v41 = vld [vmem:[%s0 + $0xd8] sm:$0xff]
  %v42 = vld [vmem:[%s0 + $0xe0] sm:$0xff]
  %v43 = vld [vmem:[%s0 + $0xe8] sm:$0xff]
  %v44 = vld [vmem:[%s0 + $0xf0] sm:$0xff]
  %v45 = vld [vmem:[%s0 + $0xf8] sm:$0xff]
  %vm46 = vcmask 982016
  %v47 = vsel %vm46, %v14, 0.0
  %48 = vadd.xlane.f32.xlu0 %v47
  %v49 = vpop.xlane.xlu0 %48
  %v50 = vsel %vm46, %v15, 0.0
  %51 = vadd.xlane.f32.xlu0 %v50
  %v52 = vpop.xlane.xlu0 %51
  %v53 = vsel %vm46, %v16, 0.0
  %54 = vadd.xlane.f32.xlu0 %v53
  %v55 = vpop.xlane.xlu0 %54
  %v56 = vsel %vm46, %v17, 0.0
  %57 = vadd.xlane.f32.xlu0 %v56
  %v58 = vpop.xlane.xlu0 %57
  %v59 = vsel %vm46, %v18, 0.0
  %60 = vadd.xlane.f32.xlu0 %v59
  %v61 = vpop.xlane.xlu0 %60
  %v62 = vsel %vm46, %v19, 0.0
  %63 = vadd.xlane.f32.xlu0 %v62
  %v64 = vpop.xlane.xlu0 %63
  %v65 = vsel %vm46, %v20, 0.0
  %66 = vadd.xlane.f32.xlu0 %v65
  %v67 = vpop.xlane.xlu0 %66
  %v68 = vsel %vm46, %v21, 0.0
  %69 = vadd.xlane.f32.xlu0 %v68
  %v70 = vpop.xlane.xlu0 %69
  %v71 = vsel %vm46, %v22, 0.0
  %72 = vadd.xlane.f32.xlu0 %v71
  %v73 = vpop.xlane.xlu0 %72
  %v74 = vsel %vm46, %v23, 0.0
  %75 = vadd.xlane.f32.xlu0 %v74
  %v76 = vpop.xlane.xlu0 %75
  %v77 = vsel %vm46, %v24, 0.0
  %78 = vadd.xlane.f32.xlu0 %v77
  %v79 = vpop.xlane.xlu0 %78
  %v80 = vsel %vm46, %v25, 0.0
  %81 = vadd.xlane.f32.xlu0 %v80
  %v82 = vpop.xlane.xlu0 %81
  %v83 = vsel %vm46, %v26, 0.0
  %84 = vadd.xlane.f32.xlu0 %v83
  %v85 = vpop.xlane.xlu0 %84
  %v86 = vsel %vm46, %v27, 0.0
  %87 = vadd.xlane.f32.xlu0 %v86
  %v88 = vpop.xlane.xlu0 %87
  %v89 = vsel %vm46, %v28, 0.0
  %90 = vadd.xlane.f32.xlu0 %v89
  %v91 = vpop.xlane.xlu0 %90
  %v92 = vsel %vm46, %v29, 0.0
  %93 = vadd.xlane.f32.xlu0 %v92
  %v94 = vpop.xlane.xlu0 %93
  %v95 = vsel %vm46, %v30, 0.0
  %96 = vadd.xlane.f32.xlu0 %v95
  %v97 = vpop.xlane.xlu0 %96
  %v98 = vsel %vm46, %v31, 0.0
  %99 = vadd.xlane.f32.xlu0 %v98
  %v100 = vpop.xlane.xlu0 %99
  %v101 = vsel %vm46, %v32, 0.0
  %102 = vadd.xlane.f32.xlu0 %v101
  %v103 = vpop.xlane.xlu0 %102
  %v104 = vsel %vm46, %v33, 0.0
  %105 = vadd.xlane.f32.xlu0 %v104
  %v106 = vpop.xlane.xlu0 %105
  %v107 = vsel %vm46, %v34, 0.0
  %108 = vadd.xlane.f32.xlu0 %v107
  %v109 = vpop.xlane.xlu0 %108
  %v110 = vsel %vm46, %v35, 0.0
  %111 = vadd.xlane.f32.xlu0 %v110
  %v112 = vpop.xlane.xlu0 %111
  %v113 = vsel %vm46, %v36, 0.0
  %114 = vadd.xlane.f32.xlu0 %v113
  %v115 = vpop.xlane.xlu0 %114
  %v116 = vsel %vm46, %v37, 0.0
  %117 = vadd.xlane.f32.xlu0 %v116
  %v118 = vpop.xlane.xlu0 %117
  %v119 = vsel %vm46, %v38, 0.0
  %120 = vadd.xlane.f32.xlu0 %v119
  %v121 = vpop.xlane.xlu0 %120
  %v122 = vsel %vm46, %v39, 0.0
  %123 = vadd.xlane.f32.xlu0 %v122
  %v124 = vpop.xlane.xlu0 %123
  %v125 = vsel %vm46, %v40, 0.0
  %126 = vadd.xlane.f32.xlu0 %v125
  %v127 = vpop.xlane.xlu0 %126
  %v128 = vsel %vm46, %v41, 0.0
  %129 = vadd.xlane.f32.xlu0 %v128
  %v130 = vpop.xlane.xlu0 %129
  %v131 = vsel %vm46, %v42, 0.0
  %132 = vadd.xlane.f32.xlu0 %v131
  %v133 = vpop.xlane.xlu0 %132
  %v134 = vsel %vm46, %v43, 0.0
  %135 = vadd.xlane.f32.xlu0 %v134
  %v136 = vpop.xlane.xlu0 %135
  %v137 = vsel %vm46, %v44, 0.0
  %138 = vadd.xlane.f32.xlu0 %v137
  %v139 = vpop.xlane.xlu0 %138
  %v140 = vsel %vm46, %v45, 0.0
  %141 = vadd.xlane.f32.xlu0 %v140
  %v142 = vpop.xlane.xlu0 %141
  %v143 = vrcp.pop 120.0
  %v144 = vmul.f32 %v49, %v143
  %v145 = vmul.f32 %v52, %v143
  %v146 = vmul.f32 %v55, %v143
  %v147 = vmul.f32 %v58, %v143
  %v148 = vmul.f32 %v61, %v143
  %v149 = vmul.f32 %v64, %v143
  %v150 = vmul.f32 %v67, %v143
  %v151 = vmul.f32 %v70, %v143
  %v152 = vmul.f32 %v73, %v143
  %v153 = vmul.f32 %v76, %v143
  %v154 = vmul.f32 %v79, %v143
  %v155 = vmul.f32 %v82, %v143
  %v156 = vmul.f32 %v85, %v143
  %v157 = vmul.f32 %v88, %v143
  %v158 = vmul.f32 %v91, %v143
  %v159 = vmul.f32 %v94, %v143
  %v160 = vmul.f32 %v97, %v143
  %v161 = vmul.f32 %v100, %v143
  %v162 = vmul.f32 %v103, %v143
  %v163 = vmul.f32 %v106, %v143
  %v164 = vmul.f32 %v109, %v143
  %v165 = vmul.f32 %v112, %v143
  %v166 = vmul.f32 %v115, %v143
  %v167 = vmul.f32 %v118, %v143
  %v168 = vmul.f32 %v121, %v143
  %v169 = vmul.f32 %v124, %v143
  %v170 = vmul.f32 %v127, %v143
  %v171 = vmul.f32 %v130, %v143
  %v172 = vmul.f32 %v133, %v143
  %v173 = vmul.f32 %v136, %v143
  %v174 = vmul.f32 %v139, %v143
  %v175 = vmul.f32 %v142, %v143
  %v176 = vsub.f32 %v14, %v144
  %v177 = vsub.f32 %v15, %v145
  %v178 = vsub.f32 %v16, %v146
  %v179 = vsub.f32 %v17, %v147
  %v180 = vsub.f32 %v18, %v148
  %v181 = vsub.f32 %v19, %v149
  %v182 = vsub.f32 %v20, %v150
  %v183 = vsub.f32 %v21, %v151
  %v184 = vsub.f32 %v22, %v152
  %v185 = vsub.f32 %v23, %v153
  %v186 = vsub.f32 %v24, %v154
  %v187 = vsub.f32 %v25, %v155
  %v188 = vsub.f32 %v26, %v156
  %v189 = vsub.f32 %v27, %v157
  %v190 = vsub.f32 %v28, %v158
  %v191 = vsub.f32 %v29, %v159
  %v192 = vsub.f32 %v30, %v160
  %v193 = vsub.f32 %v31, %v161
  %v194 = vsub.f32 %v32, %v162
  %v195 = vsub.f32 %v33, %v163
  %v196 = vsub.f32 %v34, %v164
  %v197 = vsub.f32 %v35, %v165
  %v198 = vsub.f32 %v36, %v166
  %v199 = vsub.f32 %v37, %v167
  %v200 = vsub.f32 %v38, %v168
  %v201 = vsub.f32 %v39, %v169
  %v202 = vsub.f32 %v40, %v170
  %v203 = vsub.f32 %v41, %v171
  %v204 = vsub.f32 %v42, %v172
  %v205 = vsub.f32 %v43, %v173
  %v206 = vsub.f32 %v44, %v174
  %v207 = vsub.f32 %v45, %v175
  %v208 = vmul.f32 %v176, %v176
  %v209 = vmul.f32 %v177, %v177
  %v210 = vmul.f32 %v178, %v178
  %v211 = vmul.f32 %v179, %v179
  %v212 = vmul.f32 %v180, %v180
  %v213 = vmul.f32 %v181, %v181
  %v214 = vmul.f32 %v182, %v182
  %v215 = vmul.f32 %v183, %v183
  %v216 = vmul.f32 %v184, %v184
  %v217 = vmul.f32 %v185, %v185
  %v218 = vmul.f32 %v186, %v186
  %v219 = vmul.f32 %v187, %v187
  %v220 = vmul.f32 %v188, %v188
  %v221 = vmul.f32 %v189, %v189
  %v222 = vmul.f32 %v190, %v190
  %v223 = vmul.f32 %v191, %v191
  %v224 = vmul.f32 %v192, %v192
  %v225 = vmul.f32 %v193, %v193
  %v226 = vmul.f32 %v194, %v194
  %v227 = vmul.f32 %v195, %v195
  %v228 = vmul.f32 %v196, %v196
  %v229 = vmul.f32 %v197, %v197
  %v230 = vmul.f32 %v198, %v198
  %v231 = vmul.f32 %v199, %v199
  %v232 = vmul.f32 %v200, %v200
  %v233 = vmul.f32 %v201, %v201
  %v234 = vmul.f32 %v202, %v202
  %v235 = vmul.f32 %v203, %v203
  %v236 = vmul.f32 %v204, %v204
  %v237 = vmul.f32 %v205, %v205
  %v238 = vmul.f32 %v206, %v206
  %v239 = vmul.f32 %v207, %v207
  %v240 = vsel %vm46, %v208, 0.0
  %241 = vadd.xlane.f32.xlu0 %v240
  %v242 = vpop.xlane.xlu0 %241
  %v243 = vsel %vm46, %v209, 0.0
  %244 = vadd.xlane.f32.xlu0 %v243
  %v245 = vpop.xlane.xlu0 %244
  %v246 = vsel %vm46, %v210, 0.0
  %247 = vadd.xlane.f32.xlu0 %v246
  %v248 = vpop.xlane.xlu0 %247
  %v249 = vsel %vm46, %v211, 0.0
  %250 = vadd.xlane.f32.xlu0 %v249
  %v251 = vpop.xlane.xlu0 %250
  %v252 = vsel %vm46, %v212, 0.0
  %253 = vadd.xlane.f32.xlu0 %v252
  %v254 = vpop.xlane.xlu0 %253
  %v255 = vsel %vm46, %v213, 0.0
  %256 = vadd.xlane.f32.xlu0 %v255
  %v257 = vpop.xlane.xlu0 %256
  %v258 = vsel %vm46, %v214, 0.0
  %259 = vadd.xlane.f32.xlu0 %v258
  %v260 = vpop.xlane.xlu0 %259
  %v261 = vsel %vm46, %v215, 0.0
  %262 = vadd.xlane.f32.xlu0 %v261
  %v263 = vpop.xlane.xlu0 %262
  %v264 = vsel %vm46, %v216, 0.0
  %265 = vadd.xlane.f32.xlu0 %v264
  %v266 = vpop.xlane.xlu0 %265
  %v267 = vsel %vm46, %v217, 0.0
  %268 = vadd.xlane.f32.xlu0 %v267
  %v269 = vpop.xlane.xlu0 %268
  %v270 = vsel %vm46, %v218, 0.0
  %271 = vadd.xlane.f32.xlu0 %v270
  %v272 = vpop.xlane.xlu0 %271
  %v273 = vsel %vm46, %v219, 0.0
  %274 = vadd.xlane.f32.xlu0 %v273
  %v275 = vpop.xlane.xlu0 %274
  %v276 = vsel %vm46, %v220, 0.0
  %277 = vadd.xlane.f32.xlu0 %v276
  %v278 = vpop.xlane.xlu0 %277
  %v279 = vsel %vm46, %v221, 0.0
  %280 = vadd.xlane.f32.xlu0 %v279
  %v281 = vpop.xlane.xlu0 %280
  %v282 = vsel %vm46, %v222, 0.0
  %283 = vadd.xlane.f32.xlu0 %v282
  %v284 = vpop.xlane.xlu0 %283
  %v285 = vsel %vm46, %v223, 0.0
  %286 = vadd.xlane.f32.xlu0 %v285
  %v287 = vpop.xlane.xlu0 %286
  %v288 = vsel %vm46, %v224, 0.0
  %289 = vadd.xlane.f32.xlu0 %v288
  %v290 = vpop.xlane.xlu0 %289
  %v291 = vsel %vm46, %v225, 0.0
  %292 = vadd.xlane.f32.xlu0 %v291
  %v293 = vpop.xlane.xlu0 %292
  %v294 = vsel %vm46, %v226, 0.0
  %295 = vadd.xlane.f32.xlu0 %v294
  %v296 = vpop.xlane.xlu0 %295
  %v297 = vsel %vm46, %v227, 0.0
  %298 = vadd.xlane.f32.xlu0 %v297
  %v299 = vpop.xlane.xlu0 %298
  %v300 = vsel %vm46, %v228, 0.0
  %301 = vadd.xlane.f32.xlu0 %v300
  %v302 = vpop.xlane.xlu0 %301
  %v303 = vsel %vm46, %v229, 0.0
  %304 = vadd.xlane.f32.xlu0 %v303
  %v305 = vpop.xlane.xlu0 %304
  %v306 = vsel %vm46, %v230, 0.0
  %307 = vadd.xlane.f32.xlu0 %v306
  %v308 = vpop.xlane.xlu0 %307
  %v309 = vsel %vm46, %v231, 0.0
  %310 = vadd.xlane.f32.xlu0 %v309
  %v311 = vpop.xlane.xlu0 %310
  %v312 = vsel %vm46, %v232, 0.0
  %313 = vadd.xlane.f32.xlu0 %v312
  %v314 = vpop.xlane.xlu0 %313
  %v315 = vsel %vm46, %v233, 0.0
  %316 = vadd.xlane.f32.xlu0 %v315
  %v317 = vpop.xlane.xlu0 %316
  %v318 = vsel %vm46, %v234, 0.0
  %319 = vadd.xlane.f32.xlu0 %v318
  %v320 = vpop.xlane.xlu0 %319
  %v321 = vsel %vm46, %v235, 0.0
  %322 = vadd.xlane.f32.xlu0 %v321
  %v323 = vpop.xlane.xlu0 %322
  %v324 = vsel %vm46, %v236, 0.0
  %325 = vadd.xlane.f32.xlu0 %v324
  %v326 = vpop.xlane.xlu0 %325
  %v327 = vsel %vm46, %v237, 0.0
  %328 = vadd.xlane.f32.xlu0 %v327
  %v329 = vpop.xlane.xlu0 %328
  %v330 = vsel %vm46, %v238, 0.0
  %331 = vadd.xlane.f32.xlu0 %v330
  %v332 = vpop.xlane.xlu0 %331
  %v333 = vsel %vm46, %v239, 0.0
  %334 = vadd.xlane.f32.xlu0 %v333
  %v335 = vpop.xlane.xlu0 %334
  %v336 = vmul.f32 %v242, %v143
  %v337 = vmul.f32 %v245, %v143
  %v338 = vmul.f32 %v248, %v143
  %v339 = vmul.f32 %v251, %v143
  %v340 = vmul.f32 %v254, %v143
  %v341 = vmul.f32 %v257, %v143
  %v342 = vmul.f32 %v260, %v143
  %v343 = vmul.f32 %v263, %v143
  %v344 = vmul.f32 %v266, %v143
  %v345 = vmul.f32 %v269, %v143
  %v346 = vmul.f32 %v272, %v143
  %v347 = vmul.f32 %v275, %v143
  %v348 = vmul.f32 %v278, %v143
  %v349 = vmul.f32 %v281, %v143
  %v350 = vmul.f32 %v284, %v143
  %v351 = vmul.f32 %v287, %v143
  %v352 = vmul.f32 %v290, %v143
  %v353 = vmul.f32 %v293, %v143
  %v354 = vmul.f32 %v296, %v143
  %v355 = vmul.f32 %v299, %v143
  %v356 = vmul.f32 %v302, %v143
  %v357 = vmul.f32 %v305, %v143
  %v358 = vmul.f32 %v308, %v143
  %v359 = vmul.f32 %v311, %v143
  %v360 = vmul.f32 %v314, %v143
  %v361 = vmul.f32 %v317, %v143
  %v362 = vmul.f32 %v320, %v143
  %v363 = vmul.f32 %v323, %v143
  %v364 = vmul.f32 %v326, %v143
  %v365 = vmul.f32 %v329, %v143
  %v366 = vmul.f32 %v332, %v143
  %v367 = vmul.f32 %v335, %v143
  %v368 = vadd.f32 %v336, 1e-05
  %v369 = vadd.f32 %v337, 1e-05
  %v370 = vadd.f32 %v338, 1e-05
  %v371 = vadd.f32 %v339, 1e-05
  %v372 = vadd.f32 %v340, 1e-05
  %v373 = vadd.f32 %v341, 1e-05
  %v374 = vadd.f32 %v342, 1e-05
  %v375 = vadd.f32 %v343, 1e-05
  %v376 = vadd.f32 %v344, 1e-05
  %v377 = vadd.f32 %v345, 1e-05
  %v378 = vadd.f32 %v346, 1e-05
  %v379 = vadd.f32 %v347, 1e-05
  %v380 = vadd.f32 %v348, 1e-05
  %v381 = vadd.f32 %v349, 1e-05
  %v382 = vadd.f32 %v350, 1e-05
  %v383 = vadd.f32 %v351, 1e-05
  %v384 = vadd.f32 %v352, 1e-05
  %v385 = vadd.f32 %v353, 1e-05
  %v386 = vadd.f32 %v354, 1e-05
  %v387 = vadd.f32 %v355, 1e-05
  %v388 = vadd.f32 %v356, 1e-05
  %v389 = vadd.f32 %v357, 1e-05
  %v390 = vadd.f32 %v358, 1e-05
  %v391 = vadd.f32 %v359, 1e-05
  %v392 = vadd.f32 %v360, 1e-05
  %v393 = vadd.f32 %v361, 1e-05
  %v394 = vadd.f32 %v362, 1e-05
  %v395 = vadd.f32 %v363, 1e-05
  %v396 = vadd.f32 %v364, 1e-05
  %v397 = vadd.f32 %v365, 1e-05
  %v398 = vadd.f32 %v366, 1e-05
  %v399 = vadd.f32 %v367, 1e-05
  %v400 = vrsqrt.pop %v368
  %v401 = vrsqrt.pop %v369
  %v402 = vrsqrt.pop %v370
  %v403 = vrsqrt.pop %v371
  %v404 = vrsqrt.pop %v372
  %v405 = vrsqrt.pop %v373
  %v406 = vrsqrt.pop %v374
  %v407 = vrsqrt.pop %v375
  %v408 = vrsqrt.pop %v376
  %v409 = vrsqrt.pop %v377
  %v410 = vrsqrt.pop %v378
  %v411 = vrsqrt.pop %v379
  %v412 = vrsqrt.pop %v380
  %v413 = vrsqrt.pop %v381
  %v414 = vrsqrt.pop %v382
  %v415 = vrsqrt.pop %v383
  %v416 = vrsqrt.pop %v384
  %v417 = vrsqrt.pop %v385
  %v418 = vrsqrt.pop %v386
  %v419 = vrsqrt.pop %v387
  %v420 = vrsqrt.pop %v388
  %v421 = vrsqrt.pop %v389
  %v422 = vrsqrt.pop %v390
  %v423 = vrsqrt.pop %v391
  %v424 = vrsqrt.pop %v392
  %v425 = vrsqrt.pop %v393
  %v426 = vrsqrt.pop %v394
  %v427 = vrsqrt.pop %v395
  %v428 = vrsqrt.pop %v396
  %v429 = vrsqrt.pop %v397
  %v430 = vrsqrt.pop %v398
  %v431 = vrsqrt.pop %v399
  %v432 = vmul.f32 %v176, %v400
  %v433 = vmul.f32 %v177, %v401
  %v434 = vmul.f32 %v178, %v402
  %v435 = vmul.f32 %v179, %v403
  %v436 = vmul.f32 %v180, %v404
  %v437 = vmul.f32 %v181, %v405
  %v438 = vmul.f32 %v182, %v406
  %v439 = vmul.f32 %v183, %v407
  %v440 = vmul.f32 %v184, %v408
  %v441 = vmul.f32 %v185, %v409
  %v442 = vmul.f32 %v186, %v410
  %v443 = vmul.f32 %v187, %v411
  %v444 = vmul.f32 %v188, %v412
  %v445 = vmul.f32 %v189, %v413
  %v446 = vmul.f32 %v190, %v414
  %v447 = vmul.f32 %v191, %v415
  %v448 = vmul.f32 %v192, %v416
  %v449 = vmul.f32 %v193, %v417
  %v450 = vmul.f32 %v194, %v418
  %v451 = vmul.f32 %v195, %v419
  %v452 = vmul.f32 %v196, %v420
  %v453 = vmul.f32 %v197, %v421
  %v454 = vmul.f32 %v198, %v422
  %v455 = vmul.f32 %v199, %v423
  %v456 = vmul.f32 %v200, %v424
  %v457 = vmul.f32 %v201, %v425
  %v458 = vmul.f32 %v202, %v426
  %v459 = vmul.f32 %v203, %v427
  %v460 = vmul.f32 %v204, %v428
  %v461 = vmul.f32 %v205, %v429
  %v462 = vmul.f32 %v206, %v430
  %v463 = vmul.f32 %v207, %v431
  %v464 = vld [vmem:[%s1] sm:$0x1]
  %v466 = vlaneseq
  %v467 = vshrl.u32 %v466, 7
  %v468 = vsub.s32 0, %v467
  %v469 = vrot.slane %v464, %v468
  %v471 = vmul.f32 %v432, %v469
  %v472 = vmul.f32 %v433, %v469
  %v473 = vmul.f32 %v434, %v469
  %v474 = vmul.f32 %v435, %v469
  %v475 = vmul.f32 %v436, %v469
  %v476 = vmul.f32 %v437, %v469
  %v477 = vmul.f32 %v438, %v469
  %v478 = vmul.f32 %v439, %v469
  %v479 = vmul.f32 %v440, %v469
  %v480 = vmul.f32 %v441, %v469
  %v481 = vmul.f32 %v442, %v469
  %v482 = vmul.f32 %v443, %v469
  %v483 = vmul.f32 %v444, %v469
  %v484 = vmul.f32 %v445, %v469
  %v485 = vmul.f32 %v446, %v469
  %v486 = vmul.f32 %v447, %v469
  %v487 = vmul.f32 %v448, %v469
  %v488 = vmul.f32 %v449, %v469
  %v489 = vmul.f32 %v450, %v469
  %v490 = vmul.f32 %v451, %v469
  %v491 = vmul.f32 %v452, %v469
  %v492 = vmul.f32 %v453, %v469
  %v493 = vmul.f32 %v454, %v469
  %v494 = vmul.f32 %v455, %v469
  %v495 = vmul.f32 %v456, %v469
  %v496 = vmul.f32 %v457, %v469
  %v497 = vmul.f32 %v458, %v469
  %v498 = vmul.f32 %v459, %v469
  %v499 = vmul.f32 %v460, %v469
  %v500 = vmul.f32 %v461, %v469
  %v501 = vmul.f32 %v462, %v469
  %v502 = vmul.f32 %v463, %v469
  %v503 = vld [vmem:[%s2] sm:$0x1]
  %v505 = vlaneseq
  %v506 = vshrl.u32 %v505, 7
  %v507 = vsub.s32 0, %v506
  %v508 = vrot.slane %v503, %v507
  %v510 = vadd.f32 %v471, %v508
  %v511 = vadd.f32 %v472, %v508
  %v512 = vadd.f32 %v473, %v508
  %v513 = vadd.f32 %v474, %v508
  %v514 = vadd.f32 %v475, %v508
  %v515 = vadd.f32 %v476, %v508
  %v516 = vadd.f32 %v477, %v508
  %v517 = vadd.f32 %v478, %v508
  %v518 = vadd.f32 %v479, %v508
  %v519 = vadd.f32 %v480, %v508
  %v520 = vadd.f32 %v481, %v508
  %v521 = vadd.f32 %v482, %v508
  %v522 = vadd.f32 %v483, %v508
  %v523 = vadd.f32 %v484, %v508
  %v524 = vadd.f32 %v485, %v508
  %v525 = vadd.f32 %v486, %v508
  %v526 = vadd.f32 %v487, %v508
  %v527 = vadd.f32 %v488, %v508
  %v528 = vadd.f32 %v489, %v508
  %v529 = vadd.f32 %v490, %v508
  %v530 = vadd.f32 %v491, %v508
  %v531 = vadd.f32 %v492, %v508
  %v532 = vadd.f32 %v493, %v508
  %v533 = vadd.f32 %v494, %v508
  %v534 = vadd.f32 %v495, %v508
  %v535 = vadd.f32 %v496, %v508
  %v536 = vadd.f32 %v497, %v508
  %v537 = vadd.f32 %v498, %v508
  %v538 = vadd.f32 %v499, %v508
  %v539 = vadd.f32 %v500, %v508
  %v540 = vadd.f32 %v501, %v508
  %v541 = vadd.f32 %v502, %v508
  %542 = vst.msk [vmem:[%s3] sm:$0xff] %vm46, %v510
  %543 = vst.msk [vmem:[%s3 + $0x8] sm:$0xff] %vm46, %v511
  %544 = vst.msk [vmem:[%s3 + $0x10] sm:$0xff] %vm46, %v512
  %545 = vst.msk [vmem:[%s3 + $0x18] sm:$0xff] %vm46, %v513
  %546 = vst.msk [vmem:[%s3 + $0x20] sm:$0xff] %vm46, %v514
  %547 = vst.msk [vmem:[%s3 + $0x28] sm:$0xff] %vm46, %v515
  %548 = vst.msk [vmem:[%s3 + $0x30] sm:$0xff] %vm46, %v516
  %549 = vst.msk [vmem:[%s3 + $0x38] sm:$0xff] %vm46, %v517
  %550 = vst.msk [vmem:[%s3 + $0x40] sm:$0xff] %vm46, %v518
  %551 = vst.msk [vmem:[%s3 + $0x48] sm:$0xff] %vm46, %v519
  %552 = vst.msk [vmem:[%s3 + $0x50] sm:$0xff] %vm46, %v520
  %553 = vst.msk [vmem:[%s3 + $0x58] sm:$0xff] %vm46, %v521
  %554 = vst.msk [vmem:[%s3 + $0x60] sm:$0xff] %vm46, %v522
  %555 = vst.msk [vmem:[%s3 + $0x68] sm:$0xff] %vm46, %v523
  %556 = vst.msk [vmem:[%s3 + $0x70] sm:$0xff] %vm46, %v524
  %557 = vst.msk [vmem:[%s3 + $0x78] sm:$0xff] %vm46, %v525
  %558 = vst.msk [vmem:[%s3 + $0x80] sm:$0xff] %vm46, %v526
  %559 = vst.msk [vmem:[%s3 + $0x88] sm:$0xff] %vm46, %v527
  %560 = vst.msk [vmem:[%s3 + $0x90] sm:$0xff] %vm46, %v528
  %561 = vst.msk [vmem:[%s3 + $0x98] sm:$0xff] %vm46, %v529
  %562 = vst.msk [vmem:[%s3 + $0xa0] sm:$0xff] %vm46, %v530
  %563 = vst.msk [vmem:[%s3 + $0xa8] sm:$0xff] %vm46, %v531
  %564 = vst.msk [vmem:[%s3 + $0xb0] sm:$0xff] %vm46, %v532
  %565 = vst.msk [vmem:[%s3 + $0xb8] sm:$0xff] %vm46, %v533
  %566 = vst.msk [vmem:[%s3 + $0xc0] sm:$0xff] %vm46, %v534
  %567 = vst.msk [vmem:[%s3 + $0xc8] sm:$0xff] %vm46, %v535
  %568 = vst.msk [vmem:[%s3 + $0xd0] sm:$0xff] %vm46, %v536
  %569 = vst.msk [vmem:[%s3 + $0xd8] sm:$0xff] %vm46, %v537
  %570 = vst.msk [vmem:[%s3 + $0xe0] sm:$0xff] %vm46, %v538
  %571 = vst.msk [vmem:[%s3 + $0xe8] sm:$0xff] %vm46, %v539
  %572 = vst.msk [vmem:[%s3 + $0xf0] sm:$0xff] %vm46, %v540
  %573 = vst.msk [vmem:[%s3 + $0xf8] sm:$0xff] %vm46, %v541
  // Predicated region
  $region14: #{encoder_with_svtr_forward.22} parent=0 // pred_check
    _
  $region15: #{encoder_with_svtr_forward.22} parent=0 // pred_check_branch
    %575 = sbr.rel (0) target = $region17
  $region16: #{encoder_with_svtr_forward.22} parent=0 // pred_region
    _
  $region17: #{encoder_with_svtr_forward.22} parent=0 // pred_fallthru
    _
  // Predicated region
  $region18: #{encoder_with_svtr_forward.22} parent=0 // pred_check
    _
  $region19: #{encoder_with_svtr_forward.22} parent=0 // pred_check_branch
    %577 = sbr.rel (0) target = $region21
  $region20: #{encoder_with_svtr_forward.22} parent=0 // pred_region
    _
  $region21: #{encoder_with_svtr_forward.22} parent=0 // pred_fallthru
    _

// kernel: encoder_with_svtr_forward.23
$region0: #{encoder_with_svtr_forward.23}
  #allocation0 [shape = 'u32[]', space=smem, size = 0x4, offset = 0x4, fixed_abs, tag = 'smem constant byte address 0x4 - core index']
  #allocation1 [shape = 'u32[144,128]{1,0:T(1,128)}', space=vmem, size = 0x12000, scoped, tag = 'internal scratch']
  %s0 = inlined_call_operand.vmem [shape: f32[256,120], index: 0, kind: input, shape index: {}]
  %s1 = inlined_call_operand.vmem [shape: f32[120,384], index: 1, kind: input, shape index: {}]
  %s2 = inlined_call_operand.vmem [shape: f32[1,384], index: 2, kind: input, shape index: {}]
  %s3 = inlined_call_operand.vmem [shape: f32[256,384], index: 3, kind: output, shape index: {}]
  %s4 = sld [smem:[#allocation0]]
  $region22: #{encoder_with_svtr_forward.23} parent=0
    _
  %s6 = ssub.s32 1, %s4
  %s7 = scalar_select 0, %s6, %s4
  // Predicated region
  $region2: #{encoder_with_svtr_forward.23} parent=0 // pred_check
    _
  $region3: #{encoder_with_svtr_forward.23} parent=0 // pred_check_branch
    %9 = sbr.rel (0) target = $region5
  $region4: #{encoder_with_svtr_forward.23} parent=0 // pred_region
    _
  $region5: #{encoder_with_svtr_forward.23} parent=0 // pred_fallthru
    _
  // Predicated region
  $region6: #{encoder_with_svtr_forward.23} parent=0 // pred_check
    _
  $region7: #{encoder_with_svtr_forward.23} parent=0 // pred_check_branch
    %11 = sbr.rel (0) target = $region9
  $region8: #{encoder_with_svtr_forward.23} parent=0 // pred_region
    _
  $region9: #{encoder_with_svtr_forward.23} parent=0 // pred_fallthru
    _
  // Predicated region
  $region10: #{encoder_with_svtr_forward.23} parent=0 // pred_check
    _
  $region11: #{encoder_with_svtr_forward.23} parent=0 // pred_check_branch
    %13 = sbr.rel (0) target = $region13
  $region12: #{encoder_with_svtr_forward.23} parent=0 // pred_region
    _
  $region13: #{encoder_with_svtr_forward.23} parent=0 // pred_fallthru
    _
  %v14 = vld [vmem:[%s0] sm:$0xff]
  %v15 = vld [vmem:[%s0 + $0x8] sm:$0xff]
  %v16 = vld [vmem:[%s0 + $0x10] sm:$0xff]
  %v17 = vld [vmem:[%s0 + $0x18] sm:$0xff]
  %v18 = vld [vmem:[%s0 + $0x20] sm:$0xff]
  %v19 = vld [vmem:[%s0 + $0x28] sm:$0xff]
  %v20 = vld [vmem:[%s0 + $0x30] sm:$0xff]
  %v21 = vld [vmem:[%s0 + $0x38] sm:$0xff]
  %v22 = vld [vmem:[%s0 + $0x40] sm:$0xff]
  %v23 = vld [vmem:[%s0 + $0x48] sm:$0xff]
  %v24 = vld [vmem:[%s0 + $0x50] sm:$0xff]
  %v25 = vld [vmem:[%s0 + $0x58] sm:$0xff]
  %v26 = vld [vmem:[%s0 + $0x60] sm:$0xff]
  %v27 = vld [vmem:[%s0 + $0x68] sm:$0xff]
  %v28 = vld [vmem:[%s0 + $0x70] sm:$0xff]
  %v29 = vld [vmem:[%s0 + $0x78] sm:$0xff]
  %v30 = vld [vmem:[%s0 + $0x80] sm:$0xff]
  %v31 = vld [vmem:[%s0 + $0x88] sm:$0xff]
  %v32 = vld [vmem:[%s0 + $0x90] sm:$0xff]
  %v33 = vld [vmem:[%s0 + $0x98] sm:$0xff]
  %v34 = vld [vmem:[%s0 + $0xa0] sm:$0xff]
  %v35 = vld [vmem:[%s0 + $0xa8] sm:$0xff]
  %v36 = vld [vmem:[%s0 + $0xb0] sm:$0xff]
  %v37 = vld [vmem:[%s0 + $0xb8] sm:$0xff]
  %v38 = vld [vmem:[%s0 + $0xc0] sm:$0xff]
  %v39 = vld [vmem:[%s0 + $0xc8] sm:$0xff]
  %v40 = vld [vmem:[%s0 + $0xd0] sm:$0xff]
  %v41 = vld [vmem:[%s0 + $0xd8] sm:$0xff]
  %v42 = vld [vmem:[%s0 + $0xe0] sm:$0xff]
  %v43 = vld [vmem:[%s0 + $0xe8] sm:$0xff]
  %v44 = vld [vmem:[%s0 + $0xf0] sm:$0xff]
  %v45 = vld [vmem:[%s0 + $0xf8] sm:$0xff]
  %v46 = vld [vmem:[%s1] sm:$0xff]
  %v47 = vld [vmem:[%s1 + $0x8] sm:$0xff]
  %v48 = vld [vmem:[%s1 + $0x10] sm:$0xff]
  %v49 = vld [vmem:[%s1 + $0x18] sm:$0xff]
  %v50 = vld [vmem:[%s1 + $0x20] sm:$0xff]
  %v51 = vld [vmem:[%s1 + $0x28] sm:$0xff]
  %v52 = vld [vmem:[%s1 + $0x30] sm:$0xff]
  %v53 = vld [vmem:[%s1 + $0x38] sm:$0xff]
  %v54 = vld [vmem:[%s1 + $0x40] sm:$0xff]
  %v55 = vld [vmem:[%s1 + $0x48] sm:$0xff]
  %v56 = vld [vmem:[%s1 + $0x50] sm:$0xff]
  %v57 = vld [vmem:[%s1 + $0x58] sm:$0xff]
  %v58 = vld [vmem:[%s1 + $0x60] sm:$0xff]
  %v59 = vld [vmem:[%s1 + $0x68] sm:$0xff]
  %v60 = vld [vmem:[%s1 + $0x70] sm:$0xff]
  %v61 = vld [vmem:[%s1 + $0x78] sm:$0xff]
  %v62 = vld [vmem:[%s1 + $0x80] sm:$0xff]
  %v63 = vld [vmem:[%s1 + $0x88] sm:$0xff]
  %v64 = vld [vmem:[%s1 + $0x90] sm:$0xff]
  %v65 = vld [vmem:[%s1 + $0x98] sm:$0xff]
  %v66 = vld [vmem:[%s1 + $0xa0] sm:$0xff]
  %v67 = vld [vmem:[%s1 + $0xa8] sm:$0xff]
  %v68 = vld [vmem:[%s1 + $0xb0] sm:$0xff]
  %v69 = vld [vmem:[%s1 + $0xb8] sm:$0xff]
  %v70 = vld [vmem:[%s1 + $0xc0] sm:$0xff]
  %v71 = vld [vmem:[%s1 + $0xc8] sm:$0xff]
  %v72 = vld [vmem:[%s1 + $0xd0] sm:$0xff]
  %v73 = vld [vmem:[%s1 + $0xd8] sm:$0xff]
  %v74 = vld [vmem:[%s1 + $0xe0] sm:$0xff]
  %v75 = vld [vmem:[%s1 + $0xe8] sm:$0xff]
  %v76 = vld [vmem:[%s1 + $0xf0] sm:$0xff]
  %v77 = vld [vmem:[%s1 + $0xf8] sm:$0xff]
  %v78 = vld [vmem:[%s1 + $0x100] sm:$0xff]
  %v79 = vld [vmem:[%s1 + $0x108] sm:$0xff]
  %v80 = vld [vmem:[%s1 + $0x110] sm:$0xff]
  %v81 = vld [vmem:[%s1 + $0x118] sm:$0xff]
  %v82 = vld [vmem:[%s1 + $0x120] sm:$0xff]
  %v83 = vld [vmem:[%s1 + $0x128] sm:$0xff]
  %v84 = vld [vmem:[%s1 + $0x130] sm:$0xff]
  %v85 = vld [vmem:[%s1 + $0x138] sm:$0xff]
  %v86 = vld [vmem:[%s1 + $0x140] sm:$0xff]
  %v87 = vld [vmem:[%s1 + $0x148] sm:$0xff]
  %v88 = vld [vmem:[%s1 + $0x150] sm:$0xff]
  %v89 = vld [vmem:[%s1 + $0x158] sm:$0xff]
  %v90 = vld [vmem:[%s1 + $0x160] sm:$0xff]
  %v91 = vld [vmem:[%s2] sm:$0x7]
  %v93 = vlaneseq
  %v94 = vshrl.u32 %v93, 7
  %v95 = vsub.s32 0, %v94
  %v96 = vrot.slane %v91, %v95
  %v97 = vlaneseq
  %v98 = vshrl.u32 %v97, 7
  %v99 = vsub.s32 1, %v98
  %v100 = vrot.slane %v91, %v99
  %v101 = vlaneseq
  %v102 = vshrl.u32 %v101, 7
  %v103 = vsub.s32 2, %v102
  %v104 = vrot.slane %v91, %v103
  %vm108 = vcmask 982016
  %v110 = vsel %vm108, %v14, 0
  %v113 = vsel %vm108, %v15, 0
  %v116 = vsel %vm108, %v16, 0
  %v119 = vsel %vm108, %v17, 0
  %v122 = vsel %vm108, %v18, 0
  %v125 = vsel %vm108, %v19, 0
  %v128 = vsel %vm108, %v20, 0
  %v131 = vsel %vm108, %v21, 0
  %v134 = vsel %vm108, %v22, 0
  %v137 = vsel %vm108, %v23, 0
  %v140 = vsel %vm108, %v24, 0
  %v143 = vsel %vm108, %v25, 0
  %v146 = vsel %vm108, %v26, 0
  %v149 = vsel %vm108, %v27, 0
  %v152 = vsel %vm108, %v28, 0
  %v155 = vsel %vm108, %v29, 0
  %v158 = vsel %vm108, %v30, 0
  %v161 = vsel %vm108, %v31, 0
  %v164 = vsel %vm108, %v32, 0
  %v167 = vsel %vm108, %v33, 0
  %v170 = vsel %vm108, %v34, 0
  %v173 = vsel %vm108, %v35, 0
  %v176 = vsel %vm108, %v36, 0
  %v179 = vsel %vm108, %v37, 0
  %v182 = vsel %vm108, %v38, 0
  %v185 = vsel %vm108, %v39, 0
  %v188 = vsel %vm108, %v40, 0
  %v191 = vsel %vm108, %v41, 0
  %v194 = vsel %vm108, %v42, 0
  %v197 = vsel %vm108, %v43, 0
  %v200 = vsel %vm108, %v44, 0
  %v203 = vsel %vm108, %v45, 0
  %205 = vmatprep.subr.mxu0 %v47
  %206 = vmatpush1.msra.mxu0 %v46
  %207 = vmatprep.subr.mxu0 %v50
  %208 = vmatpush1.msra.mxu0 %v49
  %209 = vmatprep.subr.mxu0 %v53
  %210 = vmatpush1.msra.mxu0 %v52
  %211 = vmatprep.subr.mxu0 %v56
  %212 = vmatpush1.msra.mxu0 %v55
  %213 = vmatprep.subr.mxu0 %v59
  %214 = vmatpush1.msra.mxu0 %v58
  %215 = vmatprep.subr.mxu0 %v62
  %216 = vmatpush1.msra.mxu0 %v61
  %217 = vmatprep.subr.mxu0 %v65
  %218 = vmatpush1.msra.mxu0 %v64
  %219 = vmatprep.subr.mxu0 %v68
  %220 = vmatpush1.msra.mxu0 %v67
  %221 = vmatprep.subr.mxu0 %v71
  %222 = vmatpush1.msra.mxu0 %v70
  %223 = vmatprep.subr.mxu0 %v74
  %224 = vmatpush1.msra.mxu0 %v73
  %225 = vmatprep.subr.mxu0 %v77
  %226 = vmatpush1.msra.mxu0 %v76
  %227 = vmatprep.subr.mxu0 %v80
  %228 = vmatpush1.msra.mxu0 %v79
  %229 = vmatprep.subr.mxu0 %v83
  %230 = vmatpush1.msra.mxu0 %v82
  %231 = vmatprep.subr.mxu0 %v86
  %232 = vmatpush1.msra.mxu0 %v85
  %233 = vmatprep.subr.mxu0 %v89
  %234 = vmatpush1.msra.mxu0 %v88
  %235 = vmatprep.subr.mxu0 0.0
  %236 = vmatpush1.msra.mxu0 0.0
  %237 = vmatprep.subr.mxu0 0.0
  %238 = vmatpush1.msra.mxu0 0.0
  %239 = vmatprep.subr.mxu0 0.0
  %240 = vmatpush1.msra.mxu0 0.0
  %241 = vmatprep.subr.mxu0 0.0
  %242 = vmatpush1.msra.mxu0 0.0
  %243 = vmatprep.subr.mxu0 0.0
  %244 = vmatpush1.msra.mxu0 0.0
  %245 = vmatprep.subr.mxu0 0.0
  %246 = vmatpush1.msra.mxu0 0.0
  %247 = vmatprep.subr.mxu0 0.0
  %248 = vmatpush1.msra.mxu0 0.0
  %249 = vmatprep.subr.mxu0 0.0
  %250 = vmatpush1.msra.mxu0 0.0
  %251 = vmatprep.subr.mxu0 0.0
  %252 = vmatpush1.msra.mxu0 0.0
  %253 = vmatprep.subr.mxu0 0.0
  %254 = vmatpush1.msra.mxu0 0.0
  %255 = vmatprep.subr.mxu0 0.0
  %256 = vmatpush1.msra.mxu0 0.0
  %257 = vmatprep.subr.mxu0 0.0
  %258 = vmatpush1.msra.mxu0 0.0
  %259 = vmatprep.subr.mxu0 0.0
  %260 = vmatpush1.msra.mxu0 0.0
  %261 = vmatprep.subr.mxu0 0.0
  %262 = vmatpush1.msra.mxu0 0.0
  %263 = vmatprep.subr.mxu0 0.0
  %264 = vmatpush1.msra.mxu0 0.0
  %265 = vmatprep.subr.mxu0 0.0
  %266 = vmatpush1.msra.mxu0 0.0
  %267 = vmatprep.subr.mxu0 0.0
  %268 = vmatpush1.msra.mxu0 0.0
  %269 = vmatprep.mubr.f32.mxu0 0.0
  %270 = vmatmul.mubr.f32.gmra.mrb[0].mxu0 %v110
  %v271 = vpop.f32.mrb[0].mxu0
  %v272 = vadd.f32 %v96, %v271
  %v273 = vpop.f32.mrb[0].mxu0
  %v274 = vadd.f32 %v100, %v273
  %275 = vmatprep.mubr.f32.mxu0 0.0
  %276 = vmatmul.mubr.f32.gmra.mrb[0].mxu0 %v113
  %v277 = vpop.f32.mrb[0].mxu0
  %v278 = vadd.f32 %v96, %v277
  %v279 = vpop.f32.mrb[0].mxu0
  %v280 = vadd.f32 %v100, %v279
  %281 = vmatprep.mubr.f32.mxu0 0.0
  %282 = vmatmul.mubr.f32.gmra.mrb[0].mxu0 %v116
  %v283 = vpop.f32.mrb[0].mxu0
  %v284 = vadd.f32 %v96, %v283
  %v285 = vpop.f32.mrb[0].mxu0
  %v286 = vadd.f32 %v100, %v285
  %287 = vmatprep.mubr.f32.mxu0 0.0
  %288 = vmatmul.mubr.f32.gmra.mrb[0].mxu0 %v119
  %v289 = vpop.f32.mrb[0].mxu0
  %v290 = vadd.f32 %v96, %v289
  %v291 = vpop.f32.mrb[0].mxu0
  %v292 = vadd.f32 %v100, %v291
  %293 = vmatprep.mubr.f32.mxu0 0.0
  %294 = vmatmul.mubr.f32.gmra.mrb[0].mxu0 %v122
  %v295 = vpop.f32.mrb[0].mxu0
  %v296 = vadd.f32 %v96, %v295
  %v297 = vpop.f32.mrb[0].mxu0
  %v298 = vadd.f32 %v100, %v297
  %299 = vmatprep.mubr.f32.mxu0 0.0
  %300 = vmatmul.mubr.f32.gmra.mrb[0].mxu0 %v125
  %v301 = vpop.f32.mrb[0].mxu0
  %v302 = vadd.f32 %v96, %v301
  %v303 = vpop.f32.mrb[0].mxu0
  %v304 = vadd.f32 %v100, %v303
  %305 = vmatprep.mubr.f32.mxu0 0.0
  %306 = vmatmul.mubr.f32.gmra.mrb[0].mxu0 %v128
  %v307 = vpop.f32.mrb[0].mxu0
  %v308 = vadd.f32 %v96, %v307
  %v309 = vpop.f32.mrb[0].mxu0
  %v310 = vadd.f32 %v100, %v309
  %311 = vmatprep.mubr.f32.mxu0 0.0
  %312 = vmatmul.mubr.f32.gmra.mrb[0].mxu0 %v131
  %v313 = vpop.f32.mrb[0].mxu0
  %v314 = vadd.f32 %v96, %v313
  %v315 = vpop.f32.mrb[0].mxu0
  %v316 = vadd.f32 %v100, %v315
  %317 = vmatprep.mubr.f32.mxu0 0.0
  %318 = vmatmul.mubr.f32.gmra.mrb[0].mxu0 %v134
  %v319 = vpop.f32.mrb[0].mxu0
  %v320 = vadd.f32 %v96, %v319
  %v321 = vpop.f32.mrb[0].mxu0
  %v322 = vadd.f32 %v100, %v321
  %323 = vmatprep.mubr.f32.mxu0 0.0
  %324 = vmatmul.mubr.f32.gmra.mrb[0].mxu0 %v137
  %v325 = vpop.f32.mrb[0].mxu0
  %v326 = vadd.f32 %v96, %v325
  %v327 = vpop.f32.mrb[0].mxu0
  %v328 = vadd.f32 %v100, %v327
  %329 = vmatprep.mubr.f32.mxu0 0.0
  %330 = vmatmul.mubr.f32.gmra.mrb[0].mxu0 %v140
  %v331 = vpop.f32.mrb[0].mxu0
  %v332 = vadd.f32 %v96, %v331
  %v333 = vpop.f32.mrb[0].mxu0
  %v334 = vadd.f32 %v100, %v333
  %335 = vmatprep.mubr.f32.mxu0 0.0
  %336 = vmatmul.mubr.f32.gmra.mrb[0].mxu0 %v143
  %v337 = vpop.f32.mrb[0].mxu0
  %v338 = vadd.f32 %v96, %v337
  %v339 = vpop.f32.mrb[0].mxu0
  %v340 = vadd.f32 %v100, %v339
  %341 = vmatprep.mubr.f32.mxu0 0.0
  %342 = vmatmul.mubr.f32.gmra.mrb[0].mxu0 %v146
  %v343 = vpop.f32.mrb[0].mxu0
  %v344 = vadd.f32 %v96, %v343
  %v345 = vpop.f32.mrb[0].mxu0
  %v346 = vadd.f32 %v100, %v345
  %347 = vmatprep.mubr.f32.mxu0 0.0
  %348 = vmatmul.mubr.f32.gmra.mrb[0].mxu0 %v149
  %v349 = vpop.f32.mrb[0].mxu0
  %v350 = vadd.f32 %v96, %v349
  %v351 = vpop.f32.mrb[0].mxu0
  %v352 = vadd.f32 %v100, %v351
  %353 = vmatprep.mubr.f32.mxu0 0.0
  %354 = vmatmul.mubr.f32.gmra.mrb[0].mxu0 %v152
  %v355 = vpop.f32.mrb[0].mxu0
  %v356 = vadd.f32 %v96, %v355
  %v357 = vpop.f32.mrb[0].mxu0
  %v358 = vadd.f32 %v100, %v357
  %359 = vmatprep.mubr.f32.mxu0 0.0
  %360 = vmatmul.mubr.f32.gmra.mrb[0].mxu0 %v155
  %v361 = vpop.f32.mrb[0].mxu0
  %v362 = vadd.f32 %v96, %v361
  %v363 = vpop.f32.mrb[0].mxu0
  %v364 = vadd.f32 %v100, %v363
  %365 = vmatprep.mubr.f32.mxu0 0.0
  %366 = vmatmul.mubr.f32.gmra.mrb[0].mxu0 %v158
  %v367 = vpop.f32.mrb[0].mxu0
  %v368 = vadd.f32 %v96, %v367
  %v369 = vpop.f32.mrb[0].mxu0
  %v370 = vadd.f32 %v100, %v369
  %371 = vmatprep.mubr.f32.mxu0 0.0
  %372 = vmatmul.mubr.f32.gmra.mrb[0].mxu0 %v161
  %v373 = vpop.f32.mrb[0].mxu0
  %v374 = vadd.f32 %v96, %v373
  %v375 = vpop.f32.mrb[0].mxu0
  %v376 = vadd.f32 %v100, %v375
  %377 = vmatprep.mubr.f32.mxu0 0.0
  %378 = vmatmul.mubr.f32.gmra.mrb[0].mxu0 %v164
  %v379 = vpop.f32.mrb[0].mxu0
  %v380 = vadd.f32 %v96, %v379
  %v381 = vpop.f32.mrb[0].mxu0
  %v382 = vadd.f32 %v100, %v381
  %383 = vmatprep.mubr.f32.mxu0 0.0
  %384 = vmatmul.mubr.f32.gmra.mrb[0].mxu0 %v167
  %v385 = vpop.f32.mrb[0].mxu0
  %v386 = vadd.f32 %v96, %v385
  %v387 = vpop.f32.mrb[0].mxu0
  %v388 = vadd.f32 %v100, %v387
  %389 = vmatprep.mubr.f32.mxu0 0.0
  %390 = vmatmul.mubr.f32.gmra.mrb[0].mxu0 %v170
  %v391 = vpop.f32.mrb[0].mxu0
  %v392 = vadd.f32 %v96, %v391
  %v393 = vpop.f32.mrb[0].mxu0
  %v394 = vadd.f32 %v100, %v393
  %395 = vmatprep.mubr.f32.mxu0 0.0
  %396 = vmatmul.mubr.f32.gmra.mrb[0].mxu0 %v173
  %v397 = vpop.f32.mrb[0].mxu0
  %v398 = vadd.f32 %v96, %v397
  %v399 = vpop.f32.mrb[0].mxu0
  %v400 = vadd.f32 %v100, %v399
  %401 = vmatprep.mubr.f32.mxu0 0.0
  %402 = vmatmul.mubr.f32.gmra.mrb[0].mxu0 %v176
  %v403 = vpop.f32.mrb[0].mxu0
  %v404 = vadd.f32 %v96, %v403
  %v405 = vpop.f32.mrb[0].mxu0
  %v406 = vadd.f32 %v100, %v405
  %407 = vmatprep.mubr.f32.mxu0 0.0
  %408 = vmatmul.mubr.f32.gmra.mrb[0].mxu0 %v179
  %v409 = vpop.f32.mrb[0].mxu0
  %v410 = vadd.f32 %v96, %v409
  %v411 = vpop.f32.mrb[0].mxu0
  %v412 = vadd.f32 %v100, %v411
  %413 = vmatprep.mubr.f32.mxu0 0.0
  %414 = vmatmul.mubr.f32.gmra.mrb[0].mxu0 %v182
  %v415 = vpop.f32.mrb[0].mxu0
  %v416 = vadd.f32 %v96, %v415
  %v417 = vpop.f32.mrb[0].mxu0
  %v418 = vadd.f32 %v100, %v417
  %419 = vmatprep.mubr.f32.mxu0 0.0
  %420 = vmatmul.mubr.f32.gmra.mrb[0].mxu0 %v185
  %v421 = vpop.f32.mrb[0].mxu0
  %v422 = vadd.f32 %v96, %v421
  %v423 = vpop.f32.mrb[0].mxu0
  %v424 = vadd.f32 %v100, %v423
  %425 = vmatprep.mubr.f32.mxu0 0.0
  %426 = vmatmul.mubr.f32.gmra.mrb[0].mxu0 %v188
  %v427 = vpop.f32.mrb[0].mxu0
  %v428 = vadd.f32 %v96, %v427
  %v429 = vpop.f32.mrb[0].mxu0
  %v430 = vadd.f32 %v100, %v429
  %431 = vmatprep.mubr.f32.mxu0 0.0
  %432 = vmatmul.mubr.f32.gmra.mrb[0].mxu0 %v191
  %v433 = vpop.f32.mrb[0].mxu0
  %v434 = vadd.f32 %v96, %v433
  %v435 = vpop.f32.mrb[0].mxu0
  %v436 = vadd.f32 %v100, %v435
  %437 = vmatprep.mubr.f32.mxu0 0.0
  %438 = vmatmul.mubr.f32.gmra.mrb[0].mxu0 %v194
  %v439 = vpop.f32.mrb[0].mxu0
  %v440 = vadd.f32 %v96, %v439
  %v441 = vpop.f32.mrb[0].mxu0
  %v442 = vadd.f32 %v100, %v441
  %443 = vmatprep.mubr.f32.mxu0 0.0
  %444 = vmatmul.mubr.f32.gmra.mrb[0].mxu0 %v197
  %v445 = vpop.f32.mrb[0].mxu0
  %v446 = vadd.f32 %v96, %v445
  %v447 = vpop.f32.mrb[0].mxu0
  %v448 = vadd.f32 %v100, %v447
  %449 = vmatprep.mubr.f32.mxu0 0.0
  %450 = vmatmul.mubr.f32.gmra.mrb[0].mxu0 %v200
  %v451 = vpop.f32.mrb[0].mxu0
  %v452 = vadd.f32 %v96, %v451
  %v453 = vpop.f32.mrb[0].mxu0
  %v454 = vadd.f32 %v100, %v453
  %455 = vmatprep.mubr.f32.mxu0 0.0
  %456 = vmatmul.mubr.f32.gmra.mrb[0].mxu0 %v203
  %v457 = vpop.f32.mrb[0].mxu0
  %v458 = vadd.f32 %v96, %v457
  %v459 = vpop.f32.mrb[0].mxu0
  %v460 = vadd.f32 %v100, %v459
  %461 = vdwg.mxu0
  %462 = vmatprep.subr.mxu0 0.0
  %463 = vmatpush1.msra.mxu0 %v48
  %464 = vmatprep.subr.mxu0 0.0
  %465 = vmatpush1.msra.mxu0 %v51
  %466 = vmatprep.subr.mxu0 0.0
  %467 = vmatpush1.msra.mxu0 %v54
  %468 = vmatprep.subr.mxu0 0.0
  %469 = vmatpush1.msra.mxu0 %v57
  %470 = vmatprep.subr.mxu0 0.0
  %471 = vmatpush1.msra.mxu0 %v60
  %472 = vmatprep.subr.mxu0 0.0
  %473 = vmatpush1.msra.mxu0 %v63
  %474 = vmatprep.subr.mxu0 0.0
  %475 = vmatpush1.msra.mxu0 %v66
  %476 = vmatprep.subr.mxu0 0.0
  %477 = vmatpush1.msra.mxu0 %v69
  %478 = vmatprep.subr.mxu0 0.0
  %479 = vmatpush1.msra.mxu0 %v72
  %480 = vmatprep.subr.mxu0 0.0
  %481 = vmatpush1.msra.mxu0 %v75
  %482 = vmatprep.subr.mxu0 0.0
  %483 = vmatpush1.msra.mxu0 %v78
  %484 = vmatprep.subr.mxu0 0.0
  %485 = vmatpush1.msra.mxu0 %v81
  %486 = vmatprep.subr.mxu0 0.0
  %487 = vmatpush1.msra.mxu0 %v84
  %488 = vmatprep.subr.mxu0 0.0
  %489 = vmatpush1.msra.mxu0 %v87
  %490 = vmatprep.subr.mxu0 0.0
  %491 = vmatpush1.msra.mxu0 %v90
  %492 = vmatprep.subr.mxu0 0.0
  %493 = vmatpush1.msra.mxu0 0.0
  %494 = vmatprep.subr.mxu0 0.0
  %495 = vmatpush1.msra.mxu0 0.0
  %496 = vmatprep.subr.mxu0 0.0
  %497 = vmatpush1.msra.mxu0 0.0
  %498 = vmatprep.subr.mxu0 0.0
  %499 = vmatpush1.msra.mxu0 0.0
  %500 = vmatprep.subr.mxu0 0.0
  %501 = vmatpush1.msra.mxu0 0.0
  %502 = vmatprep.subr.mxu0 0.0
  %503 = vmatpush1.msra.mxu0 0.0
  %504 = vmatprep.subr.mxu0 0.0
  %505 = vmatpush1.msra.mxu0 0.0
  %506 = vmatprep.subr.mxu0 0.0
  %507 = vmatpush1.msra.mxu0 0.0
  %508 = vmatprep.subr.mxu0 0.0
  %509 = vmatpush1.msra.mxu0 0.0
  %510 = vmatprep.subr.mxu0 0.0
  %511 = vmatpush1.msra.mxu0 0.0
  %512 = vmatprep.subr.mxu0 0.0
  %513 = vmatpush1.msra.mxu0 0.0
  %514 = vmatprep.subr.mxu0 0.0
  %515 = vmatpush1.msra.mxu0 0.0
  %516 = vmatprep.subr.mxu0 0.0
  %517 = vmatpush1.msra.mxu0 0.0
  %518 = vmatprep.subr.mxu0 0.0
  %519 = vmatpush1.msra.mxu0 0.0
  %520 = vmatprep.subr.mxu0 0.0
  %521 = vmatpush1.msra.mxu0 0.0
  %522 = vmatprep.subr.mxu0 0.0
  %523 = vmatpush1.msra.mxu0 0.0
  %524 = vmatprep.subr.mxu0 0.0
  %525 = vmatpush1.msra.mxu0 0.0
  %526 = vmatprep.mubr.f32.mxu0 0.0
  %527 = vmatmul.mubr.f32.gmra.mrb[0].mxu0 %v110
  %v528 = vpop.f32.mrb[0].mxu0
  %v529 = vadd.f32 %v104, %v528
  %v530 = vpop.f32.mrb[0].mxu0
  %531 = vmatprep.mubr.f32.mxu0 0.0
  %532 = vmatmul.mubr.f32.gmra.mrb[0].mxu0 %v113
  %v533 = vpop.f32.mrb[0].mxu0
  %v534 = vadd.f32 %v104, %v533
  %v535 = vpop.f32.mrb[0].mxu0
  %536 = vmatprep.mubr.f32.mxu0 0.0
  %537 = vmatmul.mubr.f32.gmra.mrb[0].mxu0 %v116
  %v538 = vpop.f32.mrb[0].mxu0
  %v539 = vadd.f32 %v104, %v538
  %v540 = vpop.f32.mrb[0].mxu0
  %541 = vmatprep.mubr.f32.mxu0 0.0
  %542 = vmatmul.mubr.f32.gmra.mrb[0].mxu0 %v119
  %v543 = vpop.f32.mrb[0].mxu0
  %v544 = vadd.f32 %v104, %v543
  %v545 = vpop.f32.mrb[0].mxu0
  %546 = vmatprep.mubr.f32.mxu0 0.0
  %547 = vmatmul.mubr.f32.gmra.mrb[0].mxu0 %v122
  %v548 = vpop.f32.mrb[0].mxu0
  %v549 = vadd.f32 %v104, %v548
  %v550 = vpop.f32.mrb[0].mxu0
  %551 = vmatprep.mubr.f32.mxu0 0.0
  %552 = vmatmul.mubr.f32.gmra.mrb[0].mxu0 %v125
  %v553 = vpop.f32.mrb[0].mxu0
  %v554 = vadd.f32 %v104, %v553
  %v555 = vpop.f32.mrb[0].mxu0
  %556 = vmatprep.mubr.f32.mxu0 0.0
  %557 = vmatmul.mubr.f32.gmra.mrb[0].mxu0 %v128
  %v558 = vpop.f32.mrb[0].mxu0
  %v559 = vadd.f32 %v104, %v558
  %v560 = vpop.f32.mrb[0].mxu0
  %561 = vmatprep.mubr.f32.mxu0 0.0
  %562 = vmatmul.mubr.f32.gmra.mrb[0].mxu0 %v131
  %v563 = vpop.f32.mrb[0].mxu0
  %v564 = vadd.f32 %v104, %v563
  %v565 = vpop.f32.mrb[0].mxu0
  %566 = vmatprep.mubr.f32.mxu0 0.0
  %567 = vmatmul.mubr.f32.gmra.mrb[0].mxu0 %v134
  %v568 = vpop.f32.mrb[0].mxu0
  %v569 = vadd.f32 %v104, %v568
  %v570 = vpop.f32.mrb[0].mxu0
  %571 = vmatprep.mubr.f32.mxu0 0.0
  %572 = vmatmul.mubr.f32.gmra.mrb[0].mxu0 %v137
  %v573 = vpop.f32.mrb[0].mxu0
  %v574 = vadd.f32 %v104, %v573
  %v575 = vpop.f32.mrb[0].mxu0
  %576 = vmatprep.mubr.f32.mxu0 0.0
  %577 = vmatmul.mubr.f32.gmra.mrb[0].mxu0 %v140
  %v578 = vpop.f32.mrb[0].mxu0
  %v579 = vadd.f32 %v104, %v578
  %v580 = vpop.f32.mrb[0].mxu0
  %581 = vmatprep.mubr.f32.mxu0 0.0
  %582 = vmatmul.mubr.f32.gmra.mrb[0].mxu0 %v143
  %v583 = vpop.f32.mrb[0].mxu0
  %v584 = vadd.f32 %v104, %v583
  %v585 = vpop.f32.mrb[0].mxu0
  %586 = vmatprep.mubr.f32.mxu0 0.0
  %587 = vmatmul.mubr.f32.gmra.mrb[0].mxu0 %v146
  %v588 = vpop.f32.mrb[0].mxu0
  %v589 = vadd.f32 %v104, %v588
  %v590 = vpop.f32.mrb[0].mxu0
  %591 = vmatprep.mubr.f32.mxu0 0.0
  %592 = vmatmul.mubr.f32.gmra.mrb[0].mxu0 %v149
  %v593 = vpop.f32.mrb[0].mxu0
  %v594 = vadd.f32 %v104, %v593
  %v595 = vpop.f32.mrb[0].mxu0
  %596 = vmatprep.mubr.f32.mxu0 0.0
  %597 = vmatmul.mubr.f32.gmra.mrb[0].mxu0 %v152
  %v598 = vpop.f32.mrb[0].mxu0
  %v599 = vadd.f32 %v104, %v598
  %v600 = vpop.f32.mrb[0].mxu0
  %601 = vmatprep.mubr.f32.mxu0 0.0
  %602 = vmatmul.mubr.f32.gmra.mrb[0].mxu0 %v155
  %v603 = vpop.f32.mrb[0].mxu0
  %v604 = vadd.f32 %v104, %v603
  %v605 = vpop.f32.mrb[0].mxu0
  %606 = vmatprep.mubr.f32.mxu0 0.0
  %607 = vmatmul.mubr.f32.gmra.mrb[0].mxu0 %v158
  %v608 = vpop.f32.mrb[0].mxu0
  %v609 = vadd.f32 %v104, %v608
  %v610 = vpop.f32.mrb[0].mxu0
  %611 = vmatprep.mubr.f32.mxu0 0.0
  %612 = vmatmul.mubr.f32.gmra.mrb[0].mxu0 %v161
  %v613 = vpop.f32.mrb[0].mxu0
  %v614 = vadd.f32 %v104, %v613
  %v615 = vpop.f32.mrb[0].mxu0
  %616 = vmatprep.mubr.f32.mxu0 0.0
  %617 = vmatmul.mubr.f32.gmra.mrb[0].mxu0 %v164
  %v618 = vpop.f32.mrb[0].mxu0
  %v619 = vadd.f32 %v104, %v618
  %v620 = vpop.f32.mrb[0].mxu0
  %621 = vmatprep.mubr.f32.mxu0 0.0
  %622 = vmatmul.mubr.f32.gmra.mrb[0].mxu0 %v167
  %v623 = vpop.f32.mrb[0].mxu0
  %v624 = vadd.f32 %v104, %v623
  %v625 = vpop.f32.mrb[0].mxu0
  %626 = vmatprep.mubr.f32.mxu0 0.0
  %627 = vmatmul.mubr.f32.gmra.mrb[0].mxu0 %v170
  %v628 = vpop.f32.mrb[0].mxu0
  %v629 = vadd.f32 %v104, %v628
  %v630 = vpop.f32.mrb[0].mxu0
  %631 = vmatprep.mubr.f32.mxu0 0.0
  %632 = vmatmul.mubr.f32.gmra.mrb[0].mxu0 %v173
  %v633 = vpop.f32.mrb[0].mxu0
  %v634 = vadd.f32 %v104, %v633
  %v635 = vpop.f32.mrb[0].mxu0
  %636 = vmatprep.mubr.f32.mxu0 0.0
  %637 = vmatmul.mubr.f32.gmra.mrb[0].mxu0 %v176
  %v638 = vpop.f32.mrb[0].mxu0
  %v639 = vadd.f32 %v104, %v638
  %v640 = vpop.f32.mrb[0].mxu0
  %641 = vmatprep.mubr.f32.mxu0 0.0
  %642 = vmatmul.mubr.f32.gmra.mrb[0].mxu0 %v179
  %v643 = vpop.f32.mrb[0].mxu0
  %v644 = vadd.f32 %v104, %v643
  %v645 = vpop.f32.mrb[0].mxu0
  %646 = vmatprep.mubr.f32.mxu0 0.0
  %647 = vmatmul.mubr.f32.gmra.mrb[0].mxu0 %v182
  %v648 = vpop.f32.mrb[0].mxu0
  %v649 = vadd.f32 %v104, %v648
  %v650 = vpop.f32.mrb[0].mxu0
  %651 = vmatprep.mubr.f32.mxu0 0.0
  %652 = vmatmul.mubr.f32.gmra.mrb[0].mxu0 %v185
  %v653 = vpop.f32.mrb[0].mxu0
  %v654 = vadd.f32 %v104, %v653
  %v655 = vpop.f32.mrb[0].mxu0
  %656 = vmatprep.mubr.f32.mxu0 0.0
  %657 = vmatmul.mubr.f32.gmra.mrb[0].mxu0 %v188
  %v658 = vpop.f32.mrb[0].mxu0
  %v659 = vadd.f32 %v104, %v658
  %v660 = vpop.f32.mrb[0].mxu0
  %661 = vmatprep.mubr.f32.mxu0 0.0
  %662 = vmatmul.mubr.f32.gmra.mrb[0].mxu0 %v191
  %v663 = vpop.f32.mrb[0].mxu0
  %v664 = vadd.f32 %v104, %v663
  %v665 = vpop.f32.mrb[0].mxu0
  %666 = vmatprep.mubr.f32.mxu0 0.0
  %667 = vmatmul.mubr.f32.gmra.mrb[0].mxu0 %v194
  %v668 = vpop.f32.mrb[0].mxu0
  %v669 = vadd.f32 %v104, %v668
  %v670 = vpop.f32.mrb[0].mxu0
  %671 = vmatprep.mubr.f32.mxu0 0.0
  %672 = vmatmul.mubr.f32.gmra.mrb[0].mxu0 %v197
  %v673 = vpop.f32.mrb[0].mxu0
  %v674 = vadd.f32 %v104, %v673
  %v675 = vpop.f32.mrb[0].mxu0
  %676 = vmatprep.mubr.f32.mxu0 0.0
  %677 = vmatmul.mubr.f32.gmra.mrb[0].mxu0 %v200
  %v678 = vpop.f32.mrb[0].mxu0
  %v679 = vadd.f32 %v104, %v678
  %v680 = vpop.f32.mrb[0].mxu0
  %681 = vmatprep.mubr.f32.mxu0 0.0
  %682 = vmatmul.mubr.f32.gmra.mrb[0].mxu0 %v203
  %v683 = vpop.f32.mrb[0].mxu0
  %v684 = vadd.f32 %v104, %v683
  %v685 = vpop.f32.mrb[0].mxu0
  %686 = vdwg.mxu0
  %687 = vst [vmem:[%s3] sm:$0xff] %v272
  %688 = vst [vmem:[%s3 + $0x8] sm:$0xff] %v274
  %689 = vst [vmem:[%s3 + $0x10] sm:$0xff] %v529
  %690 = vst [vmem:[%s3 + $0x18] sm:$0xff] %v278
  %691 = vst [vmem:[%s3 + $0x20] sm:$0xff] %v280
  %692 = vst [vmem:[%s3 + $0x28] sm:$0xff] %v534
  %693 = vst [vmem:[%s3 + $0x30] sm:$0xff] %v284
  %694 = vst [vmem:[%s3 + $0x38] sm:$0xff] %v286
  %695 = vst [vmem:[%s3 + $0x40] sm:$0xff] %v539
  %696 = vst [vmem:[%s3 + $0x48] sm:$0xff] %v290
  %697 = vst [vmem:[%s3 + $0x50] sm:$0xff] %v292
  %698 = vst [vmem:[%s3 + $0x58] sm:$0xff] %v544
  %699 = vst [vmem:[%s3 + $0x60] sm:$0xff] %v296
  %700 = vst [vmem:[%s3 + $0x68] sm:$0xff] %v298
  %701 = vst [vmem:[%s3 + $0x70] sm:$0xff] %v549
  %702 = vst [vmem:[%s3 + $0x78] sm:$0xff] %v302
  %703 = vst [vmem:[%s3 + $0x80] sm:$0xff] %v304
  %704 = vst [vmem:[%s3 + $0x88] sm:$0xff] %v554
  %705 = vst [vmem:[%s3 + $0x90] sm:$0xff] %v308
  %706 = vst [vmem:[%s3 + $0x98] sm:$0xff] %v310
  %707 = vst [vmem:[%s3 + $0xa0] sm:$0xff] %v559
  %708 = vst [vmem:[%s3 + $0xa8] sm:$0xff] %v314
  %709 = vst [vmem:[%s3 + $0xb0] sm:$0xff] %v316
  %710 = vst [vmem:[%s3 + $0xb8] sm:$0xff] %v564
  %711 = vst [vmem:[%s3 + $0xc0] sm:$0xff] %v320
  %712 = vst [vmem:[%s3 + $0xc8] sm:$0xff] %v322
  %713 = vst [vmem:[%s3 + $0xd0] sm:$0xff] %v569
  %714 = vst [vmem:[%s3 + $0xd8] sm:$0xff] %v326
  %715 = vst [vmem:[%s3 + $0xe0] sm:$0xff] %v328
  %716 = vst [vmem:[%s3 + $0xe8] sm:$0xff] %v574
  %717 = vst [vmem:[%s3 + $0xf0] sm:$0xff] %v332
  %718 = vst [vmem:[%s3 + $0xf8] sm:$0xff] %v334
  %719 = vst [vmem:[%s3 + $0x100] sm:$0xff] %v579
  %720 = vst [vmem:[%s3 + $0x108] sm:$0xff] %v338
  %721 = vst [vmem:[%s3 + $0x110] sm:$0xff] %v340
  %722 = vst [vmem:[%s3 + $0x118] sm:$0xff] %v584
  %723 = vst [vmem:[%s3 + $0x120] sm:$0xff] %v344
  %724 = vst [vmem:[%s3 + $0x128] sm:$0xff] %v346
  %725 = vst [vmem:[%s3 + $0x130] sm:$0xff] %v589
  %726 = vst [vmem:[%s3 + $0x138] sm:$0xff] %v350
  %727 = vst [vmem:[%s3 + $0x140] sm:$0xff] %v352
  %728 = vst [vmem:[%s3 + $0x148] sm:$0xff] %v594
  %729 = vst [vmem:[%s3 + $0x150] sm:$0xff] %v356
  %730 = vst [vmem:[%s3 + $0x158] sm:$0xff] %v358
  %731 = vst [vmem:[%s3 + $0x160] sm:$0xff] %v599
  %732 = vst [vmem:[%s3 + $0x168] sm:$0xff] %v362
  %733 = vst [vmem:[%s3 + $0x170] sm:$0xff] %v364
  %734 = vst [vmem:[%s3 + $0x178] sm:$0xff] %v604
  %735 = vst [vmem:[%s3 + $0x180] sm:$0xff] %v368
  %736 = vst [vmem:[%s3 + $0x188] sm:$0xff] %v370
  %737 = vst [vmem:[%s3 + $0x190] sm:$0xff] %v609
  %738 = vst [vmem:[%s3 + $0x198] sm:$0xff] %v374
  %739 = vst [vmem:[%s3 + $0x1a0] sm:$0xff] %v376
  %740 = vst [vmem:[%s3 + $0x1a8] sm:$0xff] %v614
  %741 = vst [vmem:[%s3 + $0x1b0] sm:$0xff] %v380
  %742 = vst [vmem:[%s3 + $0x1b8] sm:$0xff] %v382
  %743 = vst [vmem:[%s3 + $0x1c0] sm:$0xff] %v619
  %744 = vst [vmem:[%s3 + $0x1c8] sm:$0xff] %v386
  %745 = vst [vmem:[%s3 + $0x1d0] sm:$0xff] %v388
  %746 = vst [vmem:[%s3 + $0x1d8] sm:$0xff] %v624
  %747 = vst [vmem:[%s3 + $0x1e0] sm:$0xff] %v392
  %748 = vst [vmem:[%s3 + $0x1e8] sm:$0xff] %v394
  %749 = vst [vmem:[%s3 + $0x1f0] sm:$0xff] %v629
  %750 = vst [vmem:[%s3 + $0x1f8] sm:$0xff] %v398
  %751 = vst [vmem:[%s3 + $0x200] sm:$0xff] %v400
  %752 = vst [vmem:[%s3 + $0x208] sm:$0xff] %v634
  %753 = vst [vmem:[%s3 + $0x210] sm:$0xff] %v404
  %754 = vst [vmem:[%s3 + $0x218] sm:$0xff] %v406
  %755 = vst [vmem:[%s3 + $0x220] sm:$0xff] %v639
  %756 = vst [vmem:[%s3 + $0x228] sm:$0xff] %v410
  %757 = vst [vmem:[%s3 + $0x230] sm:$0xff] %v412
  %758 = vst [vmem:[%s3 + $0x238] sm:$0xff] %v644
  %759 = vst [vmem:[%s3 + $0x240] sm:$0xff] %v416
  %760 = vst [vmem:[%s3 + $0x248] sm:$0xff] %v418
  %761 = vst [vmem:[%s3 + $0x250] sm:$0xff] %v649
  %762 = vst [vmem:[%s3 + $0x258] sm:$0xff] %v422
  %763 = vst [vmem:[%s3 + $0x260] sm:$0xff] %v424
  %764 = vst [vmem:[%s3 + $0x268] sm:$0xff] %v654
  %765 = vst [vmem:[%s3 + $0x270] sm:$0xff] %v428
  %766 = vst [vmem:[%s3 + $0x278] sm:$0xff] %v430
  %767 = vst [vmem:[%s3 + $0x280] sm:$0xff] %v659
  %768 = vst [vmem:[%s3 + $0x288] sm:$0xff] %v434
  %769 = vst [vmem:[%s3 + $0x290] sm:$0xff] %v436
  %770 = vst [vmem:[%s3 + $0x298] sm:$0xff] %v664
  %771 = vst [vmem:[%s3 + $0x2a0] sm:$0xff] %v440
  %772 = vst [vmem:[%s3 + $0x2a8] sm:$0xff] %v442
  %773 = vst [vmem:[%s3 + $0x2b0] sm:$0xff] %v669
  %774 = vst [vmem:[%s3 + $0x2b8] sm:$0xff] %v446
  %775 = vst [vmem:[%s3 + $0x2c0] sm:$0xff] %v448
  %776 = vst [vmem:[%s3 + $0x2c8] sm:$0xff] %v674
  %777 = vst [vmem:[%s3 + $0x2d0] sm:$0xff] %v452
  %778 = vst [vmem:[%s3 + $0x2d8] sm:$0xff] %v454
  %779 = vst [vmem:[%s3 + $0x2e0] sm:$0xff] %v679
  %780 = vst [vmem:[%s3 + $0x2e8] sm:$0xff] %v458
  %781 = vst [vmem:[%s3 + $0x2f0] sm:$0xff] %v460
  %782 = vst [vmem:[%s3 + $0x2f8] sm:$0xff] %v684
  // Predicated region
  $region14: #{encoder_with_svtr_forward.23} parent=0 // pred_check
    _
  $region15: #{encoder_with_svtr_forward.23} parent=0 // pred_check_branch
    %784 = sbr.rel (0) target = $region17
  $region16: #{encoder_with_svtr_forward.23} parent=0 // pred_region
    _
  $region17: #{encoder_with_svtr_forward.23} parent=0 // pred_fallthru
    _
  // Predicated region
  $region18: #{encoder_with_svtr_forward.23} parent=0 // pred_check
    _
  $region19: #{encoder_with_svtr_forward.23} parent=0 // pred_check_branch
    %786 = sbr.rel (0) target = $region21
  $region20: #{encoder_with_svtr_forward.23} parent=0 // pred_region
    _
  $region21: #{encoder_with_svtr_forward.23} parent=0 // pred_fallthru
    _

// kernel: encoder_with_svtr_forward.24
$region0: #{encoder_with_svtr_forward.24}
  #allocation0 [shape = 'u32[]', space=smem, size = 0x4, offset = 0x4, fixed_abs, tag = 'smem constant byte address 0x4 - core index']
  #allocation1 [shape = 'u32[144,128]{1,0:T(1,128)}', space=vmem, size = 0x12000, scoped, tag = 'internal scratch']
  %s0 = inlined_call_operand.vmem [shape: f32[16,128,15], index: 0, kind: input, shape index: {}]
  %s1 = inlined_call_operand.vmem [shape: f32[16,128,15], index: 1, kind: input, shape index: {}]
  %s2 = inlined_call_operand.vmem [shape: f32[16,128,15], index: 2, kind: input, shape index: {}]
  %s3 = inlined_call_operand.vmem [shape: f32[16,128,15], index: 3, kind: output, shape index: {}]
  %s4 = sld [smem:[#allocation0]]
  $region45: #{encoder_with_svtr_forward.24} parent=0
    _
  %s6 = ssub.s32 1, %s4
  %s7 = scalar_select 0, %s6, %s4
  loop: start=0, step=1, limit=18
  $region2: #{encoder_with_svtr_forward.24} parent=0 // loop_pre_header
    _
  $region3: #{encoder_with_svtr_forward.24} parent=0 // loop_header
    %s9 = sphi 0, %s13
    %p10 = scmp.ge.s32.totalorder %s9, 18
    %s19 = sphi 0, %s21
    %s22 = sphi 0, %s19
    %s23 = sphi 0, %s22
    %s39 = sphi 0, %s23
    %s45 = sphi 0, %s47
    %s48 = sphi 0, %s45
    %s49 = sphi 0, %s48
    %s65 = sphi 0, %s49
    %s71 = sphi 0, %s73
    %s74 = sphi 0, %s71
    %s75 = sphi 0, %s74
    %s91 = sphi 0, %s75
    %s97 = sphi 0, %s99
    %s100 = sphi 0, %s97
    %s101 = sphi 0, %s100
    %s117 = sphi 0, %s101
  $region4: #{encoder_with_svtr_forward.24} parent=0 // loop_header_branch
    %12 = sbr.rel (%p10) target = $region8
  $region5: #{encoder_with_svtr_forward.24} parent=0 // loop_body
    %s14 = ssub.s32 %s9, 1
    %s15 = ssub.s32 %s9, 2
    %s16 = sadd.s32 %s9, 1
    %s17 = ssub.s32 %s9, %s16
    %p18 = scmp.eq.s32.totalorder %s17, 0
    %s20 = sadd.s32 %s19, 1
    %s21 = scalar_select %p18, %s19, %s20
    %p24 = pneg %p18
    %p25 = scmp.eq.s32.totalorder %s9, 15
    %p26 = por %p24, %p25
    %p27 = scmp.ne.s32.totalorder %s19, %s22
    %p28 = scmp.eq.s32.totalorder %s9, 0
    %p29 = por %p27, %p28
    %p30 = scmp.ne.s32.totalorder %s19, %s22
    %p31 = scmp.eq.s32.totalorder %s14, 15
    %p32 = por %p30, %p31
    %p33 = scmp.ne.s32.totalorder %s22, %s23
    %p34 = scmp.eq.s32.totalorder %s14, 0
    %p35 = por %p33, %p34
    %p36 = scmp.ne.s32.totalorder %s22, %s23
    %p37 = scmp.eq.s32.totalorder %s15, 15
    %p38 = por %p36, %p37
    %p40 = scmp.ne.s32.totalorder %s23, %s39
    %p41 = scmp.eq.s32.totalorder %s15, 0
    %p42 = por %p40, %p41
    %s43 = ssub.s32 %s9, %s16
    %p44 = scmp.eq.s32.totalorder %s43, 0
    %s46 = sadd.s32 %s45, 1
    %s47 = scalar_select %p44, %s45, %s46
    %p50 = pneg %p44
    %p51 = scmp.eq.s32.totalorder %s9, 15
    %p52 = por %p50, %p51
    %p53 = scmp.ne.s32.totalorder %s45, %s48
    %p54 = scmp.eq.s32.totalorder %s9, 0
    %p55 = por %p53, %p54
    %p56 = scmp.ne.s32.totalorder %s45, %s48
    %p57 = scmp.eq.s32.totalorder %s14, 15
    %p58 = por %p56, %p57
    %p59 = scmp.ne.s32.totalorder %s48, %s49
    %p60 = scmp.eq.s32.totalorder %s14, 0
    %p61 = por %p59, %p60
    %p62 = scmp.ne.s32.totalorder %s48, %s49
    %p63 = scmp.eq.s32.totalorder %s15, 15
    %p64 = por %p62, %p63
    %p66 = scmp.ne.s32.totalorder %s49, %s65
    %p67 = scmp.eq.s32.totalorder %s15, 0
    %p68 = por %p66, %p67
    %s69 = ssub.s32 %s9, %s16
    %p70 = scmp.eq.s32.totalorder %s69, 0
    %s72 = sadd.s32 %s71, 1
    %s73 = scalar_select %p70, %s71, %s72
    %p76 = pneg %p70
    %p77 = scmp.eq.s32.totalorder %s9, 15
    %p78 = por %p76, %p77
    %p79 = scmp.ne.s32.totalorder %s71, %s74
    %p80 = scmp.eq.s32.totalorder %s9, 0
    %p81 = por %p79, %p80
    %p82 = scmp.ne.s32.totalorder %s71, %s74
    %p83 = scmp.eq.s32.totalorder %s14, 15
    %p84 = por %p82, %p83
    %p85 = scmp.ne.s32.totalorder %s74, %s75
    %p86 = scmp.eq.s32.totalorder %s14, 0
    %p87 = por %p85, %p86
    %p88 = scmp.ne.s32.totalorder %s74, %s75
    %p89 = scmp.eq.s32.totalorder %s15, 15
    %p90 = por %p88, %p89
    %p92 = scmp.ne.s32.totalorder %s75, %s91
    %p93 = scmp.eq.s32.totalorder %s15, 0
    %p94 = por %p92, %p93
    %s95 = ssub.s32 %s9, %s16
    %p96 = scmp.eq.s32.totalorder %s95, 0
    %s98 = sadd.s32 %s97, 1
    %s99 = scalar_select %p96, %s97, %s98
    %p102 = pneg %p96
    %p103 = scmp.eq.s32.totalorder %s9, 15
    %p104 = por %p102, %p103
    %p105 = scmp.ne.s32.totalorder %s97, %s100
    %p106 = scmp.eq.s32.totalorder %s9, 0
    %p107 = por %p105, %p106
    %p108 = scmp.ne.s32.totalorder %s97, %s100
    %p109 = scmp.eq.s32.totalorder %s14, 15
    %p110 = por %p108, %p109
    %p111 = scmp.ne.s32.totalorder %s100, %s101
    %p112 = scmp.eq.s32.totalorder %s14, 0
    %p113 = por %p111, %p112
    %p114 = scmp.ne.s32.totalorder %s100, %s101
    %p115 = scmp.eq.s32.totalorder %s15, 15
    %p116 = por %p114, %p115
    %p118 = scmp.ne.s32.totalorder %s101, %s117
    %p119 = scmp.eq.s32.totalorder %s15, 0
    %p120 = por %p118, %p119
    %p121 = scmp.le.s32.totalorder 1, %s9
    %p122 = scmp.lt.s32.totalorder %s9, 17
    %p123 = pnand %p121, %p122
    %p124 = pneg %p123
    // Predicated region
    $region9: #{encoder_with_svtr_forward.24} parent=5 // pred_check
      _
    $region10: #{encoder_with_svtr_forward.24} parent=5 // pred_check_branch
      %126 = sbr.rel (%p123) target = $region12
    $region11: #{encoder_with_svtr_forward.24} parent=5 // pred_region
      %s127 = ssub.s32 %s9, 1
    $region12: #{encoder_with_svtr_forward.24} parent=5 // pred_fallthru
      _
    %p128 = scmp.lt.s32.totalorder %s9, 16
    // Predicated region
    $region13: #{encoder_with_svtr_forward.24} parent=5 // pred_check
      %p129 = pneg %p128
    $region14: #{encoder_with_svtr_forward.24} parent=5 // pred_check_branch
      %131 = sbr.rel (%p129) target = $region16
    $region15: #{encoder_with_svtr_forward.24} parent=5 // pred_region
      // Predicated region
      $region17: #{encoder_with_svtr_forward.24} parent=15 // pred_check
        %p132 = pneg %p29
      $region18: #{encoder_with_svtr_forward.24} parent=15 // pred_check_branch
        %134 = sbr.rel (%p132) target = $region20
      $region19: #{encoder_with_svtr_forward.24} parent=15 // pred_region
        %p135 = scmp.lt.s32.totalorder %s9, 15
        %s136 = scalar_select %p135, %s9, 15
        %s137 = smul.addr %s136, 16
        %s138 = smul.addr %s137, 8
        %s139 = scalar_lea.vmem %s0, %s138
      $region20: #{encoder_with_svtr_forward.24} parent=15 // pred_fallthru
        _
      // Predicated region
      $region21: #{encoder_with_svtr_forward.24} parent=15 // pred_check
        %p140 = pneg %p55
      $region22: #{encoder_with_svtr_forward.24} parent=15 // pred_check_branch
        %142 = sbr.rel (%p140) target = $region24
      $region23: #{encoder_with_svtr_forward.24} parent=15 // pred_region
        %p143 = scmp.lt.s32.totalorder %s9, 15
        %s144 = scalar_select %p143, %s9, 15
        %s145 = smul.addr %s144, 16
        %s146 = smul.addr %s145, 8
        %s147 = scalar_lea.vmem %s1, %s146
      $region24: #{encoder_with_svtr_forward.24} parent=15 // pred_fallthru
        _
      // Predicated region
      $region25: #{encoder_with_svtr_forward.24} parent=15 // pred_check
        %p148 = pneg %p81
      $region26: #{encoder_with_svtr_forward.24} parent=15 // pred_check_branch
        %150 = sbr.rel (%p148) target = $region28
      $region27: #{encoder_with_svtr_forward.24} parent=15 // pred_region
        %p151 = scmp.lt.s32.totalorder %s9, 15
        %s152 = scalar_select %p151, %s9, 15
        %s153 = smul.addr %s152, 16
        %s154 = smul.addr %s153, 8
        %s155 = scalar_lea.vmem %s2, %s154
      $region28: #{encoder_with_svtr_forward.24} parent=15 // pred_fallthru
        _
    $region16: #{encoder_with_svtr_forward.24} parent=5 // pred_fallthru
      _
    %p156 = scmp.le.s32.totalorder 1, %s9
    %p157 = scmp.lt.s32.totalorder %s9, 17
    %p158 = pnand %p156, %p157
    %p159 = pneg %p158
    // Predicated region
    $region29: #{encoder_with_svtr_forward.24} parent=5 // pred_check
      _
    $region30: #{encoder_with_svtr_forward.24} parent=5 // pred_check_branch
      %161 = sbr.rel (%p158) target = $region32
    $region31: #{encoder_with_svtr_forward.24} parent=5 // pred_region
      %s162 = ssub.s32 %s9, 1
      %p163 = scmp.lt.s32.totalorder %s14, 15
      %s164 = scalar_select %p163, %s14, 15
      %s165 = smul.addr %s164, 16
      %s166 = smul.addr %s165, 8
      %s167 = scalar_lea.vmem %s0, %s166
      %p168 = pneg %p35
      %p169 = pneg %p32
      %p170 = scmp.lt.s32.totalorder %s14, 15
      %s171 = scalar_select %p170, %s14, 15
      %s172 = smul.addr %s171, 16
      %s173 = smul.addr %s172, 8
      %s174 = scalar_lea.vmem %s1, %s173
      %p175 = pneg %p61
      %p176 = pneg %p58
      %p177 = scmp.lt.s32.totalorder %s14, 15
      %s178 = scalar_select %p177, %s14, 15
      %s179 = smul.addr %s178, 16
      %s180 = smul.addr %s179, 8
      %s181 = scalar_lea.vmem %s2, %s180
      %p182 = pneg %p87
      %p183 = pneg %p84
      %p184 = pneg %p113
      %p185 = pneg %p110
      %p186 = scmp.lt.s32.totalorder %s14, 15
      %s187 = scalar_select %p186, %s14, 15
      %s188 = smul.addr %s187, 16
      %s189 = smul.addr %s188, 8
      %s190 = scalar_lea.vmem %s3, %s189
      %p191 = scmp.lt.s32.totalorder %s14, 15
      %s192 = scalar_select %p191, %s14, 15
      %s193 = smul.addr %s192, 16
      %s194 = smul.addr %s193, 8
      %s195 = scalar_lea.vmem %s0, %s194
      %p196 = scmp.lt.s32.totalorder %s14, 15
      %s197 = scalar_select %p196, %s14, 15
      %s198 = smul.addr %s197, 16
      %s199 = smul.addr %s198, 8
      %s200 = scalar_lea.vmem %s1, %s199
      %p201 = scmp.lt.s32.totalorder %s14, 15
      %s202 = scalar_select %p201, %s14, 15
      %s203 = smul.addr %s202, 16
      %s204 = smul.addr %s203, 8
      %s205 = scalar_lea.vmem %s2, %s204
      %p206 = scmp.lt.s32.totalorder %s14, 15
      %s207 = scalar_select %p206, %s14, 15
      %s208 = smul.addr %s207, 16
      %s209 = smul.addr %s208, 8
      %s210 = scalar_lea.vmem %s3, %s209
      %v211 = vld [vmem:[%s195] sm:$0xff]
      %v212 = vld [vmem:[%s195 + $0x8] sm:$0xff]
      %v213 = vld [vmem:[%s195 + $0x10] sm:$0xff]
      %v214 = vld [vmem:[%s195 + $0x18] sm:$0xff]
      %v215 = vld [vmem:[%s195 + $0x20] sm:$0xff]
      %v216 = vld [vmem:[%s195 + $0x28] sm:$0xff]
      %v217 = vld [vmem:[%s195 + $0x30] sm:$0xff]
      %v218 = vld [vmem:[%s195 + $0x38] sm:$0xff]
      %v219 = vld [vmem:[%s195 + $0x40] sm:$0xff]
      %v220 = vld [vmem:[%s195 + $0x48] sm:$0xff]
      %v221 = vld [vmem:[%s195 + $0x50] sm:$0xff]
      %v222 = vld [vmem:[%s195 + $0x58] sm:$0xff]
      %v223 = vld [vmem:[%s195 + $0x60] sm:$0xff]
      %v224 = vld [vmem:[%s195 + $0x68] sm:$0xff]
      %v225 = vld [vmem:[%s195 + $0x70] sm:$0xff]
      %v226 = vld [vmem:[%s195 + $0x78] sm:$0xff]
      %v227 = vld [vmem:[%s200] sm:$0xff]
      %v228 = vld [vmem:[%s200 + $0x8] sm:$0xff]
      %v229 = vld [vmem:[%s200 + $0x10] sm:$0xff]
      %v230 = vld [vmem:[%s200 + $0x18] sm:$0xff]
      %v231 = vld [vmem:[%s200 + $0x20] sm:$0xff]
      %v232 = vld [vmem:[%s200 + $0x28] sm:$0xff]
      %v233 = vld [vmem:[%s200 + $0x30] sm:$0xff]
      %v234 = vld [vmem:[%s200 + $0x38] sm:$0xff]
      %v235 = vld [vmem:[%s200 + $0x40] sm:$0xff]
      %v236 = vld [vmem:[%s200 + $0x48] sm:$0xff]
      %v237 = vld [vmem:[%s200 + $0x50] sm:$0xff]
      %v238 = vld [vmem:[%s200 + $0x58] sm:$0xff]
      %v239 = vld [vmem:[%s200 + $0x60] sm:$0xff]
      %v240 = vld [vmem:[%s200 + $0x68] sm:$0xff]
      %v241 = vld [vmem:[%s200 + $0x70] sm:$0xff]
      %v242 = vld [vmem:[%s200 + $0x78] sm:$0xff]
      %v243 = vld [vmem:[%s205] sm:$0xff]
      %v244 = vld [vmem:[%s205 + $0x8] sm:$0xff]
      %v245 = vld [vmem:[%s205 + $0x10] sm:$0xff]
      %v246 = vld [vmem:[%s205 + $0x18] sm:$0xff]
      %v247 = vld [vmem:[%s205 + $0x20] sm:$0xff]
      %v248 = vld [vmem:[%s205 + $0x28] sm:$0xff]
      %v249 = vld [vmem:[%s205 + $0x30] sm:$0xff]
      %v250 = vld [vmem:[%s205 + $0x38] sm:$0xff]
      %v251 = vld [vmem:[%s205 + $0x40] sm:$0xff]
      %v252 = vld [vmem:[%s205 + $0x48] sm:$0xff]
      %v253 = vld [vmem:[%s205 + $0x50] sm:$0xff]
      %v254 = vld [vmem:[%s205 + $0x58] sm:$0xff]
      %v255 = vld [vmem:[%s205 + $0x60] sm:$0xff]
      %v256 = vld [vmem:[%s205 + $0x68] sm:$0xff]
      %v257 = vld [vmem:[%s205 + $0x70] sm:$0xff]
      %v258 = vld [vmem:[%s205 + $0x78] sm:$0xff]
      %vm259 = vcmask 121856
      %v261 = vsel %vm259, %v211, 0
      %v264 = vsel %vm259, %v212, 0
      %v267 = vsel %vm259, %v213, 0
      %v270 = vsel %vm259, %v214, 0
      %v273 = vsel %vm259, %v215, 0
      %v276 = vsel %vm259, %v216, 0
      %v279 = vsel %vm259, %v217, 0
      %v282 = vsel %vm259, %v218, 0
      %v285 = vsel %vm259, %v219, 0
      %v288 = vsel %vm259, %v220, 0
      %v291 = vsel %vm259, %v221, 0
      %v294 = vsel %vm259, %v222, 0
      %v297 = vsel %vm259, %v223, 0
      %v300 = vsel %vm259, %v224, 0
      %v303 = vsel %vm259, %v225, 0
      %v306 = vsel %vm259, %v226, 0
      %v309 = vsel %vm259, %v227, 0
      %v312 = vsel %vm259, %v228, 0
      %v315 = vsel %vm259, %v229, 0
      %v318 = vsel %vm259, %v230, 0
      %v321 = vsel %vm259, %v231, 0
      %v324 = vsel %vm259, %v232, 0
      %v327 = vsel %vm259, %v233, 0
      %v330 = vsel %vm259, %v234, 0
      %v333 = vsel %vm259, %v235, 0
      %v336 = vsel %vm259, %v236, 0
      %v339 = vsel %vm259, %v237, 0
      %v342 = vsel %vm259, %v238, 0
      %v345 = vsel %vm259, %v239, 0
      %v348 = vsel %vm259, %v240, 0
      %v351 = vsel %vm259, %v241, 0
      %v354 = vsel %vm259, %v242, 0
      %356 = vmatprep.subr.mxu0 0.0
      %357 = vmatpush1.xpose.msra.mxu0 %v309
      %358 = vmatprep.subr.mxu0 0.0
      %359 = vmatpush1.xpose.msra.mxu0 %v312
      %360 = vmatprep.subr.mxu0 0.0
      %361 = vmatpush1.xpose.msra.mxu0 %v315
      %362 = vmatprep.subr.mxu0 0.0
      %363 = vmatpush1.xpose.msra.mxu0 %v318
      %364 = vmatprep.subr.mxu0 0.0
      %365 = vmatpush1.xpose.msra.mxu0 %v321
      %366 = vmatprep.subr.mxu0 0.0
      %367 = vmatpush1.xpose.msra.mxu0 %v324
      %368 = vmatprep.subr.mxu0 0.0
      %369 = vmatpush1.xpose.msra.mxu0 %v327
      %370 = vmatprep.subr.mxu0 0.0
      %371 = vmatpush1.xpose.msra.mxu0 %v330
      %372 = vmatprep.subr.mxu0 0.0
      %373 = vmatpush1.xpose.msra.mxu0 %v333
      %374 = vmatprep.subr.mxu0 0.0
      %375 = vmatpush1.xpose.msra.mxu0 %v336
      %376 = vmatprep.subr.mxu0 0.0
      %377 = vmatpush1.xpose.msra.mxu0 %v339
      %378 = vmatprep.subr.mxu0 0.0
      %379 = vmatpush1.xpose.msra.mxu0 %v342
      %380 = vmatprep.subr.mxu0 0.0
      %381 = vmatpush1.xpose.msra.mxu0 %v345
      %382 = vmatprep.subr.mxu0 0.0
      %383 = vmatpush1.xpose.msra.mxu0 %v348
      %384 = vmatprep.subr.mxu0 0.0
      %385 = vmatpush1.xpose.msra.mxu0 %v351
      %386 = vmatprep.subr.mxu0 0.0
      %387 = vmatpush1.xpose.msra.mxu0 %v354
      %388 = vmatprep.subr.mxu0 0.0
      %389 = vmatpush1.xpose.msra.mxu0 0.0
      %390 = vmatprep.subr.mxu0 0.0
      %391 = vmatpush1.xpose.msra.mxu0 0.0
      %392 = vmatprep.subr.mxu0 0.0
      %393 = vmatpush1.xpose.msra.mxu0 0.0
      %394 = vmatprep.subr.mxu0 0.0
      %395 = vmatpush1.xpose.msra.mxu0 0.0
      %396 = vmatprep.subr.mxu0 0.0
      %397 = vmatpush1.xpose.msra.mxu0 0.0
      %398 = vmatprep.subr.mxu0 0.0
      %399 = vmatpush1.xpose.msra.mxu0 0.0
      %400 = vmatprep.subr.mxu0 0.0
      %401 = vmatpush1.xpose.msra.mxu0 0.0
      %402 = vmatprep.subr.mxu0 0.0
      %403 = vmatpush1.xpose.msra.mxu0 0.0
      %404 = vmatprep.subr.mxu0 0.0
      %405 = vmatpush1.xpose.msra.mxu0 0.0
      %406 = vmatprep.subr.mxu0 0.0
      %407 = vmatpush1.xpose.msra.mxu0 0.0
      %408 = vmatprep.subr.mxu0 0.0
      %409 = vmatpush1.xpose.msra.mxu0 0.0
      %410 = vmatprep.subr.mxu0 0.0
      %411 = vmatpush1.xpose.msra.mxu0 0.0
      %412 = vmatprep.subr.mxu0 0.0
      %413 = vmatpush1.xpose.msra.mxu0 0.0
      %414 = vmatprep.subr.mxu0 0.0
      %415 = vmatpush1.xpose.msra.mxu0 0.0
      %416 = vmatprep.subr.mxu0 0.0
      %417 = vmatpush1.xpose.msra.mxu0 0.0
      %418 = vmatprep.subr.mxu0 0.0
      %419 = vmatpush1.xpose.msra.mxu0 0.0
      %420 = vmatprep.mubr.f32.mxu0 0.0
      %421 = vmatmul.mubr.f32.gmra.mrb[0].mxu0 %v261
      %v422 = vpop.f32.mrb[0].mxu0
      %v423 = vadd.f32 0.0, %v422
      %v424 = vpop.f32.mrb[0].mxu0
      %425 = vmatprep.mubr.f32.mxu0 0.0
      %426 = vmatmul.mubr.f32.gmra.mrb[0].mxu0 %v264
      %v427 = vpop.f32.mrb[0].mxu0
      %v428 = vadd.f32 0.0, %v427
      %v429 = vpop.f32.mrb[0].mxu0
      %430 = vmatprep.mubr.f32.mxu0 0.0
      %431 = vmatmul.mubr.f32.gmra.mrb[0].mxu0 %v267
      %v432 = vpop.f32.mrb[0].mxu0
      %v433 = vadd.f32 0.0, %v432
      %v434 = vpop.f32.mrb[0].mxu0
      %435 = vmatprep.mubr.f32.mxu0 0.0
      %436 = vmatmul.mubr.f32.gmra.mrb[0].mxu0 %v270
      %v437 = vpop.f32.mrb[0].mxu0
      %v438 = vadd.f32 0.0, %v437
      %v439 = vpop.f32.mrb[0].mxu0
      %440 = vmatprep.mubr.f32.mxu0 0.0
      %441 = vmatmul.mubr.f32.gmra.mrb[0].mxu0 %v273
      %v442 = vpop.f32.mrb[0].mxu0
      %v443 = vadd.f32 0.0, %v442
      %v444 = vpop.f32.mrb[0].mxu0
      %445 = vmatprep.mubr.f32.mxu0 0.0
      %446 = vmatmul.mubr.f32.gmra.mrb[0].mxu0 %v276
      %v447 = vpop.f32.mrb[0].mxu0
      %v448 = vadd.f32 0.0, %v447
      %v449 = vpop.f32.mrb[0].mxu0
      %450 = vmatprep.mubr.f32.mxu0 0.0
      %451 = vmatmul.mubr.f32.gmra.mrb[0].mxu0 %v279
      %v452 = vpop.f32.mrb[0].mxu0
      %v453 = vadd.f32 0.0, %v452
      %v454 = vpop.f32.mrb[0].mxu0
      %455 = vmatprep.mubr.f32.mxu0 0.0
      %456 = vmatmul.mubr.f32.gmra.mrb[0].mxu0 %v282
      %v457 = vpop.f32.mrb[0].mxu0
      %v458 = vadd.f32 0.0, %v457
      %v459 = vpop.f32.mrb[0].mxu0
      %460 = vmatprep.mubr.f32.mxu0 0.0
      %461 = vmatmul.mubr.f32.gmra.mrb[0].mxu0 %v285
      %v462 = vpop.f32.mrb[0].mxu0
      %v463 = vadd.f32 0.0, %v462
      %v464 = vpop.f32.mrb[0].mxu0
      %465 = vmatprep.mubr.f32.mxu0 0.0
      %466 = vmatmul.mubr.f32.gmra.mrb[0].mxu0 %v288
      %v467 = vpop.f32.mrb[0].mxu0
      %v468 = vadd.f32 0.0, %v467
      %v469 = vpop.f32.mrb[0].mxu0
      %470 = vmatprep.mubr.f32.mxu0 0.0
      %471 = vmatmul.mubr.f32.gmra.mrb[0].mxu0 %v291
      %v472 = vpop.f32.mrb[0].mxu0
      %v473 = vadd.f32 0.0, %v472
      %v474 = vpop.f32.mrb[0].mxu0
      %475 = vmatprep.mubr.f32.mxu0 0.0
      %476 = vmatmul.mubr.f32.gmra.mrb[0].mxu0 %v294
      %v477 = vpop.f32.mrb[0].mxu0
      %v478 = vadd.f32 0.0, %v477
      %v479 = vpop.f32.mrb[0].mxu0
      %480 = vmatprep.mubr.f32.mxu0 0.0
      %481 = vmatmul.mubr.f32.gmra.mrb[0].mxu0 %v297
      %v482 = vpop.f32.mrb[0].mxu0
      %v483 = vadd.f32 0.0, %v482
      %v484 = vpop.f32.mrb[0].mxu0
      %485 = vmatprep.mubr.f32.mxu0 0.0
      %486 = vmatmul.mubr.f32.gmra.mrb[0].mxu0 %v300
      %v487 = vpop.f32.mrb[0].mxu0
      %v488 = vadd.f32 0.0, %v487
      %v489 = vpop.f32.mrb[0].mxu0
      %490 = vmatprep.mubr.f32.mxu0 0.0
      %491 = vmatmul.mubr.f32.gmra.mrb[0].mxu0 %v303
      %v492 = vpop.f32.mrb[0].mxu0
      %v493 = vadd.f32 0.0, %v492
      %v494 = vpop.f32.mrb[0].mxu0
      %495 = vmatprep.mubr.f32.mxu0 0.0
      %496 = vmatmul.mubr.f32.gmra.mrb[0].mxu0 %v306
      %v497 = vpop.f32.mrb[0].mxu0
      %v498 = vadd.f32 0.0, %v497
      %v499 = vpop.f32.mrb[0].mxu0
      %500 = vdwg.mxu0
      %v501 = vmul.f32 %v423, 0.2581989
      %v502 = vmul.f32 %v428, 0.2581989
      %v503 = vmul.f32 %v433, 0.2581989
      %v504 = vmul.f32 %v438, 0.2581989
      %v505 = vmul.f32 %v443, 0.2581989
      %v506 = vmul.f32 %v448, 0.2581989
      %v507 = vmul.f32 %v453, 0.2581989
      %v508 = vmul.f32 %v458, 0.2581989
      %v509 = vmul.f32 %v463, 0.2581989
      %v510 = vmul.f32 %v468, 0.2581989
      %v511 = vmul.f32 %v473, 0.2581989
      %v512 = vmul.f32 %v478, 0.2581989
      %v513 = vmul.f32 %v483, 0.2581989
      %v514 = vmul.f32 %v488, 0.2581989
      %v515 = vmul.f32 %v493, 0.2581989
      %v516 = vmul.f32 %v498, 0.2581989
      %517 = vmax.xlane.f32.xlu0 %v501
      %v518 = vpop.xlane.xlu0 %517
      %519 = vmax.xlane.f32.xlu0 %v502
      %v520 = vpop.xlane.xlu0 %519
      %521 = vmax.xlane.f32.xlu0 %v503
      %v522 = vpop.xlane.xlu0 %521
      %523 = vmax.xlane.f32.xlu0 %v504
      %v524 = vpop.xlane.xlu0 %523
      %525 = vmax.xlane.f32.xlu0 %v505
      %v526 = vpop.xlane.xlu0 %525
      %527 = vmax.xlane.f32.xlu0 %v506
      %v528 = vpop.xlane.xlu0 %527
      %529 = vmax.xlane.f32.xlu0 %v507
      %v530 = vpop.xlane.xlu0 %529
      %531 = vmax.xlane.f32.xlu0 %v508
      %v532 = vpop.xlane.xlu0 %531
      %533 = vmax.xlane.f32.xlu0 %v509
      %v534 = vpop.xlane.xlu0 %533
      %535 = vmax.xlane.f32.xlu0 %v510
      %v536 = vpop.xlane.xlu0 %535
      %537 = vmax.xlane.f32.xlu0 %v511
      %v538 = vpop.xlane.xlu0 %537
      %539 = vmax.xlane.f32.xlu0 %v512
      %v540 = vpop.xlane.xlu0 %539
      %541 = vmax.xlane.f32.xlu0 %v513
      %v542 = vpop.xlane.xlu0 %541
      %543 = vmax.xlane.f32.xlu0 %v514
      %v544 = vpop.xlane.xlu0 %543
      %545 = vmax.xlane.f32.xlu0 %v515
      %v546 = vpop.xlane.xlu0 %545
      %547 = vmax.xlane.f32.xlu0 %v516
      %v548 = vpop.xlane.xlu0 %547
      %v549 = vsub.f32 %v501, %v518
      %v550 = vsub.f32 %v502, %v520
      %v551 = vsub.f32 %v503, %v522
      %v552 = vsub.f32 %v504, %v524
      %v553 = vsub.f32 %v505, %v526
      %v554 = vsub.f32 %v506, %v528
      %v555 = vsub.f32 %v507, %v530
      %v556 = vsub.f32 %v508, %v532
      %v557 = vsub.f32 %v509, %v534
      %v558 = vsub.f32 %v510, %v536
      %v559 = vsub.f32 %v511, %v538
      %v560 = vsub.f32 %v512, %v540
      %v561 = vsub.f32 %v513, %v542
      %v562 = vsub.f32 %v514, %v544
      %v563 = vsub.f32 %v515, %v546
      %v564 = vsub.f32 %v516, %v548
      %v565 = vmul.f32 %v549, 1.442695
      %v566 = vpow.pop %v565
      %v567 = vmul.f32 %v550, 1.442695
      %v568 = vpow.pop %v567
      %v569 = vmul.f32 %v551, 1.442695
      %v570 = vpow.pop %v569
      %v571 = vmul.f32 %v552, 1.442695
      %v572 = vpow.pop %v571
      %v573 = vmul.f32 %v553, 1.442695
      %v574 = vpow.pop %v573
      %v575 = vmul.f32 %v554, 1.442695
      %v576 = vpow.pop %v575
      %v577 = vmul.f32 %v555, 1.442695
      %v578 = vpow.pop %v577
      %v579 = vmul.f32 %v556, 1.442695
      %v580 = vpow.pop %v579
      %v581 = vmul.f32 %v557, 1.442695
      %v582 = vpow.pop %v581
      %v583 = vmul.f32 %v558, 1.442695
      %v584 = vpow.pop %v583
      %v585 = vmul.f32 %v559, 1.442695
      %v586 = vpow.pop %v585
      %v587 = vmul.f32 %v560, 1.442695
      %v588 = vpow.pop %v587
      %v589 = vmul.f32 %v561, 1.442695
      %v590 = vpow.pop %v589
      %v591 = vmul.f32 %v562, 1.442695
      %v592 = vpow.pop %v591
      %v593 = vmul.f32 %v563, 1.442695
      %v594 = vpow.pop %v593
      %v595 = vmul.f32 %v564, 1.442695
      %v596 = vpow.pop %v595
      %597 = vadd.xlane.f32.xlu0 %v566
      %v598 = vpop.xlane.xlu0 %597
      %599 = vadd.xlane.f32.xlu0 %v568
      %v600 = vpop.xlane.xlu0 %599
      %601 = vadd.xlane.f32.xlu0 %v570
      %v602 = vpop.xlane.xlu0 %601
      %603 = vadd.xlane.f32.xlu0 %v572
      %v604 = vpop.xlane.xlu0 %603
      %605 = vadd.xlane.f32.xlu0 %v574
      %v606 = vpop.xlane.xlu0 %605
      %607 = vadd.xlane.f32.xlu0 %v576
      %v608 = vpop.xlane.xlu0 %607
      %609 = vadd.xlane.f32.xlu0 %v578
      %v610 = vpop.xlane.xlu0 %609
      %611 = vadd.xlane.f32.xlu0 %v580
      %v612 = vpop.xlane.xlu0 %611
      %613 = vadd.xlane.f32.xlu0 %v582
      %v614 = vpop.xlane.xlu0 %613
      %615 = vadd.xlane.f32.xlu0 %v584
      %v616 = vpop.xlane.xlu0 %615
      %617 = vadd.xlane.f32.xlu0 %v586
      %v618 = vpop.xlane.xlu0 %617
      %619 = vadd.xlane.f32.xlu0 %v588
      %v620 = vpop.xlane.xlu0 %619
      %621 = vadd.xlane.f32.xlu0 %v590
      %v622 = vpop.xlane.xlu0 %621
      %623 = vadd.xlane.f32.xlu0 %v592
      %v624 = vpop.xlane.xlu0 %623
      %625 = vadd.xlane.f32.xlu0 %v594
      %v626 = vpop.xlane.xlu0 %625
      %627 = vadd.xlane.f32.xlu0 %v596
      %v628 = vpop.xlane.xlu0 %627
      %v629 = vrcp.pop %v598
      %v630 = vmul.f32 %v566, %v629
      %v631 = vrcp.pop %v600
      %v632 = vmul.f32 %v568, %v631
      %v633 = vrcp.pop %v602
      %v634 = vmul.f32 %v570, %v633
      %v635 = vrcp.pop %v604
      %v636 = vmul.f32 %v572, %v635
      %v637 = vrcp.pop %v606
      %v638 = vmul.f32 %v574, %v637
      %v639 = vrcp.pop %v608
      %v640 = vmul.f32 %v576, %v639
      %v641 = vrcp.pop %v610
      %v642 = vmul.f32 %v578, %v641
      %v643 = vrcp.pop %v612
      %v644 = vmul.f32 %v580, %v643
      %v645 = vrcp.pop %v614
      %v646 = vmul.f32 %v582, %v645
      %v647 = vrcp.pop %v616
      %v648 = vmul.f32 %v584, %v647
      %v649 = vrcp.pop %v618
      %v650 = vmul.f32 %v586, %v649
      %v651 = vrcp.pop %v620
      %v652 = vmul.f32 %v588, %v651
      %v653 = vrcp.pop %v622
      %v654 = vmul.f32 %v590, %v653
      %v655 = vrcp.pop %v624
      %v656 = vmul.f32 %v592, %v655
      %v657 = vrcp.pop %v626
      %v658 = vmul.f32 %v594, %v657
      %v659 = vrcp.pop %v628
      %v660 = vmul.f32 %v596, %v659
      %661 = vmatprep.subr.mxu0 0.0
      %662 = vmatpush1.msra.mxu0 %v243
      %663 = vmatprep.subr.mxu0 0.0
      %664 = vmatpush1.msra.mxu0 %v244
      %665 = vmatprep.subr.mxu0 0.0
      %666 = vmatpush1.msra.mxu0 %v245
      %667 = vmatprep.subr.mxu0 0.0
      %668 = vmatpush1.msra.mxu0 %v246
      %669 = vmatprep.subr.mxu0 0.0
      %670 = vmatpush1.msra.mxu0 %v247
      %671 = vmatprep.subr.mxu0 0.0
      %672 = vmatpush1.msra.mxu0 %v248
      %673 = vmatprep.subr.mxu0 0.0
      %674 = vmatpush1.msra.mxu0 %v249
      %675 = vmatprep.subr.mxu0 0.0
      %676 = vmatpush1.msra.mxu0 %v250
      %677 = vmatprep.subr.mxu0 0.0
      %678 = vmatpush1.msra.mxu0 %v251
      %679 = vmatprep.subr.mxu0 0.0
      %680 = vmatpush1.msra.mxu0 %v252
      %681 = vmatprep.subr.mxu0 0.0
      %682 = vmatpush1.msra.mxu0 %v253
      %683 = vmatprep.subr.mxu0 0.0
      %684 = vmatpush1.msra.mxu0 %v254
      %685 = vmatprep.subr.mxu0 0.0
      %686 = vmatpush1.msra.mxu0 %v255
      %687 = vmatprep.subr.mxu0 0.0
      %688 = vmatpush1.msra.mxu0 %v256
      %689 = vmatprep.subr.mxu0 0.0
      %690 = vmatpush1.msra.mxu0 %v257
      %691 = vmatprep.subr.mxu0 0.0
      %692 = vmatpush1.msra.mxu0 %v258
      %693 = vmatprep.subr.mxu0 0.0
      %694 = vmatpush1.msra.mxu0 0.0
      %695 = vmatprep.subr.mxu0 0.0
      %696 = vmatpush1.msra.mxu0 0.0
      %697 = vmatprep.subr.mxu0 0.0
      %698 = vmatpush1.msra.mxu0 0.0
      %699 = vmatprep.subr.mxu0 0.0
      %700 = vmatpush1.msra.mxu0 0.0
      %701 = vmatprep.subr.mxu0 0.0
      %702 = vmatpush1.msra.mxu0 0.0
      %703 = vmatprep.subr.mxu0 0.0
      %704 = vmatpush1.msra.mxu0 0.0
      %705 = vmatprep.subr.mxu0 0.0
      %706 = vmatpush1.msra.mxu0 0.0
      %707 = vmatprep.subr.mxu0 0.0
      %708 = vmatpush1.msra.mxu0 0.0
      %709 = vmatprep.subr.mxu0 0.0
      %710 = vmatpush1.msra.mxu0 0.0
      %711 = vmatprep.subr.mxu0 0.0
      %712 = vmatpush1.msra.mxu0 0.0
      %713 = vmatprep.subr.mxu0 0.0
      %714 = vmatpush1.msra.mxu0 0.0
      %715 = vmatprep.subr.mxu0 0.0
      %716 = vmatpush1.msra.mxu0 0.0
      %717 = vmatprep.subr.mxu0 0.0
      %718 = vmatpush1.msra.mxu0 0.0
      %719 = vmatprep.subr.mxu0 0.0
      %720 = vmatpush1.msra.mxu0 0.0
      %721 = vmatprep.subr.mxu0 0.0
      %722 = vmatpush1.msra.mxu0 0.0
      %723 = vmatprep.subr.mxu0 0.0
      %724 = vmatpush1.msra.mxu0 0.0
      %725 = vmatprep.mubr.f32.mxu0 0.0
      %726 = vmatmul.mubr.f32.gmra.mrb[0].mxu0 %v630
      %v727 = vpop.f32.mrb[0].mxu0
      %v728 = vadd.f32 0.0, %v727
      %v729 = vpop.f32.mrb[0].mxu0
      %730 = vmatprep.mubr.f32.mxu0 0.0
      %731 = vmatmul.mubr.f32.gmra.mrb[0].mxu0 %v632
      %v732 = vpop.f32.mrb[0].mxu0
      %v733 = vadd.f32 0.0, %v732
      %v734 = vpop.f32.mrb[0].mxu0
      %735 = vmatprep.mubr.f32.mxu0 0.0
      %736 = vmatmul.mubr.f32.gmra.mrb[0].mxu0 %v634
      %v737 = vpop.f32.mrb[0].mxu0
      %v738 = vadd.f32 0.0, %v737
      %v739 = vpop.f32.mrb[0].mxu0
      %740 = vmatprep.mubr.f32.mxu0 0.0
      %741 = vmatmul.mubr.f32.gmra.mrb[0].mxu0 %v636
      %v742 = vpop.f32.mrb[0].mxu0
      %v743 = vadd.f32 0.0, %v742
      %v744 = vpop.f32.mrb[0].mxu0
      %745 = vmatprep.mubr.f32.mxu0 0.0
      %746 = vmatmul.mubr.f32.gmra.mrb[0].mxu0 %v638
      %v747 = vpop.f32.mrb[0].mxu0
      %v748 = vadd.f32 0.0, %v747
      %v749 = vpop.f32.mrb[0].mxu0
      %750 = vmatprep.mubr.f32.mxu0 0.0
      %751 = vmatmul.mubr.f32.gmra.mrb[0].mxu0 %v640
      %v752 = vpop.f32.mrb[0].mxu0
      %v753 = vadd.f32 0.0, %v752
      %v754 = vpop.f32.mrb[0].mxu0
      %755 = vmatprep.mubr.f32.mxu0 0.0
      %756 = vmatmul.mubr.f32.gmra.mrb[0].mxu0 %v642
      %v757 = vpop.f32.mrb[0].mxu0
      %v758 = vadd.f32 0.0, %v757
      %v759 = vpop.f32.mrb[0].mxu0
      %760 = vmatprep.mubr.f32.mxu0 0.0
      %761 = vmatmul.mubr.f32.gmra.mrb[0].mxu0 %v644
      %v762 = vpop.f32.mrb[0].mxu0
      %v763 = vadd.f32 0.0, %v762
      %v764 = vpop.f32.mrb[0].mxu0
      %765 = vmatprep.mubr.f32.mxu0 0.0
      %766 = vmatmul.mubr.f32.gmra.mrb[0].mxu0 %v646
      %v767 = vpop.f32.mrb[0].mxu0
      %v768 = vadd.f32 0.0, %v767
      %v769 = vpop.f32.mrb[0].mxu0
      %770 = vmatprep.mubr.f32.mxu0 0.0
      %771 = vmatmul.mubr.f32.gmra.mrb[0].mxu0 %v648
      %v772 = vpop.f32.mrb[0].mxu0
      %v773 = vadd.f32 0.0, %v772
      %v774 = vpop.f32.mrb[0].mxu0
      %775 = vmatprep.mubr.f32.mxu0 0.0
      %776 = vmatmul.mubr.f32.gmra.mrb[0].mxu0 %v650
      %v777 = vpop.f32.mrb[0].mxu0
      %v778 = vadd.f32 0.0, %v777
      %v779 = vpop.f32.mrb[0].mxu0
      %780 = vmatprep.mubr.f32.mxu0 0.0
      %781 = vmatmul.mubr.f32.gmra.mrb[0].mxu0 %v652
      %v782 = vpop.f32.mrb[0].mxu0
      %v783 = vadd.f32 0.0, %v782
      %v784 = vpop.f32.mrb[0].mxu0
      %785 = vmatprep.mubr.f32.mxu0 0.0
      %786 = vmatmul.mubr.f32.gmra.mrb[0].mxu0 %v654
      %v787 = vpop.f32.mrb[0].mxu0
      %v788 = vadd.f32 0.0, %v787
      %v789 = vpop.f32.mrb[0].mxu0
      %790 = vmatprep.mubr.f32.mxu0 0.0
      %791 = vmatmul.mubr.f32.gmra.mrb[0].mxu0 %v656
      %v792 = vpop.f32.mrb[0].mxu0
      %v793 = vadd.f32 0.0, %v792
      %v794 = vpop.f32.mrb[0].mxu0
      %795 = vmatprep.mubr.f32.mxu0 0.0
      %796 = vmatmul.mubr.f32.gmra.mrb[0].mxu0 %v658
      %v797 = vpop.f32.mrb[0].mxu0
      %v798 = vadd.f32 0.0, %v797
      %v799 = vpop.f32.mrb[0].mxu0
      %800 = vmatprep.mubr.f32.mxu0 0.0
      %801 = vmatmul.mubr.f32.gmra.mrb[0].mxu0 %v660
      %v802 = vpop.f32.mrb[0].mxu0
      %v803 = vadd.f32 0.0, %v802
      %v804 = vpop.f32.mrb[0].mxu0
      %805 = vdwg.mxu0
      %806 = vst.msk [vmem:[%s210] sm:$0xff] %vm259, %v728
      %807 = vst.msk [vmem:[%s210 + $0x8] sm:$0xff] %vm259, %v733
      %808 = vst.msk [vmem:[%s210 + $0x10] sm:$0xff] %vm259, %v738
      %809 = vst.msk [vmem:[%s210 + $0x18] sm:$0xff] %vm259, %v743
      %810 = vst.msk [vmem:[%s210 + $0x20] sm:$0xff] %vm259, %v748
      %811 = vst.msk [vmem:[%s210 + $0x28] sm:$0xff] %vm259, %v753
      %812 = vst.msk [vmem:[%s210 + $0x30] sm:$0xff] %vm259, %v758
      %813 = vst.msk [vmem:[%s210 + $0x38] sm:$0xff] %vm259, %v763
      %814 = vst.msk [vmem:[%s210 + $0x40] sm:$0xff] %vm259, %v768
      %815 = vst.msk [vmem:[%s210 + $0x48] sm:$0xff] %vm259, %v773
      %816 = vst.msk [vmem:[%s210 + $0x50] sm:$0xff] %vm259, %v778
      %817 = vst.msk [vmem:[%s210 + $0x58] sm:$0xff] %vm259, %v783
      %818 = vst.msk [vmem:[%s210 + $0x60] sm:$0xff] %vm259, %v788
      %819 = vst.msk [vmem:[%s210 + $0x68] sm:$0xff] %vm259, %v793
      %820 = vst.msk [vmem:[%s210 + $0x70] sm:$0xff] %vm259, %v798
      %821 = vst.msk [vmem:[%s210 + $0x78] sm:$0xff] %vm259, %v803
      %p822 = scmp.lt.s32.totalorder %s14, 15
      %s823 = scalar_select %p822, %s14, 15
      %s824 = smul.addr %s823, 16
      %s825 = smul.addr %s824, 8
      %s826 = scalar_lea.vmem %s3, %s825
      // Predicated region
      $region33: #{encoder_with_svtr_forward.24} parent=31 // pred_check
        %p827 = pneg %p110
      $region34: #{encoder_with_svtr_forward.24} parent=31 // pred_check_branch
        %829 = sbr.rel (%p827) target = $region36
      $region35: #{encoder_with_svtr_forward.24} parent=31 // pred_region
        _
      $region36: #{encoder_with_svtr_forward.24} parent=31 // pred_fallthru
        _
    $region32: #{encoder_with_svtr_forward.24} parent=5 // pred_fallthru
      _
    %p830 = scmp.le.s32.totalorder 2, %s9
    // Predicated region
    $region37: #{encoder_with_svtr_forward.24} parent=5 // pred_check
      %p831 = pneg %p830
    $region38: #{encoder_with_svtr_forward.24} parent=5 // pred_check_branch
      %833 = sbr.rel (%p831) target = $region40
    $region39: #{encoder_with_svtr_forward.24} parent=5 // pred_region
      %s834 = ssub.s32 %s9, 2
      // Predicated region
      $region41: #{encoder_with_svtr_forward.24} parent=39 // pred_check
        %p835 = pneg %p116
      $region42: #{encoder_with_svtr_forward.24} parent=39 // pred_check_branch
        %837 = sbr.rel (%p835) target = $region44
      $region43: #{encoder_with_svtr_forward.24} parent=39 // pred_region
        %p838 = scmp.lt.s32.totalorder %s15, 15
        %s839 = scalar_select %p838, %s15, 15
        %s840 = smul.addr %s839, 16
        %s841 = smul.addr %s840, 8
        %s842 = scalar_lea.vmem %s3, %s841
      $region44: #{encoder_with_svtr_forward.24} parent=39 // pred_fallthru
        _
    $region40: #{encoder_with_svtr_forward.24} parent=5 // pred_fallthru
      _
  $region6: #{encoder_with_svtr_forward.24} parent=0 // loop_footer
    %s13 = sadd.s32 1, %s9
  $region7: #{encoder_with_svtr_forward.24} parent=0 // loop_footer_branch
    %8 = sbr.rel target = $region3
  $region8: #{encoder_with_svtr_forward.24} parent=0 // loop_exit
    _

// kernel: encoder_with_svtr_forward.25
$region0: #{encoder_with_svtr_forward.25}
  #allocation0 [shape = 'u32[]', space=smem, size = 0x4, offset = 0x4, fixed_abs, tag = 'smem constant byte address 0x4 - core index']
  #allocation1 [shape = 'u32[144,128]{1,0:T(1,128)}', space=vmem, size = 0x12000, scoped, tag = 'internal scratch']
  %s0 = inlined_call_operand.vmem [shape: f32[256,120], index: 0, kind: input, shape index: {}]
  %s1 = inlined_call_operand.vmem [shape: f32[120,128], index: 1, kind: input, shape index: {}]
  %s2 = inlined_call_operand.vmem [shape: f32[1,128], index: 2, kind: input, shape index: {}]
  %s3 = inlined_call_operand.vmem [shape: f32[256,128], index: 3, kind: output, shape index: {}]
  %s4 = sld [smem:[#allocation0]]
  $region22: #{encoder_with_svtr_forward.25} parent=0
    _
  %s6 = ssub.s32 1, %s4
  %s7 = scalar_select 0, %s6, %s4
  // Predicated region
  $region2: #{encoder_with_svtr_forward.25} parent=0 // pred_check
    _
  $region3: #{encoder_with_svtr_forward.25} parent=0 // pred_check_branch
    %9 = sbr.rel (0) target = $region5
  $region4: #{encoder_with_svtr_forward.25} parent=0 // pred_region
    _
  $region5: #{encoder_with_svtr_forward.25} parent=0 // pred_fallthru
    _
  // Predicated region
  $region6: #{encoder_with_svtr_forward.25} parent=0 // pred_check
    _
  $region7: #{encoder_with_svtr_forward.25} parent=0 // pred_check_branch
    %11 = sbr.rel (0) target = $region9
  $region8: #{encoder_with_svtr_forward.25} parent=0 // pred_region
    _
  $region9: #{encoder_with_svtr_forward.25} parent=0 // pred_fallthru
    _
  // Predicated region
  $region10: #{encoder_with_svtr_forward.25} parent=0 // pred_check
    _
  $region11: #{encoder_with_svtr_forward.25} parent=0 // pred_check_branch
    %13 = sbr.rel (0) target = $region13
  $region12: #{encoder_with_svtr_forward.25} parent=0 // pred_region
    _
  $region13: #{encoder_with_svtr_forward.25} parent=0 // pred_fallthru
    _
  %v14 = vld [vmem:[%s0] sm:$0xff]
  %v15 = vld [vmem:[%s0 + $0x8] sm:$0xff]
  %v16 = vld [vmem:[%s0 + $0x10] sm:$0xff]
  %v17 = vld [vmem:[%s0 + $0x18] sm:$0xff]
  %v18 = vld [vmem:[%s0 + $0x20] sm:$0xff]
  %v19 = vld [vmem:[%s0 + $0x28] sm:$0xff]
  %v20 = vld [vmem:[%s0 + $0x30] sm:$0xff]
  %v21 = vld [vmem:[%s0 + $0x38] sm:$0xff]
  %v22 = vld [vmem:[%s0 + $0x40] sm:$0xff]
  %v23 = vld [vmem:[%s0 + $0x48] sm:$0xff]
  %v24 = vld [vmem:[%s0 + $0x50] sm:$0xff]
  %v25 = vld [vmem:[%s0 + $0x58] sm:$0xff]
  %v26 = vld [vmem:[%s0 + $0x60] sm:$0xff]
  %v27 = vld [vmem:[%s0 + $0x68] sm:$0xff]
  %v28 = vld [vmem:[%s0 + $0x70] sm:$0xff]
  %v29 = vld [vmem:[%s0 + $0x78] sm:$0xff]
  %v30 = vld [vmem:[%s0 + $0x80] sm:$0xff]
  %v31 = vld [vmem:[%s0 + $0x88] sm:$0xff]
  %v32 = vld [vmem:[%s0 + $0x90] sm:$0xff]
  %v33 = vld [vmem:[%s0 + $0x98] sm:$0xff]
  %v34 = vld [vmem:[%s0 + $0xa0] sm:$0xff]
  %v35 = vld [vmem:[%s0 + $0xa8] sm:$0xff]
  %v36 = vld [vmem:[%s0 + $0xb0] sm:$0xff]
  %v37 = vld [vmem:[%s0 + $0xb8] sm:$0xff]
  %v38 = vld [vmem:[%s0 + $0xc0] sm:$0xff]
  %v39 = vld [vmem:[%s0 + $0xc8] sm:$0xff]
  %v40 = vld [vmem:[%s0 + $0xd0] sm:$0xff]
  %v41 = vld [vmem:[%s0 + $0xd8] sm:$0xff]
  %v42 = vld [vmem:[%s0 + $0xe0] sm:$0xff]
  %v43 = vld [vmem:[%s0 + $0xe8] sm:$0xff]
  %v44 = vld [vmem:[%s0 + $0xf0] sm:$0xff]
  %v45 = vld [vmem:[%s0 + $0xf8] sm:$0xff]
  %v46 = vld [vmem:[%s1] sm:$0xff]
  %v47 = vld [vmem:[%s1 + $0x8] sm:$0xff]
  %v48 = vld [vmem:[%s1 + $0x10] sm:$0xff]
  %v49 = vld [vmem:[%s1 + $0x18] sm:$0xff]
  %v50 = vld [vmem:[%s1 + $0x20] sm:$0xff]
  %v51 = vld [vmem:[%s1 + $0x28] sm:$0xff]
  %v52 = vld [vmem:[%s1 + $0x30] sm:$0xff]
  %v53 = vld [vmem:[%s1 + $0x38] sm:$0xff]
  %v54 = vld [vmem:[%s1 + $0x40] sm:$0xff]
  %v55 = vld [vmem:[%s1 + $0x48] sm:$0xff]
  %v56 = vld [vmem:[%s1 + $0x50] sm:$0xff]
  %v57 = vld [vmem:[%s1 + $0x58] sm:$0xff]
  %v58 = vld [vmem:[%s1 + $0x60] sm:$0xff]
  %v59 = vld [vmem:[%s1 + $0x68] sm:$0xff]
  %v60 = vld [vmem:[%s1 + $0x70] sm:$0xff]
  %v61 = vld [vmem:[%s2] sm:$0x1]
  %v63 = vlaneseq
  %v64 = vshrl.u32 %v63, 7
  %v65 = vsub.s32 0, %v64
  %v66 = vrot.slane %v61, %v65
  %vm68 = vcmask 982016
  %v70 = vsel %vm68, %v14, 0
  %v73 = vsel %vm68, %v15, 0
  %v76 = vsel %vm68, %v16, 0
  %v79 = vsel %vm68, %v17, 0
  %v82 = vsel %vm68, %v18, 0
  %v85 = vsel %vm68, %v19, 0
  %v88 = vsel %vm68, %v20, 0
  %v91 = vsel %vm68, %v21, 0
  %v94 = vsel %vm68, %v22, 0
  %v97 = vsel %vm68, %v23, 0
  %v100 = vsel %vm68, %v24, 0
  %v103 = vsel %vm68, %v25, 0
  %v106 = vsel %vm68, %v26, 0
  %v109 = vsel %vm68, %v27, 0
  %v112 = vsel %vm68, %v28, 0
  %v115 = vsel %vm68, %v29, 0
  %v118 = vsel %vm68, %v30, 0
  %v121 = vsel %vm68, %v31, 0
  %v124 = vsel %vm68, %v32, 0
  %v127 = vsel %vm68, %v33, 0
  %v130 = vsel %vm68, %v34, 0
  %v133 = vsel %vm68, %v35, 0
  %v136 = vsel %vm68, %v36, 0
  %v139 = vsel %vm68, %v37, 0
  %v142 = vsel %vm68, %v38, 0
  %v145 = vsel %vm68, %v39, 0
  %v148 = vsel %vm68, %v40, 0
  %v151 = vsel %vm68, %v41, 0
  %v154 = vsel %vm68, %v42, 0
  %v157 = vsel %vm68, %v43, 0
  %v160 = vsel %vm68, %v44, 0
  %v163 = vsel %vm68, %v45, 0
  %165 = vmatprep.subr.mxu0 0.0
  %166 = vmatpush1.msra.mxu0 %v46
  %167 = vmatprep.subr.mxu0 0.0
  %168 = vmatpush1.msra.mxu0 %v47
  %169 = vmatprep.subr.mxu0 0.0
  %170 = vmatpush1.msra.mxu0 %v48
  %171 = vmatprep.subr.mxu0 0.0
  %172 = vmatpush1.msra.mxu0 %v49
  %173 = vmatprep.subr.mxu0 0.0
  %174 = vmatpush1.msra.mxu0 %v50
  %175 = vmatprep.subr.mxu0 0.0
  %176 = vmatpush1.msra.mxu0 %v51
  %177 = vmatprep.subr.mxu0 0.0
  %178 = vmatpush1.msra.mxu0 %v52
  %179 = vmatprep.subr.mxu0 0.0
  %180 = vmatpush1.msra.mxu0 %v53
  %181 = vmatprep.subr.mxu0 0.0
  %182 = vmatpush1.msra.mxu0 %v54
  %183 = vmatprep.subr.mxu0 0.0
  %184 = vmatpush1.msra.mxu0 %v55
  %185 = vmatprep.subr.mxu0 0.0
  %186 = vmatpush1.msra.mxu0 %v56
  %187 = vmatprep.subr.mxu0 0.0
  %188 = vmatpush1.msra.mxu0 %v57
  %189 = vmatprep.subr.mxu0 0.0
  %190 = vmatpush1.msra.mxu0 %v58
  %191 = vmatprep.subr.mxu0 0.0
  %192 = vmatpush1.msra.mxu0 %v59
  %193 = vmatprep.subr.mxu0 0.0
  %194 = vmatpush1.msra.mxu0 %v60
  %195 = vmatprep.subr.mxu0 0.0
  %196 = vmatpush1.msra.mxu0 0.0
  %197 = vmatprep.subr.mxu0 0.0
  %198 = vmatpush1.msra.mxu0 0.0
  %199 = vmatprep.subr.mxu0 0.0
  %200 = vmatpush1.msra.mxu0 0.0
  %201 = vmatprep.subr.mxu0 0.0
  %202 = vmatpush1.msra.mxu0 0.0
  %203 = vmatprep.subr.mxu0 0.0
  %204 = vmatpush1.msra.mxu0 0.0
  %205 = vmatprep.subr.mxu0 0.0
  %206 = vmatpush1.msra.mxu0 0.0
  %207 = vmatprep.subr.mxu0 0.0
  %208 = vmatpush1.msra.mxu0 0.0
  %209 = vmatprep.subr.mxu0 0.0
  %210 = vmatpush1.msra.mxu0 0.0
  %211 = vmatprep.subr.mxu0 0.0
  %212 = vmatpush1.msra.mxu0 0.0
  %213 = vmatprep.subr.mxu0 0.0
  %214 = vmatpush1.msra.mxu0 0.0
  %215 = vmatprep.subr.mxu0 0.0
  %216 = vmatpush1.msra.mxu0 0.0
  %217 = vmatprep.subr.mxu0 0.0
  %218 = vmatpush1.msra.mxu0 0.0
  %219 = vmatprep.subr.mxu0 0.0
  %220 = vmatpush1.msra.mxu0 0.0
  %221 = vmatprep.subr.mxu0 0.0
  %222 = vmatpush1.msra.mxu0 0.0
  %223 = vmatprep.subr.mxu0 0.0
  %224 = vmatpush1.msra.mxu0 0.0
  %225 = vmatprep.subr.mxu0 0.0
  %226 = vmatpush1.msra.mxu0 0.0
  %227 = vmatprep.subr.mxu0 0.0
  %228 = vmatpush1.msra.mxu0 0.0
  %229 = vmatprep.mubr.f32.mxu0 0.0
  %230 = vmatmul.mubr.f32.gmra.mrb[0].mxu0 %v70
  %v231 = vpop.f32.mrb[0].mxu0
  %v232 = vadd.f32 %v66, %v231
  %v233 = vpop.f32.mrb[0].mxu0
  %234 = vmatprep.mubr.f32.mxu0 0.0
  %235 = vmatmul.mubr.f32.gmra.mrb[0].mxu0 %v73
  %v236 = vpop.f32.mrb[0].mxu0
  %v237 = vadd.f32 %v66, %v236
  %v238 = vpop.f32.mrb[0].mxu0
  %239 = vmatprep.mubr.f32.mxu0 0.0
  %240 = vmatmul.mubr.f32.gmra.mrb[0].mxu0 %v76
  %v241 = vpop.f32.mrb[0].mxu0
  %v242 = vadd.f32 %v66, %v241
  %v243 = vpop.f32.mrb[0].mxu0
  %244 = vmatprep.mubr.f32.mxu0 0.0
  %245 = vmatmul.mubr.f32.gmra.mrb[0].mxu0 %v79
  %v246 = vpop.f32.mrb[0].mxu0
  %v247 = vadd.f32 %v66, %v246
  %v248 = vpop.f32.mrb[0].mxu0
  %249 = vmatprep.mubr.f32.mxu0 0.0
  %250 = vmatmul.mubr.f32.gmra.mrb[0].mxu0 %v82
  %v251 = vpop.f32.mrb[0].mxu0
  %v252 = vadd.f32 %v66, %v251
  %v253 = vpop.f32.mrb[0].mxu0
  %254 = vmatprep.mubr.f32.mxu0 0.0
  %255 = vmatmul.mubr.f32.gmra.mrb[0].mxu0 %v85
  %v256 = vpop.f32.mrb[0].mxu0
  %v257 = vadd.f32 %v66, %v256
  %v258 = vpop.f32.mrb[0].mxu0
  %259 = vmatprep.mubr.f32.mxu0 0.0
  %260 = vmatmul.mubr.f32.gmra.mrb[0].mxu0 %v88
  %v261 = vpop.f32.mrb[0].mxu0
  %v262 = vadd.f32 %v66, %v261
  %v263 = vpop.f32.mrb[0].mxu0
  %264 = vmatprep.mubr.f32.mxu0 0.0
  %265 = vmatmul.mubr.f32.gmra.mrb[0].mxu0 %v91
  %v266 = vpop.f32.mrb[0].mxu0
  %v267 = vadd.f32 %v66, %v266
  %v268 = vpop.f32.mrb[0].mxu0
  %269 = vmatprep.mubr.f32.mxu0 0.0
  %270 = vmatmul.mubr.f32.gmra.mrb[0].mxu0 %v94
  %v271 = vpop.f32.mrb[0].mxu0
  %v272 = vadd.f32 %v66, %v271
  %v273 = vpop.f32.mrb[0].mxu0
  %274 = vmatprep.mubr.f32.mxu0 0.0
  %275 = vmatmul.mubr.f32.gmra.mrb[0].mxu0 %v97
  %v276 = vpop.f32.mrb[0].mxu0
  %v277 = vadd.f32 %v66, %v276
  %v278 = vpop.f32.mrb[0].mxu0
  %279 = vmatprep.mubr.f32.mxu0 0.0
  %280 = vmatmul.mubr.f32.gmra.mrb[0].mxu0 %v100
  %v281 = vpop.f32.mrb[0].mxu0
  %v282 = vadd.f32 %v66, %v281
  %v283 = vpop.f32.mrb[0].mxu0
  %284 = vmatprep.mubr.f32.mxu0 0.0
  %285 = vmatmul.mubr.f32.gmra.mrb[0].mxu0 %v103
  %v286 = vpop.f32.mrb[0].mxu0
  %v287 = vadd.f32 %v66, %v286
  %v288 = vpop.f32.mrb[0].mxu0
  %289 = vmatprep.mubr.f32.mxu0 0.0
  %290 = vmatmul.mubr.f32.gmra.mrb[0].mxu0 %v106
  %v291 = vpop.f32.mrb[0].mxu0
  %v292 = vadd.f32 %v66, %v291
  %v293 = vpop.f32.mrb[0].mxu0
  %294 = vmatprep.mubr.f32.mxu0 0.0
  %295 = vmatmul.mubr.f32.gmra.mrb[0].mxu0 %v109
  %v296 = vpop.f32.mrb[0].mxu0
  %v297 = vadd.f32 %v66, %v296
  %v298 = vpop.f32.mrb[0].mxu0
  %299 = vmatprep.mubr.f32.mxu0 0.0
  %300 = vmatmul.mubr.f32.gmra.mrb[0].mxu0 %v112
  %v301 = vpop.f32.mrb[0].mxu0
  %v302 = vadd.f32 %v66, %v301
  %v303 = vpop.f32.mrb[0].mxu0
  %304 = vmatprep.mubr.f32.mxu0 0.0
  %305 = vmatmul.mubr.f32.gmra.mrb[0].mxu0 %v115
  %v306 = vpop.f32.mrb[0].mxu0
  %v307 = vadd.f32 %v66, %v306
  %v308 = vpop.f32.mrb[0].mxu0
  %309 = vmatprep.mubr.f32.mxu0 0.0
  %310 = vmatmul.mubr.f32.gmra.mrb[0].mxu0 %v118
  %v311 = vpop.f32.mrb[0].mxu0
  %v312 = vadd.f32 %v66, %v311
  %v313 = vpop.f32.mrb[0].mxu0
  %314 = vmatprep.mubr.f32.mxu0 0.0
  %315 = vmatmul.mubr.f32.gmra.mrb[0].mxu0 %v121
  %v316 = vpop.f32.mrb[0].mxu0
  %v317 = vadd.f32 %v66, %v316
  %v318 = vpop.f32.mrb[0].mxu0
  %319 = vmatprep.mubr.f32.mxu0 0.0
  %320 = vmatmul.mubr.f32.gmra.mrb[0].mxu0 %v124
  %v321 = vpop.f32.mrb[0].mxu0
  %v322 = vadd.f32 %v66, %v321
  %v323 = vpop.f32.mrb[0].mxu0
  %324 = vmatprep.mubr.f32.mxu0 0.0
  %325 = vmatmul.mubr.f32.gmra.mrb[0].mxu0 %v127
  %v326 = vpop.f32.mrb[0].mxu0
  %v327 = vadd.f32 %v66, %v326
  %v328 = vpop.f32.mrb[0].mxu0
  %329 = vmatprep.mubr.f32.mxu0 0.0
  %330 = vmatmul.mubr.f32.gmra.mrb[0].mxu0 %v130
  %v331 = vpop.f32.mrb[0].mxu0
  %v332 = vadd.f32 %v66, %v331
  %v333 = vpop.f32.mrb[0].mxu0
  %334 = vmatprep.mubr.f32.mxu0 0.0
  %335 = vmatmul.mubr.f32.gmra.mrb[0].mxu0 %v133
  %v336 = vpop.f32.mrb[0].mxu0
  %v337 = vadd.f32 %v66, %v336
  %v338 = vpop.f32.mrb[0].mxu0
  %339 = vmatprep.mubr.f32.mxu0 0.0
  %340 = vmatmul.mubr.f32.gmra.mrb[0].mxu0 %v136
  %v341 = vpop.f32.mrb[0].mxu0
  %v342 = vadd.f32 %v66, %v341
  %v343 = vpop.f32.mrb[0].mxu0
  %344 = vmatprep.mubr.f32.mxu0 0.0
  %345 = vmatmul.mubr.f32.gmra.mrb[0].mxu0 %v139
  %v346 = vpop.f32.mrb[0].mxu0
  %v347 = vadd.f32 %v66, %v346
  %v348 = vpop.f32.mrb[0].mxu0
  %349 = vmatprep.mubr.f32.mxu0 0.0
  %350 = vmatmul.mubr.f32.gmra.mrb[0].mxu0 %v142
  %v351 = vpop.f32.mrb[0].mxu0
  %v352 = vadd.f32 %v66, %v351
  %v353 = vpop.f32.mrb[0].mxu0
  %354 = vmatprep.mubr.f32.mxu0 0.0
  %355 = vmatmul.mubr.f32.gmra.mrb[0].mxu0 %v145
  %v356 = vpop.f32.mrb[0].mxu0
  %v357 = vadd.f32 %v66, %v356
  %v358 = vpop.f32.mrb[0].mxu0
  %359 = vmatprep.mubr.f32.mxu0 0.0
  %360 = vmatmul.mubr.f32.gmra.mrb[0].mxu0 %v148
  %v361 = vpop.f32.mrb[0].mxu0
  %v362 = vadd.f32 %v66, %v361
  %v363 = vpop.f32.mrb[0].mxu0
  %364 = vmatprep.mubr.f32.mxu0 0.0
  %365 = vmatmul.mubr.f32.gmra.mrb[0].mxu0 %v151
  %v366 = vpop.f32.mrb[0].mxu0
  %v367 = vadd.f32 %v66, %v366
  %v368 = vpop.f32.mrb[0].mxu0
  %369 = vmatprep.mubr.f32.mxu0 0.0
  %370 = vmatmul.mubr.f32.gmra.mrb[0].mxu0 %v154
  %v371 = vpop.f32.mrb[0].mxu0
  %v372 = vadd.f32 %v66, %v371
  %v373 = vpop.f32.mrb[0].mxu0
  %374 = vmatprep.mubr.f32.mxu0 0.0
  %375 = vmatmul.mubr.f32.gmra.mrb[0].mxu0 %v157
  %v376 = vpop.f32.mrb[0].mxu0
  %v377 = vadd.f32 %v66, %v376
  %v378 = vpop.f32.mrb[0].mxu0
  %379 = vmatprep.mubr.f32.mxu0 0.0
  %380 = vmatmul.mubr.f32.gmra.mrb[0].mxu0 %v160
  %v381 = vpop.f32.mrb[0].mxu0
  %v382 = vadd.f32 %v66, %v381
  %v383 = vpop.f32.mrb[0].mxu0
  %384 = vmatprep.mubr.f32.mxu0 0.0
  %385 = vmatmul.mubr.f32.gmra.mrb[0].mxu0 %v163
  %v386 = vpop.f32.mrb[0].mxu0
  %v387 = vadd.f32 %v66, %v386
  %v388 = vpop.f32.mrb[0].mxu0
  %389 = vdwg.mxu0
  %390 = vst [vmem:[%s3] sm:$0xff] %v232
  %391 = vst [vmem:[%s3 + $0x8] sm:$0xff] %v237
  %392 = vst [vmem:[%s3 + $0x10] sm:$0xff] %v242
  %393 = vst [vmem:[%s3 + $0x18] sm:$0xff] %v247
  %394 = vst [vmem:[%s3 + $0x20] sm:$0xff] %v252
  %395 = vst [vmem:[%s3 + $0x28] sm:$0xff] %v257
  %396 = vst [vmem:[%s3 + $0x30] sm:$0xff] %v262
  %397 = vst [vmem:[%s3 + $0x38] sm:$0xff] %v267
  %398 = vst [vmem:[%s3 + $0x40] sm:$0xff] %v272
  %399 = vst [vmem:[%s3 + $0x48] sm:$0xff] %v277
  %400 = vst [vmem:[%s3 + $0x50] sm:$0xff] %v282
  %401 = vst [vmem:[%s3 + $0x58] sm:$0xff] %v287
  %402 = vst [vmem:[%s3 + $0x60] sm:$0xff] %v292
  %403 = vst [vmem:[%s3 + $0x68] sm:$0xff] %v297
  %404 = vst [vmem:[%s3 + $0x70] sm:$0xff] %v302
  %405 = vst [vmem:[%s3 + $0x78] sm:$0xff] %v307
  %406 = vst [vmem:[%s3 + $0x80] sm:$0xff] %v312
  %407 = vst [vmem:[%s3 + $0x88] sm:$0xff] %v317
  %408 = vst [vmem:[%s3 + $0x90] sm:$0xff] %v322
  %409 = vst [vmem:[%s3 + $0x98] sm:$0xff] %v327
  %410 = vst [vmem:[%s3 + $0xa0] sm:$0xff] %v332
  %411 = vst [vmem:[%s3 + $0xa8] sm:$0xff] %v337
  %412 = vst [vmem:[%s3 + $0xb0] sm:$0xff] %v342
  %413 = vst [vmem:[%s3 + $0xb8] sm:$0xff] %v347
  %414 = vst [vmem:[%s3 + $0xc0] sm:$0xff] %v352
  %415 = vst [vmem:[%s3 + $0xc8] sm:$0xff] %v357
  %416 = vst [vmem:[%s3 + $0xd0] sm:$0xff] %v362
  %417 = vst [vmem:[%s3 + $0xd8] sm:$0xff] %v367
  %418 = vst [vmem:[%s3 + $0xe0] sm:$0xff] %v372
  %419 = vst [vmem:[%s3 + $0xe8] sm:$0xff] %v377
  %420 = vst [vmem:[%s3 + $0xf0] sm:$0xff] %v382
  %421 = vst [vmem:[%s3 + $0xf8] sm:$0xff] %v387
  // Predicated region
  $region14: #{encoder_with_svtr_forward.25} parent=0 // pred_check
    _
  $region15: #{encoder_with_svtr_forward.25} parent=0 // pred_check_branch
    %423 = sbr.rel (0) target = $region17
  $region16: #{encoder_with_svtr_forward.25} parent=0 // pred_region
    _
  $region17: #{encoder_with_svtr_forward.25} parent=0 // pred_fallthru
    _
  // Predicated region
  $region18: #{encoder_with_svtr_forward.25} parent=0 // pred_check
    _
  $region19: #{encoder_with_svtr_forward.25} parent=0 // pred_check_branch
    %425 = sbr.rel (0) target = $region21
  $region20: #{encoder_with_svtr_forward.25} parent=0 // pred_region
    _
  $region21: #{encoder_with_svtr_forward.25} parent=0 // pred_fallthru
    _

// kernel: encoder_with_svtr_forward.27
$region0: #{encoder_with_svtr_forward.27}
  #allocation0 [shape = 'u32[]', space=smem, size = 0x4, offset = 0x4, fixed_abs, tag = 'smem constant byte address 0x4 - core index']
  #allocation1 [shape = 'u32[144,128]{1,0:T(1,128)}', space=vmem, size = 0x12000, scoped, tag = 'internal scratch']
  %s0 = inlined_call_operand.vmem [shape: f32[256,120], index: 0, kind: input, shape index: {}]
  %s1 = inlined_call_operand.vmem [shape: f32[120,256], index: 1, kind: input, shape index: {}]
  %s2 = inlined_call_operand.vmem [shape: f32[1,256], index: 2, kind: input, shape index: {}]
  %s3 = inlined_call_operand.vmem [shape: f32[256,256], index: 3, kind: output, shape index: {}]
  %s4 = sld [smem:[#allocation0]]
  $region22: #{encoder_with_svtr_forward.27} parent=0
    _
  %s6 = ssub.s32 1, %s4
  %s7 = scalar_select 0, %s6, %s4
  // Predicated region
  $region2: #{encoder_with_svtr_forward.27} parent=0 // pred_check
    _
  $region3: #{encoder_with_svtr_forward.27} parent=0 // pred_check_branch
    %9 = sbr.rel (0) target = $region5
  $region4: #{encoder_with_svtr_forward.27} parent=0 // pred_region
    _
  $region5: #{encoder_with_svtr_forward.27} parent=0 // pred_fallthru
    _
  // Predicated region
  $region6: #{encoder_with_svtr_forward.27} parent=0 // pred_check
    _
  $region7: #{encoder_with_svtr_forward.27} parent=0 // pred_check_branch
    %11 = sbr.rel (0) target = $region9
  $region8: #{encoder_with_svtr_forward.27} parent=0 // pred_region
    _
  $region9: #{encoder_with_svtr_forward.27} parent=0 // pred_fallthru
    _
  // Predicated region
  $region10: #{encoder_with_svtr_forward.27} parent=0 // pred_check
    _
  $region11: #{encoder_with_svtr_forward.27} parent=0 // pred_check_branch
    %13 = sbr.rel (0) target = $region13
  $region12: #{encoder_with_svtr_forward.27} parent=0 // pred_region
    _
  $region13: #{encoder_with_svtr_forward.27} parent=0 // pred_fallthru
    _
  %v14 = vld [vmem:[%s0] sm:$0xff]
  %v15 = vld [vmem:[%s0 + $0x8] sm:$0xff]
  %v16 = vld [vmem:[%s0 + $0x10] sm:$0xff]
  %v17 = vld [vmem:[%s0 + $0x18] sm:$0xff]
  %v18 = vld [vmem:[%s0 + $0x20] sm:$0xff]
  %v19 = vld [vmem:[%s0 + $0x28] sm:$0xff]
  %v20 = vld [vmem:[%s0 + $0x30] sm:$0xff]
  %v21 = vld [vmem:[%s0 + $0x38] sm:$0xff]
  %v22 = vld [vmem:[%s0 + $0x40] sm:$0xff]
  %v23 = vld [vmem:[%s0 + $0x48] sm:$0xff]
  %v24 = vld [vmem:[%s0 + $0x50] sm:$0xff]
  %v25 = vld [vmem:[%s0 + $0x58] sm:$0xff]
  %v26 = vld [vmem:[%s0 + $0x60] sm:$0xff]
  %v27 = vld [vmem:[%s0 + $0x68] sm:$0xff]
  %v28 = vld [vmem:[%s0 + $0x70] sm:$0xff]
  %v29 = vld [vmem:[%s0 + $0x78] sm:$0xff]
  %v30 = vld [vmem:[%s0 + $0x80] sm:$0xff]
  %v31 = vld [vmem:[%s0 + $0x88] sm:$0xff]
  %v32 = vld [vmem:[%s0 + $0x90] sm:$0xff]
  %v33 = vld [vmem:[%s0 + $0x98] sm:$0xff]
  %v34 = vld [vmem:[%s0 + $0xa0] sm:$0xff]
  %v35 = vld [vmem:[%s0 + $0xa8] sm:$0xff]
  %v36 = vld [vmem:[%s0 + $0xb0] sm:$0xff]
  %v37 = vld [vmem:[%s0 + $0xb8] sm:$0xff]
  %v38 = vld [vmem:[%s0 + $0xc0] sm:$0xff]
  %v39 = vld [vmem:[%s0 + $0xc8] sm:$0xff]
  %v40 = vld [vmem:[%s0 + $0xd0] sm:$0xff]
  %v41 = vld [vmem:[%s0 + $0xd8] sm:$0xff]
  %v42 = vld [vmem:[%s0 + $0xe0] sm:$0xff]
  %v43 = vld [vmem:[%s0 + $0xe8] sm:$0xff]
  %v44 = vld [vmem:[%s0 + $0xf0] sm:$0xff]
  %v45 = vld [vmem:[%s0 + $0xf8] sm:$0xff]
  %v46 = vld [vmem:[%s1] sm:$0xff]
  %v47 = vld [vmem:[%s1 + $0x8] sm:$0xff]
  %v48 = vld [vmem:[%s1 + $0x10] sm:$0xff]
  %v49 = vld [vmem:[%s1 + $0x18] sm:$0xff]
  %v50 = vld [vmem:[%s1 + $0x20] sm:$0xff]
  %v51 = vld [vmem:[%s1 + $0x28] sm:$0xff]
  %v52 = vld [vmem:[%s1 + $0x30] sm:$0xff]
  %v53 = vld [vmem:[%s1 + $0x38] sm:$0xff]
  %v54 = vld [vmem:[%s1 + $0x40] sm:$0xff]
  %v55 = vld [vmem:[%s1 + $0x48] sm:$0xff]
  %v56 = vld [vmem:[%s1 + $0x50] sm:$0xff]
  %v57 = vld [vmem:[%s1 + $0x58] sm:$0xff]
  %v58 = vld [vmem:[%s1 + $0x60] sm:$0xff]
  %v59 = vld [vmem:[%s1 + $0x68] sm:$0xff]
  %v60 = vld [vmem:[%s1 + $0x70] sm:$0xff]
  %v61 = vld [vmem:[%s1 + $0x78] sm:$0xff]
  %v62 = vld [vmem:[%s1 + $0x80] sm:$0xff]
  %v63 = vld [vmem:[%s1 + $0x88] sm:$0xff]
  %v64 = vld [vmem:[%s1 + $0x90] sm:$0xff]
  %v65 = vld [vmem:[%s1 + $0x98] sm:$0xff]
  %v66 = vld [vmem:[%s1 + $0xa0] sm:$0xff]
  %v67 = vld [vmem:[%s1 + $0xa8] sm:$0xff]
  %v68 = vld [vmem:[%s1 + $0xb0] sm:$0xff]
  %v69 = vld [vmem:[%s1 + $0xb8] sm:$0xff]
  %v70 = vld [vmem:[%s1 + $0xc0] sm:$0xff]
  %v71 = vld [vmem:[%s1 + $0xc8] sm:$0xff]
  %v72 = vld [vmem:[%s1 + $0xd0] sm:$0xff]
  %v73 = vld [vmem:[%s1 + $0xd8] sm:$0xff]
  %v74 = vld [vmem:[%s1 + $0xe0] sm:$0xff]
  %v75 = vld [vmem:[%s1 + $0xe8] sm:$0xff]
  %v76 = vld [vmem:[%s2] sm:$0x3]
  %v78 = vlaneseq
  %v79 = vshrl.u32 %v78, 7
  %v80 = vsub.s32 0, %v79
  %v81 = vrot.slane %v76, %v80
  %v82 = vlaneseq
  %v83 = vshrl.u32 %v82, 7
  %v84 = vsub.s32 1, %v83
  %v85 = vrot.slane %v76, %v84
  %vm88 = vcmask 982016
  %v90 = vsel %vm88, %v14, 0
  %v93 = vsel %vm88, %v15, 0
  %v96 = vsel %vm88, %v16, 0
  %v99 = vsel %vm88, %v17, 0
  %v102 = vsel %vm88, %v18, 0
  %v105 = vsel %vm88, %v19, 0
  %v108 = vsel %vm88, %v20, 0
  %v111 = vsel %vm88, %v21, 0
  %v114 = vsel %vm88, %v22, 0
  %v117 = vsel %vm88, %v23, 0
  %v120 = vsel %vm88, %v24, 0
  %v123 = vsel %vm88, %v25, 0
  %v126 = vsel %vm88, %v26, 0
  %v129 = vsel %vm88, %v27, 0
  %v132 = vsel %vm88, %v28, 0
  %v135 = vsel %vm88, %v29, 0
  %v138 = vsel %vm88, %v30, 0
  %v141 = vsel %vm88, %v31, 0
  %v144 = vsel %vm88, %v32, 0
  %v147 = vsel %vm88, %v33, 0
  %v150 = vsel %vm88, %v34, 0
  %v153 = vsel %vm88, %v35, 0
  %v156 = vsel %vm88, %v36, 0
  %v159 = vsel %vm88, %v37, 0
  %v162 = vsel %vm88, %v38, 0
  %v165 = vsel %vm88, %v39, 0
  %v168 = vsel %vm88, %v40, 0
  %v171 = vsel %vm88, %v41, 0
  %v174 = vsel %vm88, %v42, 0
  %v177 = vsel %vm88, %v43, 0
  %v180 = vsel %vm88, %v44, 0
  %v183 = vsel %vm88, %v45, 0
  %185 = vmatprep.subr.mxu0 %v47
  %186 = vmatpush1.msra.mxu0 %v46
  %187 = vmatprep.subr.mxu0 %v49
  %188 = vmatpush1.msra.mxu0 %v48
  %189 = vmatprep.subr.mxu0 %v51
  %190 = vmatpush1.msra.mxu0 %v50
  %191 = vmatprep.subr.mxu0 %v53
  %192 = vmatpush1.msra.mxu0 %v52
  %193 = vmatprep.subr.mxu0 %v55
  %194 = vmatpush1.msra.mxu0 %v54
  %195 = vmatprep.subr.mxu0 %v57
  %196 = vmatpush1.msra.mxu0 %v56
  %197 = vmatprep.subr.mxu0 %v59
  %198 = vmatpush1.msra.mxu0 %v58
  %199 = vmatprep.subr.mxu0 %v61
  %200 = vmatpush1.msra.mxu0 %v60
  %201 = vmatprep.subr.mxu0 %v63
  %202 = vmatpush1.msra.mxu0 %v62
  %203 = vmatprep.subr.mxu0 %v65
  %204 = vmatpush1.msra.mxu0 %v64
  %205 = vmatprep.subr.mxu0 %v67
  %206 = vmatpush1.msra.mxu0 %v66
  %207 = vmatprep.subr.mxu0 %v69
  %208 = vmatpush1.msra.mxu0 %v68
  %209 = vmatprep.subr.mxu0 %v71
  %210 = vmatpush1.msra.mxu0 %v70
  %211 = vmatprep.subr.mxu0 %v73
  %212 = vmatpush1.msra.mxu0 %v72
  %213 = vmatprep.subr.mxu0 %v75
  %214 = vmatpush1.msra.mxu0 %v74
  %215 = vmatprep.subr.mxu0 0.0
  %216 = vmatpush1.msra.mxu0 0.0
  %217 = vmatprep.subr.mxu0 0.0
  %218 = vmatpush1.msra.mxu0 0.0
  %219 = vmatprep.subr.mxu0 0.0
  %220 = vmatpush1.msra.mxu0 0.0
  %221 = vmatprep.subr.mxu0 0.0
  %222 = vmatpush1.msra.mxu0 0.0
  %223 = vmatprep.subr.mxu0 0.0
  %224 = vmatpush1.msra.mxu0 0.0
  %225 = vmatprep.subr.mxu0 0.0
  %226 = vmatpush1.msra.mxu0 0.0
  %227 = vmatprep.subr.mxu0 0.0
  %228 = vmatpush1.msra.mxu0 0.0
  %229 = vmatprep.subr.mxu0 0.0
  %230 = vmatpush1.msra.mxu0 0.0
  %231 = vmatprep.subr.mxu0 0.0
  %232 = vmatpush1.msra.mxu0 0.0
  %233 = vmatprep.subr.mxu0 0.0
  %234 = vmatpush1.msra.mxu0 0.0
  %235 = vmatprep.subr.mxu0 0.0
  %236 = vmatpush1.msra.mxu0 0.0
  %237 = vmatprep.subr.mxu0 0.0
  %238 = vmatpush1.msra.mxu0 0.0
  %239 = vmatprep.subr.mxu0 0.0
  %240 = vmatpush1.msra.mxu0 0.0
  %241 = vmatprep.subr.mxu0 0.0
  %242 = vmatpush1.msra.mxu0 0.0
  %243 = vmatprep.subr.mxu0 0.0
  %244 = vmatpush1.msra.mxu0 0.0
  %245 = vmatprep.subr.mxu0 0.0
  %246 = vmatpush1.msra.mxu0 0.0
  %247 = vmatprep.subr.mxu0 0.0
  %248 = vmatpush1.msra.mxu0 0.0
  %249 = vmatprep.mubr.f32.mxu0 0.0
  %250 = vmatmul.mubr.f32.gmra.mrb[0].mxu0 %v90
  %v251 = vpop.f32.mrb[0].mxu0
  %v252 = vadd.f32 %v81, %v251
  %v253 = vpop.f32.mrb[0].mxu0
  %v254 = vadd.f32 %v85, %v253
  %255 = vmatprep.mubr.f32.mxu0 0.0
  %256 = vmatmul.mubr.f32.gmra.mrb[0].mxu0 %v93
  %v257 = vpop.f32.mrb[0].mxu0
  %v258 = vadd.f32 %v81, %v257
  %v259 = vpop.f32.mrb[0].mxu0
  %v260 = vadd.f32 %v85, %v259
  %261 = vmatprep.mubr.f32.mxu0 0.0
  %262 = vmatmul.mubr.f32.gmra.mrb[0].mxu0 %v96
  %v263 = vpop.f32.mrb[0].mxu0
  %v264 = vadd.f32 %v81, %v263
  %v265 = vpop.f32.mrb[0].mxu0
  %v266 = vadd.f32 %v85, %v265
  %267 = vmatprep.mubr.f32.mxu0 0.0
  %268 = vmatmul.mubr.f32.gmra.mrb[0].mxu0 %v99
  %v269 = vpop.f32.mrb[0].mxu0
  %v270 = vadd.f32 %v81, %v269
  %v271 = vpop.f32.mrb[0].mxu0
  %v272 = vadd.f32 %v85, %v271
  %273 = vmatprep.mubr.f32.mxu0 0.0
  %274 = vmatmul.mubr.f32.gmra.mrb[0].mxu0 %v102
  %v275 = vpop.f32.mrb[0].mxu0
  %v276 = vadd.f32 %v81, %v275
  %v277 = vpop.f32.mrb[0].mxu0
  %v278 = vadd.f32 %v85, %v277
  %279 = vmatprep.mubr.f32.mxu0 0.0
  %280 = vmatmul.mubr.f32.gmra.mrb[0].mxu0 %v105
  %v281 = vpop.f32.mrb[0].mxu0
  %v282 = vadd.f32 %v81, %v281
  %v283 = vpop.f32.mrb[0].mxu0
  %v284 = vadd.f32 %v85, %v283
  %285 = vmatprep.mubr.f32.mxu0 0.0
  %286 = vmatmul.mubr.f32.gmra.mrb[0].mxu0 %v108
  %v287 = vpop.f32.mrb[0].mxu0
  %v288 = vadd.f32 %v81, %v287
  %v289 = vpop.f32.mrb[0].mxu0
  %v290 = vadd.f32 %v85, %v289
  %291 = vmatprep.mubr.f32.mxu0 0.0
  %292 = vmatmul.mubr.f32.gmra.mrb[0].mxu0 %v111
  %v293 = vpop.f32.mrb[0].mxu0
  %v294 = vadd.f32 %v81, %v293
  %v295 = vpop.f32.mrb[0].mxu0
  %v296 = vadd.f32 %v85, %v295
  %297 = vmatprep.mubr.f32.mxu0 0.0
  %298 = vmatmul.mubr.f32.gmra.mrb[0].mxu0 %v114
  %v299 = vpop.f32.mrb[0].mxu0
  %v300 = vadd.f32 %v81, %v299
  %v301 = vpop.f32.mrb[0].mxu0
  %v302 = vadd.f32 %v85, %v301
  %303 = vmatprep.mubr.f32.mxu0 0.0
  %304 = vmatmul.mubr.f32.gmra.mrb[0].mxu0 %v117
  %v305 = vpop.f32.mrb[0].mxu0
  %v306 = vadd.f32 %v81, %v305
  %v307 = vpop.f32.mrb[0].mxu0
  %v308 = vadd.f32 %v85, %v307
  %309 = vmatprep.mubr.f32.mxu0 0.0
  %310 = vmatmul.mubr.f32.gmra.mrb[0].mxu0 %v120
  %v311 = vpop.f32.mrb[0].mxu0
  %v312 = vadd.f32 %v81, %v311
  %v313 = vpop.f32.mrb[0].mxu0
  %v314 = vadd.f32 %v85, %v313
  %315 = vmatprep.mubr.f32.mxu0 0.0
  %316 = vmatmul.mubr.f32.gmra.mrb[0].mxu0 %v123
  %v317 = vpop.f32.mrb[0].mxu0
  %v318 = vadd.f32 %v81, %v317
  %v319 = vpop.f32.mrb[0].mxu0
  %v320 = vadd.f32 %v85, %v319
  %321 = vmatprep.mubr.f32.mxu0 0.0
  %322 = vmatmul.mubr.f32.gmra.mrb[0].mxu0 %v126
  %v323 = vpop.f32.mrb[0].mxu0
  %v324 = vadd.f32 %v81, %v323
  %v325 = vpop.f32.mrb[0].mxu0
  %v326 = vadd.f32 %v85, %v325
  %327 = vmatprep.mubr.f32.mxu0 0.0
  %328 = vmatmul.mubr.f32.gmra.mrb[0].mxu0 %v129
  %v329 = vpop.f32.mrb[0].mxu0
  %v330 = vadd.f32 %v81, %v329
  %v331 = vpop.f32.mrb[0].mxu0
  %v332 = vadd.f32 %v85, %v331
  %333 = vmatprep.mubr.f32.mxu0 0.0
  %334 = vmatmul.mubr.f32.gmra.mrb[0].mxu0 %v132
  %v335 = vpop.f32.mrb[0].mxu0
  %v336 = vadd.f32 %v81, %v335
  %v337 = vpop.f32.mrb[0].mxu0
  %v338 = vadd.f32 %v85, %v337
  %339 = vmatprep.mubr.f32.mxu0 0.0
  %340 = vmatmul.mubr.f32.gmra.mrb[0].mxu0 %v135
  %v341 = vpop.f32.mrb[0].mxu0
  %v342 = vadd.f32 %v81, %v341
  %v343 = vpop.f32.mrb[0].mxu0
  %v344 = vadd.f32 %v85, %v343
  %345 = vmatprep.mubr.f32.mxu0 0.0
  %346 = vmatmul.mubr.f32.gmra.mrb[0].mxu0 %v138
  %v347 = vpop.f32.mrb[0].mxu0
  %v348 = vadd.f32 %v81, %v347
  %v349 = vpop.f32.mrb[0].mxu0
  %v350 = vadd.f32 %v85, %v349
  %351 = vmatprep.mubr.f32.mxu0 0.0
  %352 = vmatmul.mubr.f32.gmra.mrb[0].mxu0 %v141
  %v353 = vpop.f32.mrb[0].mxu0
  %v354 = vadd.f32 %v81, %v353
  %v355 = vpop.f32.mrb[0].mxu0
  %v356 = vadd.f32 %v85, %v355
  %357 = vmatprep.mubr.f32.mxu0 0.0
  %358 = vmatmul.mubr.f32.gmra.mrb[0].mxu0 %v144
  %v359 = vpop.f32.mrb[0].mxu0
  %v360 = vadd.f32 %v81, %v359
  %v361 = vpop.f32.mrb[0].mxu0
  %v362 = vadd.f32 %v85, %v361
  %363 = vmatprep.mubr.f32.mxu0 0.0
  %364 = vmatmul.mubr.f32.gmra.mrb[0].mxu0 %v147
  %v365 = vpop.f32.mrb[0].mxu0
  %v366 = vadd.f32 %v81, %v365
  %v367 = vpop.f32.mrb[0].mxu0
  %v368 = vadd.f32 %v85, %v367
  %369 = vmatprep.mubr.f32.mxu0 0.0
  %370 = vmatmul.mubr.f32.gmra.mrb[0].mxu0 %v150
  %v371 = vpop.f32.mrb[0].mxu0
  %v372 = vadd.f32 %v81, %v371
  %v373 = vpop.f32.mrb[0].mxu0
  %v374 = vadd.f32 %v85, %v373
  %375 = vmatprep.mubr.f32.mxu0 0.0
  %376 = vmatmul.mubr.f32.gmra.mrb[0].mxu0 %v153
  %v377 = vpop.f32.mrb[0].mxu0
  %v378 = vadd.f32 %v81, %v377
  %v379 = vpop.f32.mrb[0].mxu0
  %v380 = vadd.f32 %v85, %v379
  %381 = vmatprep.mubr.f32.mxu0 0.0
  %382 = vmatmul.mubr.f32.gmra.mrb[0].mxu0 %v156
  %v383 = vpop.f32.mrb[0].mxu0
  %v384 = vadd.f32 %v81, %v383
  %v385 = vpop.f32.mrb[0].mxu0
  %v386 = vadd.f32 %v85, %v385
  %387 = vmatprep.mubr.f32.mxu0 0.0
  %388 = vmatmul.mubr.f32.gmra.mrb[0].mxu0 %v159
  %v389 = vpop.f32.mrb[0].mxu0
  %v390 = vadd.f32 %v81, %v389
  %v391 = vpop.f32.mrb[0].mxu0
  %v392 = vadd.f32 %v85, %v391
  %393 = vmatprep.mubr.f32.mxu0 0.0
  %394 = vmatmul.mubr.f32.gmra.mrb[0].mxu0 %v162
  %v395 = vpop.f32.mrb[0].mxu0
  %v396 = vadd.f32 %v81, %v395
  %v397 = vpop.f32.mrb[0].mxu0
  %v398 = vadd.f32 %v85, %v397
  %399 = vmatprep.mubr.f32.mxu0 0.0
  %400 = vmatmul.mubr.f32.gmra.mrb[0].mxu0 %v165
  %v401 = vpop.f32.mrb[0].mxu0
  %v402 = vadd.f32 %v81, %v401
  %v403 = vpop.f32.mrb[0].mxu0
  %v404 = vadd.f32 %v85, %v403
  %405 = vmatprep.mubr.f32.mxu0 0.0
  %406 = vmatmul.mubr.f32.gmra.mrb[0].mxu0 %v168
  %v407 = vpop.f32.mrb[0].mxu0
  %v408 = vadd.f32 %v81, %v407
  %v409 = vpop.f32.mrb[0].mxu0
  %v410 = vadd.f32 %v85, %v409
  %411 = vmatprep.mubr.f32.mxu0 0.0
  %412 = vmatmul.mubr.f32.gmra.mrb[0].mxu0 %v171
  %v413 = vpop.f32.mrb[0].mxu0
  %v414 = vadd.f32 %v81, %v413
  %v415 = vpop.f32.mrb[0].mxu0
  %v416 = vadd.f32 %v85, %v415
  %417 = vmatprep.mubr.f32.mxu0 0.0
  %418 = vmatmul.mubr.f32.gmra.mrb[0].mxu0 %v174
  %v419 = vpop.f32.mrb[0].mxu0
  %v420 = vadd.f32 %v81, %v419
  %v421 = vpop.f32.mrb[0].mxu0
  %v422 = vadd.f32 %v85, %v421
  %423 = vmatprep.mubr.f32.mxu0 0.0
  %424 = vmatmul.mubr.f32.gmra.mrb[0].mxu0 %v177
  %v425 = vpop.f32.mrb[0].mxu0
  %v426 = vadd.f32 %v81, %v425
  %v427 = vpop.f32.mrb[0].mxu0
  %v428 = vadd.f32 %v85, %v427
  %429 = vmatprep.mubr.f32.mxu0 0.0
  %430 = vmatmul.mubr.f32.gmra.mrb[0].mxu0 %v180
  %v431 = vpop.f32.mrb[0].mxu0
  %v432 = vadd.f32 %v81, %v431
  %v433 = vpop.f32.mrb[0].mxu0
  %v434 = vadd.f32 %v85, %v433
  %435 = vmatprep.mubr.f32.mxu0 0.0
  %436 = vmatmul.mubr.f32.gmra.mrb[0].mxu0 %v183
  %v437 = vpop.f32.mrb[0].mxu0
  %v438 = vadd.f32 %v81, %v437
  %v439 = vpop.f32.mrb[0].mxu0
  %v440 = vadd.f32 %v85, %v439
  %441 = vdwg.mxu0
  %v442 = vxor.u32 %v252, 2147483648
  %v443 = vxor.u32 %v254, 2147483648
  %v444 = vxor.u32 %v258, 2147483648
  %v445 = vxor.u32 %v260, 2147483648
  %v446 = vxor.u32 %v264, 2147483648
  %v447 = vxor.u32 %v266, 2147483648
  %v448 = vxor.u32 %v270, 2147483648
  %v449 = vxor.u32 %v272, 2147483648
  %v450 = vxor.u32 %v276, 2147483648
  %v451 = vxor.u32 %v278, 2147483648
  %v452 = vxor.u32 %v282, 2147483648
  %v453 = vxor.u32 %v284, 2147483648
  %v454 = vxor.u32 %v288, 2147483648
  %v455 = vxor.u32 %v290, 2147483648
  %v456 = vxor.u32 %v294, 2147483648
  %v457 = vxor.u32 %v296, 2147483648
  %v458 = vxor.u32 %v300, 2147483648
  %v459 = vxor.u32 %v302, 2147483648
  %v460 = vxor.u32 %v306, 2147483648
  %v461 = vxor.u32 %v308, 2147483648
  %v462 = vxor.u32 %v312, 2147483648
  %v463 = vxor.u32 %v314, 2147483648
  %v464 = vxor.u32 %v318, 2147483648
  %v465 = vxor.u32 %v320, 2147483648
  %v466 = vxor.u32 %v324, 2147483648
  %v467 = vxor.u32 %v326, 2147483648
  %v468 = vxor.u32 %v330, 2147483648
  %v469 = vxor.u32 %v332, 2147483648
  %v470 = vxor.u32 %v336, 2147483648
  %v471 = vxor.u32 %v338, 2147483648
  %v472 = vxor.u32 %v342, 2147483648
  %v473 = vxor.u32 %v344, 2147483648
  %v474 = vxor.u32 %v348, 2147483648
  %v475 = vxor.u32 %v350, 2147483648
  %v476 = vxor.u32 %v354, 2147483648
  %v477 = vxor.u32 %v356, 2147483648
  %v478 = vxor.u32 %v360, 2147483648
  %v479 = vxor.u32 %v362, 2147483648
  %v480 = vxor.u32 %v366, 2147483648
  %v481 = vxor.u32 %v368, 2147483648
  %v482 = vxor.u32 %v372, 2147483648
  %v483 = vxor.u32 %v374, 2147483648
  %v484 = vxor.u32 %v378, 2147483648
  %v485 = vxor.u32 %v380, 2147483648
  %v486 = vxor.u32 %v384, 2147483648
  %v487 = vxor.u32 %v386, 2147483648
  %v488 = vxor.u32 %v390, 2147483648
  %v489 = vxor.u32 %v392, 2147483648
  %v490 = vxor.u32 %v396, 2147483648
  %v491 = vxor.u32 %v398, 2147483648
  %v492 = vxor.u32 %v402, 2147483648
  %v493 = vxor.u32 %v404, 2147483648
  %v494 = vxor.u32 %v408, 2147483648
  %v495 = vxor.u32 %v410, 2147483648
  %v496 = vxor.u32 %v414, 2147483648
  %v497 = vxor.u32 %v416, 2147483648
  %v498 = vxor.u32 %v420, 2147483648
  %v499 = vxor.u32 %v422, 2147483648
  %v500 = vxor.u32 %v426, 2147483648
  %v501 = vxor.u32 %v428, 2147483648
  %v502 = vxor.u32 %v432, 2147483648
  %v503 = vxor.u32 %v434, 2147483648
  %v504 = vxor.u32 %v438, 2147483648
  %v505 = vxor.u32 %v440, 2147483648
  %v506 = vmul.f32 %v442, 1.442695
  %v507 = vpow.pop %v506
  %v508 = vmul.f32 %v443, 1.442695
  %v509 = vpow.pop %v508
  %v510 = vmul.f32 %v444, 1.442695
  %v511 = vpow.pop %v510
  %v512 = vmul.f32 %v445, 1.442695
  %v513 = vpow.pop %v512
  %v514 = vmul.f32 %v446, 1.442695
  %v515 = vpow.pop %v514
  %v516 = vmul.f32 %v447, 1.442695
  %v517 = vpow.pop %v516
  %v518 = vmul.f32 %v448, 1.442695
  %v519 = vpow.pop %v518
  %v520 = vmul.f32 %v449, 1.442695
  %v521 = vpow.pop %v520
  %v522 = vmul.f32 %v450, 1.442695
  %v523 = vpow.pop %v522
  %v524 = vmul.f32 %v451, 1.442695
  %v525 = vpow.pop %v524
  %v526 = vmul.f32 %v452, 1.442695
  %v527 = vpow.pop %v526
  %v528 = vmul.f32 %v453, 1.442695
  %v529 = vpow.pop %v528
  %v530 = vmul.f32 %v454, 1.442695
  %v531 = vpow.pop %v530
  %v532 = vmul.f32 %v455, 1.442695
  %v533 = vpow.pop %v532
  %v534 = vmul.f32 %v456, 1.442695
  %v535 = vpow.pop %v534
  %v536 = vmul.f32 %v457, 1.442695
  %v537 = vpow.pop %v536
  %v538 = vmul.f32 %v458, 1.442695
  %v539 = vpow.pop %v538
  %v540 = vmul.f32 %v459, 1.442695
  %v541 = vpow.pop %v540
  %v542 = vmul.f32 %v460, 1.442695
  %v543 = vpow.pop %v542
  %v544 = vmul.f32 %v461, 1.442695
  %v545 = vpow.pop %v544
  %v546 = vmul.f32 %v462, 1.442695
  %v547 = vpow.pop %v546
  %v548 = vmul.f32 %v463, 1.442695
  %v549 = vpow.pop %v548
  %v550 = vmul.f32 %v464, 1.442695
  %v551 = vpow.pop %v550
  %v552 = vmul.f32 %v465, 1.442695
  %v553 = vpow.pop %v552
  %v554 = vmul.f32 %v466, 1.442695
  %v555 = vpow.pop %v554
  %v556 = vmul.f32 %v467, 1.442695
  %v557 = vpow.pop %v556
  %v558 = vmul.f32 %v468, 1.442695
  %v559 = vpow.pop %v558
  %v560 = vmul.f32 %v469, 1.442695
  %v561 = vpow.pop %v560
  %v562 = vmul.f32 %v470, 1.442695
  %v563 = vpow.pop %v562
  %v564 = vmul.f32 %v471, 1.442695
  %v565 = vpow.pop %v564
  %v566 = vmul.f32 %v472, 1.442695
  %v567 = vpow.pop %v566
  %v568 = vmul.f32 %v473, 1.442695
  %v569 = vpow.pop %v568
  %v570 = vmul.f32 %v474, 1.442695
  %v571 = vpow.pop %v570
  %v572 = vmul.f32 %v475, 1.442695
  %v573 = vpow.pop %v572
  %v574 = vmul.f32 %v476, 1.442695
  %v575 = vpow.pop %v574
  %v576 = vmul.f32 %v477, 1.442695
  %v577 = vpow.pop %v576
  %v578 = vmul.f32 %v478, 1.442695
  %v579 = vpow.pop %v578
  %v580 = vmul.f32 %v479, 1.442695
  %v581 = vpow.pop %v580
  %v582 = vmul.f32 %v480, 1.442695
  %v583 = vpow.pop %v582
  %v584 = vmul.f32 %v481, 1.442695
  %v585 = vpow.pop %v584
  %v586 = vmul.f32 %v482, 1.442695
  %v587 = vpow.pop %v586
  %v588 = vmul.f32 %v483, 1.442695
  %v589 = vpow.pop %v588
  %v590 = vmul.f32 %v484, 1.442695
  %v591 = vpow.pop %v590
  %v592 = vmul.f32 %v485, 1.442695
  %v593 = vpow.pop %v592
  %v594 = vmul.f32 %v486, 1.442695
  %v595 = vpow.pop %v594
  %v596 = vmul.f32 %v487, 1.442695
  %v597 = vpow.pop %v596
  %v598 = vmul.f32 %v488, 1.442695
  %v599 = vpow.pop %v598
  %v600 = vmul.f32 %v489, 1.442695
  %v601 = vpow.pop %v600
  %v602 = vmul.f32 %v490, 1.442695
  %v603 = vpow.pop %v602
  %v604 = vmul.f32 %v491, 1.442695
  %v605 = vpow.pop %v604
  %v606 = vmul.f32 %v492, 1.442695
  %v607 = vpow.pop %v606
  %v608 = vmul.f32 %v493, 1.442695
  %v609 = vpow.pop %v608
  %v610 = vmul.f32 %v494, 1.442695
  %v611 = vpow.pop %v610
  %v612 = vmul.f32 %v495, 1.442695
  %v613 = vpow.pop %v612
  %v614 = vmul.f32 %v496, 1.442695
  %v615 = vpow.pop %v614
  %v616 = vmul.f32 %v497, 1.442695
  %v617 = vpow.pop %v616
  %v618 = vmul.f32 %v498, 1.442695
  %v619 = vpow.pop %v618
  %v620 = vmul.f32 %v499, 1.442695
  %v621 = vpow.pop %v620
  %v622 = vmul.f32 %v500, 1.442695
  %v623 = vpow.pop %v622
  %v624 = vmul.f32 %v501, 1.442695
  %v625 = vpow.pop %v624
  %v626 = vmul.f32 %v502, 1.442695
  %v627 = vpow.pop %v626
  %v628 = vmul.f32 %v503, 1.442695
  %v629 = vpow.pop %v628
  %v630 = vmul.f32 %v504, 1.442695
  %v631 = vpow.pop %v630
  %v632 = vmul.f32 %v505, 1.442695
  %v633 = vpow.pop %v632
  %v634 = vadd.f32 %v507, 1.0
  %v635 = vadd.f32 %v509, 1.0
  %v636 = vadd.f32 %v511, 1.0
  %v637 = vadd.f32 %v513, 1.0
  %v638 = vadd.f32 %v515, 1.0
  %v639 = vadd.f32 %v517, 1.0
  %v640 = vadd.f32 %v519, 1.0
  %v641 = vadd.f32 %v521, 1.0
  %v642 = vadd.f32 %v523, 1.0
  %v643 = vadd.f32 %v525, 1.0
  %v644 = vadd.f32 %v527, 1.0
  %v645 = vadd.f32 %v529, 1.0
  %v646 = vadd.f32 %v531, 1.0
  %v647 = vadd.f32 %v533, 1.0
  %v648 = vadd.f32 %v535, 1.0
  %v649 = vadd.f32 %v537, 1.0
  %v650 = vadd.f32 %v539, 1.0
  %v651 = vadd.f32 %v541, 1.0
  %v652 = vadd.f32 %v543, 1.0
  %v653 = vadd.f32 %v545, 1.0
  %v654 = vadd.f32 %v547, 1.0
  %v655 = vadd.f32 %v549, 1.0
  %v656 = vadd.f32 %v551, 1.0
  %v657 = vadd.f32 %v553, 1.0
  %v658 = vadd.f32 %v555, 1.0
  %v659 = vadd.f32 %v557, 1.0
  %v660 = vadd.f32 %v559, 1.0
  %v661 = vadd.f32 %v561, 1.0
  %v662 = vadd.f32 %v563, 1.0
  %v663 = vadd.f32 %v565, 1.0
  %v664 = vadd.f32 %v567, 1.0
  %v665 = vadd.f32 %v569, 1.0
  %v666 = vadd.f32 %v571, 1.0
  %v667 = vadd.f32 %v573, 1.0
  %v668 = vadd.f32 %v575, 1.0
  %v669 = vadd.f32 %v577, 1.0
  %v670 = vadd.f32 %v579, 1.0
  %v671 = vadd.f32 %v581, 1.0
  %v672 = vadd.f32 %v583, 1.0
  %v673 = vadd.f32 %v585, 1.0
  %v674 = vadd.f32 %v587, 1.0
  %v675 = vadd.f32 %v589, 1.0
  %v676 = vadd.f32 %v591, 1.0
  %v677 = vadd.f32 %v593, 1.0
  %v678 = vadd.f32 %v595, 1.0
  %v679 = vadd.f32 %v597, 1.0
  %v680 = vadd.f32 %v599, 1.0
  %v681 = vadd.f32 %v601, 1.0
  %v682 = vadd.f32 %v603, 1.0
  %v683 = vadd.f32 %v605, 1.0
  %v684 = vadd.f32 %v607, 1.0
  %v685 = vadd.f32 %v609, 1.0
  %v686 = vadd.f32 %v611, 1.0
  %v687 = vadd.f32 %v613, 1.0
  %v688 = vadd.f32 %v615, 1.0
  %v689 = vadd.f32 %v617, 1.0
  %v690 = vadd.f32 %v619, 1.0
  %v691 = vadd.f32 %v621, 1.0
  %v692 = vadd.f32 %v623, 1.0
  %v693 = vadd.f32 %v625, 1.0
  %v694 = vadd.f32 %v627, 1.0
  %v695 = vadd.f32 %v629, 1.0
  %v696 = vadd.f32 %v631, 1.0
  %v697 = vadd.f32 %v633, 1.0
  %v698 = vrcp.pop %v634
  %v699 = vmul.f32 1.0, %v698
  %v700 = vrcp.pop %v635
  %v701 = vmul.f32 1.0, %v700
  %v702 = vrcp.pop %v636
  %v703 = vmul.f32 1.0, %v702
  %v704 = vrcp.pop %v637
  %v705 = vmul.f32 1.0, %v704
  %v706 = vrcp.pop %v638
  %v707 = vmul.f32 1.0, %v706
  %v708 = vrcp.pop %v639
  %v709 = vmul.f32 1.0, %v708
  %v710 = vrcp.pop %v640
  %v711 = vmul.f32 1.0, %v710
  %v712 = vrcp.pop %v641
  %v713 = vmul.f32 1.0, %v712
  %v714 = vrcp.pop %v642
  %v715 = vmul.f32 1.0, %v714
  %v716 = vrcp.pop %v643
  %v717 = vmul.f32 1.0, %v716
  %v718 = vrcp.pop %v644
  %v719 = vmul.f32 1.0, %v718
  %v720 = vrcp.pop %v645
  %v721 = vmul.f32 1.0, %v720
  %v722 = vrcp.pop %v646
  %v723 = vmul.f32 1.0, %v722
  %v724 = vrcp.pop %v647
  %v725 = vmul.f32 1.0, %v724
  %v726 = vrcp.pop %v648
  %v727 = vmul.f32 1.0, %v726
  %v728 = vrcp.pop %v649
  %v729 = vmul.f32 1.0, %v728
  %v730 = vrcp.pop %v650
  %v731 = vmul.f32 1.0, %v730
  %v732 = vrcp.pop %v651
  %v733 = vmul.f32 1.0, %v732
  %v734 = vrcp.pop %v652
  %v735 = vmul.f32 1.0, %v734
  %v736 = vrcp.pop %v653
  %v737 = vmul.f32 1.0, %v736
  %v738 = vrcp.pop %v654
  %v739 = vmul.f32 1.0, %v738
  %v740 = vrcp.pop %v655
  %v741 = vmul.f32 1.0, %v740
  %v742 = vrcp.pop %v656
  %v743 = vmul.f32 1.0, %v742
  %v744 = vrcp.pop %v657
  %v745 = vmul.f32 1.0, %v744
  %v746 = vrcp.pop %v658
  %v747 = vmul.f32 1.0, %v746
  %v748 = vrcp.pop %v659
  %v749 = vmul.f32 1.0, %v748
  %v750 = vrcp.pop %v660
  %v751 = vmul.f32 1.0, %v750
  %v752 = vrcp.pop %v661
  %v753 = vmul.f32 1.0, %v752
  %v754 = vrcp.pop %v662
  %v755 = vmul.f32 1.0, %v754
  %v756 = vrcp.pop %v663
  %v757 = vmul.f32 1.0, %v756
  %v758 = vrcp.pop %v664
  %v759 = vmul.f32 1.0, %v758
  %v760 = vrcp.pop %v665
  %v761 = vmul.f32 1.0, %v760
  %v762 = vrcp.pop %v666
  %v763 = vmul.f32 1.0, %v762
  %v764 = vrcp.pop %v667
  %v765 = vmul.f32 1.0, %v764
  %v766 = vrcp.pop %v668
  %v767 = vmul.f32 1.0, %v766
  %v768 = vrcp.pop %v669
  %v769 = vmul.f32 1.0, %v768
  %v770 = vrcp.pop %v670
  %v771 = vmul.f32 1.0, %v770
  %v772 = vrcp.pop %v671
  %v773 = vmul.f32 1.0, %v772
  %v774 = vrcp.pop %v672
  %v775 = vmul.f32 1.0, %v774
  %v776 = vrcp.pop %v673
  %v777 = vmul.f32 1.0, %v776
  %v778 = vrcp.pop %v674
  %v779 = vmul.f32 1.0, %v778
  %v780 = vrcp.pop %v675
  %v781 = vmul.f32 1.0, %v780
  %v782 = vrcp.pop %v676
  %v783 = vmul.f32 1.0, %v782
  %v784 = vrcp.pop %v677
  %v785 = vmul.f32 1.0, %v784
  %v786 = vrcp.pop %v678
  %v787 = vmul.f32 1.0, %v786
  %v788 = vrcp.pop %v679
  %v789 = vmul.f32 1.0, %v788
  %v790 = vrcp.pop %v680
  %v791 = vmul.f32 1.0, %v790
  %v792 = vrcp.pop %v681
  %v793 = vmul.f32 1.0, %v792
  %v794 = vrcp.pop %v682
  %v795 = vmul.f32 1.0, %v794
  %v796 = vrcp.pop %v683
  %v797 = vmul.f32 1.0, %v796
  %v798 = vrcp.pop %v684
  %v799 = vmul.f32 1.0, %v798
  %v800 = vrcp.pop %v685
  %v801 = vmul.f32 1.0, %v800
  %v802 = vrcp.pop %v686
  %v803 = vmul.f32 1.0, %v802
  %v804 = vrcp.pop %v687
  %v805 = vmul.f32 1.0, %v804
  %v806 = vrcp.pop %v688
  %v807 = vmul.f32 1.0, %v806
  %v808 = vrcp.pop %v689
  %v809 = vmul.f32 1.0, %v808
  %v810 = vrcp.pop %v690
  %v811 = vmul.f32 1.0, %v810
  %v812 = vrcp.pop %v691
  %v813 = vmul.f32 1.0, %v812
  %v814 = vrcp.pop %v692
  %v815 = vmul.f32 1.0, %v814
  %v816 = vrcp.pop %v693
  %v817 = vmul.f32 1.0, %v816
  %v818 = vrcp.pop %v694
  %v819 = vmul.f32 1.0, %v818
  %v820 = vrcp.pop %v695
  %v821 = vmul.f32 1.0, %v820
  %v822 = vrcp.pop %v696
  %v823 = vmul.f32 1.0, %v822
  %v824 = vrcp.pop %v697
  %v825 = vmul.f32 1.0, %v824
  %v826 = vmul.f32 %v252, %v699
  %v827 = vmul.f32 %v254, %v701
  %v828 = vmul.f32 %v258, %v703
  %v829 = vmul.f32 %v260, %v705
  %v830 = vmul.f32 %v264, %v707
  %v831 = vmul.f32 %v266, %v709
  %v832 = vmul.f32 %v270, %v711
  %v833 = vmul.f32 %v272, %v713
  %v834 = vmul.f32 %v276, %v715
  %v835 = vmul.f32 %v278, %v717
  %v836 = vmul.f32 %v282, %v719
  %v837 = vmul.f32 %v284, %v721
  %v838 = vmul.f32 %v288, %v723
  %v839 = vmul.f32 %v290, %v725
  %v840 = vmul.f32 %v294, %v727
  %v841 = vmul.f32 %v296, %v729
  %v842 = vmul.f32 %v300, %v731
  %v843 = vmul.f32 %v302, %v733
  %v844 = vmul.f32 %v306, %v735
  %v845 = vmul.f32 %v308, %v737
  %v846 = vmul.f32 %v312, %v739
  %v847 = vmul.f32 %v314, %v741
  %v848 = vmul.f32 %v318, %v743
  %v849 = vmul.f32 %v320, %v745
  %v850 = vmul.f32 %v324, %v747
  %v851 = vmul.f32 %v326, %v749
  %v852 = vmul.f32 %v330, %v751
  %v853 = vmul.f32 %v332, %v753
  %v854 = vmul.f32 %v336, %v755
  %v855 = vmul.f32 %v338, %v757
  %v856 = vmul.f32 %v342, %v759
  %v857 = vmul.f32 %v344, %v761
  %v858 = vmul.f32 %v348, %v763
  %v859 = vmul.f32 %v350, %v765
  %v860 = vmul.f32 %v354, %v767
  %v861 = vmul.f32 %v356, %v769
  %v862 = vmul.f32 %v360, %v771
  %v863 = vmul.f32 %v362, %v773
  %v864 = vmul.f32 %v366, %v775
  %v865 = vmul.f32 %v368, %v777
  %v866 = vmul.f32 %v372, %v779
  %v867 = vmul.f32 %v374, %v781
  %v868 = vmul.f32 %v378, %v783
  %v869 = vmul.f32 %v380, %v785
  %v870 = vmul.f32 %v384, %v787
  %v871 = vmul.f32 %v386, %v789
  %v872 = vmul.f32 %v390, %v791
  %v873 = vmul.f32 %v392, %v793
  %v874 = vmul.f32 %v396, %v795
  %v875 = vmul.f32 %v398, %v797
  %v876 = vmul.f32 %v402, %v799
  %v877 = vmul.f32 %v404, %v801
  %v878 = vmul.f32 %v408, %v803
  %v879 = vmul.f32 %v410, %v805
  %v880 = vmul.f32 %v414, %v807
  %v881 = vmul.f32 %v416, %v809
  %v882 = vmul.f32 %v420, %v811
  %v883 = vmul.f32 %v422, %v813
  %v884 = vmul.f32 %v426, %v815
  %v885 = vmul.f32 %v428, %v817
  %v886 = vmul.f32 %v432, %v819
  %v887 = vmul.f32 %v434, %v821
  %v888 = vmul.f32 %v438, %v823
  %v889 = vmul.f32 %v440, %v825
  %890 = vst [vmem:[%s3] sm:$0xff] %v826
  %891 = vst [vmem:[%s3 + $0x8] sm:$0xff] %v827
  %892 = vst [vmem:[%s3 + $0x10] sm:$0xff] %v828
  %893 = vst [vmem:[%s3 + $0x18] sm:$0xff] %v829
  %894 = vst [vmem:[%s3 + $0x20] sm:$0xff] %v830
  %895 = vst [vmem:[%s3 + $0x28] sm:$0xff] %v831
  %896 = vst [vmem:[%s3 + $0x30] sm:$0xff] %v832
  %897 = vst [vmem:[%s3 + $0x38] sm:$0xff] %v833
  %898 = vst [vmem:[%s3 + $0x40] sm:$0xff] %v834
  %899 = vst [vmem:[%s3 + $0x48] sm:$0xff] %v835
  %900 = vst [vmem:[%s3 + $0x50] sm:$0xff] %v836
  %901 = vst [vmem:[%s3 + $0x58] sm:$0xff] %v837
  %902 = vst [vmem:[%s3 + $0x60] sm:$0xff] %v838
  %903 = vst [vmem:[%s3 + $0x68] sm:$0xff] %v839
  %904 = vst [vmem:[%s3 + $0x70] sm:$0xff] %v840
  %905 = vst [vmem:[%s3 + $0x78] sm:$0xff] %v841
  %906 = vst [vmem:[%s3 + $0x80] sm:$0xff] %v842
  %907 = vst [vmem:[%s3 + $0x88] sm:$0xff] %v843
  %908 = vst [vmem:[%s3 + $0x90] sm:$0xff] %v844
  %909 = vst [vmem:[%s3 + $0x98] sm:$0xff] %v845
  %910 = vst [vmem:[%s3 + $0xa0] sm:$0xff] %v846
  %911 = vst [vmem:[%s3 + $0xa8] sm:$0xff] %v847
  %912 = vst [vmem:[%s3 + $0xb0] sm:$0xff] %v848
  %913 = vst [vmem:[%s3 + $0xb8] sm:$0xff] %v849
  %914 = vst [vmem:[%s3 + $0xc0] sm:$0xff] %v850
  %915 = vst [vmem:[%s3 + $0xc8] sm:$0xff] %v851
  %916 = vst [vmem:[%s3 + $0xd0] sm:$0xff] %v852
  %917 = vst [vmem:[%s3 + $0xd8] sm:$0xff] %v853
  %918 = vst [vmem:[%s3 + $0xe0] sm:$0xff] %v854
  %919 = vst [vmem:[%s3 + $0xe8] sm:$0xff] %v855
  %920 = vst [vmem:[%s3 + $0xf0] sm:$0xff] %v856
  %921 = vst [vmem:[%s3 + $0xf8] sm:$0xff] %v857
  %922 = vst [vmem:[%s3 + $0x100] sm:$0xff] %v858
  %923 = vst [vmem:[%s3 + $0x108] sm:$0xff] %v859
  %924 = vst [vmem:[%s3 + $0x110] sm:$0xff] %v860
  %925 = vst [vmem:[%s3 + $0x118] sm:$0xff] %v861
  %926 = vst [vmem:[%s3 + $0x120] sm:$0xff] %v862
  %927 = vst [vmem:[%s3 + $0x128] sm:$0xff] %v863
  %928 = vst [vmem:[%s3 + $0x130] sm:$0xff] %v864
  %929 = vst [vmem:[%s3 + $0x138] sm:$0xff] %v865
  %930 = vst [vmem:[%s3 + $0x140] sm:$0xff] %v866
  %931 = vst [vmem:[%s3 + $0x148] sm:$0xff] %v867
  %932 = vst [vmem:[%s3 + $0x150] sm:$0xff] %v868
  %933 = vst [vmem:[%s3 + $0x158] sm:$0xff] %v869
  %934 = vst [vmem:[%s3 + $0x160] sm:$0xff] %v870
  %935 = vst [vmem:[%s3 + $0x168] sm:$0xff] %v871
  %936 = vst [vmem:[%s3 + $0x170] sm:$0xff] %v872
  %937 = vst [vmem:[%s3 + $0x178] sm:$0xff] %v873
  %938 = vst [vmem:[%s3 + $0x180] sm:$0xff] %v874
  %939 = vst [vmem:[%s3 + $0x188] sm:$0xff] %v875
  %940 = vst [vmem:[%s3 + $0x190] sm:$0xff] %v876
  %941 = vst [vmem:[%s3 + $0x198] sm:$0xff] %v877
  %942 = vst [vmem:[%s3 + $0x1a0] sm:$0xff] %v878
  %943 = vst [vmem:[%s3 + $0x1a8] sm:$0xff] %v879
  %944 = vst [vmem:[%s3 + $0x1b0] sm:$0xff] %v880
  %945 = vst [vmem:[%s3 + $0x1b8] sm:$0xff] %v881
  %946 = vst [vmem:[%s3 + $0x1c0] sm:$0xff] %v882
  %947 = vst [vmem:[%s3 + $0x1c8] sm:$0xff] %v883
  %948 = vst [vmem:[%s3 + $0x1d0] sm:$0xff] %v884
  %949 = vst [vmem:[%s3 + $0x1d8] sm:$0xff] %v885
  %950 = vst [vmem:[%s3 + $0x1e0] sm:$0xff] %v886
  %951 = vst [vmem:[%s3 + $0x1e8] sm:$0xff] %v887
  %952 = vst [vmem:[%s3 + $0x1f0] sm:$0xff] %v888
  %953 = vst [vmem:[%s3 + $0x1f8] sm:$0xff] %v889
  // Predicated region
  $region14: #{encoder_with_svtr_forward.27} parent=0 // pred_check
    _
  $region15: #{encoder_with_svtr_forward.27} parent=0 // pred_check_branch
    %955 = sbr.rel (0) target = $region17
  $region16: #{encoder_with_svtr_forward.27} parent=0 // pred_region
    _
  $region17: #{encoder_with_svtr_forward.27} parent=0 // pred_fallthru
    _
  // Predicated region
  $region18: #{encoder_with_svtr_forward.27} parent=0 // pred_check
    _
  $region19: #{encoder_with_svtr_forward.27} parent=0 // pred_check_branch
    %957 = sbr.rel (0) target = $region21
  $region20: #{encoder_with_svtr_forward.27} parent=0 // pred_region
    _
  $region21: #{encoder_with_svtr_forward.27} parent=0 // pred_fallthru
    _

// kernel: encoder_with_svtr_forward.28
$region0: #{encoder_with_svtr_forward.28}
  #allocation0 [shape = 'u32[]', space=smem, size = 0x4, offset = 0x4, fixed_abs, tag = 'smem constant byte address 0x4 - core index']
  #allocation1 [shape = 'u32[144,128]{1,0:T(1,128)}', space=vmem, size = 0x12000, scoped, tag = 'internal scratch']
  %s0 = inlined_call_operand.vmem [shape: f32[256,240], index: 0, kind: input, shape index: {}]
  %s1 = inlined_call_operand.vmem [shape: f32[240,128], index: 1, kind: input, shape index: {}]
  %s2 = inlined_call_operand.vmem [shape: f32[1,128], index: 2, kind: input, shape index: {}]
  %s3 = inlined_call_operand.vmem [shape: f32[256,128], index: 3, kind: output, shape index: {}]
  %s4 = sld [smem:[#allocation0]]
  $region22: #{encoder_with_svtr_forward.28} parent=0
    _
  %s6 = ssub.s32 1, %s4
  %s7 = scalar_select 0, %s6, %s4
  // Predicated region
  $region2: #{encoder_with_svtr_forward.28} parent=0 // pred_check
    _
  $region3: #{encoder_with_svtr_forward.28} parent=0 // pred_check_branch
    %9 = sbr.rel (0) target = $region5
  $region4: #{encoder_with_svtr_forward.28} parent=0 // pred_region
    _
  $region5: #{encoder_with_svtr_forward.28} parent=0 // pred_fallthru
    _
  // Predicated region
  $region6: #{encoder_with_svtr_forward.28} parent=0 // pred_check
    _
  $region7: #{encoder_with_svtr_forward.28} parent=0 // pred_check_branch
    %11 = sbr.rel (0) target = $region9
  $region8: #{encoder_with_svtr_forward.28} parent=0 // pred_region
    _
  $region9: #{encoder_with_svtr_forward.28} parent=0 // pred_fallthru
    _
  // Predicated region
  $region10: #{encoder_with_svtr_forward.28} parent=0 // pred_check
    _
  $region11: #{encoder_with_svtr_forward.28} parent=0 // pred_check_branch
    %13 = sbr.rel (0) target = $region13
  $region12: #{encoder_with_svtr_forward.28} parent=0 // pred_region
    _
  $region13: #{encoder_with_svtr_forward.28} parent=0 // pred_fallthru
    _
  %v14 = vld [vmem:[%s0] sm:$0xff]
  %v15 = vld [vmem:[%s0 + $0x8] sm:$0xff]
  %v16 = vld [vmem:[%s0 + $0x10] sm:$0xff]
  %v17 = vld [vmem:[%s0 + $0x18] sm:$0xff]
  %v18 = vld [vmem:[%s0 + $0x20] sm:$0xff]
  %v19 = vld [vmem:[%s0 + $0x28] sm:$0xff]
  %v20 = vld [vmem:[%s0 + $0x30] sm:$0xff]
  %v21 = vld [vmem:[%s0 + $0x38] sm:$0xff]
  %v22 = vld [vmem:[%s0 + $0x40] sm:$0xff]
  %v23 = vld [vmem:[%s0 + $0x48] sm:$0xff]
  %v24 = vld [vmem:[%s0 + $0x50] sm:$0xff]
  %v25 = vld [vmem:[%s0 + $0x58] sm:$0xff]
  %v26 = vld [vmem:[%s0 + $0x60] sm:$0xff]
  %v27 = vld [vmem:[%s0 + $0x68] sm:$0xff]
  %v28 = vld [vmem:[%s0 + $0x70] sm:$0xff]
  %v29 = vld [vmem:[%s0 + $0x78] sm:$0xff]
  %v30 = vld [vmem:[%s0 + $0x80] sm:$0xff]
  %v31 = vld [vmem:[%s0 + $0x88] sm:$0xff]
  %v32 = vld [vmem:[%s0 + $0x90] sm:$0xff]
  %v33 = vld [vmem:[%s0 + $0x98] sm:$0xff]
  %v34 = vld [vmem:[%s0 + $0xa0] sm:$0xff]
  %v35 = vld [vmem:[%s0 + $0xa8] sm:$0xff]
  %v36 = vld [vmem:[%s0 + $0xb0] sm:$0xff]
  %v37 = vld [vmem:[%s0 + $0xb8] sm:$0xff]
  %v38 = vld [vmem:[%s0 + $0xc0] sm:$0xff]
  %v39 = vld [vmem:[%s0 + $0xc8] sm:$0xff]
  %v40 = vld [vmem:[%s0 + $0xd0] sm:$0xff]
  %v41 = vld [vmem:[%s0 + $0xd8] sm:$0xff]
  %v42 = vld [vmem:[%s0 + $0xe0] sm:$0xff]
  %v43 = vld [vmem:[%s0 + $0xe8] sm:$0xff]
  %v44 = vld [vmem:[%s0 + $0xf0] sm:$0xff]
  %v45 = vld [vmem:[%s0 + $0xf8] sm:$0xff]
  %v46 = vld [vmem:[%s0 + $0x100] sm:$0xff]
  %v47 = vld [vmem:[%s0 + $0x108] sm:$0xff]
  %v48 = vld [vmem:[%s0 + $0x110] sm:$0xff]
  %v49 = vld [vmem:[%s0 + $0x118] sm:$0xff]
  %v50 = vld [vmem:[%s0 + $0x120] sm:$0xff]
  %v51 = vld [vmem:[%s0 + $0x128] sm:$0xff]
  %v52 = vld [vmem:[%s0 + $0x130] sm:$0xff]
  %v53 = vld [vmem:[%s0 + $0x138] sm:$0xff]
  %v54 = vld [vmem:[%s0 + $0x140] sm:$0xff]
  %v55 = vld [vmem:[%s0 + $0x148] sm:$0xff]
  %v56 = vld [vmem:[%s0 + $0x150] sm:$0xff]
  %v57 = vld [vmem:[%s0 + $0x158] sm:$0xff]
  %v58 = vld [vmem:[%s0 + $0x160] sm:$0xff]
  %v59 = vld [vmem:[%s0 + $0x168] sm:$0xff]
  %v60 = vld [vmem:[%s0 + $0x170] sm:$0xff]
  %v61 = vld [vmem:[%s0 + $0x178] sm:$0xff]
  %v62 = vld [vmem:[%s0 + $0x180] sm:$0xff]
  %v63 = vld [vmem:[%s0 + $0x188] sm:$0xff]
  %v64 = vld [vmem:[%s0 + $0x190] sm:$0xff]
  %v65 = vld [vmem:[%s0 + $0x198] sm:$0xff]
  %v66 = vld [vmem:[%s0 + $0x1a0] sm:$0xff]
  %v67 = vld [vmem:[%s0 + $0x1a8] sm:$0xff]
  %v68 = vld [vmem:[%s0 + $0x1b0] sm:$0xff]
  %v69 = vld [vmem:[%s0 + $0x1b8] sm:$0xff]
  %v70 = vld [vmem:[%s0 + $0x1c0] sm:$0xff]
  %v71 = vld [vmem:[%s0 + $0x1c8] sm:$0xff]
  %v72 = vld [vmem:[%s0 + $0x1d0] sm:$0xff]
  %v73 = vld [vmem:[%s0 + $0x1d8] sm:$0xff]
  %v74 = vld [vmem:[%s0 + $0x1e0] sm:$0xff]
  %v75 = vld [vmem:[%s0 + $0x1e8] sm:$0xff]
  %v76 = vld [vmem:[%s0 + $0x1f0] sm:$0xff]
  %v77 = vld [vmem:[%s0 + $0x1f8] sm:$0xff]
  %v78 = vld [vmem:[%s1] sm:$0xff]
  %v79 = vld [vmem:[%s1 + $0x8] sm:$0xff]
  %v80 = vld [vmem:[%s1 + $0x10] sm:$0xff]
  %v81 = vld [vmem:[%s1 + $0x18] sm:$0xff]
  %v82 = vld [vmem:[%s1 + $0x20] sm:$0xff]
  %v83 = vld [vmem:[%s1 + $0x28] sm:$0xff]
  %v84 = vld [vmem:[%s1 + $0x30] sm:$0xff]
  %v85 = vld [vmem:[%s1 + $0x38] sm:$0xff]
  %v86 = vld [vmem:[%s1 + $0x40] sm:$0xff]
  %v87 = vld [vmem:[%s1 + $0x48] sm:$0xff]
  %v88 = vld [vmem:[%s1 + $0x50] sm:$0xff]
  %v89 = vld [vmem:[%s1 + $0x58] sm:$0xff]
  %v90 = vld [vmem:[%s1 + $0x60] sm:$0xff]
  %v91 = vld [vmem:[%s1 + $0x68] sm:$0xff]
  %v92 = vld [vmem:[%s1 + $0x70] sm:$0xff]
  %v93 = vld [vmem:[%s1 + $0x78] sm:$0xff]
  %v94 = vld [vmem:[%s1 + $0x80] sm:$0xff]
  %v95 = vld [vmem:[%s1 + $0x88] sm:$0xff]
  %v96 = vld [vmem:[%s1 + $0x90] sm:$0xff]
  %v97 = vld [vmem:[%s1 + $0x98] sm:$0xff]
  %v98 = vld [vmem:[%s1 + $0xa0] sm:$0xff]
  %v99 = vld [vmem:[%s1 + $0xa8] sm:$0xff]
  %v100 = vld [vmem:[%s1 + $0xb0] sm:$0xff]
  %v101 = vld [vmem:[%s1 + $0xb8] sm:$0xff]
  %v102 = vld [vmem:[%s1 + $0xc0] sm:$0xff]
  %v103 = vld [vmem:[%s1 + $0xc8] sm:$0xff]
  %v104 = vld [vmem:[%s1 + $0xd0] sm:$0xff]
  %v105 = vld [vmem:[%s1 + $0xd8] sm:$0xff]
  %v106 = vld [vmem:[%s1 + $0xe0] sm:$0xff]
  %v107 = vld [vmem:[%s1 + $0xe8] sm:$0xff]
  %v108 = vld [vmem:[%s2] sm:$0x1]
  %v110 = vlaneseq
  %v111 = vshrl.u32 %v110, 7
  %v112 = vsub.s32 0, %v111
  %v113 = vrot.slane %v108, %v112
  %vm115 = vcmask 916480
  %v117 = vsel %vm115, %v15, 0
  %v120 = vsel %vm115, %v17, 0
  %v123 = vsel %vm115, %v19, 0
  %v126 = vsel %vm115, %v21, 0
  %v129 = vsel %vm115, %v23, 0
  %v132 = vsel %vm115, %v25, 0
  %v135 = vsel %vm115, %v27, 0
  %v138 = vsel %vm115, %v29, 0
  %v141 = vsel %vm115, %v31, 0
  %v144 = vsel %vm115, %v33, 0
  %v147 = vsel %vm115, %v35, 0
  %v150 = vsel %vm115, %v37, 0
  %v153 = vsel %vm115, %v39, 0
  %v156 = vsel %vm115, %v41, 0
  %v159 = vsel %vm115, %v43, 0
  %v162 = vsel %vm115, %v45, 0
  %v165 = vsel %vm115, %v47, 0
  %v168 = vsel %vm115, %v49, 0
  %v171 = vsel %vm115, %v51, 0
  %v174 = vsel %vm115, %v53, 0
  %v177 = vsel %vm115, %v55, 0
  %v180 = vsel %vm115, %v57, 0
  %v183 = vsel %vm115, %v59, 0
  %v186 = vsel %vm115, %v61, 0
  %v189 = vsel %vm115, %v63, 0
  %v192 = vsel %vm115, %v65, 0
  %v195 = vsel %vm115, %v67, 0
  %v198 = vsel %vm115, %v69, 0
  %v201 = vsel %vm115, %v71, 0
  %v204 = vsel %vm115, %v73, 0
  %v207 = vsel %vm115, %v75, 0
  %v210 = vsel %vm115, %v77, 0
  %212 = vmatprep.subr.mxu0 0.0
  %213 = vmatpush1.msra.mxu0 %v78
  %214 = vmatprep.subr.mxu0 0.0
  %215 = vmatpush1.msra.mxu0 %v79
  %216 = vmatprep.subr.mxu0 0.0
  %217 = vmatpush1.msra.mxu0 %v80
  %218 = vmatprep.subr.mxu0 0.0
  %219 = vmatpush1.msra.mxu0 %v81
  %220 = vmatprep.subr.mxu0 0.0
  %221 = vmatpush1.msra.mxu0 %v82
  %222 = vmatprep.subr.mxu0 0.0
  %223 = vmatpush1.msra.mxu0 %v83
  %224 = vmatprep.subr.mxu0 0.0
  %225 = vmatpush1.msra.mxu0 %v84
  %226 = vmatprep.subr.mxu0 0.0
  %227 = vmatpush1.msra.mxu0 %v85
  %228 = vmatprep.subr.mxu0 0.0
  %229 = vmatpush1.msra.mxu0 %v86
  %230 = vmatprep.subr.mxu0 0.0
  %231 = vmatpush1.msra.mxu0 %v87
  %232 = vmatprep.subr.mxu0 0.0
  %233 = vmatpush1.msra.mxu0 %v88
  %234 = vmatprep.subr.mxu0 0.0
  %235 = vmatpush1.msra.mxu0 %v89
  %236 = vmatprep.subr.mxu0 0.0
  %237 = vmatpush1.msra.mxu0 %v90
  %238 = vmatprep.subr.mxu0 0.0
  %239 = vmatpush1.msra.mxu0 %v91
  %240 = vmatprep.subr.mxu0 0.0
  %241 = vmatpush1.msra.mxu0 %v92
  %242 = vmatprep.subr.mxu0 0.0
  %243 = vmatpush1.msra.mxu0 %v93
  %244 = vmatprep.subr.mxu0 0.0
  %245 = vmatpush1.msra.mxu0 %v94
  %246 = vmatprep.subr.mxu0 0.0
  %247 = vmatpush1.msra.mxu0 %v95
  %248 = vmatprep.subr.mxu0 0.0
  %249 = vmatpush1.msra.mxu0 %v96
  %250 = vmatprep.subr.mxu0 0.0
  %251 = vmatpush1.msra.mxu0 %v97
  %252 = vmatprep.subr.mxu0 0.0
  %253 = vmatpush1.msra.mxu0 %v98
  %254 = vmatprep.subr.mxu0 0.0
  %255 = vmatpush1.msra.mxu0 %v99
  %256 = vmatprep.subr.mxu0 0.0
  %257 = vmatpush1.msra.mxu0 %v100
  %258 = vmatprep.subr.mxu0 0.0
  %259 = vmatpush1.msra.mxu0 %v101
  %260 = vmatprep.subr.mxu0 0.0
  %261 = vmatpush1.msra.mxu0 %v102
  %262 = vmatprep.subr.mxu0 0.0
  %263 = vmatpush1.msra.mxu0 %v103
  %264 = vmatprep.subr.mxu0 0.0
  %265 = vmatpush1.msra.mxu0 %v104
  %266 = vmatprep.subr.mxu0 0.0
  %267 = vmatpush1.msra.mxu0 %v105
  %268 = vmatprep.subr.mxu0 0.0
  %269 = vmatpush1.msra.mxu0 %v106
  %270 = vmatprep.subr.mxu0 0.0
  %271 = vmatpush1.msra.mxu0 %v107
  %272 = vmatprep.subr.mxu0 0.0
  %273 = vmatpush1.msra.mxu0 0.0
  %274 = vmatprep.subr.mxu0 0.0
  %275 = vmatpush1.msra.mxu0 0.0
  %276 = vmatprep.mubr.f32.mxu0 %v117
  %277 = vmatmul.mubr.f32.gmra.mrb[0].mxu0 %v14
  %v278 = vpop.f32.mrb[0].mxu0
  %v279 = vadd.f32 %v113, %v278
  %v280 = vpop.f32.mrb[0].mxu0
  %281 = vmatprep.mubr.f32.mxu0 %v120
  %282 = vmatmul.mubr.f32.gmra.mrb[0].mxu0 %v16
  %v283 = vpop.f32.mrb[0].mxu0
  %v284 = vadd.f32 %v113, %v283
  %v285 = vpop.f32.mrb[0].mxu0
  %286 = vmatprep.mubr.f32.mxu0 %v123
  %287 = vmatmul.mubr.f32.gmra.mrb[0].mxu0 %v18
  %v288 = vpop.f32.mrb[0].mxu0
  %v289 = vadd.f32 %v113, %v288
  %v290 = vpop.f32.mrb[0].mxu0
  %291 = vmatprep.mubr.f32.mxu0 %v126
  %292 = vmatmul.mubr.f32.gmra.mrb[0].mxu0 %v20
  %v293 = vpop.f32.mrb[0].mxu0
  %v294 = vadd.f32 %v113, %v293
  %v295 = vpop.f32.mrb[0].mxu0
  %296 = vmatprep.mubr.f32.mxu0 %v129
  %297 = vmatmul.mubr.f32.gmra.mrb[0].mxu0 %v22
  %v298 = vpop.f32.mrb[0].mxu0
  %v299 = vadd.f32 %v113, %v298
  %v300 = vpop.f32.mrb[0].mxu0
  %301 = vmatprep.mubr.f32.mxu0 %v132
  %302 = vmatmul.mubr.f32.gmra.mrb[0].mxu0 %v24
  %v303 = vpop.f32.mrb[0].mxu0
  %v304 = vadd.f32 %v113, %v303
  %v305 = vpop.f32.mrb[0].mxu0
  %306 = vmatprep.mubr.f32.mxu0 %v135
  %307 = vmatmul.mubr.f32.gmra.mrb[0].mxu0 %v26
  %v308 = vpop.f32.mrb[0].mxu0
  %v309 = vadd.f32 %v113, %v308
  %v310 = vpop.f32.mrb[0].mxu0
  %311 = vmatprep.mubr.f32.mxu0 %v138
  %312 = vmatmul.mubr.f32.gmra.mrb[0].mxu0 %v28
  %v313 = vpop.f32.mrb[0].mxu0
  %v314 = vadd.f32 %v113, %v313
  %v315 = vpop.f32.mrb[0].mxu0
  %316 = vmatprep.mubr.f32.mxu0 %v141
  %317 = vmatmul.mubr.f32.gmra.mrb[0].mxu0 %v30
  %v318 = vpop.f32.mrb[0].mxu0
  %v319 = vadd.f32 %v113, %v318
  %v320 = vpop.f32.mrb[0].mxu0
  %321 = vmatprep.mubr.f32.mxu0 %v144
  %322 = vmatmul.mubr.f32.gmra.mrb[0].mxu0 %v32
  %v323 = vpop.f32.mrb[0].mxu0
  %v324 = vadd.f32 %v113, %v323
  %v325 = vpop.f32.mrb[0].mxu0
  %326 = vmatprep.mubr.f32.mxu0 %v147
  %327 = vmatmul.mubr.f32.gmra.mrb[0].mxu0 %v34
  %v328 = vpop.f32.mrb[0].mxu0
  %v329 = vadd.f32 %v113, %v328
  %v330 = vpop.f32.mrb[0].mxu0
  %331 = vmatprep.mubr.f32.mxu0 %v150
  %332 = vmatmul.mubr.f32.gmra.mrb[0].mxu0 %v36
  %v333 = vpop.f32.mrb[0].mxu0
  %v334 = vadd.f32 %v113, %v333
  %v335 = vpop.f32.mrb[0].mxu0
  %336 = vmatprep.mubr.f32.mxu0 %v153
  %337 = vmatmul.mubr.f32.gmra.mrb[0].mxu0 %v38
  %v338 = vpop.f32.mrb[0].mxu0
  %v339 = vadd.f32 %v113, %v338
  %v340 = vpop.f32.mrb[0].mxu0
  %341 = vmatprep.mubr.f32.mxu0 %v156
  %342 = vmatmul.mubr.f32.gmra.mrb[0].mxu0 %v40
  %v343 = vpop.f32.mrb[0].mxu0
  %v344 = vadd.f32 %v113, %v343
  %v345 = vpop.f32.mrb[0].mxu0
  %346 = vmatprep.mubr.f32.mxu0 %v159
  %347 = vmatmul.mubr.f32.gmra.mrb[0].mxu0 %v42
  %v348 = vpop.f32.mrb[0].mxu0
  %v349 = vadd.f32 %v113, %v348
  %v350 = vpop.f32.mrb[0].mxu0
  %351 = vmatprep.mubr.f32.mxu0 %v162
  %352 = vmatmul.mubr.f32.gmra.mrb[0].mxu0 %v44
  %v353 = vpop.f32.mrb[0].mxu0
  %v354 = vadd.f32 %v113, %v353
  %v355 = vpop.f32.mrb[0].mxu0
  %356 = vmatprep.mubr.f32.mxu0 %v165
  %357 = vmatmul.mubr.f32.gmra.mrb[0].mxu0 %v46
  %v358 = vpop.f32.mrb[0].mxu0
  %v359 = vadd.f32 %v113, %v358
  %v360 = vpop.f32.mrb[0].mxu0
  %361 = vmatprep.mubr.f32.mxu0 %v168
  %362 = vmatmul.mubr.f32.gmra.mrb[0].mxu0 %v48
  %v363 = vpop.f32.mrb[0].mxu0
  %v364 = vadd.f32 %v113, %v363
  %v365 = vpop.f32.mrb[0].mxu0
  %366 = vmatprep.mubr.f32.mxu0 %v171
  %367 = vmatmul.mubr.f32.gmra.mrb[0].mxu0 %v50
  %v368 = vpop.f32.mrb[0].mxu0
  %v369 = vadd.f32 %v113, %v368
  %v370 = vpop.f32.mrb[0].mxu0
  %371 = vmatprep.mubr.f32.mxu0 %v174
  %372 = vmatmul.mubr.f32.gmra.mrb[0].mxu0 %v52
  %v373 = vpop.f32.mrb[0].mxu0
  %v374 = vadd.f32 %v113, %v373
  %v375 = vpop.f32.mrb[0].mxu0
  %376 = vmatprep.mubr.f32.mxu0 %v177
  %377 = vmatmul.mubr.f32.gmra.mrb[0].mxu0 %v54
  %v378 = vpop.f32.mrb[0].mxu0
  %v379 = vadd.f32 %v113, %v378
  %v380 = vpop.f32.mrb[0].mxu0
  %381 = vmatprep.mubr.f32.mxu0 %v180
  %382 = vmatmul.mubr.f32.gmra.mrb[0].mxu0 %v56
  %v383 = vpop.f32.mrb[0].mxu0
  %v384 = vadd.f32 %v113, %v383
  %v385 = vpop.f32.mrb[0].mxu0
  %386 = vmatprep.mubr.f32.mxu0 %v183
  %387 = vmatmul.mubr.f32.gmra.mrb[0].mxu0 %v58
  %v388 = vpop.f32.mrb[0].mxu0
  %v389 = vadd.f32 %v113, %v388
  %v390 = vpop.f32.mrb[0].mxu0
  %391 = vmatprep.mubr.f32.mxu0 %v186
  %392 = vmatmul.mubr.f32.gmra.mrb[0].mxu0 %v60
  %v393 = vpop.f32.mrb[0].mxu0
  %v394 = vadd.f32 %v113, %v393
  %v395 = vpop.f32.mrb[0].mxu0
  %396 = vmatprep.mubr.f32.mxu0 %v189
  %397 = vmatmul.mubr.f32.gmra.mrb[0].mxu0 %v62
  %v398 = vpop.f32.mrb[0].mxu0
  %v399 = vadd.f32 %v113, %v398
  %v400 = vpop.f32.mrb[0].mxu0
  %401 = vmatprep.mubr.f32.mxu0 %v192
  %402 = vmatmul.mubr.f32.gmra.mrb[0].mxu0 %v64
  %v403 = vpop.f32.mrb[0].mxu0
  %v404 = vadd.f32 %v113, %v403
  %v405 = vpop.f32.mrb[0].mxu0
  %406 = vmatprep.mubr.f32.mxu0 %v195
  %407 = vmatmul.mubr.f32.gmra.mrb[0].mxu0 %v66
  %v408 = vpop.f32.mrb[0].mxu0
  %v409 = vadd.f32 %v113, %v408
  %v410 = vpop.f32.mrb[0].mxu0
  %411 = vmatprep.mubr.f32.mxu0 %v198
  %412 = vmatmul.mubr.f32.gmra.mrb[0].mxu0 %v68
  %v413 = vpop.f32.mrb[0].mxu0
  %v414 = vadd.f32 %v113, %v413
  %v415 = vpop.f32.mrb[0].mxu0
  %416 = vmatprep.mubr.f32.mxu0 %v201
  %417 = vmatmul.mubr.f32.gmra.mrb[0].mxu0 %v70
  %v418 = vpop.f32.mrb[0].mxu0
  %v419 = vadd.f32 %v113, %v418
  %v420 = vpop.f32.mrb[0].mxu0
  %421 = vmatprep.mubr.f32.mxu0 %v204
  %422 = vmatmul.mubr.f32.gmra.mrb[0].mxu0 %v72
  %v423 = vpop.f32.mrb[0].mxu0
  %v424 = vadd.f32 %v113, %v423
  %v425 = vpop.f32.mrb[0].mxu0
  %426 = vmatprep.mubr.f32.mxu0 %v207
  %427 = vmatmul.mubr.f32.gmra.mrb[0].mxu0 %v74
  %v428 = vpop.f32.mrb[0].mxu0
  %v429 = vadd.f32 %v113, %v428
  %v430 = vpop.f32.mrb[0].mxu0
  %431 = vmatprep.mubr.f32.mxu0 %v210
  %432 = vmatmul.mubr.f32.gmra.mrb[0].mxu0 %v76
  %v433 = vpop.f32.mrb[0].mxu0
  %v434 = vadd.f32 %v113, %v433
  %v435 = vpop.f32.mrb[0].mxu0
  %436 = vdwg.mxu0
  %437 = vst [vmem:[%s3] sm:$0xff] %v279
  %438 = vst [vmem:[%s3 + $0x8] sm:$0xff] %v284
  %439 = vst [vmem:[%s3 + $0x10] sm:$0xff] %v289
  %440 = vst [vmem:[%s3 + $0x18] sm:$0xff] %v294
  %441 = vst [vmem:[%s3 + $0x20] sm:$0xff] %v299
  %442 = vst [vmem:[%s3 + $0x28] sm:$0xff] %v304
  %443 = vst [vmem:[%s3 + $0x30] sm:$0xff] %v309
  %444 = vst [vmem:[%s3 + $0x38] sm:$0xff] %v314
  %445 = vst [vmem:[%s3 + $0x40] sm:$0xff] %v319
  %446 = vst [vmem:[%s3 + $0x48] sm:$0xff] %v324
  %447 = vst [vmem:[%s3 + $0x50] sm:$0xff] %v329
  %448 = vst [vmem:[%s3 + $0x58] sm:$0xff] %v334
  %449 = vst [vmem:[%s3 + $0x60] sm:$0xff] %v339
  %450 = vst [vmem:[%s3 + $0x68] sm:$0xff] %v344
  %451 = vst [vmem:[%s3 + $0x70] sm:$0xff] %v349
  %452 = vst [vmem:[%s3 + $0x78] sm:$0xff] %v354
  %453 = vst [vmem:[%s3 + $0x80] sm:$0xff] %v359
  %454 = vst [vmem:[%s3 + $0x88] sm:$0xff] %v364
  %455 = vst [vmem:[%s3 + $0x90] sm:$0xff] %v369
  %456 = vst [vmem:[%s3 + $0x98] sm:$0xff] %v374
  %457 = vst [vmem:[%s3 + $0xa0] sm:$0xff] %v379
  %458 = vst [vmem:[%s3 + $0xa8] sm:$0xff] %v384
  %459 = vst [vmem:[%s3 + $0xb0] sm:$0xff] %v389
  %460 = vst [vmem:[%s3 + $0xb8] sm:$0xff] %v394
  %461 = vst [vmem:[%s3 + $0xc0] sm:$0xff] %v399
  %462 = vst [vmem:[%s3 + $0xc8] sm:$0xff] %v404
  %463 = vst [vmem:[%s3 + $0xd0] sm:$0xff] %v409
  %464 = vst [vmem:[%s3 + $0xd8] sm:$0xff] %v414
  %465 = vst [vmem:[%s3 + $0xe0] sm:$0xff] %v419
  %466 = vst [vmem:[%s3 + $0xe8] sm:$0xff] %v424
  %467 = vst [vmem:[%s3 + $0xf0] sm:$0xff] %v429
  %468 = vst [vmem:[%s3 + $0xf8] sm:$0xff] %v434
  // Predicated region
  $region14: #{encoder_with_svtr_forward.28} parent=0 // pred_check
    _
  $region15: #{encoder_with_svtr_forward.28} parent=0 // pred_check_branch
    %470 = sbr.rel (0) target = $region17
  $region16: #{encoder_with_svtr_forward.28} parent=0 // pred_region
    _
  $region17: #{encoder_with_svtr_forward.28} parent=0 // pred_fallthru
    _
  // Predicated region
  $region18: #{encoder_with_svtr_forward.28} parent=0 // pred_check
    _
  $region19: #{encoder_with_svtr_forward.28} parent=0 // pred_check_branch
    %472 = sbr.rel (0) target = $region21
  $region20: #{encoder_with_svtr_forward.28} parent=0 // pred_region
    _
  $region21: #{encoder_with_svtr_forward.28} parent=0 // pred_fallthru
    _

// kernel: encoder_with_svtr_forward.36
$region0: #{encoder_with_svtr_forward.36}
  #allocation0 [shape = 'u32[]', space=smem, size = 0x4, offset = 0x4, fixed_abs, tag = 'smem constant byte address 0x4 - core index']
  #allocation1 [shape = 'u32[144,128]{1,0:T(1,128)}', space=vmem, size = 0x12000, scoped, tag = 'internal scratch']
  %s0 = inlined_call_operand.vmem [shape: f32[256,120], index: 0, kind: input, shape index: {}]
  %s1 = inlined_call_operand.vmem [shape: f32[1,120], index: 1, kind: input, shape index: {}]
  %s2 = inlined_call_operand.vmem [shape: f32[1,120], index: 2, kind: input, shape index: {}]
  %s3 = inlined_call_operand.vmem [shape: f32[256,120], index: 3, kind: output, shape index: {}]
  %s4 = sld [smem:[#allocation0]]
  $region22: #{encoder_with_svtr_forward.36} parent=0
    _
  %s6 = ssub.s32 1, %s4
  %s7 = scalar_select 0, %s6, %s4
  // Predicated region
  $region2: #{encoder_with_svtr_forward.36} parent=0 // pred_check
    _
  $region3: #{encoder_with_svtr_forward.36} parent=0 // pred_check_branch
    %9 = sbr.rel (0) target = $region5
  $region4: #{encoder_with_svtr_forward.36} parent=0 // pred_region
    _
  $region5: #{encoder_with_svtr_forward.36} parent=0 // pred_fallthru
    _
  // Predicated region
  $region6: #{encoder_with_svtr_forward.36} parent=0 // pred_check
    _
  $region7: #{encoder_with_svtr_forward.36} parent=0 // pred_check_branch
    %11 = sbr.rel (0) target = $region9
  $region8: #{encoder_with_svtr_forward.36} parent=0 // pred_region
    _
  $region9: #{encoder_with_svtr_forward.36} parent=0 // pred_fallthru
    _
  // Predicated region
  $region10: #{encoder_with_svtr_forward.36} parent=0 // pred_check
    _
  $region11: #{encoder_with_svtr_forward.36} parent=0 // pred_check_branch
    %13 = sbr.rel (0) target = $region13
  $region12: #{encoder_with_svtr_forward.36} parent=0 // pred_region
    _
  $region13: #{encoder_with_svtr_forward.36} parent=0 // pred_fallthru
    _
  %v14 = vld [vmem:[%s0] sm:$0xff]
  %v15 = vld [vmem:[%s0 + $0x8] sm:$0xff]
  %v16 = vld [vmem:[%s0 + $0x10] sm:$0xff]
  %v17 = vld [vmem:[%s0 + $0x18] sm:$0xff]
  %v18 = vld [vmem:[%s0 + $0x20] sm:$0xff]
  %v19 = vld [vmem:[%s0 + $0x28] sm:$0xff]
  %v20 = vld [vmem:[%s0 + $0x30] sm:$0xff]
  %v21 = vld [vmem:[%s0 + $0x38] sm:$0xff]
  %v22 = vld [vmem:[%s0 + $0x40] sm:$0xff]
  %v23 = vld [vmem:[%s0 + $0x48] sm:$0xff]
  %v24 = vld [vmem:[%s0 + $0x50] sm:$0xff]
  %v25 = vld [vmem:[%s0 + $0x58] sm:$0xff]
  %v26 = vld [vmem:[%s0 + $0x60] sm:$0xff]
  %v27 = vld [vmem:[%s0 + $0x68] sm:$0xff]
  %v28 = vld [vmem:[%s0 + $0x70] sm:$0xff]
  %v29 = vld [vmem:[%s0 + $0x78] sm:$0xff]
  %v30 = vld [vmem:[%s0 + $0x80] sm:$0xff]
  %v31 = vld [vmem:[%s0 + $0x88] sm:$0xff]
  %v32 = vld [vmem:[%s0 + $0x90] sm:$0xff]
  %v33 = vld [vmem:[%s0 + $0x98] sm:$0xff]
  %v34 = vld [vmem:[%s0 + $0xa0] sm:$0xff]
  %v35 = vld [vmem:[%s0 + $0xa8] sm:$0xff]
  %v36 = vld [vmem:[%s0 + $0xb0] sm:$0xff]
  %v37 = vld [vmem:[%s0 + $0xb8] sm:$0xff]
  %v38 = vld [vmem:[%s0 + $0xc0] sm:$0xff]
  %v39 = vld [vmem:[%s0 + $0xc8] sm:$0xff]
  %v40 = vld [vmem:[%s0 + $0xd0] sm:$0xff]
  %v41 = vld [vmem:[%s0 + $0xd8] sm:$0xff]
  %v42 = vld [vmem:[%s0 + $0xe0] sm:$0xff]
  %v43 = vld [vmem:[%s0 + $0xe8] sm:$0xff]
  %v44 = vld [vmem:[%s0 + $0xf0] sm:$0xff]
  %v45 = vld [vmem:[%s0 + $0xf8] sm:$0xff]
  %vm46 = vcmask 982016
  %v47 = vsel %vm46, %v14, 0.0
  %48 = vadd.xlane.f32.xlu0 %v47
  %v49 = vpop.xlane.xlu0 %48
  %v50 = vsel %vm46, %v15, 0.0
  %51 = vadd.xlane.f32.xlu0 %v50
  %v52 = vpop.xlane.xlu0 %51
  %v53 = vsel %vm46, %v16, 0.0
  %54 = vadd.xlane.f32.xlu0 %v53
  %v55 = vpop.xlane.xlu0 %54
  %v56 = vsel %vm46, %v17, 0.0
  %57 = vadd.xlane.f32.xlu0 %v56
  %v58 = vpop.xlane.xlu0 %57
  %v59 = vsel %vm46, %v18, 0.0
  %60 = vadd.xlane.f32.xlu0 %v59
  %v61 = vpop.xlane.xlu0 %60
  %v62 = vsel %vm46, %v19, 0.0
  %63 = vadd.xlane.f32.xlu0 %v62
  %v64 = vpop.xlane.xlu0 %63
  %v65 = vsel %vm46, %v20, 0.0
  %66 = vadd.xlane.f32.xlu0 %v65
  %v67 = vpop.xlane.xlu0 %66
  %v68 = vsel %vm46, %v21, 0.0
  %69 = vadd.xlane.f32.xlu0 %v68
  %v70 = vpop.xlane.xlu0 %69
  %v71 = vsel %vm46, %v22, 0.0
  %72 = vadd.xlane.f32.xlu0 %v71
  %v73 = vpop.xlane.xlu0 %72
  %v74 = vsel %vm46, %v23, 0.0
  %75 = vadd.xlane.f32.xlu0 %v74
  %v76 = vpop.xlane.xlu0 %75
  %v77 = vsel %vm46, %v24, 0.0
  %78 = vadd.xlane.f32.xlu0 %v77
  %v79 = vpop.xlane.xlu0 %78
  %v80 = vsel %vm46, %v25, 0.0
  %81 = vadd.xlane.f32.xlu0 %v80
  %v82 = vpop.xlane.xlu0 %81
  %v83 = vsel %vm46, %v26, 0.0
  %84 = vadd.xlane.f32.xlu0 %v83
  %v85 = vpop.xlane.xlu0 %84
  %v86 = vsel %vm46, %v27, 0.0
  %87 = vadd.xlane.f32.xlu0 %v86
  %v88 = vpop.xlane.xlu0 %87
  %v89 = vsel %vm46, %v28, 0.0
  %90 = vadd.xlane.f32.xlu0 %v89
  %v91 = vpop.xlane.xlu0 %90
  %v92 = vsel %vm46, %v29, 0.0
  %93 = vadd.xlane.f32.xlu0 %v92
  %v94 = vpop.xlane.xlu0 %93
  %v95 = vsel %vm46, %v30, 0.0
  %96 = vadd.xlane.f32.xlu0 %v95
  %v97 = vpop.xlane.xlu0 %96
  %v98 = vsel %vm46, %v31, 0.0
  %99 = vadd.xlane.f32.xlu0 %v98
  %v100 = vpop.xlane.xlu0 %99
  %v101 = vsel %vm46, %v32, 0.0
  %102 = vadd.xlane.f32.xlu0 %v101
  %v103 = vpop.xlane.xlu0 %102
  %v104 = vsel %vm46, %v33, 0.0
  %105 = vadd.xlane.f32.xlu0 %v104
  %v106 = vpop.xlane.xlu0 %105
  %v107 = vsel %vm46, %v34, 0.0
  %108 = vadd.xlane.f32.xlu0 %v107
  %v109 = vpop.xlane.xlu0 %108
  %v110 = vsel %vm46, %v35, 0.0
  %111 = vadd.xlane.f32.xlu0 %v110
  %v112 = vpop.xlane.xlu0 %111
  %v113 = vsel %vm46, %v36, 0.0
  %114 = vadd.xlane.f32.xlu0 %v113
  %v115 = vpop.xlane.xlu0 %114
  %v116 = vsel %vm46, %v37, 0.0
  %117 = vadd.xlane.f32.xlu0 %v116
  %v118 = vpop.xlane.xlu0 %117
  %v119 = vsel %vm46, %v38, 0.0
  %120 = vadd.xlane.f32.xlu0 %v119
  %v121 = vpop.xlane.xlu0 %120
  %v122 = vsel %vm46, %v39, 0.0
  %123 = vadd.xlane.f32.xlu0 %v122
  %v124 = vpop.xlane.xlu0 %123
  %v125 = vsel %vm46, %v40, 0.0
  %126 = vadd.xlane.f32.xlu0 %v125
  %v127 = vpop.xlane.xlu0 %126
  %v128 = vsel %vm46, %v41, 0.0
  %129 = vadd.xlane.f32.xlu0 %v128
  %v130 = vpop.xlane.xlu0 %129
  %v131 = vsel %vm46, %v42, 0.0
  %132 = vadd.xlane.f32.xlu0 %v131
  %v133 = vpop.xlane.xlu0 %132
  %v134 = vsel %vm46, %v43, 0.0
  %135 = vadd.xlane.f32.xlu0 %v134
  %v136 = vpop.xlane.xlu0 %135
  %v137 = vsel %vm46, %v44, 0.0
  %138 = vadd.xlane.f32.xlu0 %v137
  %v139 = vpop.xlane.xlu0 %138
  %v140 = vsel %vm46, %v45, 0.0
  %141 = vadd.xlane.f32.xlu0 %v140
  %v142 = vpop.xlane.xlu0 %141
  %v143 = vrcp.pop 120.0
  %v144 = vmul.f32 %v49, %v143
  %v145 = vmul.f32 %v52, %v143
  %v146 = vmul.f32 %v55, %v143
  %v147 = vmul.f32 %v58, %v143
  %v148 = vmul.f32 %v61, %v143
  %v149 = vmul.f32 %v64, %v143
  %v150 = vmul.f32 %v67, %v143
  %v151 = vmul.f32 %v70, %v143
  %v152 = vmul.f32 %v73, %v143
  %v153 = vmul.f32 %v76, %v143
  %v154 = vmul.f32 %v79, %v143
  %v155 = vmul.f32 %v82, %v143
  %v156 = vmul.f32 %v85, %v143
  %v157 = vmul.f32 %v88, %v143
  %v158 = vmul.f32 %v91, %v143
  %v159 = vmul.f32 %v94, %v143
  %v160 = vmul.f32 %v97, %v143
  %v161 = vmul.f32 %v100, %v143
  %v162 = vmul.f32 %v103, %v143
  %v163 = vmul.f32 %v106, %v143
  %v164 = vmul.f32 %v109, %v143
  %v165 = vmul.f32 %v112, %v143
  %v166 = vmul.f32 %v115, %v143
  %v167 = vmul.f32 %v118, %v143
  %v168 = vmul.f32 %v121, %v143
  %v169 = vmul.f32 %v124, %v143
  %v170 = vmul.f32 %v127, %v143
  %v171 = vmul.f32 %v130, %v143
  %v172 = vmul.f32 %v133, %v143
  %v173 = vmul.f32 %v136, %v143
  %v174 = vmul.f32 %v139, %v143
  %v175 = vmul.f32 %v142, %v143
  %v176 = vsub.f32 %v14, %v144
  %v177 = vsub.f32 %v15, %v145
  %v178 = vsub.f32 %v16, %v146
  %v179 = vsub.f32 %v17, %v147
  %v180 = vsub.f32 %v18, %v148
  %v181 = vsub.f32 %v19, %v149
  %v182 = vsub.f32 %v20, %v150
  %v183 = vsub.f32 %v21, %v151
  %v184 = vsub.f32 %v22, %v152
  %v185 = vsub.f32 %v23, %v153
  %v186 = vsub.f32 %v24, %v154
  %v187 = vsub.f32 %v25, %v155
  %v188 = vsub.f32 %v26, %v156
  %v189 = vsub.f32 %v27, %v157
  %v190 = vsub.f32 %v28, %v158
  %v191 = vsub.f32 %v29, %v159
  %v192 = vsub.f32 %v30, %v160
  %v193 = vsub.f32 %v31, %v161
  %v194 = vsub.f32 %v32, %v162
  %v195 = vsub.f32 %v33, %v163
  %v196 = vsub.f32 %v34, %v164
  %v197 = vsub.f32 %v35, %v165
  %v198 = vsub.f32 %v36, %v166
  %v199 = vsub.f32 %v37, %v167
  %v200 = vsub.f32 %v38, %v168
  %v201 = vsub.f32 %v39, %v169
  %v202 = vsub.f32 %v40, %v170
  %v203 = vsub.f32 %v41, %v171
  %v204 = vsub.f32 %v42, %v172
  %v205 = vsub.f32 %v43, %v173
  %v206 = vsub.f32 %v44, %v174
  %v207 = vsub.f32 %v45, %v175
  %v208 = vmul.f32 %v176, %v176
  %v209 = vmul.f32 %v177, %v177
  %v210 = vmul.f32 %v178, %v178
  %v211 = vmul.f32 %v179, %v179
  %v212 = vmul.f32 %v180, %v180
  %v213 = vmul.f32 %v181, %v181
  %v214 = vmul.f32 %v182, %v182
  %v215 = vmul.f32 %v183, %v183
  %v216 = vmul.f32 %v184, %v184
  %v217 = vmul.f32 %v185, %v185
  %v218 = vmul.f32 %v186, %v186
  %v219 = vmul.f32 %v187, %v187
  %v220 = vmul.f32 %v188, %v188
  %v221 = vmul.f32 %v189, %v189
  %v222 = vmul.f32 %v190, %v190
  %v223 = vmul.f32 %v191, %v191
  %v224 = vmul.f32 %v192, %v192
  %v225 = vmul.f32 %v193, %v193
  %v226 = vmul.f32 %v194, %v194
  %v227 = vmul.f32 %v195, %v195
  %v228 = vmul.f32 %v196, %v196
  %v229 = vmul.f32 %v197, %v197
  %v230 = vmul.f32 %v198, %v198
  %v231 = vmul.f32 %v199, %v199
  %v232 = vmul.f32 %v200, %v200
  %v233 = vmul.f32 %v201, %v201
  %v234 = vmul.f32 %v202, %v202
  %v235 = vmul.f32 %v203, %v203
  %v236 = vmul.f32 %v204, %v204
  %v237 = vmul.f32 %v205, %v205
  %v238 = vmul.f32 %v206, %v206
  %v239 = vmul.f32 %v207, %v207
  %v240 = vsel %vm46, %v208, 0.0
  %241 = vadd.xlane.f32.xlu0 %v240
  %v242 = vpop.xlane.xlu0 %241
  %v243 = vsel %vm46, %v209, 0.0
  %244 = vadd.xlane.f32.xlu0 %v243
  %v245 = vpop.xlane.xlu0 %244
  %v246 = vsel %vm46, %v210, 0.0
  %247 = vadd.xlane.f32.xlu0 %v246
  %v248 = vpop.xlane.xlu0 %247
  %v249 = vsel %vm46, %v211, 0.0
  %250 = vadd.xlane.f32.xlu0 %v249
  %v251 = vpop.xlane.xlu0 %250
  %v252 = vsel %vm46, %v212, 0.0
  %253 = vadd.xlane.f32.xlu0 %v252
  %v254 = vpop.xlane.xlu0 %253
  %v255 = vsel %vm46, %v213, 0.0
  %256 = vadd.xlane.f32.xlu0 %v255
  %v257 = vpop.xlane.xlu0 %256
  %v258 = vsel %vm46, %v214, 0.0
  %259 = vadd.xlane.f32.xlu0 %v258
  %v260 = vpop.xlane.xlu0 %259
  %v261 = vsel %vm46, %v215, 0.0
  %262 = vadd.xlane.f32.xlu0 %v261
  %v263 = vpop.xlane.xlu0 %262
  %v264 = vsel %vm46, %v216, 0.0
  %265 = vadd.xlane.f32.xlu0 %v264
  %v266 = vpop.xlane.xlu0 %265
  %v267 = vsel %vm46, %v217, 0.0
  %268 = vadd.xlane.f32.xlu0 %v267
  %v269 = vpop.xlane.xlu0 %268
  %v270 = vsel %vm46, %v218, 0.0
  %271 = vadd.xlane.f32.xlu0 %v270
  %v272 = vpop.xlane.xlu0 %271
  %v273 = vsel %vm46, %v219, 0.0
  %274 = vadd.xlane.f32.xlu0 %v273
  %v275 = vpop.xlane.xlu0 %274
  %v276 = vsel %vm46, %v220, 0.0
  %277 = vadd.xlane.f32.xlu0 %v276
  %v278 = vpop.xlane.xlu0 %277
  %v279 = vsel %vm46, %v221, 0.0
  %280 = vadd.xlane.f32.xlu0 %v279
  %v281 = vpop.xlane.xlu0 %280
  %v282 = vsel %vm46, %v222, 0.0
  %283 = vadd.xlane.f32.xlu0 %v282
  %v284 = vpop.xlane.xlu0 %283
  %v285 = vsel %vm46, %v223, 0.0
  %286 = vadd.xlane.f32.xlu0 %v285
  %v287 = vpop.xlane.xlu0 %286
  %v288 = vsel %vm46, %v224, 0.0
  %289 = vadd.xlane.f32.xlu0 %v288
  %v290 = vpop.xlane.xlu0 %289
  %v291 = vsel %vm46, %v225, 0.0
  %292 = vadd.xlane.f32.xlu0 %v291
  %v293 = vpop.xlane.xlu0 %292
  %v294 = vsel %vm46, %v226, 0.0
  %295 = vadd.xlane.f32.xlu0 %v294
  %v296 = vpop.xlane.xlu0 %295
  %v297 = vsel %vm46, %v227, 0.0
  %298 = vadd.xlane.f32.xlu0 %v297
  %v299 = vpop.xlane.xlu0 %298
  %v300 = vsel %vm46, %v228, 0.0
  %301 = vadd.xlane.f32.xlu0 %v300
  %v302 = vpop.xlane.xlu0 %301
  %v303 = vsel %vm46, %v229, 0.0
  %304 = vadd.xlane.f32.xlu0 %v303
  %v305 = vpop.xlane.xlu0 %304
  %v306 = vsel %vm46, %v230, 0.0
  %307 = vadd.xlane.f32.xlu0 %v306
  %v308 = vpop.xlane.xlu0 %307
  %v309 = vsel %vm46, %v231, 0.0
  %310 = vadd.xlane.f32.xlu0 %v309
  %v311 = vpop.xlane.xlu0 %310
  %v312 = vsel %vm46, %v232, 0.0
  %313 = vadd.xlane.f32.xlu0 %v312
  %v314 = vpop.xlane.xlu0 %313
  %v315 = vsel %vm46, %v233, 0.0
  %316 = vadd.xlane.f32.xlu0 %v315
  %v317 = vpop.xlane.xlu0 %316
  %v318 = vsel %vm46, %v234, 0.0
  %319 = vadd.xlane.f32.xlu0 %v318
  %v320 = vpop.xlane.xlu0 %319
  %v321 = vsel %vm46, %v235, 0.0
  %322 = vadd.xlane.f32.xlu0 %v321
  %v323 = vpop.xlane.xlu0 %322
  %v324 = vsel %vm46, %v236, 0.0
  %325 = vadd.xlane.f32.xlu0 %v324
  %v326 = vpop.xlane.xlu0 %325
  %v327 = vsel %vm46, %v237, 0.0
  %328 = vadd.xlane.f32.xlu0 %v327
  %v329 = vpop.xlane.xlu0 %328
  %v330 = vsel %vm46, %v238, 0.0
  %331 = vadd.xlane.f32.xlu0 %v330
  %v332 = vpop.xlane.xlu0 %331
  %v333 = vsel %vm46, %v239, 0.0
  %334 = vadd.xlane.f32.xlu0 %v333
  %v335 = vpop.xlane.xlu0 %334
  %v336 = vmul.f32 %v242, %v143
  %v337 = vmul.f32 %v245, %v143
  %v338 = vmul.f32 %v248, %v143
  %v339 = vmul.f32 %v251, %v143
  %v340 = vmul.f32 %v254, %v143
  %v341 = vmul.f32 %v257, %v143
  %v342 = vmul.f32 %v260, %v143
  %v343 = vmul.f32 %v263, %v143
  %v344 = vmul.f32 %v266, %v143
  %v345 = vmul.f32 %v269, %v143
  %v346 = vmul.f32 %v272, %v143
  %v347 = vmul.f32 %v275, %v143
  %v348 = vmul.f32 %v278, %v143
  %v349 = vmul.f32 %v281, %v143
  %v350 = vmul.f32 %v284, %v143
  %v351 = vmul.f32 %v287, %v143
  %v352 = vmul.f32 %v290, %v143
  %v353 = vmul.f32 %v293, %v143
  %v354 = vmul.f32 %v296, %v143
  %v355 = vmul.f32 %v299, %v143
  %v356 = vmul.f32 %v302, %v143
  %v357 = vmul.f32 %v305, %v143
  %v358 = vmul.f32 %v308, %v143
  %v359 = vmul.f32 %v311, %v143
  %v360 = vmul.f32 %v314, %v143
  %v361 = vmul.f32 %v317, %v143
  %v362 = vmul.f32 %v320, %v143
  %v363 = vmul.f32 %v323, %v143
  %v364 = vmul.f32 %v326, %v143
  %v365 = vmul.f32 %v329, %v143
  %v366 = vmul.f32 %v332, %v143
  %v367 = vmul.f32 %v335, %v143
  %v368 = vadd.f32 %v336, 1e-06
  %v369 = vadd.f32 %v337, 1e-06
  %v370 = vadd.f32 %v338, 1e-06
  %v371 = vadd.f32 %v339, 1e-06
  %v372 = vadd.f32 %v340, 1e-06
  %v373 = vadd.f32 %v341, 1e-06
  %v374 = vadd.f32 %v342, 1e-06
  %v375 = vadd.f32 %v343, 1e-06
  %v376 = vadd.f32 %v344, 1e-06
  %v377 = vadd.f32 %v345, 1e-06
  %v378 = vadd.f32 %v346, 1e-06
  %v379 = vadd.f32 %v347, 1e-06
  %v380 = vadd.f32 %v348, 1e-06
  %v381 = vadd.f32 %v349, 1e-06
  %v382 = vadd.f32 %v350, 1e-06
  %v383 = vadd.f32 %v351, 1e-06
  %v384 = vadd.f32 %v352, 1e-06
  %v385 = vadd.f32 %v353, 1e-06
  %v386 = vadd.f32 %v354, 1e-06
  %v387 = vadd.f32 %v355, 1e-06
  %v388 = vadd.f32 %v356, 1e-06
  %v389 = vadd.f32 %v357, 1e-06
  %v390 = vadd.f32 %v358, 1e-06
  %v391 = vadd.f32 %v359, 1e-06
  %v392 = vadd.f32 %v360, 1e-06
  %v393 = vadd.f32 %v361, 1e-06
  %v394 = vadd.f32 %v362, 1e-06
  %v395 = vadd.f32 %v363, 1e-06
  %v396 = vadd.f32 %v364, 1e-06
  %v397 = vadd.f32 %v365, 1e-06
  %v398 = vadd.f32 %v366, 1e-06
  %v399 = vadd.f32 %v367, 1e-06
  %v400 = vrsqrt.pop %v368
  %v401 = vrsqrt.pop %v369
  %v402 = vrsqrt.pop %v370
  %v403 = vrsqrt.pop %v371
  %v404 = vrsqrt.pop %v372
  %v405 = vrsqrt.pop %v373
  %v406 = vrsqrt.pop %v374
  %v407 = vrsqrt.pop %v375
  %v408 = vrsqrt.pop %v376
  %v409 = vrsqrt.pop %v377
  %v410 = vrsqrt.pop %v378
  %v411 = vrsqrt.pop %v379
  %v412 = vrsqrt.pop %v380
  %v413 = vrsqrt.pop %v381
  %v414 = vrsqrt.pop %v382
  %v415 = vrsqrt.pop %v383
  %v416 = vrsqrt.pop %v384
  %v417 = vrsqrt.pop %v385
  %v418 = vrsqrt.pop %v386
  %v419 = vrsqrt.pop %v387
  %v420 = vrsqrt.pop %v388
  %v421 = vrsqrt.pop %v389
  %v422 = vrsqrt.pop %v390
  %v423 = vrsqrt.pop %v391
  %v424 = vrsqrt.pop %v392
  %v425 = vrsqrt.pop %v393
  %v426 = vrsqrt.pop %v394
  %v427 = vrsqrt.pop %v395
  %v428 = vrsqrt.pop %v396
  %v429 = vrsqrt.pop %v397
  %v430 = vrsqrt.pop %v398
  %v431 = vrsqrt.pop %v399
  %v432 = vmul.f32 %v176, %v400
  %v433 = vmul.f32 %v177, %v401
  %v434 = vmul.f32 %v178, %v402
  %v435 = vmul.f32 %v179, %v403
  %v436 = vmul.f32 %v180, %v404
  %v437 = vmul.f32 %v181, %v405
  %v438 = vmul.f32 %v182, %v406
  %v439 = vmul.f32 %v183, %v407
  %v440 = vmul.f32 %v184, %v408
  %v441 = vmul.f32 %v185, %v409
  %v442 = vmul.f32 %v186, %v410
  %v443 = vmul.f32 %v187, %v411
  %v444 = vmul.f32 %v188, %v412
  %v445 = vmul.f32 %v189, %v413
  %v446 = vmul.f32 %v190, %v414
  %v447 = vmul.f32 %v191, %v415
  %v448 = vmul.f32 %v192, %v416
  %v449 = vmul.f32 %v193, %v417
  %v450 = vmul.f32 %v194, %v418
  %v451 = vmul.f32 %v195, %v419
  %v452 = vmul.f32 %v196, %v420
  %v453 = vmul.f32 %v197, %v421
  %v454 = vmul.f32 %v198, %v422
  %v455 = vmul.f32 %v199, %v423
  %v456 = vmul.f32 %v200, %v424
  %v457 = vmul.f32 %v201, %v425
  %v458 = vmul.f32 %v202, %v426
  %v459 = vmul.f32 %v203, %v427
  %v460 = vmul.f32 %v204, %v428
  %v461 = vmul.f32 %v205, %v429
  %v462 = vmul.f32 %v206, %v430
  %v463 = vmul.f32 %v207, %v431
  %v464 = vld [vmem:[%s1] sm:$0x1]
  %v466 = vlaneseq
  %v467 = vshrl.u32 %v466, 7
  %v468 = vsub.s32 0, %v467
  %v469 = vrot.slane %v464, %v468
  %v471 = vmul.f32 %v432, %v469
  %v472 = vmul.f32 %v433, %v469
  %v473 = vmul.f32 %v434, %v469
  %v474 = vmul.f32 %v435, %v469
  %v475 = vmul.f32 %v436, %v469
  %v476 = vmul.f32 %v437, %v469
  %v477 = vmul.f32 %v438, %v469
  %v478 = vmul.f32 %v439, %v469
  %v479 = vmul.f32 %v440, %v469
  %v480 = vmul.f32 %v441, %v469
  %v481 = vmul.f32 %v442, %v469
  %v482 = vmul.f32 %v443, %v469
  %v483 = vmul.f32 %v444, %v469
  %v484 = vmul.f32 %v445, %v469
  %v485 = vmul.f32 %v446, %v469
  %v486 = vmul.f32 %v447, %v469
  %v487 = vmul.f32 %v448, %v469
  %v488 = vmul.f32 %v449, %v469
  %v489 = vmul.f32 %v450, %v469
  %v490 = vmul.f32 %v451, %v469
  %v491 = vmul.f32 %v452, %v469
  %v492 = vmul.f32 %v453, %v469
  %v493 = vmul.f32 %v454, %v469
  %v494 = vmul.f32 %v455, %v469
  %v495 = vmul.f32 %v456, %v469
  %v496 = vmul.f32 %v457, %v469
  %v497 = vmul.f32 %v458, %v469
  %v498 = vmul.f32 %v459, %v469
  %v499 = vmul.f32 %v460, %v469
  %v500 = vmul.f32 %v461, %v469
  %v501 = vmul.f32 %v462, %v469
  %v502 = vmul.f32 %v463, %v469
  %v503 = vld [vmem:[%s2] sm:$0x1]
  %v505 = vlaneseq
  %v506 = vshrl.u32 %v505, 7
  %v507 = vsub.s32 0, %v506
  %v508 = vrot.slane %v503, %v507
  %v510 = vadd.f32 %v471, %v508
  %v511 = vadd.f32 %v472, %v508
  %v512 = vadd.f32 %v473, %v508
  %v513 = vadd.f32 %v474, %v508
  %v514 = vadd.f32 %v475, %v508
  %v515 = vadd.f32 %v476, %v508
  %v516 = vadd.f32 %v477, %v508
  %v517 = vadd.f32 %v478, %v508
  %v518 = vadd.f32 %v479, %v508
  %v519 = vadd.f32 %v480, %v508
  %v520 = vadd.f32 %v481, %v508
  %v521 = vadd.f32 %v482, %v508
  %v522 = vadd.f32 %v483, %v508
  %v523 = vadd.f32 %v484, %v508
  %v524 = vadd.f32 %v485, %v508
  %v525 = vadd.f32 %v486, %v508
  %v526 = vadd.f32 %v487, %v508
  %v527 = vadd.f32 %v488, %v508
  %v528 = vadd.f32 %v489, %v508
  %v529 = vadd.f32 %v490, %v508
  %v530 = vadd.f32 %v491, %v508
  %v531 = vadd.f32 %v492, %v508
  %v532 = vadd.f32 %v493, %v508
  %v533 = vadd.f32 %v494, %v508
  %v534 = vadd.f32 %v495, %v508
  %v535 = vadd.f32 %v496, %v508
  %v536 = vadd.f32 %v497, %v508
  %v537 = vadd.f32 %v498, %v508
  %v538 = vadd.f32 %v499, %v508
  %v539 = vadd.f32 %v500, %v508
  %v540 = vadd.f32 %v501, %v508
  %v541 = vadd.f32 %v502, %v508
  %542 = vst.msk [vmem:[%s3] sm:$0xff] %vm46, %v510
  %543 = vst.msk [vmem:[%s3 + $0x8] sm:$0xff] %vm46, %v511
  %544 = vst.msk [vmem:[%s3 + $0x10] sm:$0xff] %vm46, %v512
  %545 = vst.msk [vmem:[%s3 + $0x18] sm:$0xff] %vm46, %v513
  %546 = vst.msk [vmem:[%s3 + $0x20] sm:$0xff] %vm46, %v514
  %547 = vst.msk [vmem:[%s3 + $0x28] sm:$0xff] %vm46, %v515
  %548 = vst.msk [vmem:[%s3 + $0x30] sm:$0xff] %vm46, %v516
  %549 = vst.msk [vmem:[%s3 + $0x38] sm:$0xff] %vm46, %v517
  %550 = vst.msk [vmem:[%s3 + $0x40] sm:$0xff] %vm46, %v518
  %551 = vst.msk [vmem:[%s3 + $0x48] sm:$0xff] %vm46, %v519
  %552 = vst.msk [vmem:[%s3 + $0x50] sm:$0xff] %vm46, %v520
  %553 = vst.msk [vmem:[%s3 + $0x58] sm:$0xff] %vm46, %v521
  %554 = vst.msk [vmem:[%s3 + $0x60] sm:$0xff] %vm46, %v522
  %555 = vst.msk [vmem:[%s3 + $0x68] sm:$0xff] %vm46, %v523
  %556 = vst.msk [vmem:[%s3 + $0x70] sm:$0xff] %vm46, %v524
  %557 = vst.msk [vmem:[%s3 + $0x78] sm:$0xff] %vm46, %v525
  %558 = vst.msk [vmem:[%s3 + $0x80] sm:$0xff] %vm46, %v526
  %559 = vst.msk [vmem:[%s3 + $0x88] sm:$0xff] %vm46, %v527
  %560 = vst.msk [vmem:[%s3 + $0x90] sm:$0xff] %vm46, %v528
  %561 = vst.msk [vmem:[%s3 + $0x98] sm:$0xff] %vm46, %v529
  %562 = vst.msk [vmem:[%s3 + $0xa0] sm:$0xff] %vm46, %v530
  %563 = vst.msk [vmem:[%s3 + $0xa8] sm:$0xff] %vm46, %v531
  %564 = vst.msk [vmem:[%s3 + $0xb0] sm:$0xff] %vm46, %v532
  %565 = vst.msk [vmem:[%s3 + $0xb8] sm:$0xff] %vm46, %v533
  %566 = vst.msk [vmem:[%s3 + $0xc0] sm:$0xff] %vm46, %v534
  %567 = vst.msk [vmem:[%s3 + $0xc8] sm:$0xff] %vm46, %v535
  %568 = vst.msk [vmem:[%s3 + $0xd0] sm:$0xff] %vm46, %v536
  %569 = vst.msk [vmem:[%s3 + $0xd8] sm:$0xff] %vm46, %v537
  %570 = vst.msk [vmem:[%s3 + $0xe0] sm:$0xff] %vm46, %v538
  %571 = vst.msk [vmem:[%s3 + $0xe8] sm:$0xff] %vm46, %v539
  %572 = vst.msk [vmem:[%s3 + $0xf0] sm:$0xff] %vm46, %v540
  %573 = vst.msk [vmem:[%s3 + $0xf8] sm:$0xff] %vm46, %v541
  // Predicated region
  $region14: #{encoder_with_svtr_forward.36} parent=0 // pred_check
    _
  $region15: #{encoder_with_svtr_forward.36} parent=0 // pred_check_branch
    %575 = sbr.rel (0) target = $region17
  $region16: #{encoder_with_svtr_forward.36} parent=0 // pred_region
    _
  $region17: #{encoder_with_svtr_forward.36} parent=0 // pred_fallthru
    _
  // Predicated region
  $region18: #{encoder_with_svtr_forward.36} parent=0 // pred_check
    _
  $region19: #{encoder_with_svtr_forward.36} parent=0 // pred_check_branch
    %577 = sbr.rel (0) target = $region21
  $region20: #{encoder_with_svtr_forward.36} parent=0 // pred_region
    _
  $region21: #{encoder_with_svtr_forward.36} parent=0 // pred_fallthru
    _

// kernel: encoder_with_svtr_forward.37
$region0: #{encoder_with_svtr_forward.37}
  #allocation0 [shape = 'u32[]', space=smem, size = 0x4, offset = 0x4, fixed_abs, tag = 'smem constant byte address 0x4 - core index']
  #allocation1 [shape = 'u32[144,128]{1,0:T(1,128)}', space=vmem, size = 0x12000, scoped, tag = 'internal scratch']
  %s0 = inlined_call_operand.vmem [shape: f32[256,120], index: 0, kind: input, shape index: {}]
  %s1 = inlined_call_operand.vmem [shape: f32[120,128], index: 1, kind: input, shape index: {}]
  %s2 = inlined_call_operand.vmem [shape: f32[1,128], index: 2, kind: input, shape index: {}]
  %s3 = inlined_call_operand.vmem [shape: f32[256,128], index: 3, kind: output, shape index: {}]
  %s4 = sld [smem:[#allocation0]]
  $region22: #{encoder_with_svtr_forward.37} parent=0
    _
  %s6 = ssub.s32 1, %s4
  %s7 = scalar_select 0, %s6, %s4
  // Predicated region
  $region2: #{encoder_with_svtr_forward.37} parent=0 // pred_check
    _
  $region3: #{encoder_with_svtr_forward.37} parent=0 // pred_check_branch
    %9 = sbr.rel (0) target = $region5
  $region4: #{encoder_with_svtr_forward.37} parent=0 // pred_region
    _
  $region5: #{encoder_with_svtr_forward.37} parent=0 // pred_fallthru
    _
  // Predicated region
  $region6: #{encoder_with_svtr_forward.37} parent=0 // pred_check
    _
  $region7: #{encoder_with_svtr_forward.37} parent=0 // pred_check_branch
    %11 = sbr.rel (0) target = $region9
  $region8: #{encoder_with_svtr_forward.37} parent=0 // pred_region
    _
  $region9: #{encoder_with_svtr_forward.37} parent=0 // pred_fallthru
    _
  // Predicated region
  $region10: #{encoder_with_svtr_forward.37} parent=0 // pred_check
    _
  $region11: #{encoder_with_svtr_forward.37} parent=0 // pred_check_branch
    %13 = sbr.rel (0) target = $region13
  $region12: #{encoder_with_svtr_forward.37} parent=0 // pred_region
    _
  $region13: #{encoder_with_svtr_forward.37} parent=0 // pred_fallthru
    _
  %v14 = vld [vmem:[%s0] sm:$0xff]
  %v15 = vld [vmem:[%s0 + $0x8] sm:$0xff]
  %v16 = vld [vmem:[%s0 + $0x10] sm:$0xff]
  %v17 = vld [vmem:[%s0 + $0x18] sm:$0xff]
  %v18 = vld [vmem:[%s0 + $0x20] sm:$0xff]
  %v19 = vld [vmem:[%s0 + $0x28] sm:$0xff]
  %v20 = vld [vmem:[%s0 + $0x30] sm:$0xff]
  %v21 = vld [vmem:[%s0 + $0x38] sm:$0xff]
  %v22 = vld [vmem:[%s0 + $0x40] sm:$0xff]
  %v23 = vld [vmem:[%s0 + $0x48] sm:$0xff]
  %v24 = vld [vmem:[%s0 + $0x50] sm:$0xff]
  %v25 = vld [vmem:[%s0 + $0x58] sm:$0xff]
  %v26 = vld [vmem:[%s0 + $0x60] sm:$0xff]
  %v27 = vld [vmem:[%s0 + $0x68] sm:$0xff]
  %v28 = vld [vmem:[%s0 + $0x70] sm:$0xff]
  %v29 = vld [vmem:[%s0 + $0x78] sm:$0xff]
  %v30 = vld [vmem:[%s0 + $0x80] sm:$0xff]
  %v31 = vld [vmem:[%s0 + $0x88] sm:$0xff]
  %v32 = vld [vmem:[%s0 + $0x90] sm:$0xff]
  %v33 = vld [vmem:[%s0 + $0x98] sm:$0xff]
  %v34 = vld [vmem:[%s0 + $0xa0] sm:$0xff]
  %v35 = vld [vmem:[%s0 + $0xa8] sm:$0xff]
  %v36 = vld [vmem:[%s0 + $0xb0] sm:$0xff]
  %v37 = vld [vmem:[%s0 + $0xb8] sm:$0xff]
  %v38 = vld [vmem:[%s0 + $0xc0] sm:$0xff]
  %v39 = vld [vmem:[%s0 + $0xc8] sm:$0xff]
  %v40 = vld [vmem:[%s0 + $0xd0] sm:$0xff]
  %v41 = vld [vmem:[%s0 + $0xd8] sm:$0xff]
  %v42 = vld [vmem:[%s0 + $0xe0] sm:$0xff]
  %v43 = vld [vmem:[%s0 + $0xe8] sm:$0xff]
  %v44 = vld [vmem:[%s0 + $0xf0] sm:$0xff]
  %v45 = vld [vmem:[%s0 + $0xf8] sm:$0xff]
  %v46 = vld [vmem:[%s1] sm:$0xff]
  %v47 = vld [vmem:[%s1 + $0x8] sm:$0xff]
  %v48 = vld [vmem:[%s1 + $0x10] sm:$0xff]
  %v49 = vld [vmem:[%s1 + $0x18] sm:$0xff]
  %v50 = vld [vmem:[%s1 + $0x20] sm:$0xff]
  %v51 = vld [vmem:[%s1 + $0x28] sm:$0xff]
  %v52 = vld [vmem:[%s1 + $0x30] sm:$0xff]
  %v53 = vld [vmem:[%s1 + $0x38] sm:$0xff]
  %v54 = vld [vmem:[%s1 + $0x40] sm:$0xff]
  %v55 = vld [vmem:[%s1 + $0x48] sm:$0xff]
  %v56 = vld [vmem:[%s1 + $0x50] sm:$0xff]
  %v57 = vld [vmem:[%s1 + $0x58] sm:$0xff]
  %v58 = vld [vmem:[%s1 + $0x60] sm:$0xff]
  %v59 = vld [vmem:[%s1 + $0x68] sm:$0xff]
  %v60 = vld [vmem:[%s1 + $0x70] sm:$0xff]
  %v61 = vld [vmem:[%s2] sm:$0x1]
  %v63 = vlaneseq
  %v64 = vshrl.u32 %v63, 7
  %v65 = vsub.s32 0, %v64
  %v66 = vrot.slane %v61, %v65
  %vm68 = vcmask 982016
  %v70 = vsel %vm68, %v14, 0
  %v73 = vsel %vm68, %v15, 0
  %v76 = vsel %vm68, %v16, 0
  %v79 = vsel %vm68, %v17, 0
  %v82 = vsel %vm68, %v18, 0
  %v85 = vsel %vm68, %v19, 0
  %v88 = vsel %vm68, %v20, 0
  %v91 = vsel %vm68, %v21, 0
  %v94 = vsel %vm68, %v22, 0
  %v97 = vsel %vm68, %v23, 0
  %v100 = vsel %vm68, %v24, 0
  %v103 = vsel %vm68, %v25, 0
  %v106 = vsel %vm68, %v26, 0
  %v109 = vsel %vm68, %v27, 0
  %v112 = vsel %vm68, %v28, 0
  %v115 = vsel %vm68, %v29, 0
  %v118 = vsel %vm68, %v30, 0
  %v121 = vsel %vm68, %v31, 0
  %v124 = vsel %vm68, %v32, 0
  %v127 = vsel %vm68, %v33, 0
  %v130 = vsel %vm68, %v34, 0
  %v133 = vsel %vm68, %v35, 0
  %v136 = vsel %vm68, %v36, 0
  %v139 = vsel %vm68, %v37, 0
  %v142 = vsel %vm68, %v38, 0
  %v145 = vsel %vm68, %v39, 0
  %v148 = vsel %vm68, %v40, 0
  %v151 = vsel %vm68, %v41, 0
  %v154 = vsel %vm68, %v42, 0
  %v157 = vsel %vm68, %v43, 0
  %v160 = vsel %vm68, %v44, 0
  %v163 = vsel %vm68, %v45, 0
  %165 = vmatprep.subr.mxu0 0.0
  %166 = vmatpush1.msra.mxu0 %v46
  %167 = vmatprep.subr.mxu0 0.0
  %168 = vmatpush1.msra.mxu0 %v47
  %169 = vmatprep.subr.mxu0 0.0
  %170 = vmatpush1.msra.mxu0 %v48
  %171 = vmatprep.subr.mxu0 0.0
  %172 = vmatpush1.msra.mxu0 %v49
  %173 = vmatprep.subr.mxu0 0.0
  %174 = vmatpush1.msra.mxu0 %v50
  %175 = vmatprep.subr.mxu0 0.0
  %176 = vmatpush1.msra.mxu0 %v51
  %177 = vmatprep.subr.mxu0 0.0
  %178 = vmatpush1.msra.mxu0 %v52
  %179 = vmatprep.subr.mxu0 0.0
  %180 = vmatpush1.msra.mxu0 %v53
  %181 = vmatprep.subr.mxu0 0.0
  %182 = vmatpush1.msra.mxu0 %v54
  %183 = vmatprep.subr.mxu0 0.0
  %184 = vmatpush1.msra.mxu0 %v55
  %185 = vmatprep.subr.mxu0 0.0
  %186 = vmatpush1.msra.mxu0 %v56
  %187 = vmatprep.subr.mxu0 0.0
  %188 = vmatpush1.msra.mxu0 %v57
  %189 = vmatprep.subr.mxu0 0.0
  %190 = vmatpush1.msra.mxu0 %v58
  %191 = vmatprep.subr.mxu0 0.0
  %192 = vmatpush1.msra.mxu0 %v59
  %193 = vmatprep.subr.mxu0 0.0
  %194 = vmatpush1.msra.mxu0 %v60
  %195 = vmatprep.subr.mxu0 0.0
  %196 = vmatpush1.msra.mxu0 0.0
  %197 = vmatprep.subr.mxu0 0.0
  %198 = vmatpush1.msra.mxu0 0.0
  %199 = vmatprep.subr.mxu0 0.0
  %200 = vmatpush1.msra.mxu0 0.0
  %201 = vmatprep.subr.mxu0 0.0
  %202 = vmatpush1.msra.mxu0 0.0
  %203 = vmatprep.subr.mxu0 0.0
  %204 = vmatpush1.msra.mxu0 0.0
  %205 = vmatprep.subr.mxu0 0.0
  %206 = vmatpush1.msra.mxu0 0.0
  %207 = vmatprep.subr.mxu0 0.0
  %208 = vmatpush1.msra.mxu0 0.0
  %209 = vmatprep.subr.mxu0 0.0
  %210 = vmatpush1.msra.mxu0 0.0
  %211 = vmatprep.subr.mxu0 0.0
  %212 = vmatpush1.msra.mxu0 0.0
  %213 = vmatprep.subr.mxu0 0.0
  %214 = vmatpush1.msra.mxu0 0.0
  %215 = vmatprep.subr.mxu0 0.0
  %216 = vmatpush1.msra.mxu0 0.0
  %217 = vmatprep.subr.mxu0 0.0
  %218 = vmatpush1.msra.mxu0 0.0
  %219 = vmatprep.subr.mxu0 0.0
  %220 = vmatpush1.msra.mxu0 0.0
  %221 = vmatprep.subr.mxu0 0.0
  %222 = vmatpush1.msra.mxu0 0.0
  %223 = vmatprep.subr.mxu0 0.0
  %224 = vmatpush1.msra.mxu0 0.0
  %225 = vmatprep.subr.mxu0 0.0
  %226 = vmatpush1.msra.mxu0 0.0
  %227 = vmatprep.subr.mxu0 0.0
  %228 = vmatpush1.msra.mxu0 0.0
  %229 = vmatprep.mubr.f32.mxu0 0.0
  %230 = vmatmul.mubr.f32.gmra.mrb[0].mxu0 %v70
  %v231 = vpop.f32.mrb[0].mxu0
  %v232 = vadd.f32 %v66, %v231
  %v233 = vpop.f32.mrb[0].mxu0
  %234 = vmatprep.mubr.f32.mxu0 0.0
  %235 = vmatmul.mubr.f32.gmra.mrb[0].mxu0 %v73
  %v236 = vpop.f32.mrb[0].mxu0
  %v237 = vadd.f32 %v66, %v236
  %v238 = vpop.f32.mrb[0].mxu0
  %239 = vmatprep.mubr.f32.mxu0 0.0
  %240 = vmatmul.mubr.f32.gmra.mrb[0].mxu0 %v76
  %v241 = vpop.f32.mrb[0].mxu0
  %v242 = vadd.f32 %v66, %v241
  %v243 = vpop.f32.mrb[0].mxu0
  %244 = vmatprep.mubr.f32.mxu0 0.0
  %245 = vmatmul.mubr.f32.gmra.mrb[0].mxu0 %v79
  %v246 = vpop.f32.mrb[0].mxu0
  %v247 = vadd.f32 %v66, %v246
  %v248 = vpop.f32.mrb[0].mxu0
  %249 = vmatprep.mubr.f32.mxu0 0.0
  %250 = vmatmul.mubr.f32.gmra.mrb[0].mxu0 %v82
  %v251 = vpop.f32.mrb[0].mxu0
  %v252 = vadd.f32 %v66, %v251
  %v253 = vpop.f32.mrb[0].mxu0
  %254 = vmatprep.mubr.f32.mxu0 0.0
  %255 = vmatmul.mubr.f32.gmra.mrb[0].mxu0 %v85
  %v256 = vpop.f32.mrb[0].mxu0
  %v257 = vadd.f32 %v66, %v256
  %v258 = vpop.f32.mrb[0].mxu0
  %259 = vmatprep.mubr.f32.mxu0 0.0
  %260 = vmatmul.mubr.f32.gmra.mrb[0].mxu0 %v88
  %v261 = vpop.f32.mrb[0].mxu0
  %v262 = vadd.f32 %v66, %v261
  %v263 = vpop.f32.mrb[0].mxu0
  %264 = vmatprep.mubr.f32.mxu0 0.0
  %265 = vmatmul.mubr.f32.gmra.mrb[0].mxu0 %v91
  %v266 = vpop.f32.mrb[0].mxu0
  %v267 = vadd.f32 %v66, %v266
  %v268 = vpop.f32.mrb[0].mxu0
  %269 = vmatprep.mubr.f32.mxu0 0.0
  %270 = vmatmul.mubr.f32.gmra.mrb[0].mxu0 %v94
  %v271 = vpop.f32.mrb[0].mxu0
  %v272 = vadd.f32 %v66, %v271
  %v273 = vpop.f32.mrb[0].mxu0
  %274 = vmatprep.mubr.f32.mxu0 0.0
  %275 = vmatmul.mubr.f32.gmra.mrb[0].mxu0 %v97
  %v276 = vpop.f32.mrb[0].mxu0
  %v277 = vadd.f32 %v66, %v276
  %v278 = vpop.f32.mrb[0].mxu0
  %279 = vmatprep.mubr.f32.mxu0 0.0
  %280 = vmatmul.mubr.f32.gmra.mrb[0].mxu0 %v100
  %v281 = vpop.f32.mrb[0].mxu0
  %v282 = vadd.f32 %v66, %v281
  %v283 = vpop.f32.mrb[0].mxu0
  %284 = vmatprep.mubr.f32.mxu0 0.0
  %285 = vmatmul.mubr.f32.gmra.mrb[0].mxu0 %v103
  %v286 = vpop.f32.mrb[0].mxu0
  %v287 = vadd.f32 %v66, %v286
  %v288 = vpop.f32.mrb[0].mxu0
  %289 = vmatprep.mubr.f32.mxu0 0.0
  %290 = vmatmul.mubr.f32.gmra.mrb[0].mxu0 %v106
  %v291 = vpop.f32.mrb[0].mxu0
  %v292 = vadd.f32 %v66, %v291
  %v293 = vpop.f32.mrb[0].mxu0
  %294 = vmatprep.mubr.f32.mxu0 0.0
  %295 = vmatmul.mubr.f32.gmra.mrb[0].mxu0 %v109
  %v296 = vpop.f32.mrb[0].mxu0
  %v297 = vadd.f32 %v66, %v296
  %v298 = vpop.f32.mrb[0].mxu0
  %299 = vmatprep.mubr.f32.mxu0 0.0
  %300 = vmatmul.mubr.f32.gmra.mrb[0].mxu0 %v112
  %v301 = vpop.f32.mrb[0].mxu0
  %v302 = vadd.f32 %v66, %v301
  %v303 = vpop.f32.mrb[0].mxu0
  %304 = vmatprep.mubr.f32.mxu0 0.0
  %305 = vmatmul.mubr.f32.gmra.mrb[0].mxu0 %v115
  %v306 = vpop.f32.mrb[0].mxu0
  %v307 = vadd.f32 %v66, %v306
  %v308 = vpop.f32.mrb[0].mxu0
  %309 = vmatprep.mubr.f32.mxu0 0.0
  %310 = vmatmul.mubr.f32.gmra.mrb[0].mxu0 %v118
  %v311 = vpop.f32.mrb[0].mxu0
  %v312 = vadd.f32 %v66, %v311
  %v313 = vpop.f32.mrb[0].mxu0
  %314 = vmatprep.mubr.f32.mxu0 0.0
  %315 = vmatmul.mubr.f32.gmra.mrb[0].mxu0 %v121
  %v316 = vpop.f32.mrb[0].mxu0
  %v317 = vadd.f32 %v66, %v316
  %v318 = vpop.f32.mrb[0].mxu0
  %319 = vmatprep.mubr.f32.mxu0 0.0
  %320 = vmatmul.mubr.f32.gmra.mrb[0].mxu0 %v124
  %v321 = vpop.f32.mrb[0].mxu0
  %v322 = vadd.f32 %v66, %v321
  %v323 = vpop.f32.mrb[0].mxu0
  %324 = vmatprep.mubr.f32.mxu0 0.0
  %325 = vmatmul.mubr.f32.gmra.mrb[0].mxu0 %v127
  %v326 = vpop.f32.mrb[0].mxu0
  %v327 = vadd.f32 %v66, %v326
  %v328 = vpop.f32.mrb[0].mxu0
  %329 = vmatprep.mubr.f32.mxu0 0.0
  %330 = vmatmul.mubr.f32.gmra.mrb[0].mxu0 %v130
  %v331 = vpop.f32.mrb[0].mxu0
  %v332 = vadd.f32 %v66, %v331
  %v333 = vpop.f32.mrb[0].mxu0
  %334 = vmatprep.mubr.f32.mxu0 0.0
  %335 = vmatmul.mubr.f32.gmra.mrb[0].mxu0 %v133
  %v336 = vpop.f32.mrb[0].mxu0
  %v337 = vadd.f32 %v66, %v336
  %v338 = vpop.f32.mrb[0].mxu0
  %339 = vmatprep.mubr.f32.mxu0 0.0
  %340 = vmatmul.mubr.f32.gmra.mrb[0].mxu0 %v136
  %v341 = vpop.f32.mrb[0].mxu0
  %v342 = vadd.f32 %v66, %v341
  %v343 = vpop.f32.mrb[0].mxu0
  %344 = vmatprep.mubr.f32.mxu0 0.0
  %345 = vmatmul.mubr.f32.gmra.mrb[0].mxu0 %v139
  %v346 = vpop.f32.mrb[0].mxu0
  %v347 = vadd.f32 %v66, %v346
  %v348 = vpop.f32.mrb[0].mxu0
  %349 = vmatprep.mubr.f32.mxu0 0.0
  %350 = vmatmul.mubr.f32.gmra.mrb[0].mxu0 %v142
  %v351 = vpop.f32.mrb[0].mxu0
  %v352 = vadd.f32 %v66, %v351
  %v353 = vpop.f32.mrb[0].mxu0
  %354 = vmatprep.mubr.f32.mxu0 0.0
  %355 = vmatmul.mubr.f32.gmra.mrb[0].mxu0 %v145
  %v356 = vpop.f32.mrb[0].mxu0
  %v357 = vadd.f32 %v66, %v356
  %v358 = vpop.f32.mrb[0].mxu0
  %359 = vmatprep.mubr.f32.mxu0 0.0
  %360 = vmatmul.mubr.f32.gmra.mrb[0].mxu0 %v148
  %v361 = vpop.f32.mrb[0].mxu0
  %v362 = vadd.f32 %v66, %v361
  %v363 = vpop.f32.mrb[0].mxu0
  %364 = vmatprep.mubr.f32.mxu0 0.0
  %365 = vmatmul.mubr.f32.gmra.mrb[0].mxu0 %v151
  %v366 = vpop.f32.mrb[0].mxu0
  %v367 = vadd.f32 %v66, %v366
  %v368 = vpop.f32.mrb[0].mxu0
  %369 = vmatprep.mubr.f32.mxu0 0.0
  %370 = vmatmul.mubr.f32.gmra.mrb[0].mxu0 %v154
  %v371 = vpop.f32.mrb[0].mxu0
  %v372 = vadd.f32 %v66, %v371
  %v373 = vpop.f32.mrb[0].mxu0
  %374 = vmatprep.mubr.f32.mxu0 0.0
  %375 = vmatmul.mubr.f32.gmra.mrb[0].mxu0 %v157
  %v376 = vpop.f32.mrb[0].mxu0
  %v377 = vadd.f32 %v66, %v376
  %v378 = vpop.f32.mrb[0].mxu0
  %379 = vmatprep.mubr.f32.mxu0 0.0
  %380 = vmatmul.mubr.f32.gmra.mrb[0].mxu0 %v160
  %v381 = vpop.f32.mrb[0].mxu0
  %v382 = vadd.f32 %v66, %v381
  %v383 = vpop.f32.mrb[0].mxu0
  %384 = vmatprep.mubr.f32.mxu0 0.0
  %385 = vmatmul.mubr.f32.gmra.mrb[0].mxu0 %v163
  %v386 = vpop.f32.mrb[0].mxu0
  %v387 = vadd.f32 %v66, %v386
  %v388 = vpop.f32.mrb[0].mxu0
  %389 = vdwg.mxu0
  %v390 = vxor.u32 %v232, 2147483648
  %v391 = vxor.u32 %v237, 2147483648
  %v392 = vxor.u32 %v242, 2147483648
  %v393 = vxor.u32 %v247, 2147483648
  %v394 = vxor.u32 %v252, 2147483648
  %v395 = vxor.u32 %v257, 2147483648
  %v396 = vxor.u32 %v262, 2147483648
  %v397 = vxor.u32 %v267, 2147483648
  %v398 = vxor.u32 %v272, 2147483648
  %v399 = vxor.u32 %v277, 2147483648
  %v400 = vxor.u32 %v282, 2147483648
  %v401 = vxor.u32 %v287, 2147483648
  %v402 = vxor.u32 %v292, 2147483648
  %v403 = vxor.u32 %v297, 2147483648
  %v404 = vxor.u32 %v302, 2147483648
  %v405 = vxor.u32 %v307, 2147483648
  %v406 = vxor.u32 %v312, 2147483648
  %v407 = vxor.u32 %v317, 2147483648
  %v408 = vxor.u32 %v322, 2147483648
  %v409 = vxor.u32 %v327, 2147483648
  %v410 = vxor.u32 %v332, 2147483648
  %v411 = vxor.u32 %v337, 2147483648
  %v412 = vxor.u32 %v342, 2147483648
  %v413 = vxor.u32 %v347, 2147483648
  %v414 = vxor.u32 %v352, 2147483648
  %v415 = vxor.u32 %v357, 2147483648
  %v416 = vxor.u32 %v362, 2147483648
  %v417 = vxor.u32 %v367, 2147483648
  %v418 = vxor.u32 %v372, 2147483648
  %v419 = vxor.u32 %v377, 2147483648
  %v420 = vxor.u32 %v382, 2147483648
  %v421 = vxor.u32 %v387, 2147483648
  %v422 = vmul.f32 %v390, 1.442695
  %v423 = vpow.pop %v422
  %v424 = vmul.f32 %v391, 1.442695
  %v425 = vpow.pop %v424
  %v426 = vmul.f32 %v392, 1.442695
  %v427 = vpow.pop %v426
  %v428 = vmul.f32 %v393, 1.442695
  %v429 = vpow.pop %v428
  %v430 = vmul.f32 %v394, 1.442695
  %v431 = vpow.pop %v430
  %v432 = vmul.f32 %v395, 1.442695
  %v433 = vpow.pop %v432
  %v434 = vmul.f32 %v396, 1.442695
  %v435 = vpow.pop %v434
  %v436 = vmul.f32 %v397, 1.442695
  %v437 = vpow.pop %v436
  %v438 = vmul.f32 %v398, 1.442695
  %v439 = vpow.pop %v438
  %v440 = vmul.f32 %v399, 1.442695
  %v441 = vpow.pop %v440
  %v442 = vmul.f32 %v400, 1.442695
  %v443 = vpow.pop %v442
  %v444 = vmul.f32 %v401, 1.442695
  %v445 = vpow.pop %v444
  %v446 = vmul.f32 %v402, 1.442695
  %v447 = vpow.pop %v446
  %v448 = vmul.f32 %v403, 1.442695
  %v449 = vpow.pop %v448
  %v450 = vmul.f32 %v404, 1.442695
  %v451 = vpow.pop %v450
  %v452 = vmul.f32 %v405, 1.442695
  %v453 = vpow.pop %v452
  %v454 = vmul.f32 %v406, 1.442695
  %v455 = vpow.pop %v454
  %v456 = vmul.f32 %v407, 1.442695
  %v457 = vpow.pop %v456
  %v458 = vmul.f32 %v408, 1.442695
  %v459 = vpow.pop %v458
  %v460 = vmul.f32 %v409, 1.442695
  %v461 = vpow.pop %v460
  %v462 = vmul.f32 %v410, 1.442695
  %v463 = vpow.pop %v462
  %v464 = vmul.f32 %v411, 1.442695
  %v465 = vpow.pop %v464
  %v466 = vmul.f32 %v412, 1.442695
  %v467 = vpow.pop %v466
  %v468 = vmul.f32 %v413, 1.442695
  %v469 = vpow.pop %v468
  %v470 = vmul.f32 %v414, 1.442695
  %v471 = vpow.pop %v470
  %v472 = vmul.f32 %v415, 1.442695
  %v473 = vpow.pop %v472
  %v474 = vmul.f32 %v416, 1.442695
  %v475 = vpow.pop %v474
  %v476 = vmul.f32 %v417, 1.442695
  %v477 = vpow.pop %v476
  %v478 = vmul.f32 %v418, 1.442695
  %v479 = vpow.pop %v478
  %v480 = vmul.f32 %v419, 1.442695
  %v481 = vpow.pop %v480
  %v482 = vmul.f32 %v420, 1.442695
  %v483 = vpow.pop %v482
  %v484 = vmul.f32 %v421, 1.442695
  %v485 = vpow.pop %v484
  %v486 = vadd.f32 %v423, 1.0
  %v487 = vadd.f32 %v425, 1.0
  %v488 = vadd.f32 %v427, 1.0
  %v489 = vadd.f32 %v429, 1.0
  %v490 = vadd.f32 %v431, 1.0
  %v491 = vadd.f32 %v433, 1.0
  %v492 = vadd.f32 %v435, 1.0
  %v493 = vadd.f32 %v437, 1.0
  %v494 = vadd.f32 %v439, 1.0
  %v495 = vadd.f32 %v441, 1.0
  %v496 = vadd.f32 %v443, 1.0
  %v497 = vadd.f32 %v445, 1.0
  %v498 = vadd.f32 %v447, 1.0
  %v499 = vadd.f32 %v449, 1.0
  %v500 = vadd.f32 %v451, 1.0
  %v501 = vadd.f32 %v453, 1.0
  %v502 = vadd.f32 %v455, 1.0
  %v503 = vadd.f32 %v457, 1.0
  %v504 = vadd.f32 %v459, 1.0
  %v505 = vadd.f32 %v461, 1.0
  %v506 = vadd.f32 %v463, 1.0
  %v507 = vadd.f32 %v465, 1.0
  %v508 = vadd.f32 %v467, 1.0
  %v509 = vadd.f32 %v469, 1.0
  %v510 = vadd.f32 %v471, 1.0
  %v511 = vadd.f32 %v473, 1.0
  %v512 = vadd.f32 %v475, 1.0
  %v513 = vadd.f32 %v477, 1.0
  %v514 = vadd.f32 %v479, 1.0
  %v515 = vadd.f32 %v481, 1.0
  %v516 = vadd.f32 %v483, 1.0
  %v517 = vadd.f32 %v485, 1.0
  %v518 = vrcp.pop %v486
  %v519 = vmul.f32 1.0, %v518
  %v520 = vrcp.pop %v487
  %v521 = vmul.f32 1.0, %v520
  %v522 = vrcp.pop %v488
  %v523 = vmul.f32 1.0, %v522
  %v524 = vrcp.pop %v489
  %v525 = vmul.f32 1.0, %v524
  %v526 = vrcp.pop %v490
  %v527 = vmul.f32 1.0, %v526
  %v528 = vrcp.pop %v491
  %v529 = vmul.f32 1.0, %v528
  %v530 = vrcp.pop %v492
  %v531 = vmul.f32 1.0, %v530
  %v532 = vrcp.pop %v493
  %v533 = vmul.f32 1.0, %v532
  %v534 = vrcp.pop %v494
  %v535 = vmul.f32 1.0, %v534
  %v536 = vrcp.pop %v495
  %v537 = vmul.f32 1.0, %v536
  %v538 = vrcp.pop %v496
  %v539 = vmul.f32 1.0, %v538
  %v540 = vrcp.pop %v497
  %v541 = vmul.f32 1.0, %v540
  %v542 = vrcp.pop %v498
  %v543 = vmul.f32 1.0, %v542
  %v544 = vrcp.pop %v499
  %v545 = vmul.f32 1.0, %v544
  %v546 = vrcp.pop %v500
  %v547 = vmul.f32 1.0, %v546
  %v548 = vrcp.pop %v501
  %v549 = vmul.f32 1.0, %v548
  %v550 = vrcp.pop %v502
  %v551 = vmul.f32 1.0, %v550
  %v552 = vrcp.pop %v503
  %v553 = vmul.f32 1.0, %v552
  %v554 = vrcp.pop %v504
  %v555 = vmul.f32 1.0, %v554
  %v556 = vrcp.pop %v505
  %v557 = vmul.f32 1.0, %v556
  %v558 = vrcp.pop %v506
  %v559 = vmul.f32 1.0, %v558
  %v560 = vrcp.pop %v507
  %v561 = vmul.f32 1.0, %v560
  %v562 = vrcp.pop %v508
  %v563 = vmul.f32 1.0, %v562
  %v564 = vrcp.pop %v509
  %v565 = vmul.f32 1.0, %v564
  %v566 = vrcp.pop %v510
  %v567 = vmul.f32 1.0, %v566
  %v568 = vrcp.pop %v511
  %v569 = vmul.f32 1.0, %v568
  %v570 = vrcp.pop %v512
  %v571 = vmul.f32 1.0, %v570
  %v572 = vrcp.pop %v513
  %v573 = vmul.f32 1.0, %v572
  %v574 = vrcp.pop %v514
  %v575 = vmul.f32 1.0, %v574
  %v576 = vrcp.pop %v515
  %v577 = vmul.f32 1.0, %v576
  %v578 = vrcp.pop %v516
  %v579 = vmul.f32 1.0, %v578
  %v580 = vrcp.pop %v517
  %v581 = vmul.f32 1.0, %v580
  %v582 = vmul.f32 %v232, %v519
  %v583 = vmul.f32 %v237, %v521
  %v584 = vmul.f32 %v242, %v523
  %v585 = vmul.f32 %v247, %v525
  %v586 = vmul.f32 %v252, %v527
  %v587 = vmul.f32 %v257, %v529
  %v588 = vmul.f32 %v262, %v531
  %v589 = vmul.f32 %v267, %v533
  %v590 = vmul.f32 %v272, %v535
  %v591 = vmul.f32 %v277, %v537
  %v592 = vmul.f32 %v282, %v539
  %v593 = vmul.f32 %v287, %v541
  %v594 = vmul.f32 %v292, %v543
  %v595 = vmul.f32 %v297, %v545
  %v596 = vmul.f32 %v302, %v547
  %v597 = vmul.f32 %v307, %v549
  %v598 = vmul.f32 %v312, %v551
  %v599 = vmul.f32 %v317, %v553
  %v600 = vmul.f32 %v322, %v555
  %v601 = vmul.f32 %v327, %v557
  %v602 = vmul.f32 %v332, %v559
  %v603 = vmul.f32 %v337, %v561
  %v604 = vmul.f32 %v342, %v563
  %v605 = vmul.f32 %v347, %v565
  %v606 = vmul.f32 %v352, %v567
  %v607 = vmul.f32 %v357, %v569
  %v608 = vmul.f32 %v362, %v571
  %v609 = vmul.f32 %v367, %v573
  %v610 = vmul.f32 %v372, %v575
  %v611 = vmul.f32 %v377, %v577
  %v612 = vmul.f32 %v382, %v579
  %v613 = vmul.f32 %v387, %v581
  %614 = vst [vmem:[%s3] sm:$0xff] %v582
  %615 = vst [vmem:[%s3 + $0x8] sm:$0xff] %v583
  %616 = vst [vmem:[%s3 + $0x10] sm:$0xff] %v584
  %617 = vst [vmem:[%s3 + $0x18] sm:$0xff] %v585
  %618 = vst [vmem:[%s3 + $0x20] sm:$0xff] %v586
  %619 = vst [vmem:[%s3 + $0x28] sm:$0xff] %v587
  %620 = vst [vmem:[%s3 + $0x30] sm:$0xff] %v588
  %621 = vst [vmem:[%s3 + $0x38] sm:$0xff] %v589
  %622 = vst [vmem:[%s3 + $0x40] sm:$0xff] %v590
  %623 = vst [vmem:[%s3 + $0x48] sm:$0xff] %v591
  %624 = vst [vmem:[%s3 + $0x50] sm:$0xff] %v592
  %625 = vst [vmem:[%s3 + $0x58] sm:$0xff] %v593
  %626 = vst [vmem:[%s3 + $0x60] sm:$0xff] %v594
  %627 = vst [vmem:[%s3 + $0x68] sm:$0xff] %v595
  %628 = vst [vmem:[%s3 + $0x70] sm:$0xff] %v596
  %629 = vst [vmem:[%s3 + $0x78] sm:$0xff] %v597
  %630 = vst [vmem:[%s3 + $0x80] sm:$0xff] %v598
  %631 = vst [vmem:[%s3 + $0x88] sm:$0xff] %v599
  %632 = vst [vmem:[%s3 + $0x90] sm:$0xff] %v600
  %633 = vst [vmem:[%s3 + $0x98] sm:$0xff] %v601
  %634 = vst [vmem:[%s3 + $0xa0] sm:$0xff] %v602
  %635 = vst [vmem:[%s3 + $0xa8] sm:$0xff] %v603
  %636 = vst [vmem:[%s3 + $0xb0] sm:$0xff] %v604
  %637 = vst [vmem:[%s3 + $0xb8] sm:$0xff] %v605
  %638 = vst [vmem:[%s3 + $0xc0] sm:$0xff] %v606
  %639 = vst [vmem:[%s3 + $0xc8] sm:$0xff] %v607
  %640 = vst [vmem:[%s3 + $0xd0] sm:$0xff] %v608
  %641 = vst [vmem:[%s3 + $0xd8] sm:$0xff] %v609
  %642 = vst [vmem:[%s3 + $0xe0] sm:$0xff] %v610
  %643 = vst [vmem:[%s3 + $0xe8] sm:$0xff] %v611
  %644 = vst [vmem:[%s3 + $0xf0] sm:$0xff] %v612
  %645 = vst [vmem:[%s3 + $0xf8] sm:$0xff] %v613
  // Predicated region
  $region14: #{encoder_with_svtr_forward.37} parent=0 // pred_check
    _
  $region15: #{encoder_with_svtr_forward.37} parent=0 // pred_check_branch
    %647 = sbr.rel (0) target = $region17
  $region16: #{encoder_with_svtr_forward.37} parent=0 // pred_region
    _
  $region17: #{encoder_with_svtr_forward.37} parent=0 // pred_fallthru
    _
  // Predicated region
  $region18: #{encoder_with_svtr_forward.37} parent=0 // pred_check
    _
  $region19: #{encoder_with_svtr_forward.37} parent=0 // pred_check_branch
    %649 = sbr.rel (0) target = $region21
  $region20: #{encoder_with_svtr_forward.37} parent=0 // pred_region
    _
  $region21: #{encoder_with_svtr_forward.37} parent=0 // pred_fallthru
    _

// kernel: encoder_with_svtr_forward.39
$region0: #{encoder_with_svtr_forward.39}
  #allocation0 [shape = 'u32[]', space=smem, size = 0x4, offset = 0x4, fixed_abs, tag = 'smem constant byte address 0x4 - core index']
  #allocation1 [shape = 'u32[144,128]{1,0:T(1,128)}', space=vmem, size = 0x12000, scoped, tag = 'internal scratch']
  %s0 = inlined_call_operand.vmem [shape: f32[256,8], index: 0, kind: input, shape index: {}]
  %s1 = inlined_call_operand.vmem [shape: f32[8,128], index: 1, kind: input, shape index: {}]
  %s2 = inlined_call_operand.vmem [shape: f32[1,128], index: 2, kind: input, shape index: {}]
  %s3 = inlined_call_operand.hbm [shape: f32[256,128], index: 3, kind: output, shape index: {}]
  %s4 = sld [smem:[#allocation0]]
  $region22: #{encoder_with_svtr_forward.39} parent=0
    _
  %s6 = ssub.s32 1, %s4
  %s7 = scalar_select 0, %s6, %s4
  $region1: #{encoder_with_svtr_forward.39} parent=0
    #allocation2 [shape = 'u8[131072]{0}', space=vmem, size = 0x20000, scoped, tag = 'output window, operand 0, single buffered']
    #allocation3 [shape = 's32[1]{0}', space=sflag, size = 0x4, scoped, tag = 'scoped memory for encoder_with_svtr_forward.39']
    %8 = vsyncpa [#allocation3], 0
    // Predicated region
    $region2: #{encoder_with_svtr_forward.39} parent=1 // pred_check
      _
    $region3: #{encoder_with_svtr_forward.39} parent=1 // pred_check_branch
      %10 = sbr.rel (0) target = $region5
    $region4: #{encoder_with_svtr_forward.39} parent=1 // pred_region
      _
    $region5: #{encoder_with_svtr_forward.39} parent=1 // pred_fallthru
      _
    // Predicated region
    $region6: #{encoder_with_svtr_forward.39} parent=1 // pred_check
      _
    $region7: #{encoder_with_svtr_forward.39} parent=1 // pred_check_branch
      %12 = sbr.rel (0) target = $region9
    $region8: #{encoder_with_svtr_forward.39} parent=1 // pred_region
      _
    $region9: #{encoder_with_svtr_forward.39} parent=1 // pred_fallthru
      _
    // Predicated region
    $region10: #{encoder_with_svtr_forward.39} parent=1 // pred_check
      _
    $region11: #{encoder_with_svtr_forward.39} parent=1 // pred_check_branch
      %14 = sbr.rel (0) target = $region13
    $region12: #{encoder_with_svtr_forward.39} parent=1 // pred_region
      _
    $region13: #{encoder_with_svtr_forward.39} parent=1 // pred_fallthru
      _
    %v15 = vld [vmem:[%s0] sm:$0xff]
    %v16 = vld [vmem:[%s0 + $0x8] sm:$0xff]
    %v17 = vld [vmem:[%s0 + $0x10] sm:$0xff]
    %v18 = vld [vmem:[%s0 + $0x18] sm:$0xff]
    %v19 = vld [vmem:[%s0 + $0x20] sm:$0xff]
    %v20 = vld [vmem:[%s0 + $0x28] sm:$0xff]
    %v21 = vld [vmem:[%s0 + $0x30] sm:$0xff]
    %v22 = vld [vmem:[%s0 + $0x38] sm:$0xff]
    %v23 = vld [vmem:[%s0 + $0x40] sm:$0xff]
    %v24 = vld [vmem:[%s0 + $0x48] sm:$0xff]
    %v25 = vld [vmem:[%s0 + $0x50] sm:$0xff]
    %v26 = vld [vmem:[%s0 + $0x58] sm:$0xff]
    %v27 = vld [vmem:[%s0 + $0x60] sm:$0xff]
    %v28 = vld [vmem:[%s0 + $0x68] sm:$0xff]
    %v29 = vld [vmem:[%s0 + $0x70] sm:$0xff]
    %v30 = vld [vmem:[%s0 + $0x78] sm:$0xff]
    %v31 = vld [vmem:[%s0 + $0x80] sm:$0xff]
    %v32 = vld [vmem:[%s0 + $0x88] sm:$0xff]
    %v33 = vld [vmem:[%s0 + $0x90] sm:$0xff]
    %v34 = vld [vmem:[%s0 + $0x98] sm:$0xff]
    %v35 = vld [vmem:[%s0 + $0xa0] sm:$0xff]
    %v36 = vld [vmem:[%s0 + $0xa8] sm:$0xff]
    %v37 = vld [vmem:[%s0 + $0xb0] sm:$0xff]
    %v38 = vld [vmem:[%s0 + $0xb8] sm:$0xff]
    %v39 = vld [vmem:[%s0 + $0xc0] sm:$0xff]
    %v40 = vld [vmem:[%s0 + $0xc8] sm:$0xff]
    %v41 = vld [vmem:[%s0 + $0xd0] sm:$0xff]
    %v42 = vld [vmem:[%s0 + $0xd8] sm:$0xff]
    %v43 = vld [vmem:[%s0 + $0xe0] sm:$0xff]
    %v44 = vld [vmem:[%s0 + $0xe8] sm:$0xff]
    %v45 = vld [vmem:[%s0 + $0xf0] sm:$0xff]
    %v46 = vld [vmem:[%s0 + $0xf8] sm:$0xff]
    %v47 = vld [vmem:[%s1] sm:$0xff]
    %v48 = vld [vmem:[%s2] sm:$0x1]
    %v50 = vlaneseq
    %v51 = vshrl.u32 %v50, 7
    %v52 = vsub.s32 0, %v51
    %v53 = vrot.slane %v48, %v52
    %vm55 = vcmask 64512
    %v57 = vsel %vm55, %v15, 0
    %v60 = vsel %vm55, %v16, 0
    %v63 = vsel %vm55, %v17, 0
    %v66 = vsel %vm55, %v18, 0
    %v69 = vsel %vm55, %v19, 0
    %v72 = vsel %vm55, %v20, 0
    %v75 = vsel %vm55, %v21, 0
    %v78 = vsel %vm55, %v22, 0
    %v81 = vsel %vm55, %v23, 0
    %v84 = vsel %vm55, %v24, 0
    %v87 = vsel %vm55, %v25, 0
    %v90 = vsel %vm55, %v26, 0
    %v93 = vsel %vm55, %v27, 0
    %v96 = vsel %vm55, %v28, 0
    %v99 = vsel %vm55, %v29, 0
    %v102 = vsel %vm55, %v30, 0
    %v105 = vsel %vm55, %v31, 0
    %v108 = vsel %vm55, %v32, 0
    %v111 = vsel %vm55, %v33, 0
    %v114 = vsel %vm55, %v34, 0
    %v117 = vsel %vm55, %v35, 0
    %v120 = vsel %vm55, %v36, 0
    %v123 = vsel %vm55, %v37, 0
    %v126 = vsel %vm55, %v38, 0
    %v129 = vsel %vm55, %v39, 0
    %v132 = vsel %vm55, %v40, 0
    %v135 = vsel %vm55, %v41, 0
    %v138 = vsel %vm55, %v42, 0
    %v141 = vsel %vm55, %v43, 0
    %v144 = vsel %vm55, %v44, 0
    %v147 = vsel %vm55, %v45, 0
    %v150 = vsel %vm55, %v46, 0
    %152 = vmatprep.subr.mxu0 0.0
    %153 = vmatpush1.msra.mxu0 %v47
    %154 = vmatprep.subr.mxu0 0.0
    %155 = vmatpush1.msra.mxu0 0.0
    %156 = vmatprep.subr.mxu0 0.0
    %157 = vmatpush1.msra.mxu0 0.0
    %158 = vmatprep.subr.mxu0 0.0
    %159 = vmatpush1.msra.mxu0 0.0
    %160 = vmatprep.subr.mxu0 0.0
    %161 = vmatpush1.msra.mxu0 0.0
    %162 = vmatprep.subr.mxu0 0.0
    %163 = vmatpush1.msra.mxu0 0.0
    %164 = vmatprep.subr.mxu0 0.0
    %165 = vmatpush1.msra.mxu0 0.0
    %166 = vmatprep.subr.mxu0 0.0
    %167 = vmatpush1.msra.mxu0 0.0
    %168 = vmatprep.subr.mxu0 0.0
    %169 = vmatpush1.msra.mxu0 0.0
    %170 = vmatprep.subr.mxu0 0.0
    %171 = vmatpush1.msra.mxu0 0.0
    %172 = vmatprep.subr.mxu0 0.0
    %173 = vmatpush1.msra.mxu0 0.0
    %174 = vmatprep.subr.mxu0 0.0
    %175 = vmatpush1.msra.mxu0 0.0
    %176 = vmatprep.subr.mxu0 0.0
    %177 = vmatpush1.msra.mxu0 0.0
    %178 = vmatprep.subr.mxu0 0.0
    %179 = vmatpush1.msra.mxu0 0.0
    %180 = vmatprep.subr.mxu0 0.0
    %181 = vmatpush1.msra.mxu0 0.0
    %182 = vmatprep.subr.mxu0 0.0
    %183 = vmatpush1.msra.mxu0 0.0
    %184 = vmatprep.subr.mxu0 0.0
    %185 = vmatpush1.msra.mxu0 0.0
    %186 = vmatprep.subr.mxu0 0.0
    %187 = vmatpush1.msra.mxu0 0.0
    %188 = vmatprep.subr.mxu0 0.0
    %189 = vmatpush1.msra.mxu0 0.0
    %190 = vmatprep.subr.mxu0 0.0
    %191 = vmatpush1.msra.mxu0 0.0
    %192 = vmatprep.subr.mxu0 0.0
    %193 = vmatpush1.msra.mxu0 0.0
    %194 = vmatprep.subr.mxu0 0.0
    %195 = vmatpush1.msra.mxu0 0.0
    %196 = vmatprep.subr.mxu0 0.0
    %197 = vmatpush1.msra.mxu0 0.0
    %198 = vmatprep.subr.mxu0 0.0
    %199 = vmatpush1.msra.mxu0 0.0
    %200 = vmatprep.subr.mxu0 0.0
    %201 = vmatpush1.msra.mxu0 0.0
    %202 = vmatprep.subr.mxu0 0.0
    %203 = vmatpush1.msra.mxu0 0.0
    %204 = vmatprep.subr.mxu0 0.0
    %205 = vmatpush1.msra.mxu0 0.0
    %206 = vmatprep.subr.mxu0 0.0
    %207 = vmatpush1.msra.mxu0 0.0
    %208 = vmatprep.subr.mxu0 0.0
    %209 = vmatpush1.msra.mxu0 0.0
    %210 = vmatprep.subr.mxu0 0.0
    %211 = vmatpush1.msra.mxu0 0.0
    %212 = vmatprep.subr.mxu0 0.0
    %213 = vmatpush1.msra.mxu0 0.0
    %214 = vmatprep.subr.mxu0 0.0
    %215 = vmatpush1.msra.mxu0 0.0
    %216 = vmatprep.mubr.f32.mxu0 0.0
    %217 = vmatmul.mubr.f32.gmra.mrb[0].mxu0 %v57
    %v218 = vpop.f32.mrb[0].mxu0
    %v219 = vadd.f32 %v53, %v218
    %v220 = vpop.f32.mrb[0].mxu0
    %221 = vmatprep.mubr.f32.mxu0 0.0
    %222 = vmatmul.mubr.f32.gmra.mrb[0].mxu0 %v60
    %v223 = vpop.f32.mrb[0].mxu0
    %v224 = vadd.f32 %v53, %v223
    %v225 = vpop.f32.mrb[0].mxu0
    %226 = vmatprep.mubr.f32.mxu0 0.0
    %227 = vmatmul.mubr.f32.gmra.mrb[0].mxu0 %v63
    %v228 = vpop.f32.mrb[0].mxu0
    %v229 = vadd.f32 %v53, %v228
    %v230 = vpop.f32.mrb[0].mxu0
    %231 = vmatprep.mubr.f32.mxu0 0.0
    %232 = vmatmul.mubr.f32.gmra.mrb[0].mxu0 %v66
    %v233 = vpop.f32.mrb[0].mxu0
    %v234 = vadd.f32 %v53, %v233
    %v235 = vpop.f32.mrb[0].mxu0
    %236 = vmatprep.mubr.f32.mxu0 0.0
    %237 = vmatmul.mubr.f32.gmra.mrb[0].mxu0 %v69
    %v238 = vpop.f32.mrb[0].mxu0
    %v239 = vadd.f32 %v53, %v238
    %v240 = vpop.f32.mrb[0].mxu0
    %241 = vmatprep.mubr.f32.mxu0 0.0
    %242 = vmatmul.mubr.f32.gmra.mrb[0].mxu0 %v72
    %v243 = vpop.f32.mrb[0].mxu0
    %v244 = vadd.f32 %v53, %v243
    %v245 = vpop.f32.mrb[0].mxu0
    %246 = vmatprep.mubr.f32.mxu0 0.0
    %247 = vmatmul.mubr.f32.gmra.mrb[0].mxu0 %v75
    %v248 = vpop.f32.mrb[0].mxu0
    %v249 = vadd.f32 %v53, %v248
    %v250 = vpop.f32.mrb[0].mxu0
    %251 = vmatprep.mubr.f32.mxu0 0.0
    %252 = vmatmul.mubr.f32.gmra.mrb[0].mxu0 %v78
    %v253 = vpop.f32.mrb[0].mxu0
    %v254 = vadd.f32 %v53, %v253
    %v255 = vpop.f32.mrb[0].mxu0
    %256 = vmatprep.mubr.f32.mxu0 0.0
    %257 = vmatmul.mubr.f32.gmra.mrb[0].mxu0 %v81
    %v258 = vpop.f32.mrb[0].mxu0
    %v259 = vadd.f32 %v53, %v258
    %v260 = vpop.f32.mrb[0].mxu0
    %261 = vmatprep.mubr.f32.mxu0 0.0
    %262 = vmatmul.mubr.f32.gmra.mrb[0].mxu0 %v84
    %v263 = vpop.f32.mrb[0].mxu0
    %v264 = vadd.f32 %v53, %v263
    %v265 = vpop.f32.mrb[0].mxu0
    %266 = vmatprep.mubr.f32.mxu0 0.0
    %267 = vmatmul.mubr.f32.gmra.mrb[0].mxu0 %v87
    %v268 = vpop.f32.mrb[0].mxu0
    %v269 = vadd.f32 %v53, %v268
    %v270 = vpop.f32.mrb[0].mxu0
    %271 = vmatprep.mubr.f32.mxu0 0.0
    %272 = vmatmul.mubr.f32.gmra.mrb[0].mxu0 %v90
    %v273 = vpop.f32.mrb[0].mxu0
    %v274 = vadd.f32 %v53, %v273
    %v275 = vpop.f32.mrb[0].mxu0
    %276 = vmatprep.mubr.f32.mxu0 0.0
    %277 = vmatmul.mubr.f32.gmra.mrb[0].mxu0 %v93
    %v278 = vpop.f32.mrb[0].mxu0
    %v279 = vadd.f32 %v53, %v278
    %v280 = vpop.f32.mrb[0].mxu0
    %281 = vmatprep.mubr.f32.mxu0 0.0
    %282 = vmatmul.mubr.f32.gmra.mrb[0].mxu0 %v96
    %v283 = vpop.f32.mrb[0].mxu0
    %v284 = vadd.f32 %v53, %v283
    %v285 = vpop.f32.mrb[0].mxu0
    %286 = vmatprep.mubr.f32.mxu0 0.0
    %287 = vmatmul.mubr.f32.gmra.mrb[0].mxu0 %v99
    %v288 = vpop.f32.mrb[0].mxu0
    %v289 = vadd.f32 %v53, %v288
    %v290 = vpop.f32.mrb[0].mxu0
    %291 = vmatprep.mubr.f32.mxu0 0.0
    %292 = vmatmul.mubr.f32.gmra.mrb[0].mxu0 %v102
    %v293 = vpop.f32.mrb[0].mxu0
    %v294 = vadd.f32 %v53, %v293
    %v295 = vpop.f32.mrb[0].mxu0
    %296 = vmatprep.mubr.f32.mxu0 0.0
    %297 = vmatmul.mubr.f32.gmra.mrb[0].mxu0 %v105
    %v298 = vpop.f32.mrb[0].mxu0
    %v299 = vadd.f32 %v53, %v298
    %v300 = vpop.f32.mrb[0].mxu0
    %301 = vmatprep.mubr.f32.mxu0 0.0
    %302 = vmatmul.mubr.f32.gmra.mrb[0].mxu0 %v108
    %v303 = vpop.f32.mrb[0].mxu0
    %v304 = vadd.f32 %v53, %v303
    %v305 = vpop.f32.mrb[0].mxu0
    %306 = vmatprep.mubr.f32.mxu0 0.0
    %307 = vmatmul.mubr.f32.gmra.mrb[0].mxu0 %v111
    %v308 = vpop.f32.mrb[0].mxu0
    %v309 = vadd.f32 %v53, %v308
    %v310 = vpop.f32.mrb[0].mxu0
    %311 = vmatprep.mubr.f32.mxu0 0.0
    %312 = vmatmul.mubr.f32.gmra.mrb[0].mxu0 %v114
    %v313 = vpop.f32.mrb[0].mxu0
    %v314 = vadd.f32 %v53, %v313
    %v315 = vpop.f32.mrb[0].mxu0
    %316 = vmatprep.mubr.f32.mxu0 0.0
    %317 = vmatmul.mubr.f32.gmra.mrb[0].mxu0 %v117
    %v318 = vpop.f32.mrb[0].mxu0
    %v319 = vadd.f32 %v53, %v318
    %v320 = vpop.f32.mrb[0].mxu0
    %321 = vmatprep.mubr.f32.mxu0 0.0
    %322 = vmatmul.mubr.f32.gmra.mrb[0].mxu0 %v120
    %v323 = vpop.f32.mrb[0].mxu0
    %v324 = vadd.f32 %v53, %v323
    %v325 = vpop.f32.mrb[0].mxu0
    %326 = vmatprep.mubr.f32.mxu0 0.0
    %327 = vmatmul.mubr.f32.gmra.mrb[0].mxu0 %v123
    %v328 = vpop.f32.mrb[0].mxu0
    %v329 = vadd.f32 %v53, %v328
    %v330 = vpop.f32.mrb[0].mxu0
    %331 = vmatprep.mubr.f32.mxu0 0.0
    %332 = vmatmul.mubr.f32.gmra.mrb[0].mxu0 %v126
    %v333 = vpop.f32.mrb[0].mxu0
    %v334 = vadd.f32 %v53, %v333
    %v335 = vpop.f32.mrb[0].mxu0
    %336 = vmatprep.mubr.f32.mxu0 0.0
    %337 = vmatmul.mubr.f32.gmra.mrb[0].mxu0 %v129
    %v338 = vpop.f32.mrb[0].mxu0
    %v339 = vadd.f32 %v53, %v338
    %v340 = vpop.f32.mrb[0].mxu0
    %341 = vmatprep.mubr.f32.mxu0 0.0
    %342 = vmatmul.mubr.f32.gmra.mrb[0].mxu0 %v132
    %v343 = vpop.f32.mrb[0].mxu0
    %v344 = vadd.f32 %v53, %v343
    %v345 = vpop.f32.mrb[0].mxu0
    %346 = vmatprep.mubr.f32.mxu0 0.0
    %347 = vmatmul.mubr.f32.gmra.mrb[0].mxu0 %v135
    %v348 = vpop.f32.mrb[0].mxu0
    %v349 = vadd.f32 %v53, %v348
    %v350 = vpop.f32.mrb[0].mxu0
    %351 = vmatprep.mubr.f32.mxu0 0.0
    %352 = vmatmul.mubr.f32.gmra.mrb[0].mxu0 %v138
    %v353 = vpop.f32.mrb[0].mxu0
    %v354 = vadd.f32 %v53, %v353
    %v355 = vpop.f32.mrb[0].mxu0
    %356 = vmatprep.mubr.f32.mxu0 0.0
    %357 = vmatmul.mubr.f32.gmra.mrb[0].mxu0 %v141
    %v358 = vpop.f32.mrb[0].mxu0
    %v359 = vadd.f32 %v53, %v358
    %v360 = vpop.f32.mrb[0].mxu0
    %361 = vmatprep.mubr.f32.mxu0 0.0
    %362 = vmatmul.mubr.f32.gmra.mrb[0].mxu0 %v144
    %v363 = vpop.f32.mrb[0].mxu0
    %v364 = vadd.f32 %v53, %v363
    %v365 = vpop.f32.mrb[0].mxu0
    %366 = vmatprep.mubr.f32.mxu0 0.0
    %367 = vmatmul.mubr.f32.gmra.mrb[0].mxu0 %v147
    %v368 = vpop.f32.mrb[0].mxu0
    %v369 = vadd.f32 %v53, %v368
    %v370 = vpop.f32.mrb[0].mxu0
    %371 = vmatprep.mubr.f32.mxu0 0.0
    %372 = vmatmul.mubr.f32.gmra.mrb[0].mxu0 %v150
    %v373 = vpop.f32.mrb[0].mxu0
    %v374 = vadd.f32 %v53, %v373
    %v375 = vpop.f32.mrb[0].mxu0
    %376 = vdwg.mxu0
    %v377 = vxor.u32 %v219, 2147483648
    %v378 = vxor.u32 %v224, 2147483648
    %v379 = vxor.u32 %v229, 2147483648
    %v380 = vxor.u32 %v234, 2147483648
    %v381 = vxor.u32 %v239, 2147483648
    %v382 = vxor.u32 %v244, 2147483648
    %v383 = vxor.u32 %v249, 2147483648
    %v384 = vxor.u32 %v254, 2147483648
    %v385 = vxor.u32 %v259, 2147483648
    %v386 = vxor.u32 %v264, 2147483648
    %v387 = vxor.u32 %v269, 2147483648
    %v388 = vxor.u32 %v274, 2147483648
    %v389 = vxor.u32 %v279, 2147483648
    %v390 = vxor.u32 %v284, 2147483648
    %v391 = vxor.u32 %v289, 2147483648
    %v392 = vxor.u32 %v294, 2147483648
    %v393 = vxor.u32 %v299, 2147483648
    %v394 = vxor.u32 %v304, 2147483648
    %v395 = vxor.u32 %v309, 2147483648
    %v396 = vxor.u32 %v314, 2147483648
    %v397 = vxor.u32 %v319, 2147483648
    %v398 = vxor.u32 %v324, 2147483648
    %v399 = vxor.u32 %v329, 2147483648
    %v400 = vxor.u32 %v334, 2147483648
    %v401 = vxor.u32 %v339, 2147483648
    %v402 = vxor.u32 %v344, 2147483648
    %v403 = vxor.u32 %v349, 2147483648
    %v404 = vxor.u32 %v354, 2147483648
    %v405 = vxor.u32 %v359, 2147483648
    %v406 = vxor.u32 %v364, 2147483648
    %v407 = vxor.u32 %v369, 2147483648
    %v408 = vxor.u32 %v374, 2147483648
    %v409 = vmul.f32 %v377, 1.442695
    %v410 = vpow.pop %v409
    %v411 = vmul.f32 %v378, 1.442695
    %v412 = vpow.pop %v411
    %v413 = vmul.f32 %v379, 1.442695
    %v414 = vpow.pop %v413
    %v415 = vmul.f32 %v380, 1.442695
    %v416 = vpow.pop %v415
    %v417 = vmul.f32 %v381, 1.442695
    %v418 = vpow.pop %v417
    %v419 = vmul.f32 %v382, 1.442695
    %v420 = vpow.pop %v419
    %v421 = vmul.f32 %v383, 1.442695
    %v422 = vpow.pop %v421
    %v423 = vmul.f32 %v384, 1.442695
    %v424 = vpow.pop %v423
    %v425 = vmul.f32 %v385, 1.442695
    %v426 = vpow.pop %v425
    %v427 = vmul.f32 %v386, 1.442695
    %v428 = vpow.pop %v427
    %v429 = vmul.f32 %v387, 1.442695
    %v430 = vpow.pop %v429
    %v431 = vmul.f32 %v388, 1.442695
    %v432 = vpow.pop %v431
    %v433 = vmul.f32 %v389, 1.442695
    %v434 = vpow.pop %v433
    %v435 = vmul.f32 %v390, 1.442695
    %v436 = vpow.pop %v435
    %v437 = vmul.f32 %v391, 1.442695
    %v438 = vpow.pop %v437
    %v439 = vmul.f32 %v392, 1.442695
    %v440 = vpow.pop %v439
    %v441 = vmul.f32 %v393, 1.442695
    %v442 = vpow.pop %v441
    %v443 = vmul.f32 %v394, 1.442695
    %v444 = vpow.pop %v443
    %v445 = vmul.f32 %v395, 1.442695
    %v446 = vpow.pop %v445
    %v447 = vmul.f32 %v396, 1.442695
    %v448 = vpow.pop %v447
    %v449 = vmul.f32 %v397, 1.442695
    %v450 = vpow.pop %v449
    %v451 = vmul.f32 %v398, 1.442695
    %v452 = vpow.pop %v451
    %v453 = vmul.f32 %v399, 1.442695
    %v454 = vpow.pop %v453
    %v455 = vmul.f32 %v400, 1.442695
    %v456 = vpow.pop %v455
    %v457 = vmul.f32 %v401, 1.442695
    %v458 = vpow.pop %v457
    %v459 = vmul.f32 %v402, 1.442695
    %v460 = vpow.pop %v459
    %v461 = vmul.f32 %v403, 1.442695
    %v462 = vpow.pop %v461
    %v463 = vmul.f32 %v404, 1.442695
    %v464 = vpow.pop %v463
    %v465 = vmul.f32 %v405, 1.442695
    %v466 = vpow.pop %v465
    %v467 = vmul.f32 %v406, 1.442695
    %v468 = vpow.pop %v467
    %v469 = vmul.f32 %v407, 1.442695
    %v470 = vpow.pop %v469
    %v471 = vmul.f32 %v408, 1.442695
    %v472 = vpow.pop %v471
    %v473 = vadd.f32 %v410, 1.0
    %v474 = vadd.f32 %v412, 1.0
    %v475 = vadd.f32 %v414, 1.0
    %v476 = vadd.f32 %v416, 1.0
    %v477 = vadd.f32 %v418, 1.0
    %v478 = vadd.f32 %v420, 1.0
    %v479 = vadd.f32 %v422, 1.0
    %v480 = vadd.f32 %v424, 1.0
    %v481 = vadd.f32 %v426, 1.0
    %v482 = vadd.f32 %v428, 1.0
    %v483 = vadd.f32 %v430, 1.0
    %v484 = vadd.f32 %v432, 1.0
    %v485 = vadd.f32 %v434, 1.0
    %v486 = vadd.f32 %v436, 1.0
    %v487 = vadd.f32 %v438, 1.0
    %v488 = vadd.f32 %v440, 1.0
    %v489 = vadd.f32 %v442, 1.0
    %v490 = vadd.f32 %v444, 1.0
    %v491 = vadd.f32 %v446, 1.0
    %v492 = vadd.f32 %v448, 1.0
    %v493 = vadd.f32 %v450, 1.0
    %v494 = vadd.f32 %v452, 1.0
    %v495 = vadd.f32 %v454, 1.0
    %v496 = vadd.f32 %v456, 1.0
    %v497 = vadd.f32 %v458, 1.0
    %v498 = vadd.f32 %v460, 1.0
    %v499 = vadd.f32 %v462, 1.0
    %v500 = vadd.f32 %v464, 1.0
    %v501 = vadd.f32 %v466, 1.0
    %v502 = vadd.f32 %v468, 1.0
    %v503 = vadd.f32 %v470, 1.0
    %v504 = vadd.f32 %v472, 1.0
    %v505 = vrcp.pop %v473
    %v506 = vmul.f32 1.0, %v505
    %v507 = vrcp.pop %v474
    %v508 = vmul.f32 1.0, %v507
    %v509 = vrcp.pop %v475
    %v510 = vmul.f32 1.0, %v509
    %v511 = vrcp.pop %v476
    %v512 = vmul.f32 1.0, %v511
    %v513 = vrcp.pop %v477
    %v514 = vmul.f32 1.0, %v513
    %v515 = vrcp.pop %v478
    %v516 = vmul.f32 1.0, %v515
    %v517 = vrcp.pop %v479
    %v518 = vmul.f32 1.0, %v517
    %v519 = vrcp.pop %v480
    %v520 = vmul.f32 1.0, %v519
    %v521 = vrcp.pop %v481
    %v522 = vmul.f32 1.0, %v521
    %v523 = vrcp.pop %v482
    %v524 = vmul.f32 1.0, %v523
    %v525 = vrcp.pop %v483
    %v526 = vmul.f32 1.0, %v525
    %v527 = vrcp.pop %v484
    %v528 = vmul.f32 1.0, %v527
    %v529 = vrcp.pop %v485
    %v530 = vmul.f32 1.0, %v529
    %v531 = vrcp.pop %v486
    %v532 = vmul.f32 1.0, %v531
    %v533 = vrcp.pop %v487
    %v534 = vmul.f32 1.0, %v533
    %v535 = vrcp.pop %v488
    %v536 = vmul.f32 1.0, %v535
    %v537 = vrcp.pop %v489
    %v538 = vmul.f32 1.0, %v537
    %v539 = vrcp.pop %v490
    %v540 = vmul.f32 1.0, %v539
    %v541 = vrcp.pop %v491
    %v542 = vmul.f32 1.0, %v541
    %v543 = vrcp.pop %v492
    %v544 = vmul.f32 1.0, %v543
    %v545 = vrcp.pop %v493
    %v546 = vmul.f32 1.0, %v545
    %v547 = vrcp.pop %v494
    %v548 = vmul.f32 1.0, %v547
    %v549 = vrcp.pop %v495
    %v550 = vmul.f32 1.0, %v549
    %v551 = vrcp.pop %v496
    %v552 = vmul.f32 1.0, %v551
    %v553 = vrcp.pop %v497
    %v554 = vmul.f32 1.0, %v553
    %v555 = vrcp.pop %v498
    %v556 = vmul.f32 1.0, %v555
    %v557 = vrcp.pop %v499
    %v558 = vmul.f32 1.0, %v557
    %v559 = vrcp.pop %v500
    %v560 = vmul.f32 1.0, %v559
    %v561 = vrcp.pop %v501
    %v562 = vmul.f32 1.0, %v561
    %v563 = vrcp.pop %v502
    %v564 = vmul.f32 1.0, %v563
    %v565 = vrcp.pop %v503
    %v566 = vmul.f32 1.0, %v565
    %v567 = vrcp.pop %v504
    %v568 = vmul.f32 1.0, %v567
    %v569 = vmul.f32 %v219, %v506
    %v570 = vmul.f32 %v224, %v508
    %v571 = vmul.f32 %v229, %v510
    %v572 = vmul.f32 %v234, %v512
    %v573 = vmul.f32 %v239, %v514
    %v574 = vmul.f32 %v244, %v516
    %v575 = vmul.f32 %v249, %v518
    %v576 = vmul.f32 %v254, %v520
    %v577 = vmul.f32 %v259, %v522
    %v578 = vmul.f32 %v264, %v524
    %v579 = vmul.f32 %v269, %v526
    %v580 = vmul.f32 %v274, %v528
    %v581 = vmul.f32 %v279, %v530
    %v582 = vmul.f32 %v284, %v532
    %v583 = vmul.f32 %v289, %v534
    %v584 = vmul.f32 %v294, %v536
    %v585 = vmul.f32 %v299, %v538
    %v586 = vmul.f32 %v304, %v540
    %v587 = vmul.f32 %v309, %v542
    %v588 = vmul.f32 %v314, %v544
    %v589 = vmul.f32 %v319, %v546
    %v590 = vmul.f32 %v324, %v548
    %v591 = vmul.f32 %v329, %v550
    %v592 = vmul.f32 %v334, %v552
    %v593 = vmul.f32 %v339, %v554
    %v594 = vmul.f32 %v344, %v556
    %v595 = vmul.f32 %v349, %v558
    %v596 = vmul.f32 %v354, %v560
    %v597 = vmul.f32 %v359, %v562
    %v598 = vmul.f32 %v364, %v564
    %v599 = vmul.f32 %v369, %v566
    %v600 = vmul.f32 %v374, %v568
    %601 = vst [vmem:[#allocation2] sm:$0xff] %v569
    %602 = vst [vmem:[#allocation2 + $0x8] sm:$0xff] %v570
    %603 = vst [vmem:[#allocation2 + $0x10] sm:$0xff] %v571
    %604 = vst [vmem:[#allocation2 + $0x18] sm:$0xff] %v572
    %605 = vst [vmem:[#allocation2 + $0x20] sm:$0xff] %v573
    %606 = vst [vmem:[#allocation2 + $0x28] sm:$0xff] %v574
    %607 = vst [vmem:[#allocation2 + $0x30] sm:$0xff] %v575
    %608 = vst [vmem:[#allocation2 + $0x38] sm:$0xff] %v576
    %609 = vst [vmem:[#allocation2 + $0x40] sm:$0xff] %v577
    %610 = vst [vmem:[#allocation2 + $0x48] sm:$0xff] %v578
    %611 = vst [vmem:[#allocation2 + $0x50] sm:$0xff] %v579
    %612 = vst [vmem:[#allocation2 + $0x58] sm:$0xff] %v580
    %613 = vst [vmem:[#allocation2 + $0x60] sm:$0xff] %v581
    %614 = vst [vmem:[#allocation2 + $0x68] sm:$0xff] %v582
    %615 = vst [vmem:[#allocation2 + $0x70] sm:$0xff] %v583
    %616 = vst [vmem:[#allocation2 + $0x78] sm:$0xff] %v584
    %617 = vst [vmem:[#allocation2 + $0x80] sm:$0xff] %v585
    %618 = vst [vmem:[#allocation2 + $0x88] sm:$0xff] %v586
    %619 = vst [vmem:[#allocation2 + $0x90] sm:$0xff] %v587
    %620 = vst [vmem:[#allocation2 + $0x98] sm:$0xff] %v588
    %621 = vst [vmem:[#allocation2 + $0xa0] sm:$0xff] %v589
    %622 = vst [vmem:[#allocation2 + $0xa8] sm:$0xff] %v590
    %623 = vst [vmem:[#allocation2 + $0xb0] sm:$0xff] %v591
    %624 = vst [vmem:[#allocation2 + $0xb8] sm:$0xff] %v592
    %625 = vst [vmem:[#allocation2 + $0xc0] sm:$0xff] %v593
    %626 = vst [vmem:[#allocation2 + $0xc8] sm:$0xff] %v594
    %627 = vst [vmem:[#allocation2 + $0xd0] sm:$0xff] %v595
    %628 = vst [vmem:[#allocation2 + $0xd8] sm:$0xff] %v596
    %629 = vst [vmem:[#allocation2 + $0xe0] sm:$0xff] %v597
    %630 = vst [vmem:[#allocation2 + $0xe8] sm:$0xff] %v598
    %631 = vst [vmem:[#allocation2 + $0xf0] sm:$0xff] %v599
    %632 = vst [vmem:[#allocation2 + $0xf8] sm:$0xff] %v600
    // Predicated region
    $region14: #{encoder_with_svtr_forward.39} parent=1 // pred_check
      _
    $region15: #{encoder_with_svtr_forward.39} parent=1 // pred_check_branch
      %634 = sbr.rel (0) target = $region17
    $region16: #{encoder_with_svtr_forward.39} parent=1 // pred_region
      %s636 = ssub.s32 4096, 4096
      %637 = vsyncadd [#allocation3], %s636
      %s638 = sshll.u32 [#allocation2], 4
      %s639 = int_to_ptr.vmem [resolvable:$true] %s638
      %644 = dma.vmem_to_hbm [thread:$0]  %s639, 4096, %s3, [#allocation3], 128, 128, 8
    $region17: #{encoder_with_svtr_forward.39} parent=1 // pred_fallthru
      _
    // Predicated region
    $region18: #{encoder_with_svtr_forward.39} parent=1 // pred_check
      _
    $region19: #{encoder_with_svtr_forward.39} parent=1 // pred_check_branch
      %646 = sbr.rel (0) target = $region21
    $region20: #{encoder_with_svtr_forward.39} parent=1 // pred_region
      %647 = dma.done [#allocation3], 4096
    $region21: #{encoder_with_svtr_forward.39} parent=1 // pred_fallthru
      _
    %648 = vsyncpa [#allocation3], 1

// kernel: encoder_with_svtr_forward.38
$region0: #{encoder_with_svtr_forward.38}
  #allocation0 [shape = 'u32[]', space=smem, size = 0x4, offset = 0x4, fixed_abs, tag = 'smem constant byte address 0x4 - core index']
  #allocation1 [shape = 'u32[144,128]{1,0:T(1,128)}', space=vmem, size = 0x12000, scoped, tag = 'internal scratch']
  %s0 = inlined_call_operand.vmem [shape: f32[256,1152], index: 0, kind: input, shape index: {}]
  %s1 = inlined_call_operand.vmem [shape: f32[1152,128], index: 1, kind: input, shape index: {}]
  %s2 = inlined_call_operand.vmem [shape: f32[1,128], index: 2, kind: input, shape index: {}]
  %s3 = inlined_call_operand.vmem [shape: f32[256,128], index: 3, kind: output, shape index: {}]
  %s4 = sld [smem:[#allocation0]]
  $region22: #{encoder_with_svtr_forward.38} parent=0
    _
  %s6 = ssub.s32 1, %s4
  %s7 = scalar_select 0, %s6, %s4
  // Predicated region
  $region2: #{encoder_with_svtr_forward.38} parent=0 // pred_check
    _
  $region3: #{encoder_with_svtr_forward.38} parent=0 // pred_check_branch
    %9 = sbr.rel (0) target = $region5
  $region4: #{encoder_with_svtr_forward.38} parent=0 // pred_region
    _
  $region5: #{encoder_with_svtr_forward.38} parent=0 // pred_fallthru
    _
  // Predicated region
  $region6: #{encoder_with_svtr_forward.38} parent=0 // pred_check
    _
  $region7: #{encoder_with_svtr_forward.38} parent=0 // pred_check_branch
    %11 = sbr.rel (0) target = $region9
  $region8: #{encoder_with_svtr_forward.38} parent=0 // pred_region
    _
  $region9: #{encoder_with_svtr_forward.38} parent=0 // pred_fallthru
    _
  // Predicated region
  $region10: #{encoder_with_svtr_forward.38} parent=0 // pred_check
    _
  $region11: #{encoder_with_svtr_forward.38} parent=0 // pred_check_branch
    %13 = sbr.rel (0) target = $region13
  $region12: #{encoder_with_svtr_forward.38} parent=0 // pred_region
    _
  $region13: #{encoder_with_svtr_forward.38} parent=0 // pred_fallthru
    _
  %v14 = vld [vmem:[%s0] sm:$0xff]
  %v15 = vld [vmem:[%s0 + $0x8] sm:$0xff]
  %v16 = vld [vmem:[%s0 + $0x10] sm:$0xff]
  %v17 = vld [vmem:[%s0 + $0x18] sm:$0xff]
  %v18 = vld [vmem:[%s0 + $0x20] sm:$0xff]
  %v19 = vld [vmem:[%s0 + $0x28] sm:$0xff]
  %v20 = vld [vmem:[%s0 + $0x30] sm:$0xff]
  %v21 = vld [vmem:[%s0 + $0x38] sm:$0xff]
  %v22 = vld [vmem:[%s0 + $0x40] sm:$0xff]
  %v23 = vld [vmem:[%s0 + $0x48] sm:$0xff]
  %v24 = vld [vmem:[%s0 + $0x50] sm:$0xff]
  %v25 = vld [vmem:[%s0 + $0x58] sm:$0xff]
  %v26 = vld [vmem:[%s0 + $0x60] sm:$0xff]
  %v27 = vld [vmem:[%s0 + $0x68] sm:$0xff]
  %v28 = vld [vmem:[%s0 + $0x70] sm:$0xff]
  %v29 = vld [vmem:[%s0 + $0x78] sm:$0xff]
  %v30 = vld [vmem:[%s0 + $0x80] sm:$0xff]
  %v31 = vld [vmem:[%s0 + $0x88] sm:$0xff]
  %v32 = vld [vmem:[%s0 + $0x90] sm:$0xff]
  %v33 = vld [vmem:[%s0 + $0x98] sm:$0xff]
  %v34 = vld [vmem:[%s0 + $0xa0] sm:$0xff]
  %v35 = vld [vmem:[%s0 + $0xa8] sm:$0xff]
  %v36 = vld [vmem:[%s0 + $0xb0] sm:$0xff]
  %v37 = vld [vmem:[%s0 + $0xb8] sm:$0xff]
  %v38 = vld [vmem:[%s0 + $0xc0] sm:$0xff]
  %v39 = vld [vmem:[%s0 + $0xc8] sm:$0xff]
  %v40 = vld [vmem:[%s0 + $0xd0] sm:$0xff]
  %v41 = vld [vmem:[%s0 + $0xd8] sm:$0xff]
  %v42 = vld [vmem:[%s0 + $0xe0] sm:$0xff]
  %v43 = vld [vmem:[%s0 + $0xe8] sm:$0xff]
  %v44 = vld [vmem:[%s0 + $0xf0] sm:$0xff]
  %v45 = vld [vmem:[%s0 + $0xf8] sm:$0xff]
  %v46 = vld [vmem:[%s0 + $0x100] sm:$0xff]
  %v47 = vld [vmem:[%s0 + $0x108] sm:$0xff]
  %v48 = vld [vmem:[%s0 + $0x110] sm:$0xff]
  %v49 = vld [vmem:[%s0 + $0x118] sm:$0xff]
  %v50 = vld [vmem:[%s0 + $0x120] sm:$0xff]
  %v51 = vld [vmem:[%s0 + $0x128] sm:$0xff]
  %v52 = vld [vmem:[%s0 + $0x130] sm:$0xff]
  %v53 = vld [vmem:[%s0 + $0x138] sm:$0xff]
  %v54 = vld [vmem:[%s0 + $0x140] sm:$0xff]
  %v55 = vld [vmem:[%s0 + $0x148] sm:$0xff]
  %v56 = vld [vmem:[%s0 + $0x150] sm:$0xff]
  %v57 = vld [vmem:[%s0 + $0x158] sm:$0xff]
  %v58 = vld [vmem:[%s0 + $0x160] sm:$0xff]
  %v59 = vld [vmem:[%s0 + $0x168] sm:$0xff]
  %v60 = vld [vmem:[%s0 + $0x170] sm:$0xff]
  %v61 = vld [vmem:[%s0 + $0x178] sm:$0xff]
  %v62 = vld [vmem:[%s0 + $0x180] sm:$0xff]
  %v63 = vld [vmem:[%s0 + $0x188] sm:$0xff]
  %v64 = vld [vmem:[%s0 + $0x190] sm:$0xff]
  %v65 = vld [vmem:[%s0 + $0x198] sm:$0xff]
  %v66 = vld [vmem:[%s0 + $0x1a0] sm:$0xff]
  %v67 = vld [vmem:[%s0 + $0x1a8] sm:$0xff]
  %v68 = vld [vmem:[%s0 + $0x1b0] sm:$0xff]
  %v69 = vld [vmem:[%s0 + $0x1b8] sm:$0xff]
  %v70 = vld [vmem:[%s0 + $0x1c0] sm:$0xff]
  %v71 = vld [vmem:[%s0 + $0x1c8] sm:$0xff]
  %v72 = vld [vmem:[%s0 + $0x1d0] sm:$0xff]
  %v73 = vld [vmem:[%s0 + $0x1d8] sm:$0xff]
  %v74 = vld [vmem:[%s0 + $0x1e0] sm:$0xff]
  %v75 = vld [vmem:[%s0 + $0x1e8] sm:$0xff]
  %v76 = vld [vmem:[%s0 + $0x1f0] sm:$0xff]
  %v77 = vld [vmem:[%s0 + $0x1f8] sm:$0xff]
  %v78 = vld [vmem:[%s0 + $0x200] sm:$0xff]
  %v79 = vld [vmem:[%s0 + $0x208] sm:$0xff]
  %v80 = vld [vmem:[%s0 + $0x210] sm:$0xff]
  %v81 = vld [vmem:[%s0 + $0x218] sm:$0xff]
  %v82 = vld [vmem:[%s0 + $0x220] sm:$0xff]
  %v83 = vld [vmem:[%s0 + $0x228] sm:$0xff]
  %v84 = vld [vmem:[%s0 + $0x230] sm:$0xff]
  %v85 = vld [vmem:[%s0 + $0x238] sm:$0xff]
  %v86 = vld [vmem:[%s0 + $0x240] sm:$0xff]
  %v87 = vld [vmem:[%s0 + $0x248] sm:$0xff]
  %v88 = vld [vmem:[%s0 + $0x250] sm:$0xff]
  %v89 = vld [vmem:[%s0 + $0x258] sm:$0xff]
  %v90 = vld [vmem:[%s0 + $0x260] sm:$0xff]
  %v91 = vld [vmem:[%s0 + $0x268] sm:$0xff]
  %v92 = vld [vmem:[%s0 + $0x270] sm:$0xff]
  %v93 = vld [vmem:[%s0 + $0x278] sm:$0xff]
  %v94 = vld [vmem:[%s0 + $0x280] sm:$0xff]
  %v95 = vld [vmem:[%s0 + $0x288] sm:$0xff]
  %v96 = vld [vmem:[%s0 + $0x290] sm:$0xff]
  %v97 = vld [vmem:[%s0 + $0x298] sm:$0xff]
  %v98 = vld [vmem:[%s0 + $0x2a0] sm:$0xff]
  %v99 = vld [vmem:[%s0 + $0x2a8] sm:$0xff]
  %v100 = vld [vmem:[%s0 + $0x2b0] sm:$0xff]
  %v101 = vld [vmem:[%s0 + $0x2b8] sm:$0xff]
  %v102 = vld [vmem:[%s0 + $0x2c0] sm:$0xff]
  %v103 = vld [vmem:[%s0 + $0x2c8] sm:$0xff]
  %v104 = vld [vmem:[%s0 + $0x2d0] sm:$0xff]
  %v105 = vld [vmem:[%s0 + $0x2d8] sm:$0xff]
  %v106 = vld [vmem:[%s0 + $0x2e0] sm:$0xff]
  %v107 = vld [vmem:[%s0 + $0x2e8] sm:$0xff]
  %v108 = vld [vmem:[%s0 + $0x2f0] sm:$0xff]
  %v109 = vld [vmem:[%s0 + $0x2f8] sm:$0xff]
  %v110 = vld [vmem:[%s0 + $0x300] sm:$0xff]
  %v111 = vld [vmem:[%s0 + $0x308] sm:$0xff]
  %v112 = vld [vmem:[%s0 + $0x310] sm:$0xff]
  %v113 = vld [vmem:[%s0 + $0x318] sm:$0xff]
  %v114 = vld [vmem:[%s0 + $0x320] sm:$0xff]
  %v115 = vld [vmem:[%s0 + $0x328] sm:$0xff]
  %v116 = vld [vmem:[%s0 + $0x330] sm:$0xff]
  %v117 = vld [vmem:[%s0 + $0x338] sm:$0xff]
  %v118 = vld [vmem:[%s0 + $0x340] sm:$0xff]
  %v119 = vld [vmem:[%s0 + $0x348] sm:$0xff]
  %v120 = vld [vmem:[%s0 + $0x350] sm:$0xff]
  %v121 = vld [vmem:[%s0 + $0x358] sm:$0xff]
  %v122 = vld [vmem:[%s0 + $0x360] sm:$0xff]
  %v123 = vld [vmem:[%s0 + $0x368] sm:$0xff]
  %v124 = vld [vmem:[%s0 + $0x370] sm:$0xff]
  %v125 = vld [vmem:[%s0 + $0x378] sm:$0xff]
  %v126 = vld [vmem:[%s0 + $0x380] sm:$0xff]
  %v127 = vld [vmem:[%s0 + $0x388] sm:$0xff]
  %v128 = vld [vmem:[%s0 + $0x390] sm:$0xff]
  %v129 = vld [vmem:[%s0 + $0x398] sm:$0xff]
  %v130 = vld [vmem:[%s0 + $0x3a0] sm:$0xff]
  %v131 = vld [vmem:[%s0 + $0x3a8] sm:$0xff]
  %v132 = vld [vmem:[%s0 + $0x3b0] sm:$0xff]
  %v133 = vld [vmem:[%s0 + $0x3b8] sm:$0xff]
  %v134 = vld [vmem:[%s0 + $0x3c0] sm:$0xff]
  %v135 = vld [vmem:[%s0 + $0x3c8] sm:$0xff]
  %v136 = vld [vmem:[%s0 + $0x3d0] sm:$0xff]
  %v137 = vld [vmem:[%s0 + $0x3d8] sm:$0xff]
  %v138 = vld [vmem:[%s0 + $0x3e0] sm:$0xff]
  %v139 = vld [vmem:[%s0 + $0x3e8] sm:$0xff]
  %v140 = vld [vmem:[%s0 + $0x3f0] sm:$0xff]
  %v141 = vld [vmem:[%s0 + $0x3f8] sm:$0xff]
  %v142 = vld [vmem:[%s0 + $0x400] sm:$0xff]
  %v143 = vld [vmem:[%s0 + $0x408] sm:$0xff]
  %v144 = vld [vmem:[%s0 + $0x410] sm:$0xff]
  %v145 = vld [vmem:[%s0 + $0x418] sm:$0xff]
  %v146 = vld [vmem:[%s0 + $0x420] sm:$0xff]
  %v147 = vld [vmem:[%s0 + $0x428] sm:$0xff]
  %v148 = vld [vmem:[%s0 + $0x430] sm:$0xff]
  %v149 = vld [vmem:[%s0 + $0x438] sm:$0xff]
  %v150 = vld [vmem:[%s0 + $0x440] sm:$0xff]
  %v151 = vld [vmem:[%s0 + $0x448] sm:$0xff]
  %v152 = vld [vmem:[%s0 + $0x450] sm:$0xff]
  %v153 = vld [vmem:[%s0 + $0x458] sm:$0xff]
  %v154 = vld [vmem:[%s0 + $0x460] sm:$0xff]
  %v155 = vld [vmem:[%s0 + $0x468] sm:$0xff]
  %v156 = vld [vmem:[%s0 + $0x470] sm:$0xff]
  %v157 = vld [vmem:[%s0 + $0x478] sm:$0xff]
  %v158 = vld [vmem:[%s0 + $0x480] sm:$0xff]
  %v159 = vld [vmem:[%s0 + $0x488] sm:$0xff]
  %v160 = vld [vmem:[%s0 + $0x490] sm:$0xff]
  %v161 = vld [vmem:[%s0 + $0x498] sm:$0xff]
  %v162 = vld [vmem:[%s0 + $0x4a0] sm:$0xff]
  %v163 = vld [vmem:[%s0 + $0x4a8] sm:$0xff]
  %v164 = vld [vmem:[%s0 + $0x4b0] sm:$0xff]
  %v165 = vld [vmem:[%s0 + $0x4b8] sm:$0xff]
  %v166 = vld [vmem:[%s0 + $0x4c0] sm:$0xff]
  %v167 = vld [vmem:[%s0 + $0x4c8] sm:$0xff]
  %v168 = vld [vmem:[%s0 + $0x4d0] sm:$0xff]
  %v169 = vld [vmem:[%s0 + $0x4d8] sm:$0xff]
  %v170 = vld [vmem:[%s0 + $0x4e0] sm:$0xff]
  %v171 = vld [vmem:[%s0 + $0x4e8] sm:$0xff]
  %v172 = vld [vmem:[%s0 + $0x4f0] sm:$0xff]
  %v173 = vld [vmem:[%s0 + $0x4f8] sm:$0xff]
  %v174 = vld [vmem:[%s0 + $0x500] sm:$0xff]
  %v175 = vld [vmem:[%s0 + $0x508] sm:$0xff]
  %v176 = vld [vmem:[%s0 + $0x510] sm:$0xff]
  %v177 = vld [vmem:[%s0 + $0x518] sm:$0xff]
  %v178 = vld [vmem:[%s0 + $0x520] sm:$0xff]
  %v179 = vld [vmem:[%s0 + $0x528] sm:$0xff]
  %v180 = vld [vmem:[%s0 + $0x530] sm:$0xff]
  %v181 = vld [vmem:[%s0 + $0x538] sm:$0xff]
  %v182 = vld [vmem:[%s0 + $0x540] sm:$0xff]
  %v183 = vld [vmem:[%s0 + $0x548] sm:$0xff]
  %v184 = vld [vmem:[%s0 + $0x550] sm:$0xff]
  %v185 = vld [vmem:[%s0 + $0x558] sm:$0xff]
  %v186 = vld [vmem:[%s0 + $0x560] sm:$0xff]
  %v187 = vld [vmem:[%s0 + $0x568] sm:$0xff]
  %v188 = vld [vmem:[%s0 + $0x570] sm:$0xff]
  %v189 = vld [vmem:[%s0 + $0x578] sm:$0xff]
  %v190 = vld [vmem:[%s0 + $0x580] sm:$0xff]
  %v191 = vld [vmem:[%s0 + $0x588] sm:$0xff]
  %v192 = vld [vmem:[%s0 + $0x590] sm:$0xff]
  %v193 = vld [vmem:[%s0 + $0x598] sm:$0xff]
  %v194 = vld [vmem:[%s0 + $0x5a0] sm:$0xff]
  %v195 = vld [vmem:[%s0 + $0x5a8] sm:$0xff]
  %v196 = vld [vmem:[%s0 + $0x5b0] sm:$0xff]
  %v197 = vld [vmem:[%s0 + $0x5b8] sm:$0xff]
  %v198 = vld [vmem:[%s0 + $0x5c0] sm:$0xff]
  %v199 = vld [vmem:[%s0 + $0x5c8] sm:$0xff]
  %v200 = vld [vmem:[%s0 + $0x5d0] sm:$0xff]
  %v201 = vld [vmem:[%s0 + $0x5d8] sm:$0xff]
  %v202 = vld [vmem:[%s0 + $0x5e0] sm:$0xff]
  %v203 = vld [vmem:[%s0 + $0x5e8] sm:$0xff]
  %v204 = vld [vmem:[%s0 + $0x5f0] sm:$0xff]
  %v205 = vld [vmem:[%s0 + $0x5f8] sm:$0xff]
  %v206 = vld [vmem:[%s0 + $0x600] sm:$0xff]
  %v207 = vld [vmem:[%s0 + $0x608] sm:$0xff]
  %v208 = vld [vmem:[%s0 + $0x610] sm:$0xff]
  %v209 = vld [vmem:[%s0 + $0x618] sm:$0xff]
  %v210 = vld [vmem:[%s0 + $0x620] sm:$0xff]
  %v211 = vld [vmem:[%s0 + $0x628] sm:$0xff]
  %v212 = vld [vmem:[%s0 + $0x630] sm:$0xff]
  %v213 = vld [vmem:[%s0 + $0x638] sm:$0xff]
  %v214 = vld [vmem:[%s0 + $0x640] sm:$0xff]
  %v215 = vld [vmem:[%s0 + $0x648] sm:$0xff]
  %v216 = vld [vmem:[%s0 + $0x650] sm:$0xff]
  %v217 = vld [vmem:[%s0 + $0x658] sm:$0xff]
  %v218 = vld [vmem:[%s0 + $0x660] sm:$0xff]
  %v219 = vld [vmem:[%s0 + $0x668] sm:$0xff]
  %v220 = vld [vmem:[%s0 + $0x670] sm:$0xff]
  %v221 = vld [vmem:[%s0 + $0x678] sm:$0xff]
  %v222 = vld [vmem:[%s0 + $0x680] sm:$0xff]
  %v223 = vld [vmem:[%s0 + $0x688] sm:$0xff]
  %v224 = vld [vmem:[%s0 + $0x690] sm:$0xff]
  %v225 = vld [vmem:[%s0 + $0x698] sm:$0xff]
  %v226 = vld [vmem:[%s0 + $0x6a0] sm:$0xff]
  %v227 = vld [vmem:[%s0 + $0x6a8] sm:$0xff]
  %v228 = vld [vmem:[%s0 + $0x6b0] sm:$0xff]
  %v229 = vld [vmem:[%s0 + $0x6b8] sm:$0xff]
  %v230 = vld [vmem:[%s0 + $0x6c0] sm:$0xff]
  %v231 = vld [vmem:[%s0 + $0x6c8] sm:$0xff]
  %v232 = vld [vmem:[%s0 + $0x6d0] sm:$0xff]
  %v233 = vld [vmem:[%s0 + $0x6d8] sm:$0xff]
  %v234 = vld [vmem:[%s0 + $0x6e0] sm:$0xff]
  %v235 = vld [vmem:[%s0 + $0x6e8] sm:$0xff]
  %v236 = vld [vmem:[%s0 + $0x6f0] sm:$0xff]
  %v237 = vld [vmem:[%s0 + $0x6f8] sm:$0xff]
  %v238 = vld [vmem:[%s0 + $0x700] sm:$0xff]
  %v239 = vld [vmem:[%s0 + $0x708] sm:$0xff]
  %v240 = vld [vmem:[%s0 + $0x710] sm:$0xff]
  %v241 = vld [vmem:[%s0 + $0x718] sm:$0xff]
  %v242 = vld [vmem:[%s0 + $0x720] sm:$0xff]
  %v243 = vld [vmem:[%s0 + $0x728] sm:$0xff]
  %v244 = vld [vmem:[%s0 + $0x730] sm:$0xff]
  %v245 = vld [vmem:[%s0 + $0x738] sm:$0xff]
  %v246 = vld [vmem:[%s0 + $0x740] sm:$0xff]
  %v247 = vld [vmem:[%s0 + $0x748] sm:$0xff]
  %v248 = vld [vmem:[%s0 + $0x750] sm:$0xff]
  %v249 = vld [vmem:[%s0 + $0x758] sm:$0xff]
  %v250 = vld [vmem:[%s0 + $0x760] sm:$0xff]
  %v251 = vld [vmem:[%s0 + $0x768] sm:$0xff]
  %v252 = vld [vmem:[%s0 + $0x770] sm:$0xff]
  %v253 = vld [vmem:[%s0 + $0x778] sm:$0xff]
  %v254 = vld [vmem:[%s0 + $0x780] sm:$0xff]
  %v255 = vld [vmem:[%s0 + $0x788] sm:$0xff]
  %v256 = vld [vmem:[%s0 + $0x790] sm:$0xff]
  %v257 = vld [vmem:[%s0 + $0x798] sm:$0xff]
  %v258 = vld [vmem:[%s0 + $0x7a0] sm:$0xff]
  %v259 = vld [vmem:[%s0 + $0x7a8] sm:$0xff]
  %v260 = vld [vmem:[%s0 + $0x7b0] sm:$0xff]
  %v261 = vld [vmem:[%s0 + $0x7b8] sm:$0xff]
  %v262 = vld [vmem:[%s0 + $0x7c0] sm:$0xff]
  %v263 = vld [vmem:[%s0 + $0x7c8] sm:$0xff]
  %v264 = vld [vmem:[%s0 + $0x7d0] sm:$0xff]
  %v265 = vld [vmem:[%s0 + $0x7d8] sm:$0xff]
  %v266 = vld [vmem:[%s0 + $0x7e0] sm:$0xff]
  %v267 = vld [vmem:[%s0 + $0x7e8] sm:$0xff]
  %v268 = vld [vmem:[%s0 + $0x7f0] sm:$0xff]
  %v269 = vld [vmem:[%s0 + $0x7f8] sm:$0xff]
  %v270 = vld [vmem:[%s0 + $0x800] sm:$0xff]
  %v271 = vld [vmem:[%s0 + $0x808] sm:$0xff]
  %v272 = vld [vmem:[%s0 + $0x810] sm:$0xff]
  %v273 = vld [vmem:[%s0 + $0x818] sm:$0xff]
  %v274 = vld [vmem:[%s0 + $0x820] sm:$0xff]
  %v275 = vld [vmem:[%s0 + $0x828] sm:$0xff]
  %v276 = vld [vmem:[%s0 + $0x830] sm:$0xff]
  %v277 = vld [vmem:[%s0 + $0x838] sm:$0xff]
  %v278 = vld [vmem:[%s0 + $0x840] sm:$0xff]
  %v279 = vld [vmem:[%s0 + $0x848] sm:$0xff]
  %v280 = vld [vmem:[%s0 + $0x850] sm:$0xff]
  %v281 = vld [vmem:[%s0 + $0x858] sm:$0xff]
  %v282 = vld [vmem:[%s0 + $0x860] sm:$0xff]
  %v283 = vld [vmem:[%s0 + $0x868] sm:$0xff]
  %v284 = vld [vmem:[%s0 + $0x870] sm:$0xff]
  %v285 = vld [vmem:[%s0 + $0x878] sm:$0xff]
  %v286 = vld [vmem:[%s0 + $0x880] sm:$0xff]
  %v287 = vld [vmem:[%s0 + $0x888] sm:$0xff]
  %v288 = vld [vmem:[%s0 + $0x890] sm:$0xff]
  %v289 = vld [vmem:[%s0 + $0x898] sm:$0xff]
  %v290 = vld [vmem:[%s0 + $0x8a0] sm:$0xff]
  %v291 = vld [vmem:[%s0 + $0x8a8] sm:$0xff]
  %v292 = vld [vmem:[%s0 + $0x8b0] sm:$0xff]
  %v293 = vld [vmem:[%s0 + $0x8b8] sm:$0xff]
  %v294 = vld [vmem:[%s0 + $0x8c0] sm:$0xff]
  %v295 = vld [vmem:[%s0 + $0x8c8] sm:$0xff]
  %v296 = vld [vmem:[%s0 + $0x8d0] sm:$0xff]
  %v297 = vld [vmem:[%s0 + $0x8d8] sm:$0xff]
  %v298 = vld [vmem:[%s0 + $0x8e0] sm:$0xff]
  %v299 = vld [vmem:[%s0 + $0x8e8] sm:$0xff]
  %v300 = vld [vmem:[%s0 + $0x8f0] sm:$0xff]
  %v301 = vld [vmem:[%s0 + $0x8f8] sm:$0xff]
  %v302 = vld [vmem:[%s1] sm:$0xff]
  %v303 = vld [vmem:[%s1 + $0x8] sm:$0xff]
  %v304 = vld [vmem:[%s1 + $0x10] sm:$0xff]
  %v305 = vld [vmem:[%s1 + $0x18] sm:$0xff]
  %v306 = vld [vmem:[%s1 + $0x20] sm:$0xff]
  %v307 = vld [vmem:[%s1 + $0x28] sm:$0xff]
  %v308 = vld [vmem:[%s1 + $0x30] sm:$0xff]
  %v309 = vld [vmem:[%s1 + $0x38] sm:$0xff]
  %v310 = vld [vmem:[%s1 + $0x40] sm:$0xff]
  %v311 = vld [vmem:[%s1 + $0x48] sm:$0xff]
  %v312 = vld [vmem:[%s1 + $0x50] sm:$0xff]
  %v313 = vld [vmem:[%s1 + $0x58] sm:$0xff]
  %v314 = vld [vmem:[%s1 + $0x60] sm:$0xff]
  %v315 = vld [vmem:[%s1 + $0x68] sm:$0xff]
  %v316 = vld [vmem:[%s1 + $0x70] sm:$0xff]
  %v317 = vld [vmem:[%s1 + $0x78] sm:$0xff]
  %v318 = vld [vmem:[%s1 + $0x80] sm:$0xff]
  %v319 = vld [vmem:[%s1 + $0x88] sm:$0xff]
  %v320 = vld [vmem:[%s1 + $0x90] sm:$0xff]
  %v321 = vld [vmem:[%s1 + $0x98] sm:$0xff]
  %v322 = vld [vmem:[%s1 + $0xa0] sm:$0xff]
  %v323 = vld [vmem:[%s1 + $0xa8] sm:$0xff]
  %v324 = vld [vmem:[%s1 + $0xb0] sm:$0xff]
  %v325 = vld [vmem:[%s1 + $0xb8] sm:$0xff]
  %v326 = vld [vmem:[%s1 + $0xc0] sm:$0xff]
  %v327 = vld [vmem:[%s1 + $0xc8] sm:$0xff]
  %v328 = vld [vmem:[%s1 + $0xd0] sm:$0xff]
  %v329 = vld [vmem:[%s1 + $0xd8] sm:$0xff]
  %v330 = vld [vmem:[%s1 + $0xe0] sm:$0xff]
  %v331 = vld [vmem:[%s1 + $0xe8] sm:$0xff]
  %v332 = vld [vmem:[%s1 + $0xf0] sm:$0xff]
  %v333 = vld [vmem:[%s1 + $0xf8] sm:$0xff]
  %v334 = vld [vmem:[%s1 + $0x100] sm:$0xff]
  %v335 = vld [vmem:[%s1 + $0x108] sm:$0xff]
  %v336 = vld [vmem:[%s1 + $0x110] sm:$0xff]
  %v337 = vld [vmem:[%s1 + $0x118] sm:$0xff]
  %v338 = vld [vmem:[%s1 + $0x120] sm:$0xff]
  %v339 = vld [vmem:[%s1 + $0x128] sm:$0xff]
  %v340 = vld [vmem:[%s1 + $0x130] sm:$0xff]
  %v341 = vld [vmem:[%s1 + $0x138] sm:$0xff]
  %v342 = vld [vmem:[%s1 + $0x140] sm:$0xff]
  %v343 = vld [vmem:[%s1 + $0x148] sm:$0xff]
  %v344 = vld [vmem:[%s1 + $0x150] sm:$0xff]
  %v345 = vld [vmem:[%s1 + $0x158] sm:$0xff]
  %v346 = vld [vmem:[%s1 + $0x160] sm:$0xff]
  %v347 = vld [vmem:[%s1 + $0x168] sm:$0xff]
  %v348 = vld [vmem:[%s1 + $0x170] sm:$0xff]
  %v349 = vld [vmem:[%s1 + $0x178] sm:$0xff]
  %v350 = vld [vmem:[%s1 + $0x180] sm:$0xff]
  %v351 = vld [vmem:[%s1 + $0x188] sm:$0xff]
  %v352 = vld [vmem:[%s1 + $0x190] sm:$0xff]
  %v353 = vld [vmem:[%s1 + $0x198] sm:$0xff]
  %v354 = vld [vmem:[%s1 + $0x1a0] sm:$0xff]
  %v355 = vld [vmem:[%s1 + $0x1a8] sm:$0xff]
  %v356 = vld [vmem:[%s1 + $0x1b0] sm:$0xff]
  %v357 = vld [vmem:[%s1 + $0x1b8] sm:$0xff]
  %v358 = vld [vmem:[%s1 + $0x1c0] sm:$0xff]
  %v359 = vld [vmem:[%s1 + $0x1c8] sm:$0xff]
  %v360 = vld [vmem:[%s1 + $0x1d0] sm:$0xff]
  %v361 = vld [vmem:[%s1 + $0x1d8] sm:$0xff]
  %v362 = vld [vmem:[%s1 + $0x1e0] sm:$0xff]
  %v363 = vld [vmem:[%s1 + $0x1e8] sm:$0xff]
  %v364 = vld [vmem:[%s1 + $0x1f0] sm:$0xff]
  %v365 = vld [vmem:[%s1 + $0x1f8] sm:$0xff]
  %v366 = vld [vmem:[%s1 + $0x200] sm:$0xff]
  %v367 = vld [vmem:[%s1 + $0x208] sm:$0xff]
  %v368 = vld [vmem:[%s1 + $0x210] sm:$0xff]
  %v369 = vld [vmem:[%s1 + $0x218] sm:$0xff]
  %v370 = vld [vmem:[%s1 + $0x220] sm:$0xff]
  %v371 = vld [vmem:[%s1 + $0x228] sm:$0xff]
  %v372 = vld [vmem:[%s1 + $0x230] sm:$0xff]
  %v373 = vld [vmem:[%s1 + $0x238] sm:$0xff]
  %v374 = vld [vmem:[%s1 + $0x240] sm:$0xff]
  %v375 = vld [vmem:[%s1 + $0x248] sm:$0xff]
  %v376 = vld [vmem:[%s1 + $0x250] sm:$0xff]
  %v377 = vld [vmem:[%s1 + $0x258] sm:$0xff]
  %v378 = vld [vmem:[%s1 + $0x260] sm:$0xff]
  %v379 = vld [vmem:[%s1 + $0x268] sm:$0xff]
  %v380 = vld [vmem:[%s1 + $0x270] sm:$0xff]
  %v381 = vld [vmem:[%s1 + $0x278] sm:$0xff]
  %v382 = vld [vmem:[%s1 + $0x280] sm:$0xff]
  %v383 = vld [vmem:[%s1 + $0x288] sm:$0xff]
  %v384 = vld [vmem:[%s1 + $0x290] sm:$0xff]
  %v385 = vld [vmem:[%s1 + $0x298] sm:$0xff]
  %v386 = vld [vmem:[%s1 + $0x2a0] sm:$0xff]
  %v387 = vld [vmem:[%s1 + $0x2a8] sm:$0xff]
  %v388 = vld [vmem:[%s1 + $0x2b0] sm:$0xff]
  %v389 = vld [vmem:[%s1 + $0x2b8] sm:$0xff]
  %v390 = vld [vmem:[%s1 + $0x2c0] sm:$0xff]
  %v391 = vld [vmem:[%s1 + $0x2c8] sm:$0xff]
  %v392 = vld [vmem:[%s1 + $0x2d0] sm:$0xff]
  %v393 = vld [vmem:[%s1 + $0x2d8] sm:$0xff]
  %v394 = vld [vmem:[%s1 + $0x2e0] sm:$0xff]
  %v395 = vld [vmem:[%s1 + $0x2e8] sm:$0xff]
  %v396 = vld [vmem:[%s1 + $0x2f0] sm:$0xff]
  %v397 = vld [vmem:[%s1 + $0x2f8] sm:$0xff]
  %v398 = vld [vmem:[%s1 + $0x300] sm:$0xff]
  %v399 = vld [vmem:[%s1 + $0x308] sm:$0xff]
  %v400 = vld [vmem:[%s1 + $0x310] sm:$0xff]
  %v401 = vld [vmem:[%s1 + $0x318] sm:$0xff]
  %v402 = vld [vmem:[%s1 + $0x320] sm:$0xff]
  %v403 = vld [vmem:[%s1 + $0x328] sm:$0xff]
  %v404 = vld [vmem:[%s1 + $0x330] sm:$0xff]
  %v405 = vld [vmem:[%s1 + $0x338] sm:$0xff]
  %v406 = vld [vmem:[%s1 + $0x340] sm:$0xff]
  %v407 = vld [vmem:[%s1 + $0x348] sm:$0xff]
  %v408 = vld [vmem:[%s1 + $0x350] sm:$0xff]
  %v409 = vld [vmem:[%s1 + $0x358] sm:$0xff]
  %v410 = vld [vmem:[%s1 + $0x360] sm:$0xff]
  %v411 = vld [vmem:[%s1 + $0x368] sm:$0xff]
  %v412 = vld [vmem:[%s1 + $0x370] sm:$0xff]
  %v413 = vld [vmem:[%s1 + $0x378] sm:$0xff]
  %v414 = vld [vmem:[%s1 + $0x380] sm:$0xff]
  %v415 = vld [vmem:[%s1 + $0x388] sm:$0xff]
  %v416 = vld [vmem:[%s1 + $0x390] sm:$0xff]
  %v417 = vld [vmem:[%s1 + $0x398] sm:$0xff]
  %v418 = vld [vmem:[%s1 + $0x3a0] sm:$0xff]
  %v419 = vld [vmem:[%s1 + $0x3a8] sm:$0xff]
  %v420 = vld [vmem:[%s1 + $0x3b0] sm:$0xff]
  %v421 = vld [vmem:[%s1 + $0x3b8] sm:$0xff]
  %v422 = vld [vmem:[%s1 + $0x3c0] sm:$0xff]
  %v423 = vld [vmem:[%s1 + $0x3c8] sm:$0xff]
  %v424 = vld [vmem:[%s1 + $0x3d0] sm:$0xff]
  %v425 = vld [vmem:[%s1 + $0x3d8] sm:$0xff]
  %v426 = vld [vmem:[%s1 + $0x3e0] sm:$0xff]
  %v427 = vld [vmem:[%s1 + $0x3e8] sm:$0xff]
  %v428 = vld [vmem:[%s1 + $0x3f0] sm:$0xff]
  %v429 = vld [vmem:[%s1 + $0x3f8] sm:$0xff]
  %v430 = vld [vmem:[%s1 + $0x400] sm:$0xff]
  %v431 = vld [vmem:[%s1 + $0x408] sm:$0xff]
  %v432 = vld [vmem:[%s1 + $0x410] sm:$0xff]
  %v433 = vld [vmem:[%s1 + $0x418] sm:$0xff]
  %v434 = vld [vmem:[%s1 + $0x420] sm:$0xff]
  %v435 = vld [vmem:[%s1 + $0x428] sm:$0xff]
  %v436 = vld [vmem:[%s1 + $0x430] sm:$0xff]
  %v437 = vld [vmem:[%s1 + $0x438] sm:$0xff]
  %v438 = vld [vmem:[%s1 + $0x440] sm:$0xff]
  %v439 = vld [vmem:[%s1 + $0x448] sm:$0xff]
  %v440 = vld [vmem:[%s1 + $0x450] sm:$0xff]
  %v441 = vld [vmem:[%s1 + $0x458] sm:$0xff]
  %v442 = vld [vmem:[%s1 + $0x460] sm:$0xff]
  %v443 = vld [vmem:[%s1 + $0x468] sm:$0xff]
  %v444 = vld [vmem:[%s1 + $0x470] sm:$0xff]
  %v445 = vld [vmem:[%s1 + $0x478] sm:$0xff]
  %v446 = vld [vmem:[%s2] sm:$0x1]
  %v448 = vlaneseq
  %v449 = vshrl.u32 %v448, 7
  %v450 = vsub.s32 0, %v449
  %v451 = vrot.slane %v446, %v450
  %453 = vmatprep.subr.mxu0 0.0
  %454 = vmatpush1.msra.mxu0 %v302
  %455 = vmatprep.subr.mxu0 0.0
  %456 = vmatpush1.msra.mxu0 %v303
  %457 = vmatprep.subr.mxu0 0.0
  %458 = vmatpush1.msra.mxu0 %v304
  %459 = vmatprep.subr.mxu0 0.0
  %460 = vmatpush1.msra.mxu0 %v305
  %461 = vmatprep.subr.mxu0 0.0
  %462 = vmatpush1.msra.mxu0 %v306
  %463 = vmatprep.subr.mxu0 0.0
  %464 = vmatpush1.msra.mxu0 %v307
  %465 = vmatprep.subr.mxu0 0.0
  %466 = vmatpush1.msra.mxu0 %v308
  %467 = vmatprep.subr.mxu0 0.0
  %468 = vmatpush1.msra.mxu0 %v309
  %469 = vmatprep.subr.mxu0 0.0
  %470 = vmatpush1.msra.mxu0 %v310
  %471 = vmatprep.subr.mxu0 0.0
  %472 = vmatpush1.msra.mxu0 %v311
  %473 = vmatprep.subr.mxu0 0.0
  %474 = vmatpush1.msra.mxu0 %v312
  %475 = vmatprep.subr.mxu0 0.0
  %476 = vmatpush1.msra.mxu0 %v313
  %477 = vmatprep.subr.mxu0 0.0
  %478 = vmatpush1.msra.mxu0 %v314
  %479 = vmatprep.subr.mxu0 0.0
  %480 = vmatpush1.msra.mxu0 %v315
  %481 = vmatprep.subr.mxu0 0.0
  %482 = vmatpush1.msra.mxu0 %v316
  %483 = vmatprep.subr.mxu0 0.0
  %484 = vmatpush1.msra.mxu0 %v317
  %485 = vmatprep.subr.mxu0 0.0
  %486 = vmatpush1.msra.mxu0 %v318
  %487 = vmatprep.subr.mxu0 0.0
  %488 = vmatpush1.msra.mxu0 %v319
  %489 = vmatprep.subr.mxu0 0.0
  %490 = vmatpush1.msra.mxu0 %v320
  %491 = vmatprep.subr.mxu0 0.0
  %492 = vmatpush1.msra.mxu0 %v321
  %493 = vmatprep.subr.mxu0 0.0
  %494 = vmatpush1.msra.mxu0 %v322
  %495 = vmatprep.subr.mxu0 0.0
  %496 = vmatpush1.msra.mxu0 %v323
  %497 = vmatprep.subr.mxu0 0.0
  %498 = vmatpush1.msra.mxu0 %v324
  %499 = vmatprep.subr.mxu0 0.0
  %500 = vmatpush1.msra.mxu0 %v325
  %501 = vmatprep.subr.mxu0 0.0
  %502 = vmatpush1.msra.mxu0 %v326
  %503 = vmatprep.subr.mxu0 0.0
  %504 = vmatpush1.msra.mxu0 %v327
  %505 = vmatprep.subr.mxu0 0.0
  %506 = vmatpush1.msra.mxu0 %v328
  %507 = vmatprep.subr.mxu0 0.0
  %508 = vmatpush1.msra.mxu0 %v329
  %509 = vmatprep.subr.mxu0 0.0
  %510 = vmatpush1.msra.mxu0 %v330
  %511 = vmatprep.subr.mxu0 0.0
  %512 = vmatpush1.msra.mxu0 %v331
  %513 = vmatprep.subr.mxu0 0.0
  %514 = vmatpush1.msra.mxu0 %v332
  %515 = vmatprep.subr.mxu0 0.0
  %516 = vmatpush1.msra.mxu0 %v333
  %517 = vmatprep.mubr.f32.mxu0 %v15
  %518 = vmatmul.mubr.f32.gmra.mrb[0].mxu0 %v14
  %v519 = vpop.f32.mrb[0].mxu0
  %v520 = vadd.f32 %v451, %v519
  %v521 = vpop.f32.mrb[0].mxu0
  %522 = vmatprep.mubr.f32.mxu0 %v24
  %523 = vmatmul.mubr.f32.gmra.mrb[0].mxu0 %v23
  %v524 = vpop.f32.mrb[0].mxu0
  %v525 = vadd.f32 %v451, %v524
  %v526 = vpop.f32.mrb[0].mxu0
  %527 = vmatprep.mubr.f32.mxu0 %v33
  %528 = vmatmul.mubr.f32.gmra.mrb[0].mxu0 %v32
  %v529 = vpop.f32.mrb[0].mxu0
  %v530 = vadd.f32 %v451, %v529
  %v531 = vpop.f32.mrb[0].mxu0
  %532 = vmatprep.mubr.f32.mxu0 %v42
  %533 = vmatmul.mubr.f32.gmra.mrb[0].mxu0 %v41
  %v534 = vpop.f32.mrb[0].mxu0
  %v535 = vadd.f32 %v451, %v534
  %v536 = vpop.f32.mrb[0].mxu0
  %537 = vmatprep.mubr.f32.mxu0 %v51
  %538 = vmatmul.mubr.f32.gmra.mrb[0].mxu0 %v50
  %v539 = vpop.f32.mrb[0].mxu0
  %v540 = vadd.f32 %v451, %v539
  %v541 = vpop.f32.mrb[0].mxu0
  %542 = vmatprep.mubr.f32.mxu0 %v60
  %543 = vmatmul.mubr.f32.gmra.mrb[0].mxu0 %v59
  %v544 = vpop.f32.mrb[0].mxu0
  %v545 = vadd.f32 %v451, %v544
  %v546 = vpop.f32.mrb[0].mxu0
  %547 = vmatprep.mubr.f32.mxu0 %v69
  %548 = vmatmul.mubr.f32.gmra.mrb[0].mxu0 %v68
  %v549 = vpop.f32.mrb[0].mxu0
  %v550 = vadd.f32 %v451, %v549
  %v551 = vpop.f32.mrb[0].mxu0
  %552 = vmatprep.mubr.f32.mxu0 %v78
  %553 = vmatmul.mubr.f32.gmra.mrb[0].mxu0 %v77
  %v554 = vpop.f32.mrb[0].mxu0
  %v555 = vadd.f32 %v451, %v554
  %v556 = vpop.f32.mrb[0].mxu0
  %557 = vmatprep.mubr.f32.mxu0 %v87
  %558 = vmatmul.mubr.f32.gmra.mrb[0].mxu0 %v86
  %v559 = vpop.f32.mrb[0].mxu0
  %v560 = vadd.f32 %v451, %v559
  %v561 = vpop.f32.mrb[0].mxu0
  %562 = vmatprep.mubr.f32.mxu0 %v96
  %563 = vmatmul.mubr.f32.gmra.mrb[0].mxu0 %v95
  %v564 = vpop.f32.mrb[0].mxu0
  %v565 = vadd.f32 %v451, %v564
  %v566 = vpop.f32.mrb[0].mxu0
  %567 = vmatprep.mubr.f32.mxu0 %v105
  %568 = vmatmul.mubr.f32.gmra.mrb[0].mxu0 %v104
  %v569 = vpop.f32.mrb[0].mxu0
  %v570 = vadd.f32 %v451, %v569
  %v571 = vpop.f32.mrb[0].mxu0
  %572 = vmatprep.mubr.f32.mxu0 %v114
  %573 = vmatmul.mubr.f32.gmra.mrb[0].mxu0 %v113
  %v574 = vpop.f32.mrb[0].mxu0
  %v575 = vadd.f32 %v451, %v574
  %v576 = vpop.f32.mrb[0].mxu0
  %577 = vmatprep.mubr.f32.mxu0 %v123
  %578 = vmatmul.mubr.f32.gmra.mrb[0].mxu0 %v122
  %v579 = vpop.f32.mrb[0].mxu0
  %v580 = vadd.f32 %v451, %v579
  %v581 = vpop.f32.mrb[0].mxu0
  %582 = vmatprep.mubr.f32.mxu0 %v132
  %583 = vmatmul.mubr.f32.gmra.mrb[0].mxu0 %v131
  %v584 = vpop.f32.mrb[0].mxu0
  %v585 = vadd.f32 %v451, %v584
  %v586 = vpop.f32.mrb[0].mxu0
  %587 = vmatprep.mubr.f32.mxu0 %v141
  %588 = vmatmul.mubr.f32.gmra.mrb[0].mxu0 %v140
  %v589 = vpop.f32.mrb[0].mxu0
  %v590 = vadd.f32 %v451, %v589
  %v591 = vpop.f32.mrb[0].mxu0
  %592 = vmatprep.mubr.f32.mxu0 %v150
  %593 = vmatmul.mubr.f32.gmra.mrb[0].mxu0 %v149
  %v594 = vpop.f32.mrb[0].mxu0
  %v595 = vadd.f32 %v451, %v594
  %v596 = vpop.f32.mrb[0].mxu0
  %597 = vmatprep.mubr.f32.mxu0 %v159
  %598 = vmatmul.mubr.f32.gmra.mrb[0].mxu0 %v158
  %v599 = vpop.f32.mrb[0].mxu0
  %v600 = vadd.f32 %v451, %v599
  %v601 = vpop.f32.mrb[0].mxu0
  %602 = vmatprep.mubr.f32.mxu0 %v168
  %603 = vmatmul.mubr.f32.gmra.mrb[0].mxu0 %v167
  %v604 = vpop.f32.mrb[0].mxu0
  %v605 = vadd.f32 %v451, %v604
  %v606 = vpop.f32.mrb[0].mxu0
  %607 = vmatprep.mubr.f32.mxu0 %v177
  %608 = vmatmul.mubr.f32.gmra.mrb[0].mxu0 %v176
  %v609 = vpop.f32.mrb[0].mxu0
  %v610 = vadd.f32 %v451, %v609
  %v611 = vpop.f32.mrb[0].mxu0
  %612 = vmatprep.mubr.f32.mxu0 %v186
  %613 = vmatmul.mubr.f32.gmra.mrb[0].mxu0 %v185
  %v614 = vpop.f32.mrb[0].mxu0
  %v615 = vadd.f32 %v451, %v614
  %v616 = vpop.f32.mrb[0].mxu0
  %617 = vmatprep.mubr.f32.mxu0 %v195
  %618 = vmatmul.mubr.f32.gmra.mrb[0].mxu0 %v194
  %v619 = vpop.f32.mrb[0].mxu0
  %v620 = vadd.f32 %v451, %v619
  %v621 = vpop.f32.mrb[0].mxu0
  %622 = vmatprep.mubr.f32.mxu0 %v204
  %623 = vmatmul.mubr.f32.gmra.mrb[0].mxu0 %v203
  %v624 = vpop.f32.mrb[0].mxu0
  %v625 = vadd.f32 %v451, %v624
  %v626 = vpop.f32.mrb[0].mxu0
  %627 = vmatprep.mubr.f32.mxu0 %v213
  %628 = vmatmul.mubr.f32.gmra.mrb[0].mxu0 %v212
  %v629 = vpop.f32.mrb[0].mxu0
  %v630 = vadd.f32 %v451, %v629
  %v631 = vpop.f32.mrb[0].mxu0
  %632 = vmatprep.mubr.f32.mxu0 %v222
  %633 = vmatmul.mubr.f32.gmra.mrb[0].mxu0 %v221
  %v634 = vpop.f32.mrb[0].mxu0
  %v635 = vadd.f32 %v451, %v634
  %v636 = vpop.f32.mrb[0].mxu0
  %637 = vmatprep.mubr.f32.mxu0 %v231
  %638 = vmatmul.mubr.f32.gmra.mrb[0].mxu0 %v230
  %v639 = vpop.f32.mrb[0].mxu0
  %v640 = vadd.f32 %v451, %v639
  %v641 = vpop.f32.mrb[0].mxu0
  %642 = vmatprep.mubr.f32.mxu0 %v240
  %643 = vmatmul.mubr.f32.gmra.mrb[0].mxu0 %v239
  %v644 = vpop.f32.mrb[0].mxu0
  %v645 = vadd.f32 %v451, %v644
  %v646 = vpop.f32.mrb[0].mxu0
  %647 = vmatprep.mubr.f32.mxu0 %v249
  %648 = vmatmul.mubr.f32.gmra.mrb[0].mxu0 %v248
  %v649 = vpop.f32.mrb[0].mxu0
  %v650 = vadd.f32 %v451, %v649
  %v651 = vpop.f32.mrb[0].mxu0
  %652 = vmatprep.mubr.f32.mxu0 %v258
  %653 = vmatmul.mubr.f32.gmra.mrb[0].mxu0 %v257
  %v654 = vpop.f32.mrb[0].mxu0
  %v655 = vadd.f32 %v451, %v654
  %v656 = vpop.f32.mrb[0].mxu0
  %657 = vmatprep.mubr.f32.mxu0 %v267
  %658 = vmatmul.mubr.f32.gmra.mrb[0].mxu0 %v266
  %v659 = vpop.f32.mrb[0].mxu0
  %v660 = vadd.f32 %v451, %v659
  %v661 = vpop.f32.mrb[0].mxu0
  %662 = vmatprep.mubr.f32.mxu0 %v276
  %663 = vmatmul.mubr.f32.gmra.mrb[0].mxu0 %v275
  %v664 = vpop.f32.mrb[0].mxu0
  %v665 = vadd.f32 %v451, %v664
  %v666 = vpop.f32.mrb[0].mxu0
  %667 = vmatprep.mubr.f32.mxu0 %v285
  %668 = vmatmul.mubr.f32.gmra.mrb[0].mxu0 %v284
  %v669 = vpop.f32.mrb[0].mxu0
  %v670 = vadd.f32 %v451, %v669
  %v671 = vpop.f32.mrb[0].mxu0
  %672 = vmatprep.mubr.f32.mxu0 %v294
  %673 = vmatmul.mubr.f32.gmra.mrb[0].mxu0 %v293
  %v674 = vpop.f32.mrb[0].mxu0
  %v675 = vadd.f32 %v451, %v674
  %v676 = vpop.f32.mrb[0].mxu0
  %677 = vdwg.mxu0
  %678 = vmatprep.subr.mxu0 0.0
  %679 = vmatpush1.msra.mxu0 %v334
  %680 = vmatprep.subr.mxu0 0.0
  %681 = vmatpush1.msra.mxu0 %v335
  %682 = vmatprep.subr.mxu0 0.0
  %683 = vmatpush1.msra.mxu0 %v336
  %684 = vmatprep.subr.mxu0 0.0
  %685 = vmatpush1.msra.mxu0 %v337
  %686 = vmatprep.subr.mxu0 0.0
  %687 = vmatpush1.msra.mxu0 %v338
  %688 = vmatprep.subr.mxu0 0.0
  %689 = vmatpush1.msra.mxu0 %v339
  %690 = vmatprep.subr.mxu0 0.0
  %691 = vmatpush1.msra.mxu0 %v340
  %692 = vmatprep.subr.mxu0 0.0
  %693 = vmatpush1.msra.mxu0 %v341
  %694 = vmatprep.subr.mxu0 0.0
  %695 = vmatpush1.msra.mxu0 %v342
  %696 = vmatprep.subr.mxu0 0.0
  %697 = vmatpush1.msra.mxu0 %v343
  %698 = vmatprep.subr.mxu0 0.0
  %699 = vmatpush1.msra.mxu0 %v344
  %700 = vmatprep.subr.mxu0 0.0
  %701 = vmatpush1.msra.mxu0 %v345
  %702 = vmatprep.subr.mxu0 0.0
  %703 = vmatpush1.msra.mxu0 %v346
  %704 = vmatprep.subr.mxu0 0.0
  %705 = vmatpush1.msra.mxu0 %v347
  %706 = vmatprep.subr.mxu0 0.0
  %707 = vmatpush1.msra.mxu0 %v348
  %708 = vmatprep.subr.mxu0 0.0
  %709 = vmatpush1.msra.mxu0 %v349
  %710 = vmatprep.subr.mxu0 0.0
  %711 = vmatpush1.msra.mxu0 %v350
  %712 = vmatprep.subr.mxu0 0.0
  %713 = vmatpush1.msra.mxu0 %v351
  %714 = vmatprep.subr.mxu0 0.0
  %715 = vmatpush1.msra.mxu0 %v352
  %716 = vmatprep.subr.mxu0 0.0
  %717 = vmatpush1.msra.mxu0 %v353
  %718 = vmatprep.subr.mxu0 0.0
  %719 = vmatpush1.msra.mxu0 %v354
  %720 = vmatprep.subr.mxu0 0.0
  %721 = vmatpush1.msra.mxu0 %v355
  %722 = vmatprep.subr.mxu0 0.0
  %723 = vmatpush1.msra.mxu0 %v356
  %724 = vmatprep.subr.mxu0 0.0
  %725 = vmatpush1.msra.mxu0 %v357
  %726 = vmatprep.subr.mxu0 0.0
  %727 = vmatpush1.msra.mxu0 %v358
  %728 = vmatprep.subr.mxu0 0.0
  %729 = vmatpush1.msra.mxu0 %v359
  %730 = vmatprep.subr.mxu0 0.0
  %731 = vmatpush1.msra.mxu0 %v360
  %732 = vmatprep.subr.mxu0 0.0
  %733 = vmatpush1.msra.mxu0 %v361
  %734 = vmatprep.subr.mxu0 0.0
  %735 = vmatpush1.msra.mxu0 %v362
  %736 = vmatprep.subr.mxu0 0.0
  %737 = vmatpush1.msra.mxu0 %v363
  %738 = vmatprep.subr.mxu0 0.0
  %739 = vmatpush1.msra.mxu0 %v364
  %740 = vmatprep.subr.mxu0 0.0
  %741 = vmatpush1.msra.mxu0 %v365
  %742 = vmatprep.mubr.f32.mxu0 %v17
  %743 = vmatmul.mubr.f32.gmra.mrb[0].mxu0 %v16
  %v744 = vpop.f32.mrb[0].mxu0
  %v745 = vadd.f32 %v520, %v744
  %v746 = vpop.f32.mrb[0].mxu0
  %747 = vmatprep.mubr.f32.mxu0 %v26
  %748 = vmatmul.mubr.f32.gmra.mrb[0].mxu0 %v25
  %v749 = vpop.f32.mrb[0].mxu0
  %v750 = vadd.f32 %v525, %v749
  %v751 = vpop.f32.mrb[0].mxu0
  %752 = vmatprep.mubr.f32.mxu0 %v35
  %753 = vmatmul.mubr.f32.gmra.mrb[0].mxu0 %v34
  %v754 = vpop.f32.mrb[0].mxu0
  %v755 = vadd.f32 %v530, %v754
  %v756 = vpop.f32.mrb[0].mxu0
  %757 = vmatprep.mubr.f32.mxu0 %v44
  %758 = vmatmul.mubr.f32.gmra.mrb[0].mxu0 %v43
  %v759 = vpop.f32.mrb[0].mxu0
  %v760 = vadd.f32 %v535, %v759
  %v761 = vpop.f32.mrb[0].mxu0
  %762 = vmatprep.mubr.f32.mxu0 %v53
  %763 = vmatmul.mubr.f32.gmra.mrb[0].mxu0 %v52
  %v764 = vpop.f32.mrb[0].mxu0
  %v765 = vadd.f32 %v540, %v764
  %v766 = vpop.f32.mrb[0].mxu0
  %767 = vmatprep.mubr.f32.mxu0 %v62
  %768 = vmatmul.mubr.f32.gmra.mrb[0].mxu0 %v61
  %v769 = vpop.f32.mrb[0].mxu0
  %v770 = vadd.f32 %v545, %v769
  %v771 = vpop.f32.mrb[0].mxu0
  %772 = vmatprep.mubr.f32.mxu0 %v71
  %773 = vmatmul.mubr.f32.gmra.mrb[0].mxu0 %v70
  %v774 = vpop.f32.mrb[0].mxu0
  %v775 = vadd.f32 %v550, %v774
  %v776 = vpop.f32.mrb[0].mxu0
  %777 = vmatprep.mubr.f32.mxu0 %v80
  %778 = vmatmul.mubr.f32.gmra.mrb[0].mxu0 %v79
  %v779 = vpop.f32.mrb[0].mxu0
  %v780 = vadd.f32 %v555, %v779
  %v781 = vpop.f32.mrb[0].mxu0
  %782 = vmatprep.mubr.f32.mxu0 %v89
  %783 = vmatmul.mubr.f32.gmra.mrb[0].mxu0 %v88
  %v784 = vpop.f32.mrb[0].mxu0
  %v785 = vadd.f32 %v560, %v784
  %v786 = vpop.f32.mrb[0].mxu0
  %787 = vmatprep.mubr.f32.mxu0 %v98
  %788 = vmatmul.mubr.f32.gmra.mrb[0].mxu0 %v97
  %v789 = vpop.f32.mrb[0].mxu0
  %v790 = vadd.f32 %v565, %v789
  %v791 = vpop.f32.mrb[0].mxu0
  %792 = vmatprep.mubr.f32.mxu0 %v107
  %793 = vmatmul.mubr.f32.gmra.mrb[0].mxu0 %v106
  %v794 = vpop.f32.mrb[0].mxu0
  %v795 = vadd.f32 %v570, %v794
  %v796 = vpop.f32.mrb[0].mxu0
  %797 = vmatprep.mubr.f32.mxu0 %v116
  %798 = vmatmul.mubr.f32.gmra.mrb[0].mxu0 %v115
  %v799 = vpop.f32.mrb[0].mxu0
  %v800 = vadd.f32 %v575, %v799
  %v801 = vpop.f32.mrb[0].mxu0
  %802 = vmatprep.mubr.f32.mxu0 %v125
  %803 = vmatmul.mubr.f32.gmra.mrb[0].mxu0 %v124
  %v804 = vpop.f32.mrb[0].mxu0
  %v805 = vadd.f32 %v580, %v804
  %v806 = vpop.f32.mrb[0].mxu0
  %807 = vmatprep.mubr.f32.mxu0 %v134
  %808 = vmatmul.mubr.f32.gmra.mrb[0].mxu0 %v133
  %v809 = vpop.f32.mrb[0].mxu0
  %v810 = vadd.f32 %v585, %v809
  %v811 = vpop.f32.mrb[0].mxu0
  %812 = vmatprep.mubr.f32.mxu0 %v143
  %813 = vmatmul.mubr.f32.gmra.mrb[0].mxu0 %v142
  %v814 = vpop.f32.mrb[0].mxu0
  %v815 = vadd.f32 %v590, %v814
  %v816 = vpop.f32.mrb[0].mxu0
  %817 = vmatprep.mubr.f32.mxu0 %v152
  %818 = vmatmul.mubr.f32.gmra.mrb[0].mxu0 %v151
  %v819 = vpop.f32.mrb[0].mxu0
  %v820 = vadd.f32 %v595, %v819
  %v821 = vpop.f32.mrb[0].mxu0
  %822 = vmatprep.mubr.f32.mxu0 %v161
  %823 = vmatmul.mubr.f32.gmra.mrb[0].mxu0 %v160
  %v824 = vpop.f32.mrb[0].mxu0
  %v825 = vadd.f32 %v600, %v824
  %v826 = vpop.f32.mrb[0].mxu0
  %827 = vmatprep.mubr.f32.mxu0 %v170
  %828 = vmatmul.mubr.f32.gmra.mrb[0].mxu0 %v169
  %v829 = vpop.f32.mrb[0].mxu0
  %v830 = vadd.f32 %v605, %v829
  %v831 = vpop.f32.mrb[0].mxu0
  %832 = vmatprep.mubr.f32.mxu0 %v179
  %833 = vmatmul.mubr.f32.gmra.mrb[0].mxu0 %v178
  %v834 = vpop.f32.mrb[0].mxu0
  %v835 = vadd.f32 %v610, %v834
  %v836 = vpop.f32.mrb[0].mxu0
  %837 = vmatprep.mubr.f32.mxu0 %v188
  %838 = vmatmul.mubr.f32.gmra.mrb[0].mxu0 %v187
  %v839 = vpop.f32.mrb[0].mxu0
  %v840 = vadd.f32 %v615, %v839
  %v841 = vpop.f32.mrb[0].mxu0
  %842 = vmatprep.mubr.f32.mxu0 %v197
  %843 = vmatmul.mubr.f32.gmra.mrb[0].mxu0 %v196
  %v844 = vpop.f32.mrb[0].mxu0
  %v845 = vadd.f32 %v620, %v844
  %v846 = vpop.f32.mrb[0].mxu0
  %847 = vmatprep.mubr.f32.mxu0 %v206
  %848 = vmatmul.mubr.f32.gmra.mrb[0].mxu0 %v205
  %v849 = vpop.f32.mrb[0].mxu0
  %v850 = vadd.f32 %v625, %v849
  %v851 = vpop.f32.mrb[0].mxu0
  %852 = vmatprep.mubr.f32.mxu0 %v215
  %853 = vmatmul.mubr.f32.gmra.mrb[0].mxu0 %v214
  %v854 = vpop.f32.mrb[0].mxu0
  %v855 = vadd.f32 %v630, %v854
  %v856 = vpop.f32.mrb[0].mxu0
  %857 = vmatprep.mubr.f32.mxu0 %v224
  %858 = vmatmul.mubr.f32.gmra.mrb[0].mxu0 %v223
  %v859 = vpop.f32.mrb[0].mxu0
  %v860 = vadd.f32 %v635, %v859
  %v861 = vpop.f32.mrb[0].mxu0
  %862 = vmatprep.mubr.f32.mxu0 %v233
  %863 = vmatmul.mubr.f32.gmra.mrb[0].mxu0 %v232
  %v864 = vpop.f32.mrb[0].mxu0
  %v865 = vadd.f32 %v640, %v864
  %v866 = vpop.f32.mrb[0].mxu0
  %867 = vmatprep.mubr.f32.mxu0 %v242
  %868 = vmatmul.mubr.f32.gmra.mrb[0].mxu0 %v241
  %v869 = vpop.f32.mrb[0].mxu0
  %v870 = vadd.f32 %v645, %v869
  %v871 = vpop.f32.mrb[0].mxu0
  %872 = vmatprep.mubr.f32.mxu0 %v251
  %873 = vmatmul.mubr.f32.gmra.mrb[0].mxu0 %v250
  %v874 = vpop.f32.mrb[0].mxu0
  %v875 = vadd.f32 %v650, %v874
  %v876 = vpop.f32.mrb[0].mxu0
  %877 = vmatprep.mubr.f32.mxu0 %v260
  %878 = vmatmul.mubr.f32.gmra.mrb[0].mxu0 %v259
  %v879 = vpop.f32.mrb[0].mxu0
  %v880 = vadd.f32 %v655, %v879
  %v881 = vpop.f32.mrb[0].mxu0
  %882 = vmatprep.mubr.f32.mxu0 %v269
  %883 = vmatmul.mubr.f32.gmra.mrb[0].mxu0 %v268
  %v884 = vpop.f32.mrb[0].mxu0
  %v885 = vadd.f32 %v660, %v884
  %v886 = vpop.f32.mrb[0].mxu0
  %887 = vmatprep.mubr.f32.mxu0 %v278
  %888 = vmatmul.mubr.f32.gmra.mrb[0].mxu0 %v277
  %v889 = vpop.f32.mrb[0].mxu0
  %v890 = vadd.f32 %v665, %v889
  %v891 = vpop.f32.mrb[0].mxu0
  %892 = vmatprep.mubr.f32.mxu0 %v287
  %893 = vmatmul.mubr.f32.gmra.mrb[0].mxu0 %v286
  %v894 = vpop.f32.mrb[0].mxu0
  %v895 = vadd.f32 %v670, %v894
  %v896 = vpop.f32.mrb[0].mxu0
  %897 = vmatprep.mubr.f32.mxu0 %v296
  %898 = vmatmul.mubr.f32.gmra.mrb[0].mxu0 %v295
  %v899 = vpop.f32.mrb[0].mxu0
  %v900 = vadd.f32 %v675, %v899
  %v901 = vpop.f32.mrb[0].mxu0
  %902 = vdwg.mxu0
  %903 = vmatprep.subr.mxu0 0.0
  %904 = vmatpush1.msra.mxu0 %v366
  %905 = vmatprep.subr.mxu0 0.0
  %906 = vmatpush1.msra.mxu0 %v367
  %907 = vmatprep.subr.mxu0 0.0
  %908 = vmatpush1.msra.mxu0 %v368
  %909 = vmatprep.subr.mxu0 0.0
  %910 = vmatpush1.msra.mxu0 %v369
  %911 = vmatprep.subr.mxu0 0.0
  %912 = vmatpush1.msra.mxu0 %v370
  %913 = vmatprep.subr.mxu0 0.0
  %914 = vmatpush1.msra.mxu0 %v371
  %915 = vmatprep.subr.mxu0 0.0
  %916 = vmatpush1.msra.mxu0 %v372
  %917 = vmatprep.subr.mxu0 0.0
  %918 = vmatpush1.msra.mxu0 %v373
  %919 = vmatprep.subr.mxu0 0.0
  %920 = vmatpush1.msra.mxu0 %v374
  %921 = vmatprep.subr.mxu0 0.0
  %922 = vmatpush1.msra.mxu0 %v375
  %923 = vmatprep.subr.mxu0 0.0
  %924 = vmatpush1.msra.mxu0 %v376
  %925 = vmatprep.subr.mxu0 0.0
  %926 = vmatpush1.msra.mxu0 %v377
  %927 = vmatprep.subr.mxu0 0.0
  %928 = vmatpush1.msra.mxu0 %v378
  %929 = vmatprep.subr.mxu0 0.0
  %930 = vmatpush1.msra.mxu0 %v379
  %931 = vmatprep.subr.mxu0 0.0
  %932 = vmatpush1.msra.mxu0 %v380
  %933 = vmatprep.subr.mxu0 0.0
  %934 = vmatpush1.msra.mxu0 %v381
  %935 = vmatprep.subr.mxu0 0.0
  %936 = vmatpush1.msra.mxu0 %v382
  %937 = vmatprep.subr.mxu0 0.0
  %938 = vmatpush1.msra.mxu0 %v383
  %939 = vmatprep.subr.mxu0 0.0
  %940 = vmatpush1.msra.mxu0 %v384
  %941 = vmatprep.subr.mxu0 0.0
  %942 = vmatpush1.msra.mxu0 %v385
  %943 = vmatprep.subr.mxu0 0.0
  %944 = vmatpush1.msra.mxu0 %v386
  %945 = vmatprep.subr.mxu0 0.0
  %946 = vmatpush1.msra.mxu0 %v387
  %947 = vmatprep.subr.mxu0 0.0
  %948 = vmatpush1.msra.mxu0 %v388
  %949 = vmatprep.subr.mxu0 0.0
  %950 = vmatpush1.msra.mxu0 %v389
  %951 = vmatprep.subr.mxu0 0.0
  %952 = vmatpush1.msra.mxu0 %v390
  %953 = vmatprep.subr.mxu0 0.0
  %954 = vmatpush1.msra.mxu0 %v391
  %955 = vmatprep.subr.mxu0 0.0
  %956 = vmatpush1.msra.mxu0 %v392
  %957 = vmatprep.subr.mxu0 0.0
  %958 = vmatpush1.msra.mxu0 %v393
  %959 = vmatprep.subr.mxu0 0.0
  %960 = vmatpush1.msra.mxu0 %v394
  %961 = vmatprep.subr.mxu0 0.0
  %962 = vmatpush1.msra.mxu0 %v395
  %963 = vmatprep.subr.mxu0 0.0
  %964 = vmatpush1.msra.mxu0 %v396
  %965 = vmatprep.subr.mxu0 0.0
  %966 = vmatpush1.msra.mxu0 %v397
  %967 = vmatprep.mubr.f32.mxu0 %v19
  %968 = vmatmul.mubr.f32.gmra.mrb[0].mxu0 %v18
  %v969 = vpop.f32.mrb[0].mxu0
  %v970 = vadd.f32 %v745, %v969
  %v971 = vpop.f32.mrb[0].mxu0
  %972 = vmatprep.mubr.f32.mxu0 %v28
  %973 = vmatmul.mubr.f32.gmra.mrb[0].mxu0 %v27
  %v974 = vpop.f32.mrb[0].mxu0
  %v975 = vadd.f32 %v750, %v974
  %v976 = vpop.f32.mrb[0].mxu0
  %977 = vmatprep.mubr.f32.mxu0 %v37
  %978 = vmatmul.mubr.f32.gmra.mrb[0].mxu0 %v36
  %v979 = vpop.f32.mrb[0].mxu0
  %v980 = vadd.f32 %v755, %v979
  %v981 = vpop.f32.mrb[0].mxu0
  %982 = vmatprep.mubr.f32.mxu0 %v46
  %983 = vmatmul.mubr.f32.gmra.mrb[0].mxu0 %v45
  %v984 = vpop.f32.mrb[0].mxu0
  %v985 = vadd.f32 %v760, %v984
  %v986 = vpop.f32.mrb[0].mxu0
  %987 = vmatprep.mubr.f32.mxu0 %v55
  %988 = vmatmul.mubr.f32.gmra.mrb[0].mxu0 %v54
  %v989 = vpop.f32.mrb[0].mxu0
  %v990 = vadd.f32 %v765, %v989
  %v991 = vpop.f32.mrb[0].mxu0
  %992 = vmatprep.mubr.f32.mxu0 %v64
  %993 = vmatmul.mubr.f32.gmra.mrb[0].mxu0 %v63
  %v994 = vpop.f32.mrb[0].mxu0
  %v995 = vadd.f32 %v770, %v994
  %v996 = vpop.f32.mrb[0].mxu0
  %997 = vmatprep.mubr.f32.mxu0 %v73
  %998 = vmatmul.mubr.f32.gmra.mrb[0].mxu0 %v72
  %v999 = vpop.f32.mrb[0].mxu0
  %v1000 = vadd.f32 %v775, %v999
  %v1001 = vpop.f32.mrb[0].mxu0
  %1002 = vmatprep.mubr.f32.mxu0 %v82
  %1003 = vmatmul.mubr.f32.gmra.mrb[0].mxu0 %v81
  %v1004 = vpop.f32.mrb[0].mxu0
  %v1005 = vadd.f32 %v780, %v1004
  %v1006 = vpop.f32.mrb[0].mxu0
  %1007 = vmatprep.mubr.f32.mxu0 %v91
  %1008 = vmatmul.mubr.f32.gmra.mrb[0].mxu0 %v90
  %v1009 = vpop.f32.mrb[0].mxu0
  %v1010 = vadd.f32 %v785, %v1009
  %v1011 = vpop.f32.mrb[0].mxu0
  %1012 = vmatprep.mubr.f32.mxu0 %v100
  %1013 = vmatmul.mubr.f32.gmra.mrb[0].mxu0 %v99
  %v1014 = vpop.f32.mrb[0].mxu0
  %v1015 = vadd.f32 %v790, %v1014
  %v1016 = vpop.f32.mrb[0].mxu0
  %1017 = vmatprep.mubr.f32.mxu0 %v109
  %1018 = vmatmul.mubr.f32.gmra.mrb[0].mxu0 %v108
  %v1019 = vpop.f32.mrb[0].mxu0
  %v1020 = vadd.f32 %v795, %v1019
  %v1021 = vpop.f32.mrb[0].mxu0
  %1022 = vmatprep.mubr.f32.mxu0 %v118
  %1023 = vmatmul.mubr.f32.gmra.mrb[0].mxu0 %v117
  %v1024 = vpop.f32.mrb[0].mxu0
  %v1025 = vadd.f32 %v800, %v1024
  %v1026 = vpop.f32.mrb[0].mxu0
  %1027 = vmatprep.mubr.f32.mxu0 %v127
  %1028 = vmatmul.mubr.f32.gmra.mrb[0].mxu0 %v126
  %v1029 = vpop.f32.mrb[0].mxu0
  %v1030 = vadd.f32 %v805, %v1029
  %v1031 = vpop.f32.mrb[0].mxu0
  %1032 = vmatprep.mubr.f32.mxu0 %v136
  %1033 = vmatmul.mubr.f32.gmra.mrb[0].mxu0 %v135
  %v1034 = vpop.f32.mrb[0].mxu0
  %v1035 = vadd.f32 %v810, %v1034
  %v1036 = vpop.f32.mrb[0].mxu0
  %1037 = vmatprep.mubr.f32.mxu0 %v145
  %1038 = vmatmul.mubr.f32.gmra.mrb[0].mxu0 %v144
  %v1039 = vpop.f32.mrb[0].mxu0
  %v1040 = vadd.f32 %v815, %v1039
  %v1041 = vpop.f32.mrb[0].mxu0
  %1042 = vmatprep.mubr.f32.mxu0 %v154
  %1043 = vmatmul.mubr.f32.gmra.mrb[0].mxu0 %v153
  %v1044 = vpop.f32.mrb[0].mxu0
  %v1045 = vadd.f32 %v820, %v1044
  %v1046 = vpop.f32.mrb[0].mxu0
  %1047 = vmatprep.mubr.f32.mxu0 %v163
  %1048 = vmatmul.mubr.f32.gmra.mrb[0].mxu0 %v162
  %v1049 = vpop.f32.mrb[0].mxu0
  %v1050 = vadd.f32 %v825, %v1049
  %v1051 = vpop.f32.mrb[0].mxu0
  %1052 = vmatprep.mubr.f32.mxu0 %v172
  %1053 = vmatmul.mubr.f32.gmra.mrb[0].mxu0 %v171
  %v1054 = vpop.f32.mrb[0].mxu0
  %v1055 = vadd.f32 %v830, %v1054
  %v1056 = vpop.f32.mrb[0].mxu0
  %1057 = vmatprep.mubr.f32.mxu0 %v181
  %1058 = vmatmul.mubr.f32.gmra.mrb[0].mxu0 %v180
  %v1059 = vpop.f32.mrb[0].mxu0
  %v1060 = vadd.f32 %v835, %v1059
  %v1061 = vpop.f32.mrb[0].mxu0
  %1062 = vmatprep.mubr.f32.mxu0 %v190
  %1063 = vmatmul.mubr.f32.gmra.mrb[0].mxu0 %v189
  %v1064 = vpop.f32.mrb[0].mxu0
  %v1065 = vadd.f32 %v840, %v1064
  %v1066 = vpop.f32.mrb[0].mxu0
  %1067 = vmatprep.mubr.f32.mxu0 %v199
  %1068 = vmatmul.mubr.f32.gmra.mrb[0].mxu0 %v198
  %v1069 = vpop.f32.mrb[0].mxu0
  %v1070 = vadd.f32 %v845, %v1069
  %v1071 = vpop.f32.mrb[0].mxu0
  %1072 = vmatprep.mubr.f32.mxu0 %v208
  %1073 = vmatmul.mubr.f32.gmra.mrb[0].mxu0 %v207
  %v1074 = vpop.f32.mrb[0].mxu0
  %v1075 = vadd.f32 %v850, %v1074
  %v1076 = vpop.f32.mrb[0].mxu0
  %1077 = vmatprep.mubr.f32.mxu0 %v217
  %1078 = vmatmul.mubr.f32.gmra.mrb[0].mxu0 %v216
  %v1079 = vpop.f32.mrb[0].mxu0
  %v1080 = vadd.f32 %v855, %v1079
  %v1081 = vpop.f32.mrb[0].mxu0
  %1082 = vmatprep.mubr.f32.mxu0 %v226
  %1083 = vmatmul.mubr.f32.gmra.mrb[0].mxu0 %v225
  %v1084 = vpop.f32.mrb[0].mxu0
  %v1085 = vadd.f32 %v860, %v1084
  %v1086 = vpop.f32.mrb[0].mxu0
  %1087 = vmatprep.mubr.f32.mxu0 %v235
  %1088 = vmatmul.mubr.f32.gmra.mrb[0].mxu0 %v234
  %v1089 = vpop.f32.mrb[0].mxu0
  %v1090 = vadd.f32 %v865, %v1089
  %v1091 = vpop.f32.mrb[0].mxu0
  %1092 = vmatprep.mubr.f32.mxu0 %v244
  %1093 = vmatmul.mubr.f32.gmra.mrb[0].mxu0 %v243
  %v1094 = vpop.f32.mrb[0].mxu0
  %v1095 = vadd.f32 %v870, %v1094
  %v1096 = vpop.f32.mrb[0].mxu0
  %1097 = vmatprep.mubr.f32.mxu0 %v253
  %1098 = vmatmul.mubr.f32.gmra.mrb[0].mxu0 %v252
  %v1099 = vpop.f32.mrb[0].mxu0
  %v1100 = vadd.f32 %v875, %v1099
  %v1101 = vpop.f32.mrb[0].mxu0
  %1102 = vmatprep.mubr.f32.mxu0 %v262
  %1103 = vmatmul.mubr.f32.gmra.mrb[0].mxu0 %v261
  %v1104 = vpop.f32.mrb[0].mxu0
  %v1105 = vadd.f32 %v880, %v1104
  %v1106 = vpop.f32.mrb[0].mxu0
  %1107 = vmatprep.mubr.f32.mxu0 %v271
  %1108 = vmatmul.mubr.f32.gmra.mrb[0].mxu0 %v270
  %v1109 = vpop.f32.mrb[0].mxu0
  %v1110 = vadd.f32 %v885, %v1109
  %v1111 = vpop.f32.mrb[0].mxu0
  %1112 = vmatprep.mubr.f32.mxu0 %v280
  %1113 = vmatmul.mubr.f32.gmra.mrb[0].mxu0 %v279
  %v1114 = vpop.f32.mrb[0].mxu0
  %v1115 = vadd.f32 %v890, %v1114
  %v1116 = vpop.f32.mrb[0].mxu0
  %1117 = vmatprep.mubr.f32.mxu0 %v289
  %1118 = vmatmul.mubr.f32.gmra.mrb[0].mxu0 %v288
  %v1119 = vpop.f32.mrb[0].mxu0
  %v1120 = vadd.f32 %v895, %v1119
  %v1121 = vpop.f32.mrb[0].mxu0
  %1122 = vmatprep.mubr.f32.mxu0 %v298
  %1123 = vmatmul.mubr.f32.gmra.mrb[0].mxu0 %v297
  %v1124 = vpop.f32.mrb[0].mxu0
  %v1125 = vadd.f32 %v900, %v1124
  %v1126 = vpop.f32.mrb[0].mxu0
  %1127 = vdwg.mxu0
  %1128 = vmatprep.subr.mxu0 0.0
  %1129 = vmatpush1.msra.mxu0 %v398
  %1130 = vmatprep.subr.mxu0 0.0
  %1131 = vmatpush1.msra.mxu0 %v399
  %1132 = vmatprep.subr.mxu0 0.0
  %1133 = vmatpush1.msra.mxu0 %v400
  %1134 = vmatprep.subr.mxu0 0.0
  %1135 = vmatpush1.msra.mxu0 %v401
  %1136 = vmatprep.subr.mxu0 0.0
  %1137 = vmatpush1.msra.mxu0 %v402
  %1138 = vmatprep.subr.mxu0 0.0
  %1139 = vmatpush1.msra.mxu0 %v403
  %1140 = vmatprep.subr.mxu0 0.0
  %1141 = vmatpush1.msra.mxu0 %v404
  %1142 = vmatprep.subr.mxu0 0.0
  %1143 = vmatpush1.msra.mxu0 %v405
  %1144 = vmatprep.subr.mxu0 0.0
  %1145 = vmatpush1.msra.mxu0 %v406
  %1146 = vmatprep.subr.mxu0 0.0
  %1147 = vmatpush1.msra.mxu0 %v407
  %1148 = vmatprep.subr.mxu0 0.0
  %1149 = vmatpush1.msra.mxu0 %v408
  %1150 = vmatprep.subr.mxu0 0.0
  %1151 = vmatpush1.msra.mxu0 %v409
  %1152 = vmatprep.subr.mxu0 0.0
  %1153 = vmatpush1.msra.mxu0 %v410
  %1154 = vmatprep.subr.mxu0 0.0
  %1155 = vmatpush1.msra.mxu0 %v411
  %1156 = vmatprep.subr.mxu0 0.0
  %1157 = vmatpush1.msra.mxu0 %v412
  %1158 = vmatprep.subr.mxu0 0.0
  %1159 = vmatpush1.msra.mxu0 %v413
  %1160 = vmatprep.subr.mxu0 0.0
  %1161 = vmatpush1.msra.mxu0 %v414
  %1162 = vmatprep.subr.mxu0 0.0
  %1163 = vmatpush1.msra.mxu0 %v415
  %1164 = vmatprep.subr.mxu0 0.0
  %1165 = vmatpush1.msra.mxu0 %v416
  %1166 = vmatprep.subr.mxu0 0.0
  %1167 = vmatpush1.msra.mxu0 %v417
  %1168 = vmatprep.subr.mxu0 0.0
  %1169 = vmatpush1.msra.mxu0 %v418
  %1170 = vmatprep.subr.mxu0 0.0
  %1171 = vmatpush1.msra.mxu0 %v419
  %1172 = vmatprep.subr.mxu0 0.0
  %1173 = vmatpush1.msra.mxu0 %v420
  %1174 = vmatprep.subr.mxu0 0.0
  %1175 = vmatpush1.msra.mxu0 %v421
  %1176 = vmatprep.subr.mxu0 0.0
  %1177 = vmatpush1.msra.mxu0 %v422
  %1178 = vmatprep.subr.mxu0 0.0
  %1179 = vmatpush1.msra.mxu0 %v423
  %1180 = vmatprep.subr.mxu0 0.0
  %1181 = vmatpush1.msra.mxu0 %v424
  %1182 = vmatprep.subr.mxu0 0.0
  %1183 = vmatpush1.msra.mxu0 %v425
  %1184 = vmatprep.subr.mxu0 0.0
  %1185 = vmatpush1.msra.mxu0 %v426
  %1186 = vmatprep.subr.mxu0 0.0
  %1187 = vmatpush1.msra.mxu0 %v427
  %1188 = vmatprep.subr.mxu0 0.0
  %1189 = vmatpush1.msra.mxu0 %v428
  %1190 = vmatprep.subr.mxu0 0.0
  %1191 = vmatpush1.msra.mxu0 %v429
  %1192 = vmatprep.mubr.f32.mxu0 %v21
  %1193 = vmatmul.mubr.f32.gmra.mrb[0].mxu0 %v20
  %v1194 = vpop.f32.mrb[0].mxu0
  %v1195 = vadd.f32 %v970, %v1194
  %v1196 = vpop.f32.mrb[0].mxu0
  %1197 = vmatprep.mubr.f32.mxu0 %v30
  %1198 = vmatmul.mubr.f32.gmra.mrb[0].mxu0 %v29
  %v1199 = vpop.f32.mrb[0].mxu0
  %v1200 = vadd.f32 %v975, %v1199
  %v1201 = vpop.f32.mrb[0].mxu0
  %1202 = vmatprep.mubr.f32.mxu0 %v39
  %1203 = vmatmul.mubr.f32.gmra.mrb[0].mxu0 %v38
  %v1204 = vpop.f32.mrb[0].mxu0
  %v1205 = vadd.f32 %v980, %v1204
  %v1206 = vpop.f32.mrb[0].mxu0
  %1207 = vmatprep.mubr.f32.mxu0 %v48
  %1208 = vmatmul.mubr.f32.gmra.mrb[0].mxu0 %v47
  %v1209 = vpop.f32.mrb[0].mxu0
  %v1210 = vadd.f32 %v985, %v1209
  %v1211 = vpop.f32.mrb[0].mxu0
  %1212 = vmatprep.mubr.f32.mxu0 %v57
  %1213 = vmatmul.mubr.f32.gmra.mrb[0].mxu0 %v56
  %v1214 = vpop.f32.mrb[0].mxu0
  %v1215 = vadd.f32 %v990, %v1214
  %v1216 = vpop.f32.mrb[0].mxu0
  %1217 = vmatprep.mubr.f32.mxu0 %v66
  %1218 = vmatmul.mubr.f32.gmra.mrb[0].mxu0 %v65
  %v1219 = vpop.f32.mrb[0].mxu0
  %v1220 = vadd.f32 %v995, %v1219
  %v1221 = vpop.f32.mrb[0].mxu0
  %1222 = vmatprep.mubr.f32.mxu0 %v75
  %1223 = vmatmul.mubr.f32.gmra.mrb[0].mxu0 %v74
  %v1224 = vpop.f32.mrb[0].mxu0
  %v1225 = vadd.f32 %v1000, %v1224
  %v1226 = vpop.f32.mrb[0].mxu0
  %1227 = vmatprep.mubr.f32.mxu0 %v84
  %1228 = vmatmul.mubr.f32.gmra.mrb[0].mxu0 %v83
  %v1229 = vpop.f32.mrb[0].mxu0
  %v1230 = vadd.f32 %v1005, %v1229
  %v1231 = vpop.f32.mrb[0].mxu0
  %1232 = vmatprep.mubr.f32.mxu0 %v93
  %1233 = vmatmul.mubr.f32.gmra.mrb[0].mxu0 %v92
  %v1234 = vpop.f32.mrb[0].mxu0
  %v1235 = vadd.f32 %v1010, %v1234
  %v1236 = vpop.f32.mrb[0].mxu0
  %1237 = vmatprep.mubr.f32.mxu0 %v102
  %1238 = vmatmul.mubr.f32.gmra.mrb[0].mxu0 %v101
  %v1239 = vpop.f32.mrb[0].mxu0
  %v1240 = vadd.f32 %v1015, %v1239
  %v1241 = vpop.f32.mrb[0].mxu0
  %1242 = vmatprep.mubr.f32.mxu0 %v111
  %1243 = vmatmul.mubr.f32.gmra.mrb[0].mxu0 %v110
  %v1244 = vpop.f32.mrb[0].mxu0
  %v1245 = vadd.f32 %v1020, %v1244
  %v1246 = vpop.f32.mrb[0].mxu0
  %1247 = vmatprep.mubr.f32.mxu0 %v120
  %1248 = vmatmul.mubr.f32.gmra.mrb[0].mxu0 %v119
  %v1249 = vpop.f32.mrb[0].mxu0
  %v1250 = vadd.f32 %v1025, %v1249
  %v1251 = vpop.f32.mrb[0].mxu0
  %1252 = vmatprep.mubr.f32.mxu0 %v129
  %1253 = vmatmul.mubr.f32.gmra.mrb[0].mxu0 %v128
  %v1254 = vpop.f32.mrb[0].mxu0
  %v1255 = vadd.f32 %v1030, %v1254
  %v1256 = vpop.f32.mrb[0].mxu0
  %1257 = vmatprep.mubr.f32.mxu0 %v138
  %1258 = vmatmul.mubr.f32.gmra.mrb[0].mxu0 %v137
  %v1259 = vpop.f32.mrb[0].mxu0
  %v1260 = vadd.f32 %v1035, %v1259
  %v1261 = vpop.f32.mrb[0].mxu0
  %1262 = vmatprep.mubr.f32.mxu0 %v147
  %1263 = vmatmul.mubr.f32.gmra.mrb[0].mxu0 %v146
  %v1264 = vpop.f32.mrb[0].mxu0
  %v1265 = vadd.f32 %v1040, %v1264
  %v1266 = vpop.f32.mrb[0].mxu0
  %1267 = vmatprep.mubr.f32.mxu0 %v156
  %1268 = vmatmul.mubr.f32.gmra.mrb[0].mxu0 %v155
  %v1269 = vpop.f32.mrb[0].mxu0
  %v1270 = vadd.f32 %v1045, %v1269
  %v1271 = vpop.f32.mrb[0].mxu0
  %1272 = vmatprep.mubr.f32.mxu0 %v165
  %1273 = vmatmul.mubr.f32.gmra.mrb[0].mxu0 %v164
  %v1274 = vpop.f32.mrb[0].mxu0
  %v1275 = vadd.f32 %v1050, %v1274
  %v1276 = vpop.f32.mrb[0].mxu0
  %1277 = vmatprep.mubr.f32.mxu0 %v174
  %1278 = vmatmul.mubr.f32.gmra.mrb[0].mxu0 %v173
  %v1279 = vpop.f32.mrb[0].mxu0
  %v1280 = vadd.f32 %v1055, %v1279
  %v1281 = vpop.f32.mrb[0].mxu0
  %1282 = vmatprep.mubr.f32.mxu0 %v183
  %1283 = vmatmul.mubr.f32.gmra.mrb[0].mxu0 %v182
  %v1284 = vpop.f32.mrb[0].mxu0
  %v1285 = vadd.f32 %v1060, %v1284
  %v1286 = vpop.f32.mrb[0].mxu0
  %1287 = vmatprep.mubr.f32.mxu0 %v192
  %1288 = vmatmul.mubr.f32.gmra.mrb[0].mxu0 %v191
  %v1289 = vpop.f32.mrb[0].mxu0
  %v1290 = vadd.f32 %v1065, %v1289
  %v1291 = vpop.f32.mrb[0].mxu0
  %1292 = vmatprep.mubr.f32.mxu0 %v201
  %1293 = vmatmul.mubr.f32.gmra.mrb[0].mxu0 %v200
  %v1294 = vpop.f32.mrb[0].mxu0
  %v1295 = vadd.f32 %v1070, %v1294
  %v1296 = vpop.f32.mrb[0].mxu0
  %1297 = vmatprep.mubr.f32.mxu0 %v210
  %1298 = vmatmul.mubr.f32.gmra.mrb[0].mxu0 %v209
  %v1299 = vpop.f32.mrb[0].mxu0
  %v1300 = vadd.f32 %v1075, %v1299
  %v1301 = vpop.f32.mrb[0].mxu0
  %1302 = vmatprep.mubr.f32.mxu0 %v219
  %1303 = vmatmul.mubr.f32.gmra.mrb[0].mxu0 %v218
  %v1304 = vpop.f32.mrb[0].mxu0
  %v1305 = vadd.f32 %v1080, %v1304
  %v1306 = vpop.f32.mrb[0].mxu0
  %1307 = vmatprep.mubr.f32.mxu0 %v228
  %1308 = vmatmul.mubr.f32.gmra.mrb[0].mxu0 %v227
  %v1309 = vpop.f32.mrb[0].mxu0
  %v1310 = vadd.f32 %v1085, %v1309
  %v1311 = vpop.f32.mrb[0].mxu0
  %1312 = vmatprep.mubr.f32.mxu0 %v237
  %1313 = vmatmul.mubr.f32.gmra.mrb[0].mxu0 %v236
  %v1314 = vpop.f32.mrb[0].mxu0
  %v1315 = vadd.f32 %v1090, %v1314
  %v1316 = vpop.f32.mrb[0].mxu0
  %1317 = vmatprep.mubr.f32.mxu0 %v246
  %1318 = vmatmul.mubr.f32.gmra.mrb[0].mxu0 %v245
  %v1319 = vpop.f32.mrb[0].mxu0
  %v1320 = vadd.f32 %v1095, %v1319
  %v1321 = vpop.f32.mrb[0].mxu0
  %1322 = vmatprep.mubr.f32.mxu0 %v255
  %1323 = vmatmul.mubr.f32.gmra.mrb[0].mxu0 %v254
  %v1324 = vpop.f32.mrb[0].mxu0
  %v1325 = vadd.f32 %v1100, %v1324
  %v1326 = vpop.f32.mrb[0].mxu0
  %1327 = vmatprep.mubr.f32.mxu0 %v264
  %1328 = vmatmul.mubr.f32.gmra.mrb[0].mxu0 %v263
  %v1329 = vpop.f32.mrb[0].mxu0
  %v1330 = vadd.f32 %v1105, %v1329
  %v1331 = vpop.f32.mrb[0].mxu0
  %1332 = vmatprep.mubr.f32.mxu0 %v273
  %1333 = vmatmul.mubr.f32.gmra.mrb[0].mxu0 %v272
  %v1334 = vpop.f32.mrb[0].mxu0
  %v1335 = vadd.f32 %v1110, %v1334
  %v1336 = vpop.f32.mrb[0].mxu0
  %1337 = vmatprep.mubr.f32.mxu0 %v282
  %1338 = vmatmul.mubr.f32.gmra.mrb[0].mxu0 %v281
  %v1339 = vpop.f32.mrb[0].mxu0
  %v1340 = vadd.f32 %v1115, %v1339
  %v1341 = vpop.f32.mrb[0].mxu0
  %1342 = vmatprep.mubr.f32.mxu0 %v291
  %1343 = vmatmul.mubr.f32.gmra.mrb[0].mxu0 %v290
  %v1344 = vpop.f32.mrb[0].mxu0
  %v1345 = vadd.f32 %v1120, %v1344
  %v1346 = vpop.f32.mrb[0].mxu0
  %1347 = vmatprep.mubr.f32.mxu0 %v300
  %1348 = vmatmul.mubr.f32.gmra.mrb[0].mxu0 %v299
  %v1349 = vpop.f32.mrb[0].mxu0
  %v1350 = vadd.f32 %v1125, %v1349
  %v1351 = vpop.f32.mrb[0].mxu0
  %1352 = vdwg.mxu0
  %1353 = vmatprep.subr.mxu0 0.0
  %1354 = vmatpush1.msra.mxu0 %v430
  %1355 = vmatprep.subr.mxu0 0.0
  %1356 = vmatpush1.msra.mxu0 %v431
  %1357 = vmatprep.subr.mxu0 0.0
  %1358 = vmatpush1.msra.mxu0 %v432
  %1359 = vmatprep.subr.mxu0 0.0
  %1360 = vmatpush1.msra.mxu0 %v433
  %1361 = vmatprep.subr.mxu0 0.0
  %1362 = vmatpush1.msra.mxu0 %v434
  %1363 = vmatprep.subr.mxu0 0.0
  %1364 = vmatpush1.msra.mxu0 %v435
  %1365 = vmatprep.subr.mxu0 0.0
  %1366 = vmatpush1.msra.mxu0 %v436
  %1367 = vmatprep.subr.mxu0 0.0
  %1368 = vmatpush1.msra.mxu0 %v437
  %1369 = vmatprep.subr.mxu0 0.0
  %1370 = vmatpush1.msra.mxu0 %v438
  %1371 = vmatprep.subr.mxu0 0.0
  %1372 = vmatpush1.msra.mxu0 %v439
  %1373 = vmatprep.subr.mxu0 0.0
  %1374 = vmatpush1.msra.mxu0 %v440
  %1375 = vmatprep.subr.mxu0 0.0
  %1376 = vmatpush1.msra.mxu0 %v441
  %1377 = vmatprep.subr.mxu0 0.0
  %1378 = vmatpush1.msra.mxu0 %v442
  %1379 = vmatprep.subr.mxu0 0.0
  %1380 = vmatpush1.msra.mxu0 %v443
  %1381 = vmatprep.subr.mxu0 0.0
  %1382 = vmatpush1.msra.mxu0 %v444
  %1383 = vmatprep.subr.mxu0 0.0
  %1384 = vmatpush1.msra.mxu0 %v445
  %1385 = vmatprep.subr.mxu0 0.0
  %1386 = vmatpush1.msra.mxu0 0.0
  %1387 = vmatprep.subr.mxu0 0.0
  %1388 = vmatpush1.msra.mxu0 0.0
  %1389 = vmatprep.subr.mxu0 0.0
  %1390 = vmatpush1.msra.mxu0 0.0
  %1391 = vmatprep.subr.mxu0 0.0
  %1392 = vmatpush1.msra.mxu0 0.0
  %1393 = vmatprep.subr.mxu0 0.0
  %1394 = vmatpush1.msra.mxu0 0.0
  %1395 = vmatprep.subr.mxu0 0.0
  %1396 = vmatpush1.msra.mxu0 0.0
  %1397 = vmatprep.subr.mxu0 0.0
  %1398 = vmatpush1.msra.mxu0 0.0
  %1399 = vmatprep.subr.mxu0 0.0
  %1400 = vmatpush1.msra.mxu0 0.0
  %1401 = vmatprep.subr.mxu0 0.0
  %1402 = vmatpush1.msra.mxu0 0.0
  %1403 = vmatprep.subr.mxu0 0.0
  %1404 = vmatpush1.msra.mxu0 0.0
  %1405 = vmatprep.subr.mxu0 0.0
  %1406 = vmatpush1.msra.mxu0 0.0
  %1407 = vmatprep.subr.mxu0 0.0
  %1408 = vmatpush1.msra.mxu0 0.0
  %1409 = vmatprep.subr.mxu0 0.0
  %1410 = vmatpush1.msra.mxu0 0.0
  %1411 = vmatprep.subr.mxu0 0.0
  %1412 = vmatpush1.msra.mxu0 0.0
  %1413 = vmatprep.subr.mxu0 0.0
  %1414 = vmatpush1.msra.mxu0 0.0
  %1415 = vmatprep.subr.mxu0 0.0
  %1416 = vmatpush1.msra.mxu0 0.0
  %1417 = vmatprep.mubr.f32.mxu0 0.0
  %1418 = vmatmul.mubr.f32.gmra.mrb[0].mxu0 %v22
  %v1419 = vpop.f32.mrb[0].mxu0
  %v1420 = vadd.f32 %v1195, %v1419
  %v1421 = vpop.f32.mrb[0].mxu0
  %1422 = vmatprep.mubr.f32.mxu0 0.0
  %1423 = vmatmul.mubr.f32.gmra.mrb[0].mxu0 %v31
  %v1424 = vpop.f32.mrb[0].mxu0
  %v1425 = vadd.f32 %v1200, %v1424
  %v1426 = vpop.f32.mrb[0].mxu0
  %1427 = vmatprep.mubr.f32.mxu0 0.0
  %1428 = vmatmul.mubr.f32.gmra.mrb[0].mxu0 %v40
  %v1429 = vpop.f32.mrb[0].mxu0
  %v1430 = vadd.f32 %v1205, %v1429
  %v1431 = vpop.f32.mrb[0].mxu0
  %1432 = vmatprep.mubr.f32.mxu0 0.0
  %1433 = vmatmul.mubr.f32.gmra.mrb[0].mxu0 %v49
  %v1434 = vpop.f32.mrb[0].mxu0
  %v1435 = vadd.f32 %v1210, %v1434
  %v1436 = vpop.f32.mrb[0].mxu0
  %1437 = vmatprep.mubr.f32.mxu0 0.0
  %1438 = vmatmul.mubr.f32.gmra.mrb[0].mxu0 %v58
  %v1439 = vpop.f32.mrb[0].mxu0
  %v1440 = vadd.f32 %v1215, %v1439
  %v1441 = vpop.f32.mrb[0].mxu0
  %1442 = vmatprep.mubr.f32.mxu0 0.0
  %1443 = vmatmul.mubr.f32.gmra.mrb[0].mxu0 %v67
  %v1444 = vpop.f32.mrb[0].mxu0
  %v1445 = vadd.f32 %v1220, %v1444
  %v1446 = vpop.f32.mrb[0].mxu0
  %1447 = vmatprep.mubr.f32.mxu0 0.0
  %1448 = vmatmul.mubr.f32.gmra.mrb[0].mxu0 %v76
  %v1449 = vpop.f32.mrb[0].mxu0
  %v1450 = vadd.f32 %v1225, %v1449
  %v1451 = vpop.f32.mrb[0].mxu0
  %1452 = vmatprep.mubr.f32.mxu0 0.0
  %1453 = vmatmul.mubr.f32.gmra.mrb[0].mxu0 %v85
  %v1454 = vpop.f32.mrb[0].mxu0
  %v1455 = vadd.f32 %v1230, %v1454
  %v1456 = vpop.f32.mrb[0].mxu0
  %1457 = vmatprep.mubr.f32.mxu0 0.0
  %1458 = vmatmul.mubr.f32.gmra.mrb[0].mxu0 %v94
  %v1459 = vpop.f32.mrb[0].mxu0
  %v1460 = vadd.f32 %v1235, %v1459
  %v1461 = vpop.f32.mrb[0].mxu0
  %1462 = vmatprep.mubr.f32.mxu0 0.0
  %1463 = vmatmul.mubr.f32.gmra.mrb[0].mxu0 %v103
  %v1464 = vpop.f32.mrb[0].mxu0
  %v1465 = vadd.f32 %v1240, %v1464
  %v1466 = vpop.f32.mrb[0].mxu0
  %1467 = vmatprep.mubr.f32.mxu0 0.0
  %1468 = vmatmul.mubr.f32.gmra.mrb[0].mxu0 %v112
  %v1469 = vpop.f32.mrb[0].mxu0
  %v1470 = vadd.f32 %v1245, %v1469
  %v1471 = vpop.f32.mrb[0].mxu0
  %1472 = vmatprep.mubr.f32.mxu0 0.0
  %1473 = vmatmul.mubr.f32.gmra.mrb[0].mxu0 %v121
  %v1474 = vpop.f32.mrb[0].mxu0
  %v1475 = vadd.f32 %v1250, %v1474
  %v1476 = vpop.f32.mrb[0].mxu0
  %1477 = vmatprep.mubr.f32.mxu0 0.0
  %1478 = vmatmul.mubr.f32.gmra.mrb[0].mxu0 %v130
  %v1479 = vpop.f32.mrb[0].mxu0
  %v1480 = vadd.f32 %v1255, %v1479
  %v1481 = vpop.f32.mrb[0].mxu0
  %1482 = vmatprep.mubr.f32.mxu0 0.0
  %1483 = vmatmul.mubr.f32.gmra.mrb[0].mxu0 %v139
  %v1484 = vpop.f32.mrb[0].mxu0
  %v1485 = vadd.f32 %v1260, %v1484
  %v1486 = vpop.f32.mrb[0].mxu0
  %1487 = vmatprep.mubr.f32.mxu0 0.0
  %1488 = vmatmul.mubr.f32.gmra.mrb[0].mxu0 %v148
  %v1489 = vpop.f32.mrb[0].mxu0
  %v1490 = vadd.f32 %v1265, %v1489
  %v1491 = vpop.f32.mrb[0].mxu0
  %1492 = vmatprep.mubr.f32.mxu0 0.0
  %1493 = vmatmul.mubr.f32.gmra.mrb[0].mxu0 %v157
  %v1494 = vpop.f32.mrb[0].mxu0
  %v1495 = vadd.f32 %v1270, %v1494
  %v1496 = vpop.f32.mrb[0].mxu0
  %1497 = vmatprep.mubr.f32.mxu0 0.0
  %1498 = vmatmul.mubr.f32.gmra.mrb[0].mxu0 %v166
  %v1499 = vpop.f32.mrb[0].mxu0
  %v1500 = vadd.f32 %v1275, %v1499
  %v1501 = vpop.f32.mrb[0].mxu0
  %1502 = vmatprep.mubr.f32.mxu0 0.0
  %1503 = vmatmul.mubr.f32.gmra.mrb[0].mxu0 %v175
  %v1504 = vpop.f32.mrb[0].mxu0
  %v1505 = vadd.f32 %v1280, %v1504
  %v1506 = vpop.f32.mrb[0].mxu0
  %1507 = vmatprep.mubr.f32.mxu0 0.0
  %1508 = vmatmul.mubr.f32.gmra.mrb[0].mxu0 %v184
  %v1509 = vpop.f32.mrb[0].mxu0
  %v1510 = vadd.f32 %v1285, %v1509
  %v1511 = vpop.f32.mrb[0].mxu0
  %1512 = vmatprep.mubr.f32.mxu0 0.0
  %1513 = vmatmul.mubr.f32.gmra.mrb[0].mxu0 %v193
  %v1514 = vpop.f32.mrb[0].mxu0
  %v1515 = vadd.f32 %v1290, %v1514
  %v1516 = vpop.f32.mrb[0].mxu0
  %1517 = vmatprep.mubr.f32.mxu0 0.0
  %1518 = vmatmul.mubr.f32.gmra.mrb[0].mxu0 %v202
  %v1519 = vpop.f32.mrb[0].mxu0
  %v1520 = vadd.f32 %v1295, %v1519
  %v1521 = vpop.f32.mrb[0].mxu0
  %1522 = vmatprep.mubr.f32.mxu0 0.0
  %1523 = vmatmul.mubr.f32.gmra.mrb[0].mxu0 %v211
  %v1524 = vpop.f32.mrb[0].mxu0
  %v1525 = vadd.f32 %v1300, %v1524
  %v1526 = vpop.f32.mrb[0].mxu0
  %1527 = vmatprep.mubr.f32.mxu0 0.0
  %1528 = vmatmul.mubr.f32.gmra.mrb[0].mxu0 %v220
  %v1529 = vpop.f32.mrb[0].mxu0
  %v1530 = vadd.f32 %v1305, %v1529
  %v1531 = vpop.f32.mrb[0].mxu0
  %1532 = vmatprep.mubr.f32.mxu0 0.0
  %1533 = vmatmul.mubr.f32.gmra.mrb[0].mxu0 %v229
  %v1534 = vpop.f32.mrb[0].mxu0
  %v1535 = vadd.f32 %v1310, %v1534
  %v1536 = vpop.f32.mrb[0].mxu0
  %1537 = vmatprep.mubr.f32.mxu0 0.0
  %1538 = vmatmul.mubr.f32.gmra.mrb[0].mxu0 %v238
  %v1539 = vpop.f32.mrb[0].mxu0
  %v1540 = vadd.f32 %v1315, %v1539
  %v1541 = vpop.f32.mrb[0].mxu0
  %1542 = vmatprep.mubr.f32.mxu0 0.0
  %1543 = vmatmul.mubr.f32.gmra.mrb[0].mxu0 %v247
  %v1544 = vpop.f32.mrb[0].mxu0
  %v1545 = vadd.f32 %v1320, %v1544
  %v1546 = vpop.f32.mrb[0].mxu0
  %1547 = vmatprep.mubr.f32.mxu0 0.0
  %1548 = vmatmul.mubr.f32.gmra.mrb[0].mxu0 %v256
  %v1549 = vpop.f32.mrb[0].mxu0
  %v1550 = vadd.f32 %v1325, %v1549
  %v1551 = vpop.f32.mrb[0].mxu0
  %1552 = vmatprep.mubr.f32.mxu0 0.0
  %1553 = vmatmul.mubr.f32.gmra.mrb[0].mxu0 %v265
  %v1554 = vpop.f32.mrb[0].mxu0
  %v1555 = vadd.f32 %v1330, %v1554
  %v1556 = vpop.f32.mrb[0].mxu0
  %1557 = vmatprep.mubr.f32.mxu0 0.0
  %1558 = vmatmul.mubr.f32.gmra.mrb[0].mxu0 %v274
  %v1559 = vpop.f32.mrb[0].mxu0
  %v1560 = vadd.f32 %v1335, %v1559
  %v1561 = vpop.f32.mrb[0].mxu0
  %1562 = vmatprep.mubr.f32.mxu0 0.0
  %1563 = vmatmul.mubr.f32.gmra.mrb[0].mxu0 %v283
  %v1564 = vpop.f32.mrb[0].mxu0
  %v1565 = vadd.f32 %v1340, %v1564
  %v1566 = vpop.f32.mrb[0].mxu0
  %1567 = vmatprep.mubr.f32.mxu0 0.0
  %1568 = vmatmul.mubr.f32.gmra.mrb[0].mxu0 %v292
  %v1569 = vpop.f32.mrb[0].mxu0
  %v1570 = vadd.f32 %v1345, %v1569
  %v1571 = vpop.f32.mrb[0].mxu0
  %1572 = vmatprep.mubr.f32.mxu0 0.0
  %1573 = vmatmul.mubr.f32.gmra.mrb[0].mxu0 %v301
  %v1574 = vpop.f32.mrb[0].mxu0
  %v1575 = vadd.f32 %v1350, %v1574
  %v1576 = vpop.f32.mrb[0].mxu0
  %1577 = vdwg.mxu0
  %v1578 = vxor.u32 %v1420, 2147483648
  %v1579 = vxor.u32 %v1425, 2147483648
  %v1580 = vxor.u32 %v1430, 2147483648
  %v1581 = vxor.u32 %v1435, 2147483648
  %v1582 = vxor.u32 %v1440, 2147483648
  %v1583 = vxor.u32 %v1445, 2147483648
  %v1584 = vxor.u32 %v1450, 2147483648
  %v1585 = vxor.u32 %v1455, 2147483648
  %v1586 = vxor.u32 %v1460, 2147483648
  %v1587 = vxor.u32 %v1465, 2147483648
  %v1588 = vxor.u32 %v1470, 2147483648
  %v1589 = vxor.u32 %v1475, 2147483648
  %v1590 = vxor.u32 %v1480, 2147483648
  %v1591 = vxor.u32 %v1485, 2147483648
  %v1592 = vxor.u32 %v1490, 2147483648
  %v1593 = vxor.u32 %v1495, 2147483648
  %v1594 = vxor.u32 %v1500, 2147483648
  %v1595 = vxor.u32 %v1505, 2147483648
  %v1596 = vxor.u32 %v1510, 2147483648
  %v1597 = vxor.u32 %v1515, 2147483648
  %v1598 = vxor.u32 %v1520, 2147483648
  %v1599 = vxor.u32 %v1525, 2147483648
  %v1600 = vxor.u32 %v1530, 2147483648
  %v1601 = vxor.u32 %v1535, 2147483648
  %v1602 = vxor.u32 %v1540, 2147483648
  %v1603 = vxor.u32 %v1545, 2147483648
  %v1604 = vxor.u32 %v1550, 2147483648
  %v1605 = vxor.u32 %v1555, 2147483648
  %v1606 = vxor.u32 %v1560, 2147483648
  %v1607 = vxor.u32 %v1565, 2147483648
  %v1608 = vxor.u32 %v1570, 2147483648
  %v1609 = vxor.u32 %v1575, 2147483648
  %v1610 = vmul.f32 %v1578, 1.442695
  %v1611 = vpow.pop %v1610
  %v1612 = vmul.f32 %v1579, 1.442695
  %v1613 = vpow.pop %v1612
  %v1614 = vmul.f32 %v1580, 1.442695
  %v1615 = vpow.pop %v1614
  %v1616 = vmul.f32 %v1581, 1.442695
  %v1617 = vpow.pop %v1616
  %v1618 = vmul.f32 %v1582, 1.442695
  %v1619 = vpow.pop %v1618
  %v1620 = vmul.f32 %v1583, 1.442695
  %v1621 = vpow.pop %v1620
  %v1622 = vmul.f32 %v1584, 1.442695
  %v1623 = vpow.pop %v1622
  %v1624 = vmul.f32 %v1585, 1.442695
  %v1625 = vpow.pop %v1624
  %v1626 = vmul.f32 %v1586, 1.442695
  %v1627 = vpow.pop %v1626
  %v1628 = vmul.f32 %v1587, 1.442695
  %v1629 = vpow.pop %v1628
  %v1630 = vmul.f32 %v1588, 1.442695
  %v1631 = vpow.pop %v1630
  %v1632 = vmul.f32 %v1589, 1.442695
  %v1633 = vpow.pop %v1632
  %v1634 = vmul.f32 %v1590, 1.442695
  %v1635 = vpow.pop %v1634
  %v1636 = vmul.f32 %v1591, 1.442695
  %v1637 = vpow.pop %v1636
  %v1638 = vmul.f32 %v1592, 1.442695
  %v1639 = vpow.pop %v1638
  %v1640 = vmul.f32 %v1593, 1.442695
  %v1641 = vpow.pop %v1640
  %v1642 = vmul.f32 %v1594, 1.442695
  %v1643 = vpow.pop %v1642
  %v1644 = vmul.f32 %v1595, 1.442695
  %v1645 = vpow.pop %v1644
  %v1646 = vmul.f32 %v1596, 1.442695
  %v1647 = vpow.pop %v1646
  %v1648 = vmul.f32 %v1597, 1.442695
  %v1649 = vpow.pop %v1648
  %v1650 = vmul.f32 %v1598, 1.442695
  %v1651 = vpow.pop %v1650
  %v1652 = vmul.f32 %v1599, 1.442695
  %v1653 = vpow.pop %v1652
  %v1654 = vmul.f32 %v1600, 1.442695
  %v1655 = vpow.pop %v1654
  %v1656 = vmul.f32 %v1601, 1.442695
  %v1657 = vpow.pop %v1656
  %v1658 = vmul.f32 %v1602, 1.442695
  %v1659 = vpow.pop %v1658
  %v1660 = vmul.f32 %v1603, 1.442695
  %v1661 = vpow.pop %v1660
  %v1662 = vmul.f32 %v1604, 1.442695
  %v1663 = vpow.pop %v1662
  %v1664 = vmul.f32 %v1605, 1.442695
  %v1665 = vpow.pop %v1664
  %v1666 = vmul.f32 %v1606, 1.442695
  %v1667 = vpow.pop %v1666
  %v1668 = vmul.f32 %v1607, 1.442695
  %v1669 = vpow.pop %v1668
  %v1670 = vmul.f32 %v1608, 1.442695
  %v1671 = vpow.pop %v1670
  %v1672 = vmul.f32 %v1609, 1.442695
  %v1673 = vpow.pop %v1672
  %v1674 = vadd.f32 %v1611, 1.0
  %v1675 = vadd.f32 %v1613, 1.0
  %v1676 = vadd.f32 %v1615, 1.0
  %v1677 = vadd.f32 %v1617, 1.0
  %v1678 = vadd.f32 %v1619, 1.0
  %v1679 = vadd.f32 %v1621, 1.0
  %v1680 = vadd.f32 %v1623, 1.0
  %v1681 = vadd.f32 %v1625, 1.0
  %v1682 = vadd.f32 %v1627, 1.0
  %v1683 = vadd.f32 %v1629, 1.0
  %v1684 = vadd.f32 %v1631, 1.0
  %v1685 = vadd.f32 %v1633, 1.0
  %v1686 = vadd.f32 %v1635, 1.0
  %v1687 = vadd.f32 %v1637, 1.0
  %v1688 = vadd.f32 %v1639, 1.0
  %v1689 = vadd.f32 %v1641, 1.0
  %v1690 = vadd.f32 %v1643, 1.0
  %v1691 = vadd.f32 %v1645, 1.0
  %v1692 = vadd.f32 %v1647, 1.0
  %v1693 = vadd.f32 %v1649, 1.0
  %v1694 = vadd.f32 %v1651, 1.0
  %v1695 = vadd.f32 %v1653, 1.0
  %v1696 = vadd.f32 %v1655, 1.0
  %v1697 = vadd.f32 %v1657, 1.0
  %v1698 = vadd.f32 %v1659, 1.0
  %v1699 = vadd.f32 %v1661, 1.0
  %v1700 = vadd.f32 %v1663, 1.0
  %v1701 = vadd.f32 %v1665, 1.0
  %v1702 = vadd.f32 %v1667, 1.0
  %v1703 = vadd.f32 %v1669, 1.0
  %v1704 = vadd.f32 %v1671, 1.0
  %v1705 = vadd.f32 %v1673, 1.0
  %v1706 = vrcp.pop %v1674
  %v1707 = vmul.f32 1.0, %v1706
  %v1708 = vrcp.pop %v1675
  %v1709 = vmul.f32 1.0, %v1708
  %v1710 = vrcp.pop %v1676
  %v1711 = vmul.f32 1.0, %v1710
  %v1712 = vrcp.pop %v1677
  %v1713 = vmul.f32 1.0, %v1712
  %v1714 = vrcp.pop %v1678
  %v1715 = vmul.f32 1.0, %v1714
  %v1716 = vrcp.pop %v1679
  %v1717 = vmul.f32 1.0, %v1716
  %v1718 = vrcp.pop %v1680
  %v1719 = vmul.f32 1.0, %v1718
  %v1720 = vrcp.pop %v1681
  %v1721 = vmul.f32 1.0, %v1720
  %v1722 = vrcp.pop %v1682
  %v1723 = vmul.f32 1.0, %v1722
  %v1724 = vrcp.pop %v1683
  %v1725 = vmul.f32 1.0, %v1724
  %v1726 = vrcp.pop %v1684
  %v1727 = vmul.f32 1.0, %v1726
  %v1728 = vrcp.pop %v1685
  %v1729 = vmul.f32 1.0, %v1728
  %v1730 = vrcp.pop %v1686
  %v1731 = vmul.f32 1.0, %v1730
  %v1732 = vrcp.pop %v1687
  %v1733 = vmul.f32 1.0, %v1732
  %v1734 = vrcp.pop %v1688
  %v1735 = vmul.f32 1.0, %v1734
  %v1736 = vrcp.pop %v1689
  %v1737 = vmul.f32 1.0, %v1736
  %v1738 = vrcp.pop %v1690
  %v1739 = vmul.f32 1.0, %v1738
  %v1740 = vrcp.pop %v1691
  %v1741 = vmul.f32 1.0, %v1740
  %v1742 = vrcp.pop %v1692
  %v1743 = vmul.f32 1.0, %v1742
  %v1744 = vrcp.pop %v1693
  %v1745 = vmul.f32 1.0, %v1744
  %v1746 = vrcp.pop %v1694
  %v1747 = vmul.f32 1.0, %v1746
  %v1748 = vrcp.pop %v1695
  %v1749 = vmul.f32 1.0, %v1748
  %v1750 = vrcp.pop %v1696
  %v1751 = vmul.f32 1.0, %v1750
  %v1752 = vrcp.pop %v1697
  %v1753 = vmul.f32 1.0, %v1752
  %v1754 = vrcp.pop %v1698
  %v1755 = vmul.f32 1.0, %v1754
  %v1756 = vrcp.pop %v1699
  %v1757 = vmul.f32 1.0, %v1756
  %v1758 = vrcp.pop %v1700
  %v1759 = vmul.f32 1.0, %v1758
  %v1760 = vrcp.pop %v1701
  %v1761 = vmul.f32 1.0, %v1760
  %v1762 = vrcp.pop %v1702
  %v1763 = vmul.f32 1.0, %v1762
  %v1764 = vrcp.pop %v1703
  %v1765 = vmul.f32 1.0, %v1764
  %v1766 = vrcp.pop %v1704
  %v1767 = vmul.f32 1.0, %v1766
  %v1768 = vrcp.pop %v1705
  %v1769 = vmul.f32 1.0, %v1768
  %v1770 = vmul.f32 %v1420, %v1707
  %v1771 = vmul.f32 %v1425, %v1709
  %v1772 = vmul.f32 %v1430, %v1711
  %v1773 = vmul.f32 %v1435, %v1713
  %v1774 = vmul.f32 %v1440, %v1715
  %v1775 = vmul.f32 %v1445, %v1717
  %v1776 = vmul.f32 %v1450, %v1719
  %v1777 = vmul.f32 %v1455, %v1721
  %v1778 = vmul.f32 %v1460, %v1723
  %v1779 = vmul.f32 %v1465, %v1725
  %v1780 = vmul.f32 %v1470, %v1727
  %v1781 = vmul.f32 %v1475, %v1729
  %v1782 = vmul.f32 %v1480, %v1731
  %v1783 = vmul.f32 %v1485, %v1733
  %v1784 = vmul.f32 %v1490, %v1735
  %v1785 = vmul.f32 %v1495, %v1737
  %v1786 = vmul.f32 %v1500, %v1739
  %v1787 = vmul.f32 %v1505, %v1741
  %v1788 = vmul.f32 %v1510, %v1743
  %v1789 = vmul.f32 %v1515, %v1745
  %v1790 = vmul.f32 %v1520, %v1747
  %v1791 = vmul.f32 %v1525, %v1749
  %v1792 = vmul.f32 %v1530, %v1751
  %v1793 = vmul.f32 %v1535, %v1753
  %v1794 = vmul.f32 %v1540, %v1755
  %v1795 = vmul.f32 %v1545, %v1757
  %v1796 = vmul.f32 %v1550, %v1759
  %v1797 = vmul.f32 %v1555, %v1761
  %v1798 = vmul.f32 %v1560, %v1763
  %v1799 = vmul.f32 %v1565, %v1765
  %v1800 = vmul.f32 %v1570, %v1767
  %v1801 = vmul.f32 %v1575, %v1769
  %1802 = vst [vmem:[%s3] sm:$0xff] %v1770
  %1803 = vst [vmem:[%s3 + $0x8] sm:$0xff] %v1771
  %1804 = vst [vmem:[%s3 + $0x10] sm:$0xff] %v1772
  %1805 = vst [vmem:[%s3 + $0x18] sm:$0xff] %v1773
  %1806 = vst [vmem:[%s3 + $0x20] sm:$0xff] %v1774
  %1807 = vst [vmem:[%s3 + $0x28] sm:$0xff] %v1775
  %1808 = vst [vmem:[%s3 + $0x30] sm:$0xff] %v1776
  %1809 = vst [vmem:[%s3 + $0x38] sm:$0xff] %v1777
  %1810 = vst [vmem:[%s3 + $0x40] sm:$0xff] %v1778
  %1811 = vst [vmem:[%s3 + $0x48] sm:$0xff] %v1779
  %1812 = vst [vmem:[%s3 + $0x50] sm:$0xff] %v1780
  %1813 = vst [vmem:[%s3 + $0x58] sm:$0xff] %v1781
  %1814 = vst [vmem:[%s3 + $0x60] sm:$0xff] %v1782
  %1815 = vst [vmem:[%s3 + $0x68] sm:$0xff] %v1783
  %1816 = vst [vmem:[%s3 + $0x70] sm:$0xff] %v1784
  %1817 = vst [vmem:[%s3 + $0x78] sm:$0xff] %v1785
  %1818 = vst [vmem:[%s3 + $0x80] sm:$0xff] %v1786
  %1819 = vst [vmem:[%s3 + $0x88] sm:$0xff] %v1787
  %1820 = vst [vmem:[%s3 + $0x90] sm:$0xff] %v1788
  %1821 = vst [vmem:[%s3 + $0x98] sm:$0xff] %v1789
  %1822 = vst [vmem:[%s3 + $0xa0] sm:$0xff] %v1790
  %1823 = vst [vmem:[%s3 + $0xa8] sm:$0xff] %v1791
  %1824 = vst [vmem:[%s3 + $0xb0] sm:$0xff] %v1792
  %1825 = vst [vmem:[%s3 + $0xb8] sm:$0xff] %v1793
  %1826 = vst [vmem:[%s3 + $0xc0] sm:$0xff] %v1794
  %1827 = vst [vmem:[%s3 + $0xc8] sm:$0xff] %v1795
  %1828 = vst [vmem:[%s3 + $0xd0] sm:$0xff] %v1796
  %1829 = vst [vmem:[%s3 + $0xd8] sm:$0xff] %v1797
  %1830 = vst [vmem:[%s3 + $0xe0] sm:$0xff] %v1798
  %1831 = vst [vmem:[%s3 + $0xe8] sm:$0xff] %v1799
  %1832 = vst [vmem:[%s3 + $0xf0] sm:$0xff] %v1800
  %1833 = vst [vmem:[%s3 + $0xf8] sm:$0xff] %v1801
  // Predicated region
  $region14: #{encoder_with_svtr_forward.38} parent=0 // pred_check
    _
  $region15: #{encoder_with_svtr_forward.38} parent=0 // pred_check_branch
    %1835 = sbr.rel (0) target = $region17
  $region16: #{encoder_with_svtr_forward.38} parent=0 // pred_region
    _
  $region17: #{encoder_with_svtr_forward.38} parent=0 // pred_fallthru
    _
  // Predicated region
  $region18: #{encoder_with_svtr_forward.38} parent=0 // pred_check
    _
  $region19: #{encoder_with_svtr_forward.38} parent=0 // pred_check_branch
    %1837 = sbr.rel (0) target = $region21
  $region20: #{encoder_with_svtr_forward.38} parent=0 // pred_region
    _
  $region21: #{encoder_with_svtr_forward.38} parent=0 // pred_fallthru
    _

</llo_original>
